<compile_context>
chip_gen: v5e
topology: v5e:2x2
jax: 0.10.0
libtpu: 0.0.40
codegen_flags: <defaults>
</compile_context>

<pallas_src>
import jax
import jax.numpy as jnp
from jax import lax
from jax.experimental import pallas as pl
from jax.experimental.pallas import tpu as pltpu

EPS = 1e-5
LEAKY_SLOPE = 0.05
MXU_DTYPE = jnp.float32             # set to jnp.bfloat16 for production sizes
VMEM_LIMIT = 32 * 1024 * 1024       # safe scoped-VMEM limit on v5e/v6e/v7x


# ----------------------------------------------------------------------------
# Fused kernel: conv1 -> (conv + BN + lrelu) x3 -> fc, everything VMEM-resident
# ----------------------------------------------------------------------------
def _fused_disc_kernel(p1_ref, w1_ref, b1_ref,
                       s2_ref, w2_ref, g2_ref, be2_ref,
                       s3_ref, w3_ref, g3_ref, be3_ref,
                       s4_ref, w4_ref, g4_ref, be4_ref,
                       s5_ref, w5_ref, b5_ref,
                       out_ref):
    f32 = jnp.float32
    cdt = p1_ref.dtype                        # MXU input dtype

    def lrelu(y):                             # f32 epilogue math
        return jnp.where(y >= 0.0, y, LEAKY_SLOPE * y)

    def batchnorm(y, g_ref, b_ref):           # training-mode batch stats over M
        mean = jnp.mean(y, axis=0, keepdims=True)
        var = jnp.mean(jnp.square(y - mean), axis=0, keepdims=True)
        scale = g_ref[...] * lax.rsqrt(var + EPS)        # EUP rsqrt
        return y * scale + (b_ref[...] - mean * scale)

    def tap_conv(x, s_ref, w_ref):
        # In-VMEM patch extraction + conv:  sum_t (S_t @ x) @ W_t.
        # S_t is a 0/1 row-selection matrix (all-zero rows for padding taps),
        # so the whole conv is plain 2D MXU matmuls -- no strided loads, no
        # gathers, no HBM traffic for patches.
        acc = None
        for t in range(s_ref.shape[0]):       # static unroll over k*k taps
            g = jnp.dot(s_ref[t], x, preferred_element_type=f32)
            c = jnp.dot(g.astype(cdt), w_ref[t], preferred_element_type=f32)
            acc = c if acc is None else acc + c
        return acc

    # conv1 (no BN): patches were pre-extracted wrapper-side.
    y = jnp.dot(p1_ref[...], w1_ref[...], preferred_element_type=f32) + b1_ref[...]
    x = lrelu(y).astype(cdt)

    # conv2..conv4: conv + fused BatchNorm + leaky relu.  The conv bias is
    # dropped: it cancels exactly against the batch-mean subtraction.
    x = lrelu(batchnorm(tap_conv(x, s2_ref, w2_ref), g2_ref, be2_ref)).astype(cdt)
    x = lrelu(batchnorm(tap_conv(x, s3_ref, w3_ref), g3_ref, be3_ref)).astype(cdt)
    x = lrelu(batchnorm(tap_conv(x, s4_ref, w4_ref), g4_ref, be4_ref)).astype(cdt)

    # fc folded into the same kernel: conv (k = image_size // 16), bias, no act.
    out_ref[...] = (tap_conv(x, s5_ref, w5_ref) + b5_ref[...]).astype(out_ref.dtype)


# ----------------------------------------------------------------------------
# Wrapper-side one-time prep
# ----------------------------------------------------------------------------
def _im2col(x_nhwc, *, k, stride, pad):
    """XLA-side patch extraction for conv1 only; feature order (kh, kw, cin)."""
    n, h, w, c = x_nhwc.shape
    ho = (h + 2 * pad - k) // stride + 1
    wo = (w + 2 * pad - k) // stride + 1
    xp = jnp.pad(x_nhwc, ((0, 0), (pad, pad), (pad, pad), (0, 0)))
    ih = (jnp.arange(ho) * stride)[:, None] + jnp.arange(k)[None, :]    # (ho, k)
    iw = (jnp.arange(wo) * stride)[:, None] + jnp.arange(k)[None, :]    # (wo, k)
    p = xp[:, ih[:, None, :, None], iw[None, :, None, :], :]            # (n,ho,wo,k,k,c)
    return p.reshape(n * ho * wo, k * k * c)


def _build_tap_selectors(n, h, w, k, stride, pad, dtype):
    """0/1 gather matrices, one per tap: S[t] has shape (M_out, M_in) with
    S[t][m_out, m_in] = 1 iff input pixel m_in feeds output pixel m_out at tap
    t = (kh, kw); out-of-bounds (zero-padding) taps give all-zero rows."""
    ho = (h + 2 * pad - k) // stride + 1
    wo = (w + 2 * pad - k) // stride + 1
    m_in = n * h * w
    ns, ohs, ows = jnp.meshgrid(jnp.arange(n), jnp.arange(ho), jnp.arange(wo),
                                indexing="ij")
    ns, ohs, ows = ns.reshape(-1), ohs.reshape(-1), ows.reshape(-1)
    taps = []
    for kh in range(k):
        for kw in range(k):
            hi = ohs * stride + kh - pad
            wi = ows * stride + kw - pad
            valid = ((hi >= 0) & (hi < h) & (wi >= 0) & (wi < w)).astype(dtype)
            src = (ns * h + jnp.clip(hi, 0, h - 1)) * w + jnp.clip(wi, 0, w - 1)
            taps.append(jax.nn.one_hot(src, m_in, dtype=dtype) * valid[:, None])
    return jnp.stack(taps), ho                # (k*k, n*ho*wo, m_in)


def prepare(params, *, batch, image_size, dtype=MXU_DTYPE):
    """One-time prep: matmul-layout weights, per-tap gather matrices, BN params.
    Returns the flat operand tuple the fused kernel consumes after the conv1
    patches."""
    def tap_weights(w):                        # (Cout,Cin,K,K) -> (K*K,Cin,Cout)
        cout, cin, k, _ = w.shape
        return jnp.transpose(w, (2, 3, 1, 0)).reshape(k * k, cin, cout).astype(dtype)

    def row(v):
        return v.reshape(1, -1).astype(jnp.float32)

    ops = []
    # conv1: (K*K*Cin, Cout) weight; feature order (kh, kw, cin) matches _im2col.
    w1 = params["conv1"]["w"]
    cout1, cin1, k1, _ = w1.shape
    ops += [jnp.transpose(w1, (2, 3, 1, 0)).reshape(k1 * k1 * cin1, cout1).astype(dtype),
            row(params["conv1"]["b"])]

    # BN layers: tap selectors + per-tap weights + gamma/beta (conv bias is
    # dropped -- it cancels exactly against the BatchNorm mean subtraction).
    hin = image_size // 2
    for name in ("conv2", "conv3", "conv4"):
        sel, hout = _build_tap_selectors(batch, hin, hin, 4, 2, 1, dtype)
        ops += [sel, tap_weights(params[name]["w"]),
                row(params[name]["gamma"]), row(params[name]["beta"])]
        hin = hout

    # fc (folded into the fused kernel): k = image_size // 16, stride 1, pad 0.
    kf = image_size // 16
    sel, _ = _build_tap_selectors(batch, hin, hin, kf, 1, 0, dtype)
    ops += [sel, tap_weights(params["fc"]["w"]), row(params["fc"]["b"])]
    return tuple(ops)


def discriminator_forward(x_nchw, operands):
    x = jnp.transpose(x_nchw, (0, 2, 3, 1)).astype(MXU_DTYPE)   # NCHW -> NHWC
    patches1 = _im2col(x, k=4, stride=2, pad=1)
    n = x.shape[0]
    n_inputs = 1 + len(operands)
    out = pl.pallas_call(
        _fused_disc_kernel,
        out_shape=jax.ShapeDtypeStruct((n, 1), jnp.float32),
        in_specs=[pl.BlockSpec(memory_space=pltpu.MemorySpace.VMEM)] * n_inputs,
        out_specs=pl.BlockSpec(memory_space=pltpu.MemorySpace.VMEM),
        compiler_params=pltpu.CompilerParams(vmem_limit_bytes=VMEM_LIMIT),
    )(patches1, *operands)
    return jnp.squeeze(out)                   # matches torch .squeeze(): (N,)


# ----------------------------------------------------------------------------
# Pure-JAX f32 reference (pins tap / feature ordering of the Pallas path)
# ----------------------------------------------------------------------------
def ref_forward(x, params):
    prec = lax.Precision.HIGHEST

    def convr(x, w, b, stride, pad):
        y = lax.conv_general_dilated(
            x, w, (stride, stride), [(pad, pad), (pad, pad)],
            dimension_numbers=("NCHW", "OIHW", "NCHW"), precision=prec)
        return y + b[None, :, None, None]

    def bnr(y, g, be):
        mean = jnp.mean(y, axis=(0, 2, 3), keepdims=True)
        var = jnp.mean((y - mean) ** 2, axis=(0, 2, 3), keepdims=True)
        return (y - mean) * lax.rsqrt(var + EPS) * g[None, :, None, None] \
            + be[None, :, None, None]

    def lrelu(y):
        return jnp.where(y >= 0, y, LEAKY_SLOPE * y)

    p = params
    y = lrelu(convr(x, p["conv1"]["w"], p["conv1"]["b"], 2, 1))
    y = lrelu(bnr(convr(y, p["conv2"]["w"], p["conv2"]["b"], 2, 1),
                  p["conv2"]["gamma"], p["conv2"]["beta"]))
    y = lrelu(bnr(convr(y, p["conv3"]["w"], p["conv3"]["b"], 2, 1),
                  p["conv3"]["gamma"], p["conv3"]["beta"]))
    y = lrelu(bnr(convr(y, p["conv4"]["w"], p["conv4"]["b"], 2, 1),
                  p["conv4"]["gamma"], p["conv4"]["beta"]))
    y = convr(y, p["fc"]["w"], p["fc"]["b"], 1, 0)
    return jnp.squeeze(y)


# ----------------------------------------------------------------------------
# Deterministic parameter construction
# ----------------------------------------------------------------------------
def init_conv(key, cin, cout, k, bn):
    kw, kb, kg, kbe = jax.random.split(key, 4)
    fan_in = cin * k * k
    p = {
        "w": jax.random.normal(kw, (cout, cin, k, k), jnp.float32) / jnp.sqrt(fan_in),
        "b": 0.1 * jax.random.normal(kb, (cout,), jnp.float32),
    }
    if bn:
        p["gamma"] = 1.0 + 0.1 * jax.random.normal(kg, (cout,), jnp.float32)
        p["beta"] = 0.1 * jax.random.normal(kbe, (cout,), jnp.float32)
    return p


def make_params(key, image_size=32, conv_dim=8):
    ks = jax.random.split(key, 5)
    return {
        "conv1": init_conv(ks[0], 3, conv_dim, 4, bn=False),
        "conv2": init_conv(ks[1], conv_dim, conv_dim * 2, 4, bn=True),
        "conv3": init_conv(ks[2], conv_dim * 2, conv_dim * 4, 4, bn=True),
        "conv4": init_conv(ks[3], conv_dim * 4, conv_dim * 8, 4, bn=True),
        "fc":    init_conv(ks[4], conv_dim * 8, 1, image_size // 16, bn=False),
    }


if __name__ == "__main__":
    key = jax.random.PRNGKey(0)
    k_param, k_x = jax.random.split(key)

    image_size, conv_dim, batch = 32, 8, 2
    params = make_params(k_param, image_size=image_size, conv_dim=conv_dim)
    x = jax.random.normal(k_x, (batch, 3, image_size, image_size), jnp.float32)

    operands = prepare(params, batch=batch, image_size=image_size)  # one-time prep
    fwd = jax.jit(discriminator_forward)

    out = jax.block_until_ready(fwd(x, operands))
    ref = jax.block_until_ready(ref_forward(x, params))

    assert out.shape == ref.shape == (batch,), (out.shape, ref.shape)
    assert bool(jnp.all(jnp.isfinite(out))), out
    assert jnp.allclose(out, ref, rtol=3e-2, atol=3e-2), (out, ref)
    print("KERNEL_OK")
</pallas_src>

<mosaic_0001>
module attributes {stable_mosaic.version = 11 : i64} {
  func.func @_fused_disc_kernel(%arg0: memref<512x48xf32, #tpu.memory_space<vmem>>, %arg1: memref<48x8xf32, #tpu.memory_space<vmem>>, %arg2: memref<1x8xf32, #tpu.memory_space<vmem>>, %arg3: memref<16x128x512xf32, #tpu.memory_space<vmem>>, %arg4: memref<16x8x16xf32, #tpu.memory_space<vmem>>, %arg5: memref<1x16xf32, #tpu.memory_space<vmem>>, %arg6: memref<1x16xf32, #tpu.memory_space<vmem>>, %arg7: memref<16x32x128xf32, #tpu.memory_space<vmem>>, %arg8: memref<16x16x32xf32, #tpu.memory_space<vmem>>, %arg9: memref<1x32xf32, #tpu.memory_space<vmem>>, %arg10: memref<1x32xf32, #tpu.memory_space<vmem>>, %arg11: memref<16x8x32xf32, #tpu.memory_space<vmem>>, %arg12: memref<16x32x64xf32, #tpu.memory_space<vmem>>, %arg13: memref<1x64xf32, #tpu.memory_space<vmem>>, %arg14: memref<1x64xf32, #tpu.memory_space<vmem>>, %arg15: memref<4x2x8xf32, #tpu.memory_space<vmem>>, %arg16: memref<4x64x1xf32, #tpu.memory_space<vmem>>, %arg17: memref<1x1xf32, #tpu.memory_space<vmem>>, %arg18: memref<2x1xf32, #tpu.memory_space<vmem>>) attributes {dimension_semantics = [], scalar_prefetch = 0 : i64, scratch_operands = 0 : i64, tpu.core_type = #tpu.core_type<tc>} {
    %c0 = arith.constant 0 : index
    %c0_0 = arith.constant 0 : index
    %0 = vector.load %arg0[%c0, %c0_0] : memref<512x48xf32, #tpu.memory_space<vmem>>, vector<512x48xf32>
    %c0_1 = arith.constant 0 : index
    %c0_2 = arith.constant 0 : index
    %1 = vector.load %arg1[%c0_1, %c0_2] : memref<48x8xf32, #tpu.memory_space<vmem>>, vector<48x8xf32>
    %cst = arith.constant dense<0.000000e+00> : vector<512x8xf32>
    %2 = tpu.matmul %0, %1, %cst {dimension_numbers = #tpu.dot_dimension_numbers<[1], [0], [0], [1], [0, 0, 1, 1], [], []>} : vector<512x48xf32>, vector<48x8xf32>, vector<512x8xf32> -> vector<512x8xf32>
    %c0_3 = arith.constant 0 : index
    %c0_4 = arith.constant 0 : index
    %3 = vector.load %arg2[%c0_3, %c0_4] : memref<1x8xf32, #tpu.memory_space<vmem>>, vector<1x8xf32>
    %4 = vector.broadcast %3 : vector<1x8xf32> to vector<512x8xf32>
    %5 = arith.addf %2, %4 : vector<512x8xf32>
    %cst_5 = arith.constant 0.000000e+00 : f32
    %6 = vector.broadcast %cst_5 : f32 to vector<512x8xf32>
    %7 = arith.cmpf oge, %5, %6 : vector<512x8xf32>
    %cst_6 = arith.constant 5.000000e-02 : f32
    %8 = vector.broadcast %cst_6 : f32 to vector<512x8xf32>
    %9 = arith.mulf %8, %5 : vector<512x8xf32>
    %10 = arith.select %7, %5, %9 : vector<512x8xi1>, vector<512x8xf32>
    %c0_7 = arith.constant 0 : index
    %c0_8 = arith.constant 0 : index
    %c0_9 = arith.constant 0 : index
    %11 = vector.load %arg3[%c0_7, %c0_8, %c0_9] : memref<16x128x512xf32, #tpu.memory_space<vmem>>, vector<1x128x512xf32>
    %12 = vector.shape_cast %11 : vector<1x128x512xf32> to vector<128x512xf32>
    %cst_10 = arith.constant dense<0.000000e+00> : vector<128x8xf32>
    %13 = tpu.matmul %12, %10, %cst_10 {dimension_numbers = #tpu.dot_dimension_numbers<[1], [0], [0], [1], [0, 0, 1, 1], [], []>} : vector<128x512xf32>, vector<512x8xf32>, vector<128x8xf32> -> vector<128x8xf32>
    %c0_11 = arith.constant 0 : index
    %c0_12 = arith.constant 0 : index
    %c0_13 = arith.constant 0 : index
    %14 = vector.load %arg4[%c0_11, %c0_12, %c0_13] : memref<16x8x16xf32, #tpu.memory_space<vmem>>, vector<1x8x16xf32>
    %15 = vector.shape_cast %14 : vector<1x8x16xf32> to vector<8x16xf32>
    %cst_14 = arith.constant dense<0.000000e+00> : vector<128x16xf32>
    %16 = tpu.matmul %13, %15, %cst_14 {dimension_numbers = #tpu.dot_dimension_numbers<[1], [0], [0], [1], [0, 0, 1, 1], [], []>} : vector<128x8xf32>, vector<8x16xf32>, vector<128x16xf32> -> vector<128x16xf32>
    %c1 = arith.constant 1 : index
    %c0_15 = arith.constant 0 : index
    %c0_16 = arith.constant 0 : index
    %17 = vector.load %arg3[%c1, %c0_15, %c0_16] : memref<16x128x512xf32, #tpu.memory_space<vmem>>, vector<1x128x512xf32>
    %18 = vector.shape_cast %17 : vector<1x128x512xf32> to vector<128x512xf32>
    %cst_17 = arith.constant dense<0.000000e+00> : vector<128x8xf32>
    %19 = tpu.matmul %18, %10, %cst_17 {dimension_numbers = #tpu.dot_dimension_numbers<[1], [0], [0], [1], [0, 0, 1, 1], [], []>} : vector<128x512xf32>, vector<512x8xf32>, vector<128x8xf32> -> vector<128x8xf32>
    %c1_18 = arith.constant 1 : index
    %c0_19 = arith.constant 0 : index
    %c0_20 = arith.constant 0 : index
    %20 = vector.load %arg4[%c1_18, %c0_19, %c0_20] : memref<16x8x16xf32, #tpu.memory_space<vmem>>, vector<1x8x16xf32>
    %21 = vector.shape_cast %20 : vector<1x8x16xf32> to vector<8x16xf32>
    %cst_21 = arith.constant dense<0.000000e+00> : vector<128x16xf32>
    %22 = tpu.matmul %19, %21, %cst_21 {dimension_numbers = #tpu.dot_dimension_numbers<[1], [0], [0], [1], [0, 0, 1, 1], [], []>} : vector<128x8xf32>, vector<8x16xf32>, vector<128x16xf32> -> vector<128x16xf32>
    %23 = arith.addf %16, %22 : vector<128x16xf32>
    %c2 = arith.constant 2 : index
    %c0_22 = arith.constant 0 : index
    %c0_23 = arith.constant 0 : index
    %24 = vector.load %arg3[%c2, %c0_22, %c0_23] : memref<16x128x512xf32, #tpu.memory_space<vmem>>, vector<1x128x512xf32>
    %25 = vector.shape_cast %24 : vector<1x128x512xf32> to vector<128x512xf32>
    %cst_24 = arith.constant dense<0.000000e+00> : vector<128x8xf32>
    %26 = tpu.matmul %25, %10, %cst_24 {dimension_numbers = #tpu.dot_dimension_numbers<[1], [0], [0], [1], [0, 0, 1, 1], [], []>} : vector<128x512xf32>, vector<512x8xf32>, vector<128x8xf32> -> vector<128x8xf32>
    %c2_25 = arith.constant 2 : index
    %c0_26 = arith.constant 0 : index
    %c0_27 = arith.constant 0 : index
    %27 = vector.load %arg4[%c2_25, %c0_26, %c0_27] : memref<16x8x16xf32, #tpu.memory_space<vmem>>, vector<1x8x16xf32>
    %28 = vector.shape_cast %27 : vector<1x8x16xf32> to vector<8x16xf32>
    %cst_28 = arith.constant dense<0.000000e+00> : vector<128x16xf32>
    %29 = tpu.matmul %26, %28, %cst_28 {dimension_numbers = #tpu.dot_dimension_numbers<[1], [0], [0], [1], [0, 0, 1, 1], [], []>} : vector<128x8xf32>, vector<8x16xf32>, vector<128x16xf32> -> vector<128x16xf32>
    %30 = arith.addf %23, %29 : vector<128x16xf32>
    %c3 = arith.constant 3 : index
    %c0_29 = arith.constant 0 : index
    %c0_30 = arith.constant 0 : index
    %31 = vector.load %arg3[%c3, %c0_29, %c0_30] : memref<16x128x512xf32, #tpu.memory_space<vmem>>, vector<1x128x512xf32>
    %32 = vector.shape_cast %31 : vector<1x128x512xf32> to vector<128x512xf32>
    %cst_31 = arith.constant dense<0.000000e+00> : vector<128x8xf32>
    %33 = tpu.matmul %32, %10, %cst_31 {dimension_numbers = #tpu.dot_dimension_numbers<[1], [0], [0], [1], [0, 0, 1, 1], [], []>} : vector<128x512xf32>, vector<512x8xf32>, vector<128x8xf32> -> vector<128x8xf32>
    %c3_32 = arith.constant 3 : index
    %c0_33 = arith.constant 0 : index
    %c0_34 = arith.constant 0 : index
    %34 = vector.load %arg4[%c3_32, %c0_33, %c0_34] : memref<16x8x16xf32, #tpu.memory_space<vmem>>, vector<1x8x16xf32>
    %35 = vector.shape_cast %34 : vector<1x8x16xf32> to vector<8x16xf32>
    %cst_35 = arith.constant dense<0.000000e+00> : vector<128x16xf32>
    %36 = tpu.matmul %33, %35, %cst_35 {dimension_numbers = #tpu.dot_dimension_numbers<[1], [0], [0], [1], [0, 0, 1, 1], [], []>} : vector<128x8xf32>, vector<8x16xf32>, vector<128x16xf32> -> vector<128x16xf32>
    %37 = arith.addf %30, %36 : vector<128x16xf32>
    %c4 = arith.constant 4 : index
    %c0_36 = arith.constant 0 : index
    %c0_37 = arith.constant 0 : index
    %38 = vector.load %arg3[%c4, %c0_36, %c0_37] : memref<16x128x512xf32, #tpu.memory_space<vmem>>, vector<1x128x512xf32>
    %39 = vector.shape_cast %38 : vector<1x128x512xf32> to vector<128x512xf32>
    %cst_38 = arith.constant dense<0.000000e+00> : vector<128x8xf32>
    %40 = tpu.matmul %39, %10, %cst_38 {dimension_numbers = #tpu.dot_dimension_numbers<[1], [0], [0], [1], [0, 0, 1, 1], [], []>} : vector<128x512xf32>, vector<512x8xf32>, vector<128x8xf32> -> vector<128x8xf32>
    %c4_39 = arith.constant 4 : index
    %c0_40 = arith.constant 0 : index
    %c0_41 = arith.constant 0 : index
    %41 = vector.load %arg4[%c4_39, %c0_40, %c0_41] : memref<16x8x16xf32, #tpu.memory_space<vmem>>, vector<1x8x16xf32>
    %42 = vector.shape_cast %41 : vector<1x8x16xf32> to vector<8x16xf32>
    %cst_42 = arith.constant dense<0.000000e+00> : vector<128x16xf32>
    %43 = tpu.matmul %40, %42, %cst_42 {dimension_numbers = #tpu.dot_dimension_numbers<[1], [0], [0], [1], [0, 0, 1, 1], [], []>} : vector<128x8xf32>, vector<8x16xf32>, vector<128x16xf32> -> vector<128x16xf32>
    %44 = arith.addf %37, %43 : vector<128x16xf32>
    %c5 = arith.constant 5 : index
    %c0_43 = arith.constant 0 : index
    %c0_44 = arith.constant 0 : index
    %45 = vector.load %arg3[%c5, %c0_43, %c0_44] : memref<16x128x512xf32, #tpu.memory_space<vmem>>, vector<1x128x512xf32>
    %46 = vector.shape_cast %45 : vector<1x128x512xf32> to vector<128x512xf32>
    %cst_45 = arith.constant dense<0.000000e+00> : vector<128x8xf32>
    %47 = tpu.matmul %46, %10, %cst_45 {dimension_numbers = #tpu.dot_dimension_numbers<[1], [0], [0], [1], [0, 0, 1, 1], [], []>} : vector<128x512xf32>, vector<512x8xf32>, vector<128x8xf32> -> vector<128x8xf32>
    %c5_46 = arith.constant 5 : index
    %c0_47 = arith.constant 0 : index
    %c0_48 = arith.constant 0 : index
    %48 = vector.load %arg4[%c5_46, %c0_47, %c0_48] : memref<16x8x16xf32, #tpu.memory_space<vmem>>, vector<1x8x16xf32>
    %49 = vector.shape_cast %48 : vector<1x8x16xf32> to vector<8x16xf32>
    %cst_49 = arith.constant dense<0.000000e+00> : vector<128x16xf32>
    %50 = tpu.matmul %47, %49, %cst_49 {dimension_numbers = #tpu.dot_dimension_numbers<[1], [0], [0], [1], [0, 0, 1, 1], [], []>} : vector<128x8xf32>, vector<8x16xf32>, vector<128x16xf32> -> vector<128x16xf32>
    %51 = arith.addf %44, %50 : vector<128x16xf32>
    %c6 = arith.constant 6 : index
    %c0_50 = arith.constant 0 : index
    %c0_51 = arith.constant 0 : index
    %52 = vector.load %arg3[%c6, %c0_50, %c0_51] : memref<16x128x512xf32, #tpu.memory_space<vmem>>, vector<1x128x512xf32>
    %53 = vector.shape_cast %52 : vector<1x128x512xf32> to vector<128x512xf32>
    %cst_52 = arith.constant dense<0.000000e+00> : vector<128x8xf32>
    %54 = tpu.matmul %53, %10, %cst_52 {dimension_numbers = #tpu.dot_dimension_numbers<[1], [0], [0], [1], [0, 0, 1, 1], [], []>} : vector<128x512xf32>, vector<512x8xf32>, vector<128x8xf32> -> vector<128x8xf32>
    %c6_53 = arith.constant 6 : index
    %c0_54 = arith.constant 0 : index
    %c0_55 = arith.constant 0 : index
    %55 = vector.load %arg4[%c6_53, %c0_54, %c0_55] : memref<16x8x16xf32, #tpu.memory_space<vmem>>, vector<1x8x16xf32>
    %56 = vector.shape_cast %55 : vector<1x8x16xf32> to vector<8x16xf32>
    %cst_56 = arith.constant dense<0.000000e+00> : vector<128x16xf32>
    %57 = tpu.matmul %54, %56, %cst_56 {dimension_numbers = #tpu.dot_dimension_numbers<[1], [0], [0], [1], [0, 0, 1, 1], [], []>} : vector<128x8xf32>, vector<8x16xf32>, vector<128x16xf32> -> vector<128x16xf32>
    %58 = arith.addf %51, %57 : vector<128x16xf32>
    %c7 = arith.constant 7 : index
    %c0_57 = arith.constant 0 : index
    %c0_58 = arith.constant 0 : index
    %59 = vector.load %arg3[%c7, %c0_57, %c0_58] : memref<16x128x512xf32, #tpu.memory_space<vmem>>, vector<1x128x512xf32>
    %60 = vector.shape_cast %59 : vector<1x128x512xf32> to vector<128x512xf32>
    %cst_59 = arith.constant dense<0.000000e+00> : vector<128x8xf32>
    %61 = tpu.matmul %60, %10, %cst_59 {dimension_numbers = #tpu.dot_dimension_numbers<[1], [0], [0], [1], [0, 0, 1, 1], [], []>} : vector<128x512xf32>, vector<512x8xf32>, vector<128x8xf32> -> vector<128x8xf32>
    %c7_60 = arith.constant 7 : index
    %c0_61 = arith.constant 0 : index
    %c0_62 = arith.constant 0 : index
    %62 = vector.load %arg4[%c7_60, %c0_61, %c0_62] : memref<16x8x16xf32, #tpu.memory_space<vmem>>, vector<1x8x16xf32>
    %63 = vector.shape_cast %62 : vector<1x8x16xf32> to vector<8x16xf32>
    %cst_63 = arith.constant dense<0.000000e+00> : vector<128x16xf32>
    %64 = tpu.matmul %61, %63, %cst_63 {dimension_numbers = #tpu.dot_dimension_numbers<[1], [0], [0], [1], [0, 0, 1, 1], [], []>} : vector<128x8xf32>, vector<8x16xf32>, vector<128x16xf32> -> vector<128x16xf32>
    %65 = arith.addf %58, %64 : vector<128x16xf32>
    %c8 = arith.constant 8 : index
    %c0_64 = arith.constant 0 : index
    %c0_65 = arith.constant 0 : index
    %66 = vector.load %arg3[%c8, %c0_64, %c0_65] : memref<16x128x512xf32, #tpu.memory_space<vmem>>, vector<1x128x512xf32>
    %67 = vector.shape_cast %66 : vector<1x128x512xf32> to vector<128x512xf32>
    %cst_66 = arith.constant dense<0.000000e+00> : vector<128x8xf32>
    %68 = tpu.matmul %67, %10, %cst_66 {dimension_numbers = #tpu.dot_dimension_numbers<[1], [0], [0], [1], [0, 0, 1, 1], [], []>} : vector<128x512xf32>, vector<512x8xf32>, vector<128x8xf32> -> vector<128x8xf32>
    %c8_67 = arith.constant 8 : index
    %c0_68 = arith.constant 0 : index
    %c0_69 = arith.constant 0 : index
    %69 = vector.load %arg4[%c8_67, %c0_68, %c0_69] : memref<16x8x16xf32, #tpu.memory_space<vmem>>, vector<1x8x16xf32>
    %70 = vector.shape_cast %69 : vector<1x8x16xf32> to vector<8x16xf32>
    %cst_70 = arith.constant dense<0.000000e+00> : vector<128x16xf32>
    %71 = tpu.matmul %68, %70, %cst_70 {dimension_numbers = #tpu.dot_dimension_numbers<[1], [0], [0], [1], [0, 0, 1, 1], [], []>} : vector<128x8xf32>, vector<8x16xf32>, vector<128x16xf32> -> vector<128x16xf32>
    %72 = arith.addf %65, %71 : vector<128x16xf32>
    %c9 = arith.constant 9 : index
    %c0_71 = arith.constant 0 : index
    %c0_72 = arith.constant 0 : index
    %73 = vector.load %arg3[%c9, %c0_71, %c0_72] : memref<16x128x512xf32, #tpu.memory_space<vmem>>, vector<1x128x512xf32>
    %74 = vector.shape_cast %73 : vector<1x128x512xf32> to vector<128x512xf32>
    %cst_73 = arith.constant dense<0.000000e+00> : vector<128x8xf32>
    %75 = tpu.matmul %74, %10, %cst_73 {dimension_numbers = #tpu.dot_dimension_numbers<[1], [0], [0], [1], [0, 0, 1, 1], [], []>} : vector<128x512xf32>, vector<512x8xf32>, vector<128x8xf32> -> vector<128x8xf32>
    %c9_74 = arith.constant 9 : index
    %c0_75 = arith.constant 0 : index
    %c0_76 = arith.constant 0 : index
    %76 = vector.load %arg4[%c9_74, %c0_75, %c0_76] : memref<16x8x16xf32, #tpu.memory_space<vmem>>, vector<1x8x16xf32>
    %77 = vector.shape_cast %76 : vector<1x8x16xf32> to vector<8x16xf32>
    %cst_77 = arith.constant dense<0.000000e+00> : vector<128x16xf32>
    %78 = tpu.matmul %75, %77, %cst_77 {dimension_numbers = #tpu.dot_dimension_numbers<[1], [0], [0], [1], [0, 0, 1, 1], [], []>} : vector<128x8xf32>, vector<8x16xf32>, vector<128x16xf32> -> vector<128x16xf32>
    %79 = arith.addf %72, %78 : vector<128x16xf32>
    %c10 = arith.constant 10 : index
    %c0_78 = arith.constant 0 : index
    %c0_79 = arith.constant 0 : index
    %80 = vector.load %arg3[%c10, %c0_78, %c0_79] : memref<16x128x512xf32, #tpu.memory_space<vmem>>, vector<1x128x512xf32>
    %81 = vector.shape_cast %80 : vector<1x128x512xf32> to vector<128x512xf32>
    %cst_80 = arith.constant dense<0.000000e+00> : vector<128x8xf32>
    %82 = tpu.matmul %81, %10, %cst_80 {dimension_numbers = #tpu.dot_dimension_numbers<[1], [0], [0], [1], [0, 0, 1, 1], [], []>} : vector<128x512xf32>, vector<512x8xf32>, vector<128x8xf32> -> vector<128x8xf32>
    %c10_81 = arith.constant 10 : index
    %c0_82 = arith.constant 0 : index
    %c0_83 = arith.constant 0 : index
    %83 = vector.load %arg4[%c10_81, %c0_82, %c0_83] : memref<16x8x16xf32, #tpu.memory_space<vmem>>, vector<1x8x16xf32>
    %84 = vector.shape_cast %83 : vector<1x8x16xf32> to vector<8x16xf32>
    %cst_84 = arith.constant dense<0.000000e+00> : vector<128x16xf32>
    %85 = tpu.matmul %82, %84, %cst_84 {dimension_numbers = #tpu.dot_dimension_numbers<[1], [0], [0], [1], [0, 0, 1, 1], [], []>} : vector<128x8xf32>, vector<8x16xf32>, vector<128x16xf32> -> vector<128x16xf32>
    %86 = arith.addf %79, %85 : vector<128x16xf32>
    %c11 = arith.constant 11 : index
    %c0_85 = arith.constant 0 : index
    %c0_86 = arith.constant 0 : index
    %87 = vector.load %arg3[%c11, %c0_85, %c0_86] : memref<16x128x512xf32, #tpu.memory_space<vmem>>, vector<1x128x512xf32>
    %88 = vector.shape_cast %87 : vector<1x128x512xf32> to vector<128x512xf32>
    %cst_87 = arith.constant dense<0.000000e+00> : vector<128x8xf32>
    %89 = tpu.matmul %88, %10, %cst_87 {dimension_numbers = #tpu.dot_dimension_numbers<[1], [0], [0], [1], [0, 0, 1, 1], [], []>} : vector<128x512xf32>, vector<512x8xf32>, vector<128x8xf32> -> vector<128x8xf32>
    %c11_88 = arith.constant 11 : index
    %c0_89 = arith.constant 0 : index
    %c0_90 = arith.constant 0 : index
    %90 = vector.load %arg4[%c11_88, %c0_89, %c0_90] : memref<16x8x16xf32, #tpu.memory_space<vmem>>, vector<1x8x16xf32>
    %91 = vector.shape_cast %90 : vector<1x8x16xf32> to vector<8x16xf32>
    %cst_91 = arith.constant dense<0.000000e+00> : vector<128x16xf32>
    %92 = tpu.matmul %89, %91, %cst_91 {dimension_numbers = #tpu.dot_dimension_numbers<[1], [0], [0], [1], [0, 0, 1, 1], [], []>} : vector<128x8xf32>, vector<8x16xf32>, vector<128x16xf32> -> vector<128x16xf32>
    %93 = arith.addf %86, %92 : vector<128x16xf32>
    %c12 = arith.constant 12 : index
    %c0_92 = arith.constant 0 : index
    %c0_93 = arith.constant 0 : index
    %94 = vector.load %arg3[%c12, %c0_92, %c0_93] : memref<16x128x512xf32, #tpu.memory_space<vmem>>, vector<1x128x512xf32>
    %95 = vector.shape_cast %94 : vector<1x128x512xf32> to vector<128x512xf32>
    %cst_94 = arith.constant dense<0.000000e+00> : vector<128x8xf32>
    %96 = tpu.matmul %95, %10, %cst_94 {dimension_numbers = #tpu.dot_dimension_numbers<[1], [0], [0], [1], [0, 0, 1, 1], [], []>} : vector<128x512xf32>, vector<512x8xf32>, vector<128x8xf32> -> vector<128x8xf32>
    %c12_95 = arith.constant 12 : index
    %c0_96 = arith.constant 0 : index
    %c0_97 = arith.constant 0 : index
    %97 = vector.load %arg4[%c12_95, %c0_96, %c0_97] : memref<16x8x16xf32, #tpu.memory_space<vmem>>, vector<1x8x16xf32>
    %98 = vector.shape_cast %97 : vector<1x8x16xf32> to vector<8x16xf32>
    %cst_98 = arith.constant dense<0.000000e+00> : vector<128x16xf32>
    %99 = tpu.matmul %96, %98, %cst_98 {dimension_numbers = #tpu.dot_dimension_numbers<[1], [0], [0], [1], [0, 0, 1, 1], [], []>} : vector<128x8xf32>, vector<8x16xf32>, vector<128x16xf32> -> vector<128x16xf32>
    %100 = arith.addf %93, %99 : vector<128x16xf32>
    %c13 = arith.constant 13 : index
    %c0_99 = arith.constant 0 : index
    %c0_100 = arith.constant 0 : index
    %101 = vector.load %arg3[%c13, %c0_99, %c0_100] : memref<16x128x512xf32, #tpu.memory_space<vmem>>, vector<1x128x512xf32>
    %102 = vector.shape_cast %101 : vector<1x128x512xf32> to vector<128x512xf32>
    %cst_101 = arith.constant dense<0.000000e+00> : vector<128x8xf32>
    %103 = tpu.matmul %102, %10, %cst_101 {dimension_numbers = #tpu.dot_dimension_numbers<[1], [0], [0], [1], [0, 0, 1, 1], [], []>} : vector<128x512xf32>, vector<512x8xf32>, vector<128x8xf32> -> vector<128x8xf32>
    %c13_102 = arith.constant 13 : index
    %c0_103 = arith.constant 0 : index
    %c0_104 = arith.constant 0 : index
    %104 = vector.load %arg4[%c13_102, %c0_103, %c0_104] : memref<16x8x16xf32, #tpu.memory_space<vmem>>, vector<1x8x16xf32>
    %105 = vector.shape_cast %104 : vector<1x8x16xf32> to vector<8x16xf32>
    %cst_105 = arith.constant dense<0.000000e+00> : vector<128x16xf32>
    %106 = tpu.matmul %103, %105, %cst_105 {dimension_numbers = #tpu.dot_dimension_numbers<[1], [0], [0], [1], [0, 0, 1, 1], [], []>} : vector<128x8xf32>, vector<8x16xf32>, vector<128x16xf32> -> vector<128x16xf32>
    %107 = arith.addf %100, %106 : vector<128x16xf32>
    %c14 = arith.constant 14 : index
    %c0_106 = arith.constant 0 : index
    %c0_107 = arith.constant 0 : index
    %108 = vector.load %arg3[%c14, %c0_106, %c0_107] : memref<16x128x512xf32, #tpu.memory_space<vmem>>, vector<1x128x512xf32>
    %109 = vector.shape_cast %108 : vector<1x128x512xf32> to vector<128x512xf32>
    %cst_108 = arith.constant dense<0.000000e+00> : vector<128x8xf32>
    %110 = tpu.matmul %109, %10, %cst_108 {dimension_numbers = #tpu.dot_dimension_numbers<[1], [0], [0], [1], [0, 0, 1, 1], [], []>} : vector<128x512xf32>, vector<512x8xf32>, vector<128x8xf32> -> vector<128x8xf32>
    %c14_109 = arith.constant 14 : index
    %c0_110 = arith.constant 0 : index
    %c0_111 = arith.constant 0 : index
    %111 = vector.load %arg4[%c14_109, %c0_110, %c0_111] : memref<16x8x16xf32, #tpu.memory_space<vmem>>, vector<1x8x16xf32>
    %112 = vector.shape_cast %111 : vector<1x8x16xf32> to vector<8x16xf32>
    %cst_112 = arith.constant dense<0.000000e+00> : vector<128x16xf32>
    %113 = tpu.matmul %110, %112, %cst_112 {dimension_numbers = #tpu.dot_dimension_numbers<[1], [0], [0], [1], [0, 0, 1, 1], [], []>} : vector<128x8xf32>, vector<8x16xf32>, vector<128x16xf32> -> vector<128x16xf32>
    %114 = arith.addf %107, %113 : vector<128x16xf32>
    %c15 = arith.constant 15 : index
    %c0_113 = arith.constant 0 : index
    %c0_114 = arith.constant 0 : index
    %115 = vector.load %arg3[%c15, %c0_113, %c0_114] : memref<16x128x512xf32, #tpu.memory_space<vmem>>, vector<1x128x512xf32>
    %116 = vector.shape_cast %115 : vector<1x128x512xf32> to vector<128x512xf32>
    %cst_115 = arith.constant dense<0.000000e+00> : vector<128x8xf32>
    %117 = tpu.matmul %116, %10, %cst_115 {dimension_numbers = #tpu.dot_dimension_numbers<[1], [0], [0], [1], [0, 0, 1, 1], [], []>} : vector<128x512xf32>, vector<512x8xf32>, vector<128x8xf32> -> vector<128x8xf32>
    %c15_116 = arith.constant 15 : index
    %c0_117 = arith.constant 0 : index
    %c0_118 = arith.constant 0 : index
    %118 = vector.load %arg4[%c15_116, %c0_117, %c0_118] : memref<16x8x16xf32, #tpu.memory_space<vmem>>, vector<1x8x16xf32>
    %119 = vector.shape_cast %118 : vector<1x8x16xf32> to vector<8x16xf32>
    %cst_119 = arith.constant dense<0.000000e+00> : vector<128x16xf32>
    %120 = tpu.matmul %117, %119, %cst_119 {dimension_numbers = #tpu.dot_dimension_numbers<[1], [0], [0], [1], [0, 0, 1, 1], [], []>} : vector<128x8xf32>, vector<8x16xf32>, vector<128x16xf32> -> vector<128x16xf32>
    %121 = arith.addf %114, %120 : vector<128x16xf32>
    %cst_120 = arith.constant dense<0.000000e+00> : vector<16xf32>
    %122 = vector.multi_reduction <add>, %121, %cst_120 [0] : vector<128x16xf32> to vector<16xf32>
    %123 = vector.shape_cast %122 : vector<16xf32> to vector<1x16xf32>
    %cst_121 = arith.constant 1.280000e+02 : f32
    %124 = vector.broadcast %cst_121 : f32 to vector<1x16xf32>
    %125 = arith.divf %123, %124 : vector<1x16xf32>
    %126 = vector.broadcast %125 : vector<1x16xf32> to vector<128x16xf32>
    %127 = arith.subf %121, %126 : vector<128x16xf32>
    %128 = arith.mulf %127, %127 : vector<128x16xf32>
    %cst_122 = arith.constant dense<0.000000e+00> : vector<16xf32>
    %129 = vector.multi_reduction <add>, %128, %cst_122 [0] : vector<128x16xf32> to vector<16xf32>
    %130 = vector.shape_cast %129 : vector<16xf32> to vector<1x16xf32>
    %cst_123 = arith.constant 1.280000e+02 : f32
    %131 = vector.broadcast %cst_123 : f32 to vector<1x16xf32>
    %132 = arith.divf %130, %131 : vector<1x16xf32>
    %c0_124 = arith.constant 0 : index
    %c0_125 = arith.constant 0 : index
    %133 = vector.load %arg5[%c0_124, %c0_125] : memref<1x16xf32, #tpu.memory_space<vmem>>, vector<1x16xf32>
    %cst_126 = arith.constant 9.99999974E-6 : f32
    %134 = vector.broadcast %cst_126 : f32 to vector<1x16xf32>
    %135 = arith.addf %132, %134 : vector<1x16xf32>
    %136 = math.rsqrt %135 : vector<1x16xf32>
    %137 = arith.mulf %133, %136 : vector<1x16xf32>
    %138 = vector.broadcast %137 : vector<1x16xf32> to vector<128x16xf32>
    %139 = arith.mulf %121, %138 : vector<128x16xf32>
    %c0_127 = arith.constant 0 : index
    %c0_128 = arith.constant 0 : index
    %140 = vector.load %arg6[%c0_127, %c0_128] : memref<1x16xf32, #tpu.memory_space<vmem>>, vector<1x16xf32>
    %141 = arith.mulf %125, %137 : vector<1x16xf32>
    %142 = arith.subf %140, %141 : vector<1x16xf32>
    %143 = vector.broadcast %142 : vector<1x16xf32> to vector<128x16xf32>
    %144 = arith.addf %139, %143 : vector<128x16xf32>
    %cst_129 = arith.constant 0.000000e+00 : f32
    %145 = vector.broadcast %cst_129 : f32 to vector<128x16xf32>
    %146 = arith.cmpf oge, %144, %145 : vector<128x16xf32>
    %cst_130 = arith.constant 5.000000e-02 : f32
    %147 = vector.broadcast %cst_130 : f32 to vector<128x16xf32>
    %148 = arith.mulf %147, %144 : vector<128x16xf32>
    %149 = arith.select %146, %144, %148 : vector<128x16xi1>, vector<128x16xf32>
    %c0_131 = arith.constant 0 : index
    %c0_132 = arith.constant 0 : index
    %c0_133 = arith.constant 0 : index
    %150 = vector.load %arg7[%c0_131, %c0_132, %c0_133] : memref<16x32x128xf32, #tpu.memory_space<vmem>>, vector<1x32x128xf32>
    %151 = vector.shape_cast %150 : vector<1x32x128xf32> to vector<32x128xf32>
    %cst_134 = arith.constant dense<0.000000e+00> : vector<32x16xf32>
    %152 = tpu.matmul %151, %149, %cst_134 {dimension_numbers = #tpu.dot_dimension_numbers<[1], [0], [0], [1], [0, 0, 1, 1], [], []>} : vector<32x128xf32>, vector<128x16xf32>, vector<32x16xf32> -> vector<32x16xf32>
    %c0_135 = arith.constant 0 : index
    %c0_136 = arith.constant 0 : index
    %c0_137 = arith.constant 0 : index
    %153 = vector.load %arg8[%c0_135, %c0_136, %c0_137] : memref<16x16x32xf32, #tpu.memory_space<vmem>>, vector<1x16x32xf32>
    %154 = vector.shape_cast %153 : vector<1x16x32xf32> to vector<16x32xf32>
    %cst_138 = arith.constant dense<0.000000e+00> : vector<32x32xf32>
    %155 = tpu.matmul %152, %154, %cst_138 {dimension_numbers = #tpu.dot_dimension_numbers<[1], [0], [0], [1], [0, 0, 1, 1], [], []>} : vector<32x16xf32>, vector<16x32xf32>, vector<32x32xf32> -> vector<32x32xf32>
    %c1_139 = arith.constant 1 : index
    %c0_140 = arith.constant 0 : index
    %c0_141 = arith.constant 0 : index
    %156 = vector.load %arg7[%c1_139, %c0_140, %c0_141] : memref<16x32x128xf32, #tpu.memory_space<vmem>>, vector<1x32x128xf32>
    %157 = vector.shape_cast %156 : vector<1x32x128xf32> to vector<32x128xf32>
    %cst_142 = arith.constant dense<0.000000e+00> : vector<32x16xf32>
    %158 = tpu.matmul %157, %149, %cst_142 {dimension_numbers = #tpu.dot_dimension_numbers<[1], [0], [0], [1], [0, 0, 1, 1], [], []>} : vector<32x128xf32>, vector<128x16xf32>, vector<32x16xf32> -> vector<32x16xf32>
    %c1_143 = arith.constant 1 : index
    %c0_144 = arith.constant 0 : index
    %c0_145 = arith.constant 0 : index
    %159 = vector.load %arg8[%c1_143, %c0_144, %c0_145] : memref<16x16x32xf32, #tpu.memory_space<vmem>>, vector<1x16x32xf32>
    %160 = vector.shape_cast %159 : vector<1x16x32xf32> to vector<16x32xf32>
    %cst_146 = arith.constant dense<0.000000e+00> : vector<32x32xf32>
    %161 = tpu.matmul %158, %160, %cst_146 {dimension_numbers = #tpu.dot_dimension_numbers<[1], [0], [0], [1], [0, 0, 1, 1], [], []>} : vector<32x16xf32>, vector<16x32xf32>, vector<32x32xf32> -> vector<32x32xf32>
    %162 = arith.addf %155, %161 : vector<32x32xf32>
    %c2_147 = arith.constant 2 : index
    %c0_148 = arith.constant 0 : index
    %c0_149 = arith.constant 0 : index
    %163 = vector.load %arg7[%c2_147, %c0_148, %c0_149] : memref<16x32x128xf32, #tpu.memory_space<vmem>>, vector<1x32x128xf32>
    %164 = vector.shape_cast %163 : vector<1x32x128xf32> to vector<32x128xf32>
    %cst_150 = arith.constant dense<0.000000e+00> : vector<32x16xf32>
    %165 = tpu.matmul %164, %149, %cst_150 {dimension_numbers = #tpu.dot_dimension_numbers<[1], [0], [0], [1], [0, 0, 1, 1], [], []>} : vector<32x128xf32>, vector<128x16xf32>, vector<32x16xf32> -> vector<32x16xf32>
    %c2_151 = arith.constant 2 : index
    %c0_152 = arith.constant 0 : index
    %c0_153 = arith.constant 0 : index
    %166 = vector.load %arg8[%c2_151, %c0_152, %c0_153] : memref<16x16x32xf32, #tpu.memory_space<vmem>>, vector<1x16x32xf32>
    %167 = vector.shape_cast %166 : vector<1x16x32xf32> to vector<16x32xf32>
    %cst_154 = arith.constant dense<0.000000e+00> : vector<32x32xf32>
    %168 = tpu.matmul %165, %167, %cst_154 {dimension_numbers = #tpu.dot_dimension_numbers<[1], [0], [0], [1], [0, 0, 1, 1], [], []>} : vector<32x16xf32>, vector<16x32xf32>, vector<32x32xf32> -> vector<32x32xf32>
    %169 = arith.addf %162, %168 : vector<32x32xf32>
    %c3_155 = arith.constant 3 : index
    %c0_156 = arith.constant 0 : index
    %c0_157 = arith.constant 0 : index
    %170 = vector.load %arg7[%c3_155, %c0_156, %c0_157] : memref<16x32x128xf32, #tpu.memory_space<vmem>>, vector<1x32x128xf32>
    %171 = vector.shape_cast %170 : vector<1x32x128xf32> to vector<32x128xf32>
    %cst_158 = arith.constant dense<0.000000e+00> : vector<32x16xf32>
    %172 = tpu.matmul %171, %149, %cst_158 {dimension_numbers = #tpu.dot_dimension_numbers<[1], [0], [0], [1], [0, 0, 1, 1], [], []>} : vector<32x128xf32>, vector<128x16xf32>, vector<32x16xf32> -> vector<32x16xf32>
    %c3_159 = arith.constant 3 : index
    %c0_160 = arith.constant 0 : index
    %c0_161 = arith.constant 0 : index
    %173 = vector.load %arg8[%c3_159, %c0_160, %c0_161] : memref<16x16x32xf32, #tpu.memory_space<vmem>>, vector<1x16x32xf32>
    %174 = vector.shape_cast %173 : vector<1x16x32xf32> to vector<16x32xf32>
    %cst_162 = arith.constant dense<0.000000e+00> : vector<32x32xf32>
    %175 = tpu.matmul %172, %174, %cst_162 {dimension_numbers = #tpu.dot_dimension_numbers<[1], [0], [0], [1], [0, 0, 1, 1], [], []>} : vector<32x16xf32>, vector<16x32xf32>, vector<32x32xf32> -> vector<32x32xf32>
    %176 = arith.addf %169, %175 : vector<32x32xf32>
    %c4_163 = arith.constant 4 : index
    %c0_164 = arith.constant 0 : index
    %c0_165 = arith.constant 0 : index
    %177 = vector.load %arg7[%c4_163, %c0_164, %c0_165] : memref<16x32x128xf32, #tpu.memory_space<vmem>>, vector<1x32x128xf32>
    %178 = vector.shape_cast %177 : vector<1x32x128xf32> to vector<32x128xf32>
    %cst_166 = arith.constant dense<0.000000e+00> : vector<32x16xf32>
    %179 = tpu.matmul %178, %149, %cst_166 {dimension_numbers = #tpu.dot_dimension_numbers<[1], [0], [0], [1], [0, 0, 1, 1], [], []>} : vector<32x128xf32>, vector<128x16xf32>, vector<32x16xf32> -> vector<32x16xf32>
    %c4_167 = arith.constant 4 : index
    %c0_168 = arith.constant 0 : index
    %c0_169 = arith.constant 0 : index
    %180 = vector.load %arg8[%c4_167, %c0_168, %c0_169] : memref<16x16x32xf32, #tpu.memory_space<vmem>>, vector<1x16x32xf32>
    %181 = vector.shape_cast %180 : vector<1x16x32xf32> to vector<16x32xf32>
    %cst_170 = arith.constant dense<0.000000e+00> : vector<32x32xf32>
    %182 = tpu.matmul %179, %181, %cst_170 {dimension_numbers = #tpu.dot_dimension_numbers<[1], [0], [0], [1], [0, 0, 1, 1], [], []>} : vector<32x16xf32>, vector<16x32xf32>, vector<32x32xf32> -> vector<32x32xf32>
    %183 = arith.addf %176, %182 : vector<32x32xf32>
    %c5_171 = arith.constant 5 : index
    %c0_172 = arith.constant 0 : index
    %c0_173 = arith.constant 0 : index
    %184 = vector.load %arg7[%c5_171, %c0_172, %c0_173] : memref<16x32x128xf32, #tpu.memory_space<vmem>>, vector<1x32x128xf32>
    %185 = vector.shape_cast %184 : vector<1x32x128xf32> to vector<32x128xf32>
    %cst_174 = arith.constant dense<0.000000e+00> : vector<32x16xf32>
    %186 = tpu.matmul %185, %149, %cst_174 {dimension_numbers = #tpu.dot_dimension_numbers<[1], [0], [0], [1], [0, 0, 1, 1], [], []>} : vector<32x128xf32>, vector<128x16xf32>, vector<32x16xf32> -> vector<32x16xf32>
    %c5_175 = arith.constant 5 : index
    %c0_176 = arith.constant 0 : index
    %c0_177 = arith.constant 0 : index
    %187 = vector.load %arg8[%c5_175, %c0_176, %c0_177] : memref<16x16x32xf32, #tpu.memory_space<vmem>>, vector<1x16x32xf32>
    %188 = vector.shape_cast %187 : vector<1x16x32xf32> to vector<16x32xf32>
    %cst_178 = arith.constant dense<0.000000e+00> : vector<32x32xf32>
    %189 = tpu.matmul %186, %188, %cst_178 {dimension_numbers = #tpu.dot_dimension_numbers<[1], [0], [0], [1], [0, 0, 1, 1], [], []>} : vector<32x16xf32>, vector<16x32xf32>, vector<32x32xf32> -> vector<32x32xf32>
    %190 = arith.addf %183, %189 : vector<32x32xf32>
    %c6_179 = arith.constant 6 : index
    %c0_180 = arith.constant 0 : index
    %c0_181 = arith.constant 0 : index
    %191 = vector.load %arg7[%c6_179, %c0_180, %c0_181] : memref<16x32x128xf32, #tpu.memory_space<vmem>>, vector<1x32x128xf32>
    %192 = vector.shape_cast %191 : vector<1x32x128xf32> to vector<32x128xf32>
    %cst_182 = arith.constant dense<0.000000e+00> : vector<32x16xf32>
    %193 = tpu.matmul %192, %149, %cst_182 {dimension_numbers = #tpu.dot_dimension_numbers<[1], [0], [0], [1], [0, 0, 1, 1], [], []>} : vector<32x128xf32>, vector<128x16xf32>, vector<32x16xf32> -> vector<32x16xf32>
    %c6_183 = arith.constant 6 : index
    %c0_184 = arith.constant 0 : index
    %c0_185 = arith.constant 0 : index
    %194 = vector.load %arg8[%c6_183, %c0_184, %c0_185] : memref<16x16x32xf32, #tpu.memory_space<vmem>>, vector<1x16x32xf32>
    %195 = vector.shape_cast %194 : vector<1x16x32xf32> to vector<16x32xf32>
    %cst_186 = arith.constant dense<0.000000e+00> : vector<32x32xf32>
    %196 = tpu.matmul %193, %195, %cst_186 {dimension_numbers = #tpu.dot_dimension_numbers<[1], [0], [0], [1], [0, 0, 1, 1], [], []>} : vector<32x16xf32>, vector<16x32xf32>, vector<32x32xf32> -> vector<32x32xf32>
    %197 = arith.addf %190, %196 : vector<32x32xf32>
    %c7_187 = arith.constant 7 : index
    %c0_188 = arith.constant 0 : index
    %c0_189 = arith.constant 0 : index
    %198 = vector.load %arg7[%c7_187, %c0_188, %c0_189] : memref<16x32x128xf32, #tpu.memory_space<vmem>>, vector<1x32x128xf32>
    %199 = vector.shape_cast %198 : vector<1x32x128xf32> to vector<32x128xf32>
    %cst_190 = arith.constant dense<0.000000e+00> : vector<32x16xf32>
    %200 = tpu.matmul %199, %149, %cst_190 {dimension_numbers = #tpu.dot_dimension_numbers<[1], [0], [0], [1], [0, 0, 1, 1], [], []>} : vector<32x128xf32>, vector<128x16xf32>, vector<32x16xf32> -> vector<32x16xf32>
    %c7_191 = arith.constant 7 : index
    %c0_192 = arith.constant 0 : index
    %c0_193 = arith.constant 0 : index
    %201 = vector.load %arg8[%c7_191, %c0_192, %c0_193] : memref<16x16x32xf32, #tpu.memory_space<vmem>>, vector<1x16x32xf32>
    %202 = vector.shape_cast %201 : vector<1x16x32xf32> to vector<16x32xf32>
    %cst_194 = arith.constant dense<0.000000e+00> : vector<32x32xf32>
    %203 = tpu.matmul %200, %202, %cst_194 {dimension_numbers = #tpu.dot_dimension_numbers<[1], [0], [0], [1], [0, 0, 1, 1], [], []>} : vector<32x16xf32>, vector<16x32xf32>, vector<32x32xf32> -> vector<32x32xf32>
    %204 = arith.addf %197, %203 : vector<32x32xf32>
    %c8_195 = arith.constant 8 : index
    %c0_196 = arith.constant 0 : index
    %c0_197 = arith.constant 0 : index
    %205 = vector.load %arg7[%c8_195, %c0_196, %c0_197] : memref<16x32x128xf32, #tpu.memory_space<vmem>>, vector<1x32x128xf32>
    %206 = vector.shape_cast %205 : vector<1x32x128xf32> to vector<32x128xf32>
    %cst_198 = arith.constant dense<0.000000e+00> : vector<32x16xf32>
    %207 = tpu.matmul %206, %149, %cst_198 {dimension_numbers = #tpu.dot_dimension_numbers<[1], [0], [0], [1], [0, 0, 1, 1], [], []>} : vector<32x128xf32>, vector<128x16xf32>, vector<32x16xf32> -> vector<32x16xf32>
    %c8_199 = arith.constant 8 : index
    %c0_200 = arith.constant 0 : index
    %c0_201 = arith.constant 0 : index
    %208 = vector.load %arg8[%c8_199, %c0_200, %c0_201] : memref<16x16x32xf32, #tpu.memory_space<vmem>>, vector<1x16x32xf32>
    %209 = vector.shape_cast %208 : vector<1x16x32xf32> to vector<16x32xf32>
    %cst_202 = arith.constant dense<0.000000e+00> : vector<32x32xf32>
    %210 = tpu.matmul %207, %209, %cst_202 {dimension_numbers = #tpu.dot_dimension_numbers<[1], [0], [0], [1], [0, 0, 1, 1], [], []>} : vector<32x16xf32>, vector<16x32xf32>, vector<32x32xf32> -> vector<32x32xf32>
    %211 = arith.addf %204, %210 : vector<32x32xf32>
    %c9_203 = arith.constant 9 : index
    %c0_204 = arith.constant 0 : index
    %c0_205 = arith.constant 0 : index
    %212 = vector.load %arg7[%c9_203, %c0_204, %c0_205] : memref<16x32x128xf32, #tpu.memory_space<vmem>>, vector<1x32x128xf32>
    %213 = vector.shape_cast %212 : vector<1x32x128xf32> to vector<32x128xf32>
    %cst_206 = arith.constant dense<0.000000e+00> : vector<32x16xf32>
    %214 = tpu.matmul %213, %149, %cst_206 {dimension_numbers = #tpu.dot_dimension_numbers<[1], [0], [0], [1], [0, 0, 1, 1], [], []>} : vector<32x128xf32>, vector<128x16xf32>, vector<32x16xf32> -> vector<32x16xf32>
    %c9_207 = arith.constant 9 : index
    %c0_208 = arith.constant 0 : index
    %c0_209 = arith.constant 0 : index
    %215 = vector.load %arg8[%c9_207, %c0_208, %c0_209] : memref<16x16x32xf32, #tpu.memory_space<vmem>>, vector<1x16x32xf32>
    %216 = vector.shape_cast %215 : vector<1x16x32xf32> to vector<16x32xf32>
    %cst_210 = arith.constant dense<0.000000e+00> : vector<32x32xf32>
    %217 = tpu.matmul %214, %216, %cst_210 {dimension_numbers = #tpu.dot_dimension_numbers<[1], [0], [0], [1], [0, 0, 1, 1], [], []>} : vector<32x16xf32>, vector<16x32xf32>, vector<32x32xf32> -> vector<32x32xf32>
    %218 = arith.addf %211, %217 : vector<32x32xf32>
    %c10_211 = arith.constant 10 : index
    %c0_212 = arith.constant 0 : index
    %c0_213 = arith.constant 0 : index
    %219 = vector.load %arg7[%c10_211, %c0_212, %c0_213] : memref<16x32x128xf32, #tpu.memory_space<vmem>>, vector<1x32x128xf32>
    %220 = vector.shape_cast %219 : vector<1x32x128xf32> to vector<32x128xf32>
    %cst_214 = arith.constant dense<0.000000e+00> : vector<32x16xf32>
    %221 = tpu.matmul %220, %149, %cst_214 {dimension_numbers = #tpu.dot_dimension_numbers<[1], [0], [0], [1], [0, 0, 1, 1], [], []>} : vector<32x128xf32>, vector<128x16xf32>, vector<32x16xf32> -> vector<32x16xf32>
    %c10_215 = arith.constant 10 : index
    %c0_216 = arith.constant 0 : index
    %c0_217 = arith.constant 0 : index
    %222 = vector.load %arg8[%c10_215, %c0_216, %c0_217] : memref<16x16x32xf32, #tpu.memory_space<vmem>>, vector<1x16x32xf32>
    %223 = vector.shape_cast %222 : vector<1x16x32xf32> to vector<16x32xf32>
    %cst_218 = arith.constant dense<0.000000e+00> : vector<32x32xf32>
    %224 = tpu.matmul %221, %223, %cst_218 {dimension_numbers = #tpu.dot_dimension_numbers<[1], [0], [0], [1], [0, 0, 1, 1], [], []>} : vector<32x16xf32>, vector<16x32xf32>, vector<32x32xf32> -> vector<32x32xf32>
    %225 = arith.addf %218, %224 : vector<32x32xf32>
    %c11_219 = arith.constant 11 : index
    %c0_220 = arith.constant 0 : index
    %c0_221 = arith.constant 0 : index
    %226 = vector.load %arg7[%c11_219, %c0_220, %c0_221] : memref<16x32x128xf32, #tpu.memory_space<vmem>>, vector<1x32x128xf32>
    %227 = vector.shape_cast %226 : vector<1x32x128xf32> to vector<32x128xf32>
    %cst_222 = arith.constant dense<0.000000e+00> : vector<32x16xf32>
    %228 = tpu.matmul %227, %149, %cst_222 {dimension_numbers = #tpu.dot_dimension_numbers<[1], [0], [0], [1], [0, 0, 1, 1], [], []>} : vector<32x128xf32>, vector<128x16xf32>, vector<32x16xf32> -> vector<32x16xf32>
    %c11_223 = arith.constant 11 : index
    %c0_224 = arith.constant 0 : index
    %c0_225 = arith.constant 0 : index
    %229 = vector.load %arg8[%c11_223, %c0_224, %c0_225] : memref<16x16x32xf32, #tpu.memory_space<vmem>>, vector<1x16x32xf32>
    %230 = vector.shape_cast %229 : vector<1x16x32xf32> to vector<16x32xf32>
    %cst_226 = arith.constant dense<0.000000e+00> : vector<32x32xf32>
    %231 = tpu.matmul %228, %230, %cst_226 {dimension_numbers = #tpu.dot_dimension_numbers<[1], [0], [0], [1], [0, 0, 1, 1], [], []>} : vector<32x16xf32>, vector<16x32xf32>, vector<32x32xf32> -> vector<32x32xf32>
    %232 = arith.addf %225, %231 : vector<32x32xf32>
    %c12_227 = arith.constant 12 : index
    %c0_228 = arith.constant 0 : index
    %c0_229 = arith.constant 0 : index
    %233 = vector.load %arg7[%c12_227, %c0_228, %c0_229] : memref<16x32x128xf32, #tpu.memory_space<vmem>>, vector<1x32x128xf32>
    %234 = vector.shape_cast %233 : vector<1x32x128xf32> to vector<32x128xf32>
    %cst_230 = arith.constant dense<0.000000e+00> : vector<32x16xf32>
    %235 = tpu.matmul %234, %149, %cst_230 {dimension_numbers = #tpu.dot_dimension_numbers<[1], [0], [0], [1], [0, 0, 1, 1], [], []>} : vector<32x128xf32>, vector<128x16xf32>, vector<32x16xf32> -> vector<32x16xf32>
    %c12_231 = arith.constant 12 : index
    %c0_232 = arith.constant 0 : index
    %c0_233 = arith.constant 0 : index
    %236 = vector.load %arg8[%c12_231, %c0_232, %c0_233] : memref<16x16x32xf32, #tpu.memory_space<vmem>>, vector<1x16x32xf32>
    %237 = vector.shape_cast %236 : vector<1x16x32xf32> to vector<16x32xf32>
    %cst_234 = arith.constant dense<0.000000e+00> : vector<32x32xf32>
    %238 = tpu.matmul %235, %237, %cst_234 {dimension_numbers = #tpu.dot_dimension_numbers<[1], [0], [0], [1], [0, 0, 1, 1], [], []>} : vector<32x16xf32>, vector<16x32xf32>, vector<32x32xf32> -> vector<32x32xf32>
    %239 = arith.addf %232, %238 : vector<32x32xf32>
    %c13_235 = arith.constant 13 : index
    %c0_236 = arith.constant 0 : index
    %c0_237 = arith.constant 0 : index
    %240 = vector.load %arg7[%c13_235, %c0_236, %c0_237] : memref<16x32x128xf32, #tpu.memory_space<vmem>>, vector<1x32x128xf32>
    %241 = vector.shape_cast %240 : vector<1x32x128xf32> to vector<32x128xf32>
    %cst_238 = arith.constant dense<0.000000e+00> : vector<32x16xf32>
    %242 = tpu.matmul %241, %149, %cst_238 {dimension_numbers = #tpu.dot_dimension_numbers<[1], [0], [0], [1], [0, 0, 1, 1], [], []>} : vector<32x128xf32>, vector<128x16xf32>, vector<32x16xf32> -> vector<32x16xf32>
    %c13_239 = arith.constant 13 : index
    %c0_240 = arith.constant 0 : index
    %c0_241 = arith.constant 0 : index
    %243 = vector.load %arg8[%c13_239, %c0_240, %c0_241] : memref<16x16x32xf32, #tpu.memory_space<vmem>>, vector<1x16x32xf32>
    %244 = vector.shape_cast %243 : vector<1x16x32xf32> to vector<16x32xf32>
    %cst_242 = arith.constant dense<0.000000e+00> : vector<32x32xf32>
    %245 = tpu.matmul %242, %244, %cst_242 {dimension_numbers = #tpu.dot_dimension_numbers<[1], [0], [0], [1], [0, 0, 1, 1], [], []>} : vector<32x16xf32>, vector<16x32xf32>, vector<32x32xf32> -> vector<32x32xf32>
    %246 = arith.addf %239, %245 : vector<32x32xf32>
    %c14_243 = arith.constant 14 : index
    %c0_244 = arith.constant 0 : index
    %c0_245 = arith.constant 0 : index
    %247 = vector.load %arg7[%c14_243, %c0_244, %c0_245] : memref<16x32x128xf32, #tpu.memory_space<vmem>>, vector<1x32x128xf32>
    %248 = vector.shape_cast %247 : vector<1x32x128xf32> to vector<32x128xf32>
    %cst_246 = arith.constant dense<0.000000e+00> : vector<32x16xf32>
    %249 = tpu.matmul %248, %149, %cst_246 {dimension_numbers = #tpu.dot_dimension_numbers<[1], [0], [0], [1], [0, 0, 1, 1], [], []>} : vector<32x128xf32>, vector<128x16xf32>, vector<32x16xf32> -> vector<32x16xf32>
    %c14_247 = arith.constant 14 : index
    %c0_248 = arith.constant 0 : index
    %c0_249 = arith.constant 0 : index
    %250 = vector.load %arg8[%c14_247, %c0_248, %c0_249] : memref<16x16x32xf32, #tpu.memory_space<vmem>>, vector<1x16x32xf32>
    %251 = vector.shape_cast %250 : vector<1x16x32xf32> to vector<16x32xf32>
    %cst_250 = arith.constant dense<0.000000e+00> : vector<32x32xf32>
    %252 = tpu.matmul %249, %251, %cst_250 {dimension_numbers = #tpu.dot_dimension_numbers<[1], [0], [0], [1], [0, 0, 1, 1], [], []>} : vector<32x16xf32>, vector<16x32xf32>, vector<32x32xf32> -> vector<32x32xf32>
    %253 = arith.addf %246, %252 : vector<32x32xf32>
    %c15_251 = arith.constant 15 : index
    %c0_252 = arith.constant 0 : index
    %c0_253 = arith.constant 0 : index
    %254 = vector.load %arg7[%c15_251, %c0_252, %c0_253] : memref<16x32x128xf32, #tpu.memory_space<vmem>>, vector<1x32x128xf32>
    %255 = vector.shape_cast %254 : vector<1x32x128xf32> to vector<32x128xf32>
    %cst_254 = arith.constant dense<0.000000e+00> : vector<32x16xf32>
    %256 = tpu.matmul %255, %149, %cst_254 {dimension_numbers = #tpu.dot_dimension_numbers<[1], [0], [0], [1], [0, 0, 1, 1], [], []>} : vector<32x128xf32>, vector<128x16xf32>, vector<32x16xf32> -> vector<32x16xf32>
    %c15_255 = arith.constant 15 : index
    %c0_256 = arith.constant 0 : index
    %c0_257 = arith.constant 0 : index
    %257 = vector.load %arg8[%c15_255, %c0_256, %c0_257] : memref<16x16x32xf32, #tpu.memory_space<vmem>>, vector<1x16x32xf32>
    %258 = vector.shape_cast %257 : vector<1x16x32xf32> to vector<16x32xf32>
    %cst_258 = arith.constant dense<0.000000e+00> : vector<32x32xf32>
    %259 = tpu.matmul %256, %258, %cst_258 {dimension_numbers = #tpu.dot_dimension_numbers<[1], [0], [0], [1], [0, 0, 1, 1], [], []>} : vector<32x16xf32>, vector<16x32xf32>, vector<32x32xf32> -> vector<32x32xf32>
    %260 = arith.addf %253, %259 : vector<32x32xf32>
    %cst_259 = arith.constant dense<0.000000e+00> : vector<32xf32>
    %261 = vector.multi_reduction <add>, %260, %cst_259 [0] : vector<32x32xf32> to vector<32xf32>
    %262 = vector.shape_cast %261 : vector<32xf32> to vector<1x32xf32>
    %cst_260 = arith.constant 3.200000e+01 : f32
    %263 = vector.broadcast %cst_260 : f32 to vector<1x32xf32>
    %264 = arith.divf %262, %263 : vector<1x32xf32>
    %265 = vector.broadcast %264 : vector<1x32xf32> to vector<32x32xf32>
    %266 = arith.subf %260, %265 : vector<32x32xf32>
    %267 = arith.mulf %266, %266 : vector<32x32xf32>
    %cst_261 = arith.constant dense<0.000000e+00> : vector<32xf32>
    %268 = vector.multi_reduction <add>, %267, %cst_261 [0] : vector<32x32xf32> to vector<32xf32>
    %269 = vector.shape_cast %268 : vector<32xf32> to vector<1x32xf32>
    %cst_262 = arith.constant 3.200000e+01 : f32
    %270 = vector.broadcast %cst_262 : f32 to vector<1x32xf32>
    %271 = arith.divf %269, %270 : vector<1x32xf32>
    %c0_263 = arith.constant 0 : index
    %c0_264 = arith.constant 0 : index
    %272 = vector.load %arg9[%c0_263, %c0_264] : memref<1x32xf32, #tpu.memory_space<vmem>>, vector<1x32xf32>
    %cst_265 = arith.constant 9.99999974E-6 : f32
    %273 = vector.broadcast %cst_265 : f32 to vector<1x32xf32>
    %274 = arith.addf %271, %273 : vector<1x32xf32>
    %275 = math.rsqrt %274 : vector<1x32xf32>
    %276 = arith.mulf %272, %275 : vector<1x32xf32>
    %277 = vector.broadcast %276 : vector<1x32xf32> to vector<32x32xf32>
    %278 = arith.mulf %260, %277 : vector<32x32xf32>
    %c0_266 = arith.constant 0 : index
    %c0_267 = arith.constant 0 : index
    %279 = vector.load %arg10[%c0_266, %c0_267] : memref<1x32xf32, #tpu.memory_space<vmem>>, vector<1x32xf32>
    %280 = arith.mulf %264, %276 : vector<1x32xf32>
    %281 = arith.subf %279, %280 : vector<1x32xf32>
    %282 = vector.broadcast %281 : vector<1x32xf32> to vector<32x32xf32>
    %283 = arith.addf %278, %282 : vector<32x32xf32>
    %cst_268 = arith.constant 0.000000e+00 : f32
    %284 = vector.broadcast %cst_268 : f32 to vector<32x32xf32>
    %285 = arith.cmpf oge, %283, %284 : vector<32x32xf32>
    %cst_269 = arith.constant 5.000000e-02 : f32
    %286 = vector.broadcast %cst_269 : f32 to vector<32x32xf32>
    %287 = arith.mulf %286, %283 : vector<32x32xf32>
    %288 = arith.select %285, %283, %287 : vector<32x32xi1>, vector<32x32xf32>
    %c0_270 = arith.constant 0 : index
    %c0_271 = arith.constant 0 : index
    %c0_272 = arith.constant 0 : index
    %289 = vector.load %arg11[%c0_270, %c0_271, %c0_272] : memref<16x8x32xf32, #tpu.memory_space<vmem>>, vector<1x8x32xf32>
    %290 = vector.shape_cast %289 : vector<1x8x32xf32> to vector<8x32xf32>
    %cst_273 = arith.constant dense<0.000000e+00> : vector<8x32xf32>
    %291 = tpu.matmul %290, %288, %cst_273 {dimension_numbers = #tpu.dot_dimension_numbers<[1], [0], [0], [1], [0, 0, 1, 1], [], []>} : vector<8x32xf32>, vector<32x32xf32>, vector<8x32xf32> -> vector<8x32xf32>
    %c0_274 = arith.constant 0 : index
    %c0_275 = arith.constant 0 : index
    %c0_276 = arith.constant 0 : index
    %292 = vector.load %arg12[%c0_274, %c0_275, %c0_276] : memref<16x32x64xf32, #tpu.memory_space<vmem>>, vector<1x32x64xf32>
    %293 = vector.shape_cast %292 : vector<1x32x64xf32> to vector<32x64xf32>
    %cst_277 = arith.constant dense<0.000000e+00> : vector<8x64xf32>
    %294 = tpu.matmul %291, %293, %cst_277 {dimension_numbers = #tpu.dot_dimension_numbers<[1], [0], [0], [1], [0, 0, 1, 1], [], []>} : vector<8x32xf32>, vector<32x64xf32>, vector<8x64xf32> -> vector<8x64xf32>
    %c1_278 = arith.constant 1 : index
    %c0_279 = arith.constant 0 : index
    %c0_280 = arith.constant 0 : index
    %295 = vector.load %arg11[%c1_278, %c0_279, %c0_280] : memref<16x8x32xf32, #tpu.memory_space<vmem>>, vector<1x8x32xf32>
    %296 = vector.shape_cast %295 : vector<1x8x32xf32> to vector<8x32xf32>
    %cst_281 = arith.constant dense<0.000000e+00> : vector<8x32xf32>
    %297 = tpu.matmul %296, %288, %cst_281 {dimension_numbers = #tpu.dot_dimension_numbers<[1], [0], [0], [1], [0, 0, 1, 1], [], []>} : vector<8x32xf32>, vector<32x32xf32>, vector<8x32xf32> -> vector<8x32xf32>
    %c1_282 = arith.constant 1 : index
    %c0_283 = arith.constant 0 : index
    %c0_284 = arith.constant 0 : index
    %298 = vector.load %arg12[%c1_282, %c0_283, %c0_284] : memref<16x32x64xf32, #tpu.memory_space<vmem>>, vector<1x32x64xf32>
    %299 = vector.shape_cast %298 : vector<1x32x64xf32> to vector<32x64xf32>
    %cst_285 = arith.constant dense<0.000000e+00> : vector<8x64xf32>
    %300 = tpu.matmul %297, %299, %cst_285 {dimension_numbers = #tpu.dot_dimension_numbers<[1], [0], [0], [1], [0, 0, 1, 1], [], []>} : vector<8x32xf32>, vector<32x64xf32>, vector<8x64xf32> -> vector<8x64xf32>
    %301 = arith.addf %294, %300 : vector<8x64xf32>
    %c2_286 = arith.constant 2 : index
    %c0_287 = arith.constant 0 : index
    %c0_288 = arith.constant 0 : index
    %302 = vector.load %arg11[%c2_286, %c0_287, %c0_288] : memref<16x8x32xf32, #tpu.memory_space<vmem>>, vector<1x8x32xf32>
    %303 = vector.shape_cast %302 : vector<1x8x32xf32> to vector<8x32xf32>
    %cst_289 = arith.constant dense<0.000000e+00> : vector<8x32xf32>
    %304 = tpu.matmul %303, %288, %cst_289 {dimension_numbers = #tpu.dot_dimension_numbers<[1], [0], [0], [1], [0, 0, 1, 1], [], []>} : vector<8x32xf32>, vector<32x32xf32>, vector<8x32xf32> -> vector<8x32xf32>
    %c2_290 = arith.constant 2 : index
    %c0_291 = arith.constant 0 : index
    %c0_292 = arith.constant 0 : index
    %305 = vector.load %arg12[%c2_290, %c0_291, %c0_292] : memref<16x32x64xf32, #tpu.memory_space<vmem>>, vector<1x32x64xf32>
    %306 = vector.shape_cast %305 : vector<1x32x64xf32> to vector<32x64xf32>
    %cst_293 = arith.constant dense<0.000000e+00> : vector<8x64xf32>
    %307 = tpu.matmul %304, %306, %cst_293 {dimension_numbers = #tpu.dot_dimension_numbers<[1], [0], [0], [1], [0, 0, 1, 1], [], []>} : vector<8x32xf32>, vector<32x64xf32>, vector<8x64xf32> -> vector<8x64xf32>
    %308 = arith.addf %301, %307 : vector<8x64xf32>
    %c3_294 = arith.constant 3 : index
    %c0_295 = arith.constant 0 : index
    %c0_296 = arith.constant 0 : index
    %309 = vector.load %arg11[%c3_294, %c0_295, %c0_296] : memref<16x8x32xf32, #tpu.memory_space<vmem>>, vector<1x8x32xf32>
    %310 = vector.shape_cast %309 : vector<1x8x32xf32> to vector<8x32xf32>
    %cst_297 = arith.constant dense<0.000000e+00> : vector<8x32xf32>
    %311 = tpu.matmul %310, %288, %cst_297 {dimension_numbers = #tpu.dot_dimension_numbers<[1], [0], [0], [1], [0, 0, 1, 1], [], []>} : vector<8x32xf32>, vector<32x32xf32>, vector<8x32xf32> -> vector<8x32xf32>
    %c3_298 = arith.constant 3 : index
    %c0_299 = arith.constant 0 : index
    %c0_300 = arith.constant 0 : index
    %312 = vector.load %arg12[%c3_298, %c0_299, %c0_300] : memref<16x32x64xf32, #tpu.memory_space<vmem>>, vector<1x32x64xf32>
    %313 = vector.shape_cast %312 : vector<1x32x64xf32> to vector<32x64xf32>
    %cst_301 = arith.constant dense<0.000000e+00> : vector<8x64xf32>
    %314 = tpu.matmul %311, %313, %cst_301 {dimension_numbers = #tpu.dot_dimension_numbers<[1], [0], [0], [1], [0, 0, 1, 1], [], []>} : vector<8x32xf32>, vector<32x64xf32>, vector<8x64xf32> -> vector<8x64xf32>
    %315 = arith.addf %308, %314 : vector<8x64xf32>
    %c4_302 = arith.constant 4 : index
    %c0_303 = arith.constant 0 : index
    %c0_304 = arith.constant 0 : index
    %316 = vector.load %arg11[%c4_302, %c0_303, %c0_304] : memref<16x8x32xf32, #tpu.memory_space<vmem>>, vector<1x8x32xf32>
    %317 = vector.shape_cast %316 : vector<1x8x32xf32> to vector<8x32xf32>
    %cst_305 = arith.constant dense<0.000000e+00> : vector<8x32xf32>
    %318 = tpu.matmul %317, %288, %cst_305 {dimension_numbers = #tpu.dot_dimension_numbers<[1], [0], [0], [1], [0, 0, 1, 1], [], []>} : vector<8x32xf32>, vector<32x32xf32>, vector<8x32xf32> -> vector<8x32xf32>
    %c4_306 = arith.constant 4 : index
    %c0_307 = arith.constant 0 : index
    %c0_308 = arith.constant 0 : index
    %319 = vector.load %arg12[%c4_306, %c0_307, %c0_308] : memref<16x32x64xf32, #tpu.memory_space<vmem>>, vector<1x32x64xf32>
    %320 = vector.shape_cast %319 : vector<1x32x64xf32> to vector<32x64xf32>
    %cst_309 = arith.constant dense<0.000000e+00> : vector<8x64xf32>
    %321 = tpu.matmul %318, %320, %cst_309 {dimension_numbers = #tpu.dot_dimension_numbers<[1], [0], [0], [1], [0, 0, 1, 1], [], []>} : vector<8x32xf32>, vector<32x64xf32>, vector<8x64xf32> -> vector<8x64xf32>
    %322 = arith.addf %315, %321 : vector<8x64xf32>
    %c5_310 = arith.constant 5 : index
    %c0_311 = arith.constant 0 : index
    %c0_312 = arith.constant 0 : index
    %323 = vector.load %arg11[%c5_310, %c0_311, %c0_312] : memref<16x8x32xf32, #tpu.memory_space<vmem>>, vector<1x8x32xf32>
    %324 = vector.shape_cast %323 : vector<1x8x32xf32> to vector<8x32xf32>
    %cst_313 = arith.constant dense<0.000000e+00> : vector<8x32xf32>
    %325 = tpu.matmul %324, %288, %cst_313 {dimension_numbers = #tpu.dot_dimension_numbers<[1], [0], [0], [1], [0, 0, 1, 1], [], []>} : vector<8x32xf32>, vector<32x32xf32>, vector<8x32xf32> -> vector<8x32xf32>
    %c5_314 = arith.constant 5 : index
    %c0_315 = arith.constant 0 : index
    %c0_316 = arith.constant 0 : index
    %326 = vector.load %arg12[%c5_314, %c0_315, %c0_316] : memref<16x32x64xf32, #tpu.memory_space<vmem>>, vector<1x32x64xf32>
    %327 = vector.shape_cast %326 : vector<1x32x64xf32> to vector<32x64xf32>
    %cst_317 = arith.constant dense<0.000000e+00> : vector<8x64xf32>
    %328 = tpu.matmul %325, %327, %cst_317 {dimension_numbers = #tpu.dot_dimension_numbers<[1], [0], [0], [1], [0, 0, 1, 1], [], []>} : vector<8x32xf32>, vector<32x64xf32>, vector<8x64xf32> -> vector<8x64xf32>
    %329 = arith.addf %322, %328 : vector<8x64xf32>
    %c6_318 = arith.constant 6 : index
    %c0_319 = arith.constant 0 : index
    %c0_320 = arith.constant 0 : index
    %330 = vector.load %arg11[%c6_318, %c0_319, %c0_320] : memref<16x8x32xf32, #tpu.memory_space<vmem>>, vector<1x8x32xf32>
    %331 = vector.shape_cast %330 : vector<1x8x32xf32> to vector<8x32xf32>
    %cst_321 = arith.constant dense<0.000000e+00> : vector<8x32xf32>
    %332 = tpu.matmul %331, %288, %cst_321 {dimension_numbers = #tpu.dot_dimension_numbers<[1], [0], [0], [1], [0, 0, 1, 1], [], []>} : vector<8x32xf32>, vector<32x32xf32>, vector<8x32xf32> -> vector<8x32xf32>
    %c6_322 = arith.constant 6 : index
    %c0_323 = arith.constant 0 : index
    %c0_324 = arith.constant 0 : index
    %333 = vector.load %arg12[%c6_322, %c0_323, %c0_324] : memref<16x32x64xf32, #tpu.memory_space<vmem>>, vector<1x32x64xf32>
    %334 = vector.shape_cast %333 : vector<1x32x64xf32> to vector<32x64xf32>
    %cst_325 = arith.constant dense<0.000000e+00> : vector<8x64xf32>
    %335 = tpu.matmul %332, %334, %cst_325 {dimension_numbers = #tpu.dot_dimension_numbers<[1], [0], [0], [1], [0, 0, 1, 1], [], []>} : vector<8x32xf32>, vector<32x64xf32>, vector<8x64xf32> -> vector<8x64xf32>
    %336 = arith.addf %329, %335 : vector<8x64xf32>
    %c7_326 = arith.constant 7 : index
    %c0_327 = arith.constant 0 : index
    %c0_328 = arith.constant 0 : index
    %337 = vector.load %arg11[%c7_326, %c0_327, %c0_328] : memref<16x8x32xf32, #tpu.memory_space<vmem>>, vector<1x8x32xf32>
    %338 = vector.shape_cast %337 : vector<1x8x32xf32> to vector<8x32xf32>
    %cst_329 = arith.constant dense<0.000000e+00> : vector<8x32xf32>
    %339 = tpu.matmul %338, %288, %cst_329 {dimension_numbers = #tpu.dot_dimension_numbers<[1], [0], [0], [1], [0, 0, 1, 1], [], []>} : vector<8x32xf32>, vector<32x32xf32>, vector<8x32xf32> -> vector<8x32xf32>
    %c7_330 = arith.constant 7 : index
    %c0_331 = arith.constant 0 : index
    %c0_332 = arith.constant 0 : index
    %340 = vector.load %arg12[%c7_330, %c0_331, %c0_332] : memref<16x32x64xf32, #tpu.memory_space<vmem>>, vector<1x32x64xf32>
    %341 = vector.shape_cast %340 : vector<1x32x64xf32> to vector<32x64xf32>
    %cst_333 = arith.constant dense<0.000000e+00> : vector<8x64xf32>
    %342 = tpu.matmul %339, %341, %cst_333 {dimension_numbers = #tpu.dot_dimension_numbers<[1], [0], [0], [1], [0, 0, 1, 1], [], []>} : vector<8x32xf32>, vector<32x64xf32>, vector<8x64xf32> -> vector<8x64xf32>
    %343 = arith.addf %336, %342 : vector<8x64xf32>
    %c8_334 = arith.constant 8 : index
    %c0_335 = arith.constant 0 : index
    %c0_336 = arith.constant 0 : index
    %344 = vector.load %arg11[%c8_334, %c0_335, %c0_336] : memref<16x8x32xf32, #tpu.memory_space<vmem>>, vector<1x8x32xf32>
    %345 = vector.shape_cast %344 : vector<1x8x32xf32> to vector<8x32xf32>
    %cst_337 = arith.constant dense<0.000000e+00> : vector<8x32xf32>
    %346 = tpu.matmul %345, %288, %cst_337 {dimension_numbers = #tpu.dot_dimension_numbers<[1], [0], [0], [1], [0, 0, 1, 1], [], []>} : vector<8x32xf32>, vector<32x32xf32>, vector<8x32xf32> -> vector<8x32xf32>
    %c8_338 = arith.constant 8 : index
    %c0_339 = arith.constant 0 : index
    %c0_340 = arith.constant 0 : index
    %347 = vector.load %arg12[%c8_338, %c0_339, %c0_340] : memref<16x32x64xf32, #tpu.memory_space<vmem>>, vector<1x32x64xf32>
    %348 = vector.shape_cast %347 : vector<1x32x64xf32> to vector<32x64xf32>
    %cst_341 = arith.constant dense<0.000000e+00> : vector<8x64xf32>
    %349 = tpu.matmul %346, %348, %cst_341 {dimension_numbers = #tpu.dot_dimension_numbers<[1], [0], [0], [1], [0, 0, 1, 1], [], []>} : vector<8x32xf32>, vector<32x64xf32>, vector<8x64xf32> -> vector<8x64xf32>
    %350 = arith.addf %343, %349 : vector<8x64xf32>
    %c9_342 = arith.constant 9 : index
    %c0_343 = arith.constant 0 : index
    %c0_344 = arith.constant 0 : index
    %351 = vector.load %arg11[%c9_342, %c0_343, %c0_344] : memref<16x8x32xf32, #tpu.memory_space<vmem>>, vector<1x8x32xf32>
    %352 = vector.shape_cast %351 : vector<1x8x32xf32> to vector<8x32xf32>
    %cst_345 = arith.constant dense<0.000000e+00> : vector<8x32xf32>
    %353 = tpu.matmul %352, %288, %cst_345 {dimension_numbers = #tpu.dot_dimension_numbers<[1], [0], [0], [1], [0, 0, 1, 1], [], []>} : vector<8x32xf32>, vector<32x32xf32>, vector<8x32xf32> -> vector<8x32xf32>
    %c9_346 = arith.constant 9 : index
    %c0_347 = arith.constant 0 : index
    %c0_348 = arith.constant 0 : index
    %354 = vector.load %arg12[%c9_346, %c0_347, %c0_348] : memref<16x32x64xf32, #tpu.memory_space<vmem>>, vector<1x32x64xf32>
    %355 = vector.shape_cast %354 : vector<1x32x64xf32> to vector<32x64xf32>
    %cst_349 = arith.constant dense<0.000000e+00> : vector<8x64xf32>
    %356 = tpu.matmul %353, %355, %cst_349 {dimension_numbers = #tpu.dot_dimension_numbers<[1], [0], [0], [1], [0, 0, 1, 1], [], []>} : vector<8x32xf32>, vector<32x64xf32>, vector<8x64xf32> -> vector<8x64xf32>
    %357 = arith.addf %350, %356 : vector<8x64xf32>
    %c10_350 = arith.constant 10 : index
    %c0_351 = arith.constant 0 : index
    %c0_352 = arith.constant 0 : index
    %358 = vector.load %arg11[%c10_350, %c0_351, %c0_352] : memref<16x8x32xf32, #tpu.memory_space<vmem>>, vector<1x8x32xf32>
    %359 = vector.shape_cast %358 : vector<1x8x32xf32> to vector<8x32xf32>
    %cst_353 = arith.constant dense<0.000000e+00> : vector<8x32xf32>
    %360 = tpu.matmul %359, %288, %cst_353 {dimension_numbers = #tpu.dot_dimension_numbers<[1], [0], [0], [1], [0, 0, 1, 1], [], []>} : vector<8x32xf32>, vector<32x32xf32>, vector<8x32xf32> -> vector<8x32xf32>
    %c10_354 = arith.constant 10 : index
    %c0_355 = arith.constant 0 : index
    %c0_356 = arith.constant 0 : index
    %361 = vector.load %arg12[%c10_354, %c0_355, %c0_356] : memref<16x32x64xf32, #tpu.memory_space<vmem>>, vector<1x32x64xf32>
    %362 = vector.shape_cast %361 : vector<1x32x64xf32> to vector<32x64xf32>
    %cst_357 = arith.constant dense<0.000000e+00> : vector<8x64xf32>
    %363 = tpu.matmul %360, %362, %cst_357 {dimension_numbers = #tpu.dot_dimension_numbers<[1], [0], [0], [1], [0, 0, 1, 1], [], []>} : vector<8x32xf32>, vector<32x64xf32>, vector<8x64xf32> -> vector<8x64xf32>
    %364 = arith.addf %357, %363 : vector<8x64xf32>
    %c11_358 = arith.constant 11 : index
    %c0_359 = arith.constant 0 : index
    %c0_360 = arith.constant 0 : index
    %365 = vector.load %arg11[%c11_358, %c0_359, %c0_360] : memref<16x8x32xf32, #tpu.memory_space<vmem>>, vector<1x8x32xf32>
    %366 = vector.shape_cast %365 : vector<1x8x32xf32> to vector<8x32xf32>
    %cst_361 = arith.constant dense<0.000000e+00> : vector<8x32xf32>
    %367 = tpu.matmul %366, %288, %cst_361 {dimension_numbers = #tpu.dot_dimension_numbers<[1], [0], [0], [1], [0, 0, 1, 1], [], []>} : vector<8x32xf32>, vector<32x32xf32>, vector<8x32xf32> -> vector<8x32xf32>
    %c11_362 = arith.constant 11 : index
    %c0_363 = arith.constant 0 : index
    %c0_364 = arith.constant 0 : index
    %368 = vector.load %arg12[%c11_362, %c0_363, %c0_364] : memref<16x32x64xf32, #tpu.memory_space<vmem>>, vector<1x32x64xf32>
    %369 = vector.shape_cast %368 : vector<1x32x64xf32> to vector<32x64xf32>
    %cst_365 = arith.constant dense<0.000000e+00> : vector<8x64xf32>
    %370 = tpu.matmul %367, %369, %cst_365 {dimension_numbers = #tpu.dot_dimension_numbers<[1], [0], [0], [1], [0, 0, 1, 1], [], []>} : vector<8x32xf32>, vector<32x64xf32>, vector<8x64xf32> -> vector<8x64xf32>
    %371 = arith.addf %364, %370 : vector<8x64xf32>
    %c12_366 = arith.constant 12 : index
    %c0_367 = arith.constant 0 : index
    %c0_368 = arith.constant 0 : index
    %372 = vector.load %arg11[%c12_366, %c0_367, %c0_368] : memref<16x8x32xf32, #tpu.memory_space<vmem>>, vector<1x8x32xf32>
    %373 = vector.shape_cast %372 : vector<1x8x32xf32> to vector<8x32xf32>
    %cst_369 = arith.constant dense<0.000000e+00> : vector<8x32xf32>
    %374 = tpu.matmul %373, %288, %cst_369 {dimension_numbers = #tpu.dot_dimension_numbers<[1], [0], [0], [1], [0, 0, 1, 1], [], []>} : vector<8x32xf32>, vector<32x32xf32>, vector<8x32xf32> -> vector<8x32xf32>
    %c12_370 = arith.constant 12 : index
    %c0_371 = arith.constant 0 : index
    %c0_372 = arith.constant 0 : index
    %375 = vector.load %arg12[%c12_370, %c0_371, %c0_372] : memref<16x32x64xf32, #tpu.memory_space<vmem>>, vector<1x32x64xf32>
    %376 = vector.shape_cast %375 : vector<1x32x64xf32> to vector<32x64xf32>
    %cst_373 = arith.constant dense<0.000000e+00> : vector<8x64xf32>
    %377 = tpu.matmul %374, %376, %cst_373 {dimension_numbers = #tpu.dot_dimension_numbers<[1], [0], [0], [1], [0, 0, 1, 1], [], []>} : vector<8x32xf32>, vector<32x64xf32>, vector<8x64xf32> -> vector<8x64xf32>
    %378 = arith.addf %371, %377 : vector<8x64xf32>
    %c13_374 = arith.constant 13 : index
    %c0_375 = arith.constant 0 : index
    %c0_376 = arith.constant 0 : index
    %379 = vector.load %arg11[%c13_374, %c0_375, %c0_376] : memref<16x8x32xf32, #tpu.memory_space<vmem>>, vector<1x8x32xf32>
    %380 = vector.shape_cast %379 : vector<1x8x32xf32> to vector<8x32xf32>
    %cst_377 = arith.constant dense<0.000000e+00> : vector<8x32xf32>
    %381 = tpu.matmul %380, %288, %cst_377 {dimension_numbers = #tpu.dot_dimension_numbers<[1], [0], [0], [1], [0, 0, 1, 1], [], []>} : vector<8x32xf32>, vector<32x32xf32>, vector<8x32xf32> -> vector<8x32xf32>
    %c13_378 = arith.constant 13 : index
    %c0_379 = arith.constant 0 : index
    %c0_380 = arith.constant 0 : index
    %382 = vector.load %arg12[%c13_378, %c0_379, %c0_380] : memref<16x32x64xf32, #tpu.memory_space<vmem>>, vector<1x32x64xf32>
    %383 = vector.shape_cast %382 : vector<1x32x64xf32> to vector<32x64xf32>
    %cst_381 = arith.constant dense<0.000000e+00> : vector<8x64xf32>
    %384 = tpu.matmul %381, %383, %cst_381 {dimension_numbers = #tpu.dot_dimension_numbers<[1], [0], [0], [1], [0, 0, 1, 1], [], []>} : vector<8x32xf32>, vector<32x64xf32>, vector<8x64xf32> -> vector<8x64xf32>
    %385 = arith.addf %378, %384 : vector<8x64xf32>
    %c14_382 = arith.constant 14 : index
    %c0_383 = arith.constant 0 : index
    %c0_384 = arith.constant 0 : index
    %386 = vector.load %arg11[%c14_382, %c0_383, %c0_384] : memref<16x8x32xf32, #tpu.memory_space<vmem>>, vector<1x8x32xf32>
    %387 = vector.shape_cast %386 : vector<1x8x32xf32> to vector<8x32xf32>
    %cst_385 = arith.constant dense<0.000000e+00> : vector<8x32xf32>
    %388 = tpu.matmul %387, %288, %cst_385 {dimension_numbers = #tpu.dot_dimension_numbers<[1], [0], [0], [1], [0, 0, 1, 1], [], []>} : vector<8x32xf32>, vector<32x32xf32>, vector<8x32xf32> -> vector<8x32xf32>
    %c14_386 = arith.constant 14 : index
    %c0_387 = arith.constant 0 : index
    %c0_388 = arith.constant 0 : index
    %389 = vector.load %arg12[%c14_386, %c0_387, %c0_388] : memref<16x32x64xf32, #tpu.memory_space<vmem>>, vector<1x32x64xf32>
    %390 = vector.shape_cast %389 : vector<1x32x64xf32> to vector<32x64xf32>
    %cst_389 = arith.constant dense<0.000000e+00> : vector<8x64xf32>
    %391 = tpu.matmul %388, %390, %cst_389 {dimension_numbers = #tpu.dot_dimension_numbers<[1], [0], [0], [1], [0, 0, 1, 1], [], []>} : vector<8x32xf32>, vector<32x64xf32>, vector<8x64xf32> -> vector<8x64xf32>
    %392 = arith.addf %385, %391 : vector<8x64xf32>
    %c15_390 = arith.constant 15 : index
    %c0_391 = arith.constant 0 : index
    %c0_392 = arith.constant 0 : index
    %393 = vector.load %arg11[%c15_390, %c0_391, %c0_392] : memref<16x8x32xf32, #tpu.memory_space<vmem>>, vector<1x8x32xf32>
    %394 = vector.shape_cast %393 : vector<1x8x32xf32> to vector<8x32xf32>
    %cst_393 = arith.constant dense<0.000000e+00> : vector<8x32xf32>
    %395 = tpu.matmul %394, %288, %cst_393 {dimension_numbers = #tpu.dot_dimension_numbers<[1], [0], [0], [1], [0, 0, 1, 1], [], []>} : vector<8x32xf32>, vector<32x32xf32>, vector<8x32xf32> -> vector<8x32xf32>
    %c15_394 = arith.constant 15 : index
    %c0_395 = arith.constant 0 : index
    %c0_396 = arith.constant 0 : index
    %396 = vector.load %arg12[%c15_394, %c0_395, %c0_396] : memref<16x32x64xf32, #tpu.memory_space<vmem>>, vector<1x32x64xf32>
    %397 = vector.shape_cast %396 : vector<1x32x64xf32> to vector<32x64xf32>
    %cst_397 = arith.constant dense<0.000000e+00> : vector<8x64xf32>
    %398 = tpu.matmul %395, %397, %cst_397 {dimension_numbers = #tpu.dot_dimension_numbers<[1], [0], [0], [1], [0, 0, 1, 1], [], []>} : vector<8x32xf32>, vector<32x64xf32>, vector<8x64xf32> -> vector<8x64xf32>
    %399 = arith.addf %392, %398 : vector<8x64xf32>
    %cst_398 = arith.constant dense<0.000000e+00> : vector<64xf32>
    %400 = vector.multi_reduction <add>, %399, %cst_398 [0] : vector<8x64xf32> to vector<64xf32>
    %401 = vector.shape_cast %400 : vector<64xf32> to vector<1x64xf32>
    %cst_399 = arith.constant 8.000000e+00 : f32
    %402 = vector.broadcast %cst_399 : f32 to vector<1x64xf32>
    %403 = arith.divf %401, %402 : vector<1x64xf32>
    %404 = vector.broadcast %403 : vector<1x64xf32> to vector<8x64xf32>
    %405 = arith.subf %399, %404 : vector<8x64xf32>
    %406 = arith.mulf %405, %405 : vector<8x64xf32>
    %cst_400 = arith.constant dense<0.000000e+00> : vector<64xf32>
    %407 = vector.multi_reduction <add>, %406, %cst_400 [0] : vector<8x64xf32> to vector<64xf32>
    %408 = vector.shape_cast %407 : vector<64xf32> to vector<1x64xf32>
    %cst_401 = arith.constant 8.000000e+00 : f32
    %409 = vector.broadcast %cst_401 : f32 to vector<1x64xf32>
    %410 = arith.divf %408, %409 : vector<1x64xf32>
    %c0_402 = arith.constant 0 : index
    %c0_403 = arith.constant 0 : index
    %411 = vector.load %arg13[%c0_402, %c0_403] : memref<1x64xf32, #tpu.memory_space<vmem>>, vector<1x64xf32>
    %cst_404 = arith.constant 9.99999974E-6 : f32
    %412 = vector.broadcast %cst_404 : f32 to vector<1x64xf32>
    %413 = arith.addf %410, %412 : vector<1x64xf32>
    %414 = math.rsqrt %413 : vector<1x64xf32>
    %415 = arith.mulf %411, %414 : vector<1x64xf32>
    %416 = vector.broadcast %415 : vector<1x64xf32> to vector<8x64xf32>
    %417 = arith.mulf %399, %416 : vector<8x64xf32>
    %c0_405 = arith.constant 0 : index
    %c0_406 = arith.constant 0 : index
    %418 = vector.load %arg14[%c0_405, %c0_406] : memref<1x64xf32, #tpu.memory_space<vmem>>, vector<1x64xf32>
    %419 = arith.mulf %403, %415 : vector<1x64xf32>
    %420 = arith.subf %418, %419 : vector<1x64xf32>
    %421 = vector.broadcast %420 : vector<1x64xf32> to vector<8x64xf32>
    %422 = arith.addf %417, %421 : vector<8x64xf32>
    %cst_407 = arith.constant 0.000000e+00 : f32
    %423 = vector.broadcast %cst_407 : f32 to vector<8x64xf32>
    %424 = arith.cmpf oge, %422, %423 : vector<8x64xf32>
    %cst_408 = arith.constant 5.000000e-02 : f32
    %425 = vector.broadcast %cst_408 : f32 to vector<8x64xf32>
    %426 = arith.mulf %425, %422 : vector<8x64xf32>
    %427 = arith.select %424, %422, %426 : vector<8x64xi1>, vector<8x64xf32>
    %c0_409 = arith.constant 0 : index
    %c0_410 = arith.constant 0 : index
    %c0_411 = arith.constant 0 : index
    %428 = vector.load %arg15[%c0_409, %c0_410, %c0_411] : memref<4x2x8xf32, #tpu.memory_space<vmem>>, vector<1x2x8xf32>
    %429 = vector.shape_cast %428 : vector<1x2x8xf32> to vector<2x8xf32>
    %cst_412 = arith.constant dense<0.000000e+00> : vector<2x64xf32>
    %430 = tpu.matmul %429, %427, %cst_412 {dimension_numbers = #tpu.dot_dimension_numbers<[1], [0], [0], [1], [0, 0, 1, 1], [], []>} : vector<2x8xf32>, vector<8x64xf32>, vector<2x64xf32> -> vector<2x64xf32>
    %c0_413 = arith.constant 0 : index
    %c0_414 = arith.constant 0 : index
    %c0_415 = arith.constant 0 : index
    %431 = vector.load %arg16[%c0_413, %c0_414, %c0_415] : memref<4x64x1xf32, #tpu.memory_space<vmem>>, vector<1x64x1xf32>
    %432 = vector.shape_cast %431 : vector<1x64x1xf32> to vector<64x1xf32>
    %cst_416 = arith.constant dense<0.000000e+00> : vector<2x1xf32>
    %433 = tpu.matmul %430, %432, %cst_416 {dimension_numbers = #tpu.dot_dimension_numbers<[1], [0], [0], [1], [0, 0, 1, 1], [], []>} : vector<2x64xf32>, vector<64x1xf32>, vector<2x1xf32> -> vector<2x1xf32>
    %c1_417 = arith.constant 1 : index
    %c0_418 = arith.constant 0 : index
    %c0_419 = arith.constant 0 : index
    %434 = vector.load %arg15[%c1_417, %c0_418, %c0_419] : memref<4x2x8xf32, #tpu.memory_space<vmem>>, vector<1x2x8xf32>
    %435 = vector.shape_cast %434 : vector<1x2x8xf32> to vector<2x8xf32>
    %cst_420 = arith.constant dense<0.000000e+00> : vector<2x64xf32>
    %436 = tpu.matmul %435, %427, %cst_420 {dimension_numbers = #tpu.dot_dimension_numbers<[1], [0], [0], [1], [0, 0, 1, 1], [], []>} : vector<2x8xf32>, vector<8x64xf32>, vector<2x64xf32> -> vector<2x64xf32>
    %c1_421 = arith.constant 1 : index
    %c0_422 = arith.constant 0 : index
    %c0_423 = arith.constant 0 : index
    %437 = vector.load %arg16[%c1_421, %c0_422, %c0_423] : memref<4x64x1xf32, #tpu.memory_space<vmem>>, vector<1x64x1xf32>
    %438 = vector.shape_cast %437 : vector<1x64x1xf32> to vector<64x1xf32>
    %cst_424 = arith.constant dense<0.000000e+00> : vector<2x1xf32>
    %439 = tpu.matmul %436, %438, %cst_424 {dimension_numbers = #tpu.dot_dimension_numbers<[1], [0], [0], [1], [0, 0, 1, 1], [], []>} : vector<2x64xf32>, vector<64x1xf32>, vector<2x1xf32> -> vector<2x1xf32>
    %440 = arith.addf %433, %439 : vector<2x1xf32>
    %c2_425 = arith.constant 2 : index
    %c0_426 = arith.constant 0 : index
    %c0_427 = arith.constant 0 : index
    %441 = vector.load %arg15[%c2_425, %c0_426, %c0_427] : memref<4x2x8xf32, #tpu.memory_space<vmem>>, vector<1x2x8xf32>
    %442 = vector.shape_cast %441 : vector<1x2x8xf32> to vector<2x8xf32>
    %cst_428 = arith.constant dense<0.000000e+00> : vector<2x64xf32>
    %443 = tpu.matmul %442, %427, %cst_428 {dimension_numbers = #tpu.dot_dimension_numbers<[1], [0], [0], [1], [0, 0, 1, 1], [], []>} : vector<2x8xf32>, vector<8x64xf32>, vector<2x64xf32> -> vector<2x64xf32>
    %c2_429 = arith.constant 2 : index
    %c0_430 = arith.constant 0 : index
    %c0_431 = arith.constant 0 : index
    %444 = vector.load %arg16[%c2_429, %c0_430, %c0_431] : memref<4x64x1xf32, #tpu.memory_space<vmem>>, vector<1x64x1xf32>
    %445 = vector.shape_cast %444 : vector<1x64x1xf32> to vector<64x1xf32>
    %cst_432 = arith.constant dense<0.000000e+00> : vector<2x1xf32>
    %446 = tpu.matmul %443, %445, %cst_432 {dimension_numbers = #tpu.dot_dimension_numbers<[1], [0], [0], [1], [0, 0, 1, 1], [], []>} : vector<2x64xf32>, vector<64x1xf32>, vector<2x1xf32> -> vector<2x1xf32>
    %447 = arith.addf %440, %446 : vector<2x1xf32>
    %c3_433 = arith.constant 3 : index
    %c0_434 = arith.constant 0 : index
    %c0_435 = arith.constant 0 : index
    %448 = vector.load %arg15[%c3_433, %c0_434, %c0_435] : memref<4x2x8xf32, #tpu.memory_space<vmem>>, vector<1x2x8xf32>
    %449 = vector.shape_cast %448 : vector<1x2x8xf32> to vector<2x8xf32>
    %cst_436 = arith.constant dense<0.000000e+00> : vector<2x64xf32>
    %450 = tpu.matmul %449, %427, %cst_436 {dimension_numbers = #tpu.dot_dimension_numbers<[1], [0], [0], [1], [0, 0, 1, 1], [], []>} : vector<2x8xf32>, vector<8x64xf32>, vector<2x64xf32> -> vector<2x64xf32>
    %c3_437 = arith.constant 3 : index
    %c0_438 = arith.constant 0 : index
    %c0_439 = arith.constant 0 : index
    %451 = vector.load %arg16[%c3_437, %c0_438, %c0_439] : memref<4x64x1xf32, #tpu.memory_space<vmem>>, vector<1x64x1xf32>
    %452 = vector.shape_cast %451 : vector<1x64x1xf32> to vector<64x1xf32>
    %cst_440 = arith.constant dense<0.000000e+00> : vector<2x1xf32>
    %453 = tpu.matmul %450, %452, %cst_440 {dimension_numbers = #tpu.dot_dimension_numbers<[1], [0], [0], [1], [0, 0, 1, 1], [], []>} : vector<2x64xf32>, vector<64x1xf32>, vector<2x1xf32> -> vector<2x1xf32>
    %454 = arith.addf %447, %453 : vector<2x1xf32>
    %c0_441 = arith.constant 0 : index
    %c0_442 = arith.constant 0 : index
    %455 = vector.load %arg17[%c0_441, %c0_442] : memref<1x1xf32, #tpu.memory_space<vmem>>, vector<1x1xf32>
    %456 = vector.broadcast %455 : vector<1x1xf32> to vector<2x1xf32>
    %457 = arith.addf %454, %456 : vector<2x1xf32>
    %c0_443 = arith.constant 0 : index
    %c0_444 = arith.constant 0 : index
    %458 = vector.load %arg18[%c0_443, %c0_444] : memref<2x1xf32, #tpu.memory_space<vmem>>, vector<2x1xf32>
    tpu.vector_store %arg18[%c0_443, %c0_444], %457 {strides = array<i32>} : memref<2x1xf32, #tpu.memory_space<vmem>>, vector<2x1xf32>,
    return
  }
}

</mosaic_0001>

<llo_original>
// kernel: discriminator_forward.1
$region0: #{discriminator_forward.1}
  #allocation0 [shape = 'u32[]', space=smem, size = 0x4, offset = 0x4, fixed_abs, tag = 'smem constant byte address 0x4 - core index']
  #allocation1 [shape = 'u32[72,128]{1,0:T(1,128)}', space=vmem, size = 0x9000, scoped, tag = 'internal scratch']
  #allocation2 [shape = 'f32[1,1]{1,0:T(1,128)S(1)}', space=vmem, size = 0x200, scoped, tag = 'scoped memory for discriminator_forward.1']
  %s0 = inlined_call_operand.vmem [shape: f32[512,48], index: 0, kind: input, shape index: {}]
  %s1 = inlined_call_operand.vmem [shape: f32[48,8], index: 1, kind: input, shape index: {}]
  %s2 = inlined_call_operand.vmem [shape: f32[1,8], index: 2, kind: input, shape index: {}]
  %s3 = inlined_call_operand.vmem [shape: f32[16,128,512], index: 3, kind: input, shape index: {}]
  %s4 = inlined_call_operand.vmem [shape: f32[16,8,16], index: 4, kind: input, shape index: {}]
  %s5 = inlined_call_operand.vmem [shape: f32[1,16], index: 5, kind: input, shape index: {}]
  %s6 = inlined_call_operand.vmem [shape: f32[1,16], index: 6, kind: input, shape index: {}]
  %s7 = inlined_call_operand.vmem [shape: f32[16,32,128], index: 7, kind: input, shape index: {}]
  %s8 = inlined_call_operand.vmem [shape: f32[16,16,32], index: 8, kind: input, shape index: {}]
  %s9 = inlined_call_operand.vmem [shape: f32[1,32], index: 9, kind: input, shape index: {}]
  %s10 = inlined_call_operand.vmem [shape: f32[1,32], index: 10, kind: input, shape index: {}]
  %s11 = inlined_call_operand.vmem [shape: f32[16,8,32], index: 11, kind: input, shape index: {}]
  %s12 = inlined_call_operand.vmem [shape: f32[16,32,64], index: 12, kind: input, shape index: {}]
  %s13 = inlined_call_operand.vmem [shape: f32[1,64], index: 13, kind: input, shape index: {}]
  %s14 = inlined_call_operand.vmem [shape: f32[1,64], index: 14, kind: input, shape index: {}]
  %s15 = inlined_call_operand.vmem [shape: f32[4,2,8], index: 15, kind: input, shape index: {}]
  %s16 = inlined_call_operand.vmem [shape: f32[4,64,1], index: 16, kind: input, shape index: {}]
  %s17 = inlined_call_operand.<no memory space> [shape: f32[1,1], index: 17, kind: input, shape index: {}]
  %s18 = inlined_call_operand.vmem [shape: f32[2,1], index: 18, kind: output, shape index: {}]
  %s19 = sld [smem:[#allocation0]]
  $region82: #{discriminator_forward.1} parent=0
    _
  %s21 = ssub.s32 1, %s19
  %s22 = scalar_select 0, %s21, %s19
  %v23 = vstv %s17
  %24 = vst [vmem:[#allocation2] sm:$0x1] %v23
  // Predicated region
  $region2: #{discriminator_forward.1} parent=0 // pred_check
    _
  $region3: #{discriminator_forward.1} parent=0 // pred_check_branch
    %26 = sbr.rel (0) target = $region5
  $region4: #{discriminator_forward.1} parent=0 // pred_region
    _
  $region5: #{discriminator_forward.1} parent=0 // pred_fallthru
    _
  // Predicated region
  $region6: #{discriminator_forward.1} parent=0 // pred_check
    _
  $region7: #{discriminator_forward.1} parent=0 // pred_check_branch
    %28 = sbr.rel (0) target = $region9
  $region8: #{discriminator_forward.1} parent=0 // pred_region
    _
  $region9: #{discriminator_forward.1} parent=0 // pred_fallthru
    _
  // Predicated region
  $region10: #{discriminator_forward.1} parent=0 // pred_check
    _
  $region11: #{discriminator_forward.1} parent=0 // pred_check_branch
    %30 = sbr.rel (0) target = $region13
  $region12: #{discriminator_forward.1} parent=0 // pred_region
    _
  $region13: #{discriminator_forward.1} parent=0 // pred_fallthru
    _
  // Predicated region
  $region14: #{discriminator_forward.1} parent=0 // pred_check
    _
  $region15: #{discriminator_forward.1} parent=0 // pred_check_branch
    %32 = sbr.rel (0) target = $region17
  $region16: #{discriminator_forward.1} parent=0 // pred_region
    _
  $region17: #{discriminator_forward.1} parent=0 // pred_fallthru
    _
  // Predicated region
  $region18: #{discriminator_forward.1} parent=0 // pred_check
    _
  $region19: #{discriminator_forward.1} parent=0 // pred_check_branch
    %34 = sbr.rel (0) target = $region21
  $region20: #{discriminator_forward.1} parent=0 // pred_region
    _
  $region21: #{discriminator_forward.1} parent=0 // pred_fallthru
    _
  // Predicated region
  $region22: #{discriminator_forward.1} parent=0 // pred_check
    _
  $region23: #{discriminator_forward.1} parent=0 // pred_check_branch
    %36 = sbr.rel (0) target = $region25
  $region24: #{discriminator_forward.1} parent=0 // pred_region
    _
  $region25: #{discriminator_forward.1} parent=0 // pred_fallthru
    _
  // Predicated region
  $region26: #{discriminator_forward.1} parent=0 // pred_check
    _
  $region27: #{discriminator_forward.1} parent=0 // pred_check_branch
    %38 = sbr.rel (0) target = $region29
  $region28: #{discriminator_forward.1} parent=0 // pred_region
    _
  $region29: #{discriminator_forward.1} parent=0 // pred_fallthru
    _
  // Predicated region
  $region30: #{discriminator_forward.1} parent=0 // pred_check
    _
  $region31: #{discriminator_forward.1} parent=0 // pred_check_branch
    %40 = sbr.rel (0) target = $region33
  $region32: #{discriminator_forward.1} parent=0 // pred_region
    _
  $region33: #{discriminator_forward.1} parent=0 // pred_fallthru
    _
  // Predicated region
  $region34: #{discriminator_forward.1} parent=0 // pred_check
    _
  $region35: #{discriminator_forward.1} parent=0 // pred_check_branch
    %42 = sbr.rel (0) target = $region37
  $region36: #{discriminator_forward.1} parent=0 // pred_region
    _
  $region37: #{discriminator_forward.1} parent=0 // pred_fallthru
    _
  // Predicated region
  $region38: #{discriminator_forward.1} parent=0 // pred_check
    _
  $region39: #{discriminator_forward.1} parent=0 // pred_check_branch
    %44 = sbr.rel (0) target = $region41
  $region40: #{discriminator_forward.1} parent=0 // pred_region
    _
  $region41: #{discriminator_forward.1} parent=0 // pred_fallthru
    _
  // Predicated region
  $region42: #{discriminator_forward.1} parent=0 // pred_check
    _
  $region43: #{discriminator_forward.1} parent=0 // pred_check_branch
    %46 = sbr.rel (0) target = $region45
  $region44: #{discriminator_forward.1} parent=0 // pred_region
    _
  $region45: #{discriminator_forward.1} parent=0 // pred_fallthru
    _
  // Predicated region
  $region46: #{discriminator_forward.1} parent=0 // pred_check
    _
  $region47: #{discriminator_forward.1} parent=0 // pred_check_branch
    %48 = sbr.rel (0) target = $region49
  $region48: #{discriminator_forward.1} parent=0 // pred_region
    _
  $region49: #{discriminator_forward.1} parent=0 // pred_fallthru
    _
  // Predicated region
  $region50: #{discriminator_forward.1} parent=0 // pred_check
    _
  $region51: #{discriminator_forward.1} parent=0 // pred_check_branch
    %50 = sbr.rel (0) target = $region53
  $region52: #{discriminator_forward.1} parent=0 // pred_region
    _
  $region53: #{discriminator_forward.1} parent=0 // pred_fallthru
    _
  // Predicated region
  $region54: #{discriminator_forward.1} parent=0 // pred_check
    _
  $region55: #{discriminator_forward.1} parent=0 // pred_check_branch
    %52 = sbr.rel (0) target = $region57
  $region56: #{discriminator_forward.1} parent=0 // pred_region
    _
  $region57: #{discriminator_forward.1} parent=0 // pred_fallthru
    _
  // Predicated region
  $region58: #{discriminator_forward.1} parent=0 // pred_check
    _
  $region59: #{discriminator_forward.1} parent=0 // pred_check_branch
    %54 = sbr.rel (0) target = $region61
  $region60: #{discriminator_forward.1} parent=0 // pred_region
    _
  $region61: #{discriminator_forward.1} parent=0 // pred_fallthru
    _
  // Predicated region
  $region62: #{discriminator_forward.1} parent=0 // pred_check
    _
  $region63: #{discriminator_forward.1} parent=0 // pred_check_branch
    %56 = sbr.rel (0) target = $region65
  $region64: #{discriminator_forward.1} parent=0 // pred_region
    _
  $region65: #{discriminator_forward.1} parent=0 // pred_fallthru
    _
  // Predicated region
  $region66: #{discriminator_forward.1} parent=0 // pred_check
    _
  $region67: #{discriminator_forward.1} parent=0 // pred_check_branch
    %58 = sbr.rel (0) target = $region69
  $region68: #{discriminator_forward.1} parent=0 // pred_region
    _
  $region69: #{discriminator_forward.1} parent=0 // pred_fallthru
    _
  // Predicated region
  $region70: #{discriminator_forward.1} parent=0 // pred_check
    _
  $region71: #{discriminator_forward.1} parent=0 // pred_check_branch
    %60 = sbr.rel (0) target = $region73
  $region72: #{discriminator_forward.1} parent=0 // pred_region
    _
  $region73: #{discriminator_forward.1} parent=0 // pred_fallthru
    _
  %v61 = vld [vmem:[%s0] sm:$0xff]
  %v62 = vld [vmem:[%s0 + $0x8] sm:$0xff]
  %v63 = vld [vmem:[%s0 + $0x10] sm:$0xff]
  %v64 = vld [vmem:[%s0 + $0x18] sm:$0xff]
  %v65 = vld [vmem:[%s0 + $0x20] sm:$0xff]
  %v66 = vld [vmem:[%s0 + $0x28] sm:$0xff]
  %v67 = vld [vmem:[%s0 + $0x30] sm:$0xff]
  %v68 = vld [vmem:[%s0 + $0x38] sm:$0xff]
  %v69 = vld [vmem:[%s0 + $0x40] sm:$0xff]
  %v70 = vld [vmem:[%s0 + $0x48] sm:$0xff]
  %v71 = vld [vmem:[%s0 + $0x50] sm:$0xff]
  %v72 = vld [vmem:[%s0 + $0x58] sm:$0xff]
  %v73 = vld [vmem:[%s0 + $0x60] sm:$0xff]
  %v74 = vld [vmem:[%s0 + $0x68] sm:$0xff]
  %v75 = vld [vmem:[%s0 + $0x70] sm:$0xff]
  %v76 = vld [vmem:[%s0 + $0x78] sm:$0xff]
  %v77 = vld [vmem:[%s0 + $0x80] sm:$0xff]
  %v78 = vld [vmem:[%s0 + $0x88] sm:$0xff]
  %v79 = vld [vmem:[%s0 + $0x90] sm:$0xff]
  %v80 = vld [vmem:[%s0 + $0x98] sm:$0xff]
  %v81 = vld [vmem:[%s0 + $0xa0] sm:$0xff]
  %v82 = vld [vmem:[%s0 + $0xa8] sm:$0xff]
  %v83 = vld [vmem:[%s0 + $0xb0] sm:$0xff]
  %v84 = vld [vmem:[%s0 + $0xb8] sm:$0xff]
  %v85 = vld [vmem:[%s0 + $0xc0] sm:$0xff]
  %v86 = vld [vmem:[%s0 + $0xc8] sm:$0xff]
  %v87 = vld [vmem:[%s0 + $0xd0] sm:$0xff]
  %v88 = vld [vmem:[%s0 + $0xd8] sm:$0xff]
  %v89 = vld [vmem:[%s0 + $0xe0] sm:$0xff]
  %v90 = vld [vmem:[%s0 + $0xe8] sm:$0xff]
  %v91 = vld [vmem:[%s0 + $0xf0] sm:$0xff]
  %v92 = vld [vmem:[%s0 + $0xf8] sm:$0xff]
  %v93 = vld [vmem:[%s0 + $0x100] sm:$0xff]
  %v94 = vld [vmem:[%s0 + $0x108] sm:$0xff]
  %v95 = vld [vmem:[%s0 + $0x110] sm:$0xff]
  %v96 = vld [vmem:[%s0 + $0x118] sm:$0xff]
  %v97 = vld [vmem:[%s0 + $0x120] sm:$0xff]
  %v98 = vld [vmem:[%s0 + $0x128] sm:$0xff]
  %v99 = vld [vmem:[%s0 + $0x130] sm:$0xff]
  %v100 = vld [vmem:[%s0 + $0x138] sm:$0xff]
  %v101 = vld [vmem:[%s0 + $0x140] sm:$0xff]
  %v102 = vld [vmem:[%s0 + $0x148] sm:$0xff]
  %v103 = vld [vmem:[%s0 + $0x150] sm:$0xff]
  %v104 = vld [vmem:[%s0 + $0x158] sm:$0xff]
  %v105 = vld [vmem:[%s0 + $0x160] sm:$0xff]
  %v106 = vld [vmem:[%s0 + $0x168] sm:$0xff]
  %v107 = vld [vmem:[%s0 + $0x170] sm:$0xff]
  %v108 = vld [vmem:[%s0 + $0x178] sm:$0xff]
  %v109 = vld [vmem:[%s0 + $0x180] sm:$0xff]
  %v110 = vld [vmem:[%s0 + $0x188] sm:$0xff]
  %v111 = vld [vmem:[%s0 + $0x190] sm:$0xff]
  %v112 = vld [vmem:[%s0 + $0x198] sm:$0xff]
  %v113 = vld [vmem:[%s0 + $0x1a0] sm:$0xff]
  %v114 = vld [vmem:[%s0 + $0x1a8] sm:$0xff]
  %v115 = vld [vmem:[%s0 + $0x1b0] sm:$0xff]
  %v116 = vld [vmem:[%s0 + $0x1b8] sm:$0xff]
  %v117 = vld [vmem:[%s0 + $0x1c0] sm:$0xff]
  %v118 = vld [vmem:[%s0 + $0x1c8] sm:$0xff]
  %v119 = vld [vmem:[%s0 + $0x1d0] sm:$0xff]
  %v120 = vld [vmem:[%s0 + $0x1d8] sm:$0xff]
  %v121 = vld [vmem:[%s0 + $0x1e0] sm:$0xff]
  %v122 = vld [vmem:[%s0 + $0x1e8] sm:$0xff]
  %v123 = vld [vmem:[%s0 + $0x1f0] sm:$0xff]
  %v124 = vld [vmem:[%s0 + $0x1f8] sm:$0xff]
  %v125 = vld [vmem:[%s1] sm:$0xff]
  %v126 = vld [vmem:[%s1 + $0x8] sm:$0xff]
  %v127 = vld [vmem:[%s1 + $0x10] sm:$0xff]
  %v128 = vld [vmem:[%s1 + $0x18] sm:$0xff]
  %v129 = vld [vmem:[%s1 + $0x20] sm:$0xff]
  %v130 = vld [vmem:[%s1 + $0x28] sm:$0xff]
  %v131 = vld [vmem:[%s2] sm:$0x1]
  %v133 = vperm.slane %v131, 0
  %vm135 = vcmask 392192
  %v137 = vsel %vm135, %v61, 0
  %v140 = vsel %vm135, %v62, 0
  %v143 = vsel %vm135, %v63, 0
  %v146 = vsel %vm135, %v64, 0
  %v149 = vsel %vm135, %v65, 0
  %v152 = vsel %vm135, %v66, 0
  %v155 = vsel %vm135, %v67, 0
  %v158 = vsel %vm135, %v68, 0
  %v161 = vsel %vm135, %v69, 0
  %v164 = vsel %vm135, %v70, 0
  %v167 = vsel %vm135, %v71, 0
  %v170 = vsel %vm135, %v72, 0
  %v173 = vsel %vm135, %v73, 0
  %v176 = vsel %vm135, %v74, 0
  %v179 = vsel %vm135, %v75, 0
  %v182 = vsel %vm135, %v76, 0
  %v185 = vsel %vm135, %v77, 0
  %v188 = vsel %vm135, %v78, 0
  %v191 = vsel %vm135, %v79, 0
  %v194 = vsel %vm135, %v80, 0
  %v197 = vsel %vm135, %v81, 0
  %v200 = vsel %vm135, %v82, 0
  %v203 = vsel %vm135, %v83, 0
  %v206 = vsel %vm135, %v84, 0
  %v209 = vsel %vm135, %v85, 0
  %v212 = vsel %vm135, %v86, 0
  %v215 = vsel %vm135, %v87, 0
  %v218 = vsel %vm135, %v88, 0
  %v221 = vsel %vm135, %v89, 0
  %v224 = vsel %vm135, %v90, 0
  %v227 = vsel %vm135, %v91, 0
  %v230 = vsel %vm135, %v92, 0
  %v233 = vsel %vm135, %v93, 0
  %v236 = vsel %vm135, %v94, 0
  %v239 = vsel %vm135, %v95, 0
  %v242 = vsel %vm135, %v96, 0
  %v245 = vsel %vm135, %v97, 0
  %v248 = vsel %vm135, %v98, 0
  %v251 = vsel %vm135, %v99, 0
  %v254 = vsel %vm135, %v100, 0
  %v257 = vsel %vm135, %v101, 0
  %v260 = vsel %vm135, %v102, 0
  %v263 = vsel %vm135, %v103, 0
  %v266 = vsel %vm135, %v104, 0
  %v269 = vsel %vm135, %v105, 0
  %v272 = vsel %vm135, %v106, 0
  %v275 = vsel %vm135, %v107, 0
  %v278 = vsel %vm135, %v108, 0
  %v281 = vsel %vm135, %v109, 0
  %v284 = vsel %vm135, %v110, 0
  %v287 = vsel %vm135, %v111, 0
  %v290 = vsel %vm135, %v112, 0
  %v293 = vsel %vm135, %v113, 0
  %v296 = vsel %vm135, %v114, 0
  %v299 = vsel %vm135, %v115, 0
  %v302 = vsel %vm135, %v116, 0
  %v305 = vsel %vm135, %v117, 0
  %v308 = vsel %vm135, %v118, 0
  %v311 = vsel %vm135, %v119, 0
  %v314 = vsel %vm135, %v120, 0
  %v317 = vsel %vm135, %v121, 0
  %v320 = vsel %vm135, %v122, 0
  %v323 = vsel %vm135, %v123, 0
  %v326 = vsel %vm135, %v124, 0
  %328 = vmatpush.msra.mxu0 0.0
  %329 = vmatpush.msra.mxu0 0.0
  %330 = vmatpush.msra.mxu0 0.0
  %331 = vmatpush.msra.mxu0 0.0
  %332 = vmatpush.msra.mxu0 0.0
  %333 = vmatpush.msra.mxu0 0.0
  %334 = vmatpush.msra.mxu0 0.0
  %335 = vmatpush.msra.mxu0 0.0
  %336 = vmatpush.msra.mxu0 0.0
  %337 = vmatpush.msra.mxu0 0.0
  %338 = vmatpush.msra.mxu0 %v130
  %339 = vmatpush.msra.mxu0 %v129
  %340 = vmatpush.msra.mxu0 %v128
  %341 = vmatpush.msra.mxu0 %v127
  %342 = vmatpush.msra.mxu0 %v126
  %343 = vmatpush.msra.mxu0 %v125
  %344 = vmatmul.f32.gmra.mxu0 %v137
  %v345 = vpop.f32.mrf.mxu0
  %v346 = vadd.f32 %v133, %v345
  %347 = vmatmul.f32.gmra.mxu0 %v140
  %v348 = vpop.f32.mrf.mxu0
  %v349 = vadd.f32 %v133, %v348
  %350 = vmatmul.f32.gmra.mxu0 %v143
  %v351 = vpop.f32.mrf.mxu0
  %v352 = vadd.f32 %v133, %v351
  %353 = vmatmul.f32.gmra.mxu0 %v146
  %v354 = vpop.f32.mrf.mxu0
  %v355 = vadd.f32 %v133, %v354
  %356 = vmatmul.f32.gmra.mxu0 %v149
  %v357 = vpop.f32.mrf.mxu0
  %v358 = vadd.f32 %v133, %v357
  %359 = vmatmul.f32.gmra.mxu0 %v152
  %v360 = vpop.f32.mrf.mxu0
  %v361 = vadd.f32 %v133, %v360
  %362 = vmatmul.f32.gmra.mxu0 %v155
  %v363 = vpop.f32.mrf.mxu0
  %v364 = vadd.f32 %v133, %v363
  %365 = vmatmul.f32.gmra.mxu0 %v158
  %v366 = vpop.f32.mrf.mxu0
  %v367 = vadd.f32 %v133, %v366
  %368 = vmatmul.f32.gmra.mxu0 %v161
  %v369 = vpop.f32.mrf.mxu0
  %v370 = vadd.f32 %v133, %v369
  %371 = vmatmul.f32.gmra.mxu0 %v164
  %v372 = vpop.f32.mrf.mxu0
  %v373 = vadd.f32 %v133, %v372
  %374 = vmatmul.f32.gmra.mxu0 %v167
  %v375 = vpop.f32.mrf.mxu0
  %v376 = vadd.f32 %v133, %v375
  %377 = vmatmul.f32.gmra.mxu0 %v170
  %v378 = vpop.f32.mrf.mxu0
  %v379 = vadd.f32 %v133, %v378
  %380 = vmatmul.f32.gmra.mxu0 %v173
  %v381 = vpop.f32.mrf.mxu0
  %v382 = vadd.f32 %v133, %v381
  %383 = vmatmul.f32.gmra.mxu0 %v176
  %v384 = vpop.f32.mrf.mxu0
  %v385 = vadd.f32 %v133, %v384
  %386 = vmatmul.f32.gmra.mxu0 %v179
  %v387 = vpop.f32.mrf.mxu0
  %v388 = vadd.f32 %v133, %v387
  %389 = vmatmul.f32.gmra.mxu0 %v182
  %v390 = vpop.f32.mrf.mxu0
  %v391 = vadd.f32 %v133, %v390
  %392 = vmatmul.f32.gmra.mxu0 %v185
  %v393 = vpop.f32.mrf.mxu0
  %v394 = vadd.f32 %v133, %v393
  %395 = vmatmul.f32.gmra.mxu0 %v188
  %v396 = vpop.f32.mrf.mxu0
  %v397 = vadd.f32 %v133, %v396
  %398 = vmatmul.f32.gmra.mxu0 %v191
  %v399 = vpop.f32.mrf.mxu0
  %v400 = vadd.f32 %v133, %v399
  %401 = vmatmul.f32.gmra.mxu0 %v194
  %v402 = vpop.f32.mrf.mxu0
  %v403 = vadd.f32 %v133, %v402
  %404 = vmatmul.f32.gmra.mxu0 %v197
  %v405 = vpop.f32.mrf.mxu0
  %v406 = vadd.f32 %v133, %v405
  %407 = vmatmul.f32.gmra.mxu0 %v200
  %v408 = vpop.f32.mrf.mxu0
  %v409 = vadd.f32 %v133, %v408
  %410 = vmatmul.f32.gmra.mxu0 %v203
  %v411 = vpop.f32.mrf.mxu0
  %v412 = vadd.f32 %v133, %v411
  %413 = vmatmul.f32.gmra.mxu0 %v206
  %v414 = vpop.f32.mrf.mxu0
  %v415 = vadd.f32 %v133, %v414
  %416 = vmatmul.f32.gmra.mxu0 %v209
  %v417 = vpop.f32.mrf.mxu0
  %v418 = vadd.f32 %v133, %v417
  %419 = vmatmul.f32.gmra.mxu0 %v212
  %v420 = vpop.f32.mrf.mxu0
  %v421 = vadd.f32 %v133, %v420
  %422 = vmatmul.f32.gmra.mxu0 %v215
  %v423 = vpop.f32.mrf.mxu0
  %v424 = vadd.f32 %v133, %v423
  %425 = vmatmul.f32.gmra.mxu0 %v218
  %v426 = vpop.f32.mrf.mxu0
  %v427 = vadd.f32 %v133, %v426
  %428 = vmatmul.f32.gmra.mxu0 %v221
  %v429 = vpop.f32.mrf.mxu0
  %v430 = vadd.f32 %v133, %v429
  %431 = vmatmul.f32.gmra.mxu0 %v224
  %v432 = vpop.f32.mrf.mxu0
  %v433 = vadd.f32 %v133, %v432
  %434 = vmatmul.f32.gmra.mxu0 %v227
  %v435 = vpop.f32.mrf.mxu0
  %v436 = vadd.f32 %v133, %v435
  %437 = vmatmul.f32.gmra.mxu0 %v230
  %v438 = vpop.f32.mrf.mxu0
  %v439 = vadd.f32 %v133, %v438
  %440 = vmatmul.f32.gmra.mxu0 %v233
  %v441 = vpop.f32.mrf.mxu0
  %v442 = vadd.f32 %v133, %v441
  %443 = vmatmul.f32.gmra.mxu0 %v236
  %v444 = vpop.f32.mrf.mxu0
  %v445 = vadd.f32 %v133, %v444
  %446 = vmatmul.f32.gmra.mxu0 %v239
  %v447 = vpop.f32.mrf.mxu0
  %v448 = vadd.f32 %v133, %v447
  %449 = vmatmul.f32.gmra.mxu0 %v242
  %v450 = vpop.f32.mrf.mxu0
  %v451 = vadd.f32 %v133, %v450
  %452 = vmatmul.f32.gmra.mxu0 %v245
  %v453 = vpop.f32.mrf.mxu0
  %v454 = vadd.f32 %v133, %v453
  %455 = vmatmul.f32.gmra.mxu0 %v248
  %v456 = vpop.f32.mrf.mxu0
  %v457 = vadd.f32 %v133, %v456
  %458 = vmatmul.f32.gmra.mxu0 %v251
  %v459 = vpop.f32.mrf.mxu0
  %v460 = vadd.f32 %v133, %v459
  %461 = vmatmul.f32.gmra.mxu0 %v254
  %v462 = vpop.f32.mrf.mxu0
  %v463 = vadd.f32 %v133, %v462
  %464 = vmatmul.f32.gmra.mxu0 %v257
  %v465 = vpop.f32.mrf.mxu0
  %v466 = vadd.f32 %v133, %v465
  %467 = vmatmul.f32.gmra.mxu0 %v260
  %v468 = vpop.f32.mrf.mxu0
  %v469 = vadd.f32 %v133, %v468
  %470 = vmatmul.f32.gmra.mxu0 %v263
  %v471 = vpop.f32.mrf.mxu0
  %v472 = vadd.f32 %v133, %v471
  %473 = vmatmul.f32.gmra.mxu0 %v266
  %v474 = vpop.f32.mrf.mxu0
  %v475 = vadd.f32 %v133, %v474
  %476 = vmatmul.f32.gmra.mxu0 %v269
  %v477 = vpop.f32.mrf.mxu0
  %v478 = vadd.f32 %v133, %v477
  %479 = vmatmul.f32.gmra.mxu0 %v272
  %v480 = vpop.f32.mrf.mxu0
  %v481 = vadd.f32 %v133, %v480
  %482 = vmatmul.f32.gmra.mxu0 %v275
  %v483 = vpop.f32.mrf.mxu0
  %v484 = vadd.f32 %v133, %v483
  %485 = vmatmul.f32.gmra.mxu0 %v278
  %v486 = vpop.f32.mrf.mxu0
  %v487 = vadd.f32 %v133, %v486
  %488 = vmatmul.f32.gmra.mxu0 %v281
  %v489 = vpop.f32.mrf.mxu0
  %v490 = vadd.f32 %v133, %v489
  %491 = vmatmul.f32.gmra.mxu0 %v284
  %v492 = vpop.f32.mrf.mxu0
  %v493 = vadd.f32 %v133, %v492
  %494 = vmatmul.f32.gmra.mxu0 %v287
  %v495 = vpop.f32.mrf.mxu0
  %v496 = vadd.f32 %v133, %v495
  %497 = vmatmul.f32.gmra.mxu0 %v290
  %v498 = vpop.f32.mrf.mxu0
  %v499 = vadd.f32 %v133, %v498
  %500 = vmatmul.f32.gmra.mxu0 %v293
  %v501 = vpop.f32.mrf.mxu0
  %v502 = vadd.f32 %v133, %v501
  %503 = vmatmul.f32.gmra.mxu0 %v296
  %v504 = vpop.f32.mrf.mxu0
  %v505 = vadd.f32 %v133, %v504
  %506 = vmatmul.f32.gmra.mxu0 %v299
  %v507 = vpop.f32.mrf.mxu0
  %v508 = vadd.f32 %v133, %v507
  %509 = vmatmul.f32.gmra.mxu0 %v302
  %v510 = vpop.f32.mrf.mxu0
  %v511 = vadd.f32 %v133, %v510
  %512 = vmatmul.f32.gmra.mxu0 %v305
  %v513 = vpop.f32.mrf.mxu0
  %v514 = vadd.f32 %v133, %v513
  %515 = vmatmul.f32.gmra.mxu0 %v308
  %v516 = vpop.f32.mrf.mxu0
  %v517 = vadd.f32 %v133, %v516
  %518 = vmatmul.f32.gmra.mxu0 %v311
  %v519 = vpop.f32.mrf.mxu0
  %v520 = vadd.f32 %v133, %v519
  %521 = vmatmul.f32.gmra.mxu0 %v314
  %v522 = vpop.f32.mrf.mxu0
  %v523 = vadd.f32 %v133, %v522
  %524 = vmatmul.f32.gmra.mxu0 %v317
  %v525 = vpop.f32.mrf.mxu0
  %v526 = vadd.f32 %v133, %v525
  %527 = vmatmul.f32.gmra.mxu0 %v320
  %v528 = vpop.f32.mrf.mxu0
  %v529 = vadd.f32 %v133, %v528
  %530 = vmatmul.f32.gmra.mxu0 %v323
  %v531 = vpop.f32.mrf.mxu0
  %v532 = vadd.f32 %v133, %v531
  %533 = vmatmul.f32.gmra.mxu0 %v326
  %v534 = vpop.f32.mrf.mxu0
  %v535 = vadd.f32 %v133, %v534
  %536 = vdwg.mxu0
  %vm537 = vcmp.ge.f32.partialorder %v346, 0.0
  %vm538 = vcmp.ge.f32.partialorder %v349, 0.0
  %vm539 = vcmp.ge.f32.partialorder %v352, 0.0
  %vm540 = vcmp.ge.f32.partialorder %v355, 0.0
  %vm541 = vcmp.ge.f32.partialorder %v358, 0.0
  %vm542 = vcmp.ge.f32.partialorder %v361, 0.0
  %vm543 = vcmp.ge.f32.partialorder %v364, 0.0
  %vm544 = vcmp.ge.f32.partialorder %v367, 0.0
  %vm545 = vcmp.ge.f32.partialorder %v370, 0.0
  %vm546 = vcmp.ge.f32.partialorder %v373, 0.0
  %vm547 = vcmp.ge.f32.partialorder %v376, 0.0
  %vm548 = vcmp.ge.f32.partialorder %v379, 0.0
  %vm549 = vcmp.ge.f32.partialorder %v382, 0.0
  %vm550 = vcmp.ge.f32.partialorder %v385, 0.0
  %vm551 = vcmp.ge.f32.partialorder %v388, 0.0
  %vm552 = vcmp.ge.f32.partialorder %v391, 0.0
  %vm553 = vcmp.ge.f32.partialorder %v394, 0.0
  %vm554 = vcmp.ge.f32.partialorder %v397, 0.0
  %vm555 = vcmp.ge.f32.partialorder %v400, 0.0
  %vm556 = vcmp.ge.f32.partialorder %v403, 0.0
  %vm557 = vcmp.ge.f32.partialorder %v406, 0.0
  %vm558 = vcmp.ge.f32.partialorder %v409, 0.0
  %vm559 = vcmp.ge.f32.partialorder %v412, 0.0
  %vm560 = vcmp.ge.f32.partialorder %v415, 0.0
  %vm561 = vcmp.ge.f32.partialorder %v418, 0.0
  %vm562 = vcmp.ge.f32.partialorder %v421, 0.0
  %vm563 = vcmp.ge.f32.partialorder %v424, 0.0
  %vm564 = vcmp.ge.f32.partialorder %v427, 0.0
  %vm565 = vcmp.ge.f32.partialorder %v430, 0.0
  %vm566 = vcmp.ge.f32.partialorder %v433, 0.0
  %vm567 = vcmp.ge.f32.partialorder %v436, 0.0
  %vm568 = vcmp.ge.f32.partialorder %v439, 0.0
  %vm569 = vcmp.ge.f32.partialorder %v442, 0.0
  %vm570 = vcmp.ge.f32.partialorder %v445, 0.0
  %vm571 = vcmp.ge.f32.partialorder %v448, 0.0
  %vm572 = vcmp.ge.f32.partialorder %v451, 0.0
  %vm573 = vcmp.ge.f32.partialorder %v454, 0.0
  %vm574 = vcmp.ge.f32.partialorder %v457, 0.0
  %vm575 = vcmp.ge.f32.partialorder %v460, 0.0
  %vm576 = vcmp.ge.f32.partialorder %v463, 0.0
  %vm577 = vcmp.ge.f32.partialorder %v466, 0.0
  %vm578 = vcmp.ge.f32.partialorder %v469, 0.0
  %vm579 = vcmp.ge.f32.partialorder %v472, 0.0
  %vm580 = vcmp.ge.f32.partialorder %v475, 0.0
  %vm581 = vcmp.ge.f32.partialorder %v478, 0.0
  %vm582 = vcmp.ge.f32.partialorder %v481, 0.0
  %vm583 = vcmp.ge.f32.partialorder %v484, 0.0
  %vm584 = vcmp.ge.f32.partialorder %v487, 0.0
  %vm585 = vcmp.ge.f32.partialorder %v490, 0.0
  %vm586 = vcmp.ge.f32.partialorder %v493, 0.0
  %vm587 = vcmp.ge.f32.partialorder %v496, 0.0
  %vm588 = vcmp.ge.f32.partialorder %v499, 0.0
  %vm589 = vcmp.ge.f32.partialorder %v502, 0.0
  %vm590 = vcmp.ge.f32.partialorder %v505, 0.0
  %vm591 = vcmp.ge.f32.partialorder %v508, 0.0
  %vm592 = vcmp.ge.f32.partialorder %v511, 0.0
  %vm593 = vcmp.ge.f32.partialorder %v514, 0.0
  %vm594 = vcmp.ge.f32.partialorder %v517, 0.0
  %vm595 = vcmp.ge.f32.partialorder %v520, 0.0
  %vm596 = vcmp.ge.f32.partialorder %v523, 0.0
  %vm597 = vcmp.ge.f32.partialorder %v526, 0.0
  %vm598 = vcmp.ge.f32.partialorder %v529, 0.0
  %vm599 = vcmp.ge.f32.partialorder %v532, 0.0
  %vm600 = vcmp.ge.f32.partialorder %v535, 0.0
  %v601 = vmul.f32 %v346, 0.05
  %v602 = vmul.f32 %v349, 0.05
  %v603 = vmul.f32 %v352, 0.05
  %v604 = vmul.f32 %v355, 0.05
  %v605 = vmul.f32 %v358, 0.05
  %v606 = vmul.f32 %v361, 0.05
  %v607 = vmul.f32 %v364, 0.05
  %v608 = vmul.f32 %v367, 0.05
  %v609 = vmul.f32 %v370, 0.05
  %v610 = vmul.f32 %v373, 0.05
  %v611 = vmul.f32 %v376, 0.05
  %v612 = vmul.f32 %v379, 0.05
  %v613 = vmul.f32 %v382, 0.05
  %v614 = vmul.f32 %v385, 0.05
  %v615 = vmul.f32 %v388, 0.05
  %v616 = vmul.f32 %v391, 0.05
  %v617 = vmul.f32 %v394, 0.05
  %v618 = vmul.f32 %v397, 0.05
  %v619 = vmul.f32 %v400, 0.05
  %v620 = vmul.f32 %v403, 0.05
  %v621 = vmul.f32 %v406, 0.05
  %v622 = vmul.f32 %v409, 0.05
  %v623 = vmul.f32 %v412, 0.05
  %v624 = vmul.f32 %v415, 0.05
  %v625 = vmul.f32 %v418, 0.05
  %v626 = vmul.f32 %v421, 0.05
  %v627 = vmul.f32 %v424, 0.05
  %v628 = vmul.f32 %v427, 0.05
  %v629 = vmul.f32 %v430, 0.05
  %v630 = vmul.f32 %v433, 0.05
  %v631 = vmul.f32 %v436, 0.05
  %v632 = vmul.f32 %v439, 0.05
  %v633 = vmul.f32 %v442, 0.05
  %v634 = vmul.f32 %v445, 0.05
  %v635 = vmul.f32 %v448, 0.05
  %v636 = vmul.f32 %v451, 0.05
  %v637 = vmul.f32 %v454, 0.05
  %v638 = vmul.f32 %v457, 0.05
  %v639 = vmul.f32 %v460, 0.05
  %v640 = vmul.f32 %v463, 0.05
  %v641 = vmul.f32 %v466, 0.05
  %v642 = vmul.f32 %v469, 0.05
  %v643 = vmul.f32 %v472, 0.05
  %v644 = vmul.f32 %v475, 0.05
  %v645 = vmul.f32 %v478, 0.05
  %v646 = vmul.f32 %v481, 0.05
  %v647 = vmul.f32 %v484, 0.05
  %v648 = vmul.f32 %v487, 0.05
  %v649 = vmul.f32 %v490, 0.05
  %v650 = vmul.f32 %v493, 0.05
  %v651 = vmul.f32 %v496, 0.05
  %v652 = vmul.f32 %v499, 0.05
  %v653 = vmul.f32 %v502, 0.05
  %v654 = vmul.f32 %v505, 0.05
  %v655 = vmul.f32 %v508, 0.05
  %v656 = vmul.f32 %v511, 0.05
  %v657 = vmul.f32 %v514, 0.05
  %v658 = vmul.f32 %v517, 0.05
  %v659 = vmul.f32 %v520, 0.05
  %v660 = vmul.f32 %v523, 0.05
  %v661 = vmul.f32 %v526, 0.05
  %v662 = vmul.f32 %v529, 0.05
  %v663 = vmul.f32 %v532, 0.05
  %v664 = vmul.f32 %v535, 0.05
  %v665 = vsel %vm537, %v346, %v601
  %v666 = vsel %vm538, %v349, %v602
  %v667 = vsel %vm539, %v352, %v603
  %v668 = vsel %vm540, %v355, %v604
  %v669 = vsel %vm541, %v358, %v605
  %v670 = vsel %vm542, %v361, %v606
  %v671 = vsel %vm543, %v364, %v607
  %v672 = vsel %vm544, %v367, %v608
  %v673 = vsel %vm545, %v370, %v609
  %v674 = vsel %vm546, %v373, %v610
  %v675 = vsel %vm547, %v376, %v611
  %v676 = vsel %vm548, %v379, %v612
  %v677 = vsel %vm549, %v382, %v613
  %v678 = vsel %vm550, %v385, %v614
  %v679 = vsel %vm551, %v388, %v615
  %v680 = vsel %vm552, %v391, %v616
  %v681 = vsel %vm553, %v394, %v617
  %v682 = vsel %vm554, %v397, %v618
  %v683 = vsel %vm555, %v400, %v619
  %v684 = vsel %vm556, %v403, %v620
  %v685 = vsel %vm557, %v406, %v621
  %v686 = vsel %vm558, %v409, %v622
  %v687 = vsel %vm559, %v412, %v623
  %v688 = vsel %vm560, %v415, %v624
  %v689 = vsel %vm561, %v418, %v625
  %v690 = vsel %vm562, %v421, %v626
  %v691 = vsel %vm563, %v424, %v627
  %v692 = vsel %vm564, %v427, %v628
  %v693 = vsel %vm565, %v430, %v629
  %v694 = vsel %vm566, %v433, %v630
  %v695 = vsel %vm567, %v436, %v631
  %v696 = vsel %vm568, %v439, %v632
  %v697 = vsel %vm569, %v442, %v633
  %v698 = vsel %vm570, %v445, %v634
  %v699 = vsel %vm571, %v448, %v635
  %v700 = vsel %vm572, %v451, %v636
  %v701 = vsel %vm573, %v454, %v637
  %v702 = vsel %vm574, %v457, %v638
  %v703 = vsel %vm575, %v460, %v639
  %v704 = vsel %vm576, %v463, %v640
  %v705 = vsel %vm577, %v466, %v641
  %v706 = vsel %vm578, %v469, %v642
  %v707 = vsel %vm579, %v472, %v643
  %v708 = vsel %vm580, %v475, %v644
  %v709 = vsel %vm581, %v478, %v645
  %v710 = vsel %vm582, %v481, %v646
  %v711 = vsel %vm583, %v484, %v647
  %v712 = vsel %vm584, %v487, %v648
  %v713 = vsel %vm585, %v490, %v649
  %v714 = vsel %vm586, %v493, %v650
  %v715 = vsel %vm587, %v496, %v651
  %v716 = vsel %vm588, %v499, %v652
  %v717 = vsel %vm589, %v502, %v653
  %v718 = vsel %vm590, %v505, %v654
  %v719 = vsel %vm591, %v508, %v655
  %v720 = vsel %vm592, %v511, %v656
  %v721 = vsel %vm593, %v514, %v657
  %v722 = vsel %vm594, %v517, %v658
  %v723 = vsel %vm595, %v520, %v659
  %v724 = vsel %vm596, %v523, %v660
  %v725 = vsel %vm597, %v526, %v661
  %v726 = vsel %vm598, %v529, %v662
  %v727 = vsel %vm599, %v532, %v663
  %v728 = vsel %vm600, %v535, %v664
  %v729 = vld [vmem:[%s3] sm:$0xff]
  %v730 = vld [vmem:[%s3 + $0x8] sm:$0xff]
  %v731 = vld [vmem:[%s3 + $0x10] sm:$0xff]
  %v732 = vld [vmem:[%s3 + $0x18] sm:$0xff]
  %v733 = vld [vmem:[%s3 + $0x20] sm:$0xff]
  %v734 = vld [vmem:[%s3 + $0x28] sm:$0xff]
  %v735 = vld [vmem:[%s3 + $0x30] sm:$0xff]
  %v736 = vld [vmem:[%s3 + $0x38] sm:$0xff]
  %v737 = vld [vmem:[%s3 + $0x40] sm:$0xff]
  %v738 = vld [vmem:[%s3 + $0x48] sm:$0xff]
  %v739 = vld [vmem:[%s3 + $0x50] sm:$0xff]
  %v740 = vld [vmem:[%s3 + $0x58] sm:$0xff]
  %v741 = vld [vmem:[%s3 + $0x60] sm:$0xff]
  %v742 = vld [vmem:[%s3 + $0x68] sm:$0xff]
  %v743 = vld [vmem:[%s3 + $0x70] sm:$0xff]
  %v744 = vld [vmem:[%s3 + $0x78] sm:$0xff]
  %v745 = vld [vmem:[%s3 + $0x80] sm:$0xff]
  %v746 = vld [vmem:[%s3 + $0x88] sm:$0xff]
  %v747 = vld [vmem:[%s3 + $0x90] sm:$0xff]
  %v748 = vld [vmem:[%s3 + $0x98] sm:$0xff]
  %v749 = vld [vmem:[%s3 + $0xa0] sm:$0xff]
  %v750 = vld [vmem:[%s3 + $0xa8] sm:$0xff]
  %v751 = vld [vmem:[%s3 + $0xb0] sm:$0xff]
  %v752 = vld [vmem:[%s3 + $0xb8] sm:$0xff]
  %v753 = vld [vmem:[%s3 + $0xc0] sm:$0xff]
  %v754 = vld [vmem:[%s3 + $0xc8] sm:$0xff]
  %v755 = vld [vmem:[%s3 + $0xd0] sm:$0xff]
  %v756 = vld [vmem:[%s3 + $0xd8] sm:$0xff]
  %v757 = vld [vmem:[%s3 + $0xe0] sm:$0xff]
  %v758 = vld [vmem:[%s3 + $0xe8] sm:$0xff]
  %v759 = vld [vmem:[%s3 + $0xf0] sm:$0xff]
  %v760 = vld [vmem:[%s3 + $0xf8] sm:$0xff]
  %v761 = vld [vmem:[%s3 + $0x100] sm:$0xff]
  %v762 = vld [vmem:[%s3 + $0x108] sm:$0xff]
  %v763 = vld [vmem:[%s3 + $0x110] sm:$0xff]
  %v764 = vld [vmem:[%s3 + $0x118] sm:$0xff]
  %v765 = vld [vmem:[%s3 + $0x120] sm:$0xff]
  %v766 = vld [vmem:[%s3 + $0x128] sm:$0xff]
  %v767 = vld [vmem:[%s3 + $0x130] sm:$0xff]
  %v768 = vld [vmem:[%s3 + $0x138] sm:$0xff]
  %v769 = vld [vmem:[%s3 + $0x140] sm:$0xff]
  %v770 = vld [vmem:[%s3 + $0x148] sm:$0xff]
  %v771 = vld [vmem:[%s3 + $0x150] sm:$0xff]
  %v772 = vld [vmem:[%s3 + $0x158] sm:$0xff]
  %v773 = vld [vmem:[%s3 + $0x160] sm:$0xff]
  %v774 = vld [vmem:[%s3 + $0x168] sm:$0xff]
  %v775 = vld [vmem:[%s3 + $0x170] sm:$0xff]
  %v776 = vld [vmem:[%s3 + $0x178] sm:$0xff]
  %v777 = vld [vmem:[%s3 + $0x180] sm:$0xff]
  %v778 = vld [vmem:[%s3 + $0x188] sm:$0xff]
  %v779 = vld [vmem:[%s3 + $0x190] sm:$0xff]
  %v780 = vld [vmem:[%s3 + $0x198] sm:$0xff]
  %v781 = vld [vmem:[%s3 + $0x1a0] sm:$0xff]
  %v782 = vld [vmem:[%s3 + $0x1a8] sm:$0xff]
  %v783 = vld [vmem:[%s3 + $0x1b0] sm:$0xff]
  %v784 = vld [vmem:[%s3 + $0x1b8] sm:$0xff]
  %v785 = vld [vmem:[%s3 + $0x1c0] sm:$0xff]
  %v786 = vld [vmem:[%s3 + $0x1c8] sm:$0xff]
  %v787 = vld [vmem:[%s3 + $0x1d0] sm:$0xff]
  %v788 = vld [vmem:[%s3 + $0x1d8] sm:$0xff]
  %v789 = vld [vmem:[%s3 + $0x1e0] sm:$0xff]
  %v790 = vld [vmem:[%s3 + $0x1e8] sm:$0xff]
  %v791 = vld [vmem:[%s3 + $0x1f0] sm:$0xff]
  %v792 = vld [vmem:[%s3 + $0x1f8] sm:$0xff]
  %793 = vmatpush.msra.mxu0 %v680
  %794 = vmatpush.msra.mxu0 %v679
  %795 = vmatpush.msra.mxu0 %v678
  %796 = vmatpush.msra.mxu0 %v677
  %797 = vmatpush.msra.mxu0 %v676
  %798 = vmatpush.msra.mxu0 %v675
  %799 = vmatpush.msra.mxu0 %v674
  %800 = vmatpush.msra.mxu0 %v673
  %801 = vmatpush.msra.mxu0 %v672
  %802 = vmatpush.msra.mxu0 %v671
  %803 = vmatpush.msra.mxu0 %v670
  %804 = vmatpush.msra.mxu0 %v669
  %805 = vmatpush.msra.mxu0 %v668
  %806 = vmatpush.msra.mxu0 %v667
  %807 = vmatpush.msra.mxu0 %v666
  %808 = vmatpush.msra.mxu0 %v665
  %809 = vmatmul.f32.gmra.mxu0 %v729
  %v810 = vpop.f32.mrf.mxu0
  %v811 = vadd.f32 0.0, %v810
  %812 = vmatmul.f32.gmra.mxu0 %v733
  %v813 = vpop.f32.mrf.mxu0
  %v814 = vadd.f32 0.0, %v813
  %815 = vmatmul.f32.gmra.mxu0 %v737
  %v816 = vpop.f32.mrf.mxu0
  %v817 = vadd.f32 0.0, %v816
  %818 = vmatmul.f32.gmra.mxu0 %v741
  %v819 = vpop.f32.mrf.mxu0
  %v820 = vadd.f32 0.0, %v819
  %821 = vmatmul.f32.gmra.mxu0 %v745
  %v822 = vpop.f32.mrf.mxu0
  %v823 = vadd.f32 0.0, %v822
  %824 = vmatmul.f32.gmra.mxu0 %v749
  %v825 = vpop.f32.mrf.mxu0
  %v826 = vadd.f32 0.0, %v825
  %827 = vmatmul.f32.gmra.mxu0 %v753
  %v828 = vpop.f32.mrf.mxu0
  %v829 = vadd.f32 0.0, %v828
  %830 = vmatmul.f32.gmra.mxu0 %v757
  %v831 = vpop.f32.mrf.mxu0
  %v832 = vadd.f32 0.0, %v831
  %833 = vmatmul.f32.gmra.mxu0 %v761
  %v834 = vpop.f32.mrf.mxu0
  %v835 = vadd.f32 0.0, %v834
  %836 = vmatmul.f32.gmra.mxu0 %v765
  %v837 = vpop.f32.mrf.mxu0
  %v838 = vadd.f32 0.0, %v837
  %839 = vmatmul.f32.gmra.mxu0 %v769
  %v840 = vpop.f32.mrf.mxu0
  %v841 = vadd.f32 0.0, %v840
  %842 = vmatmul.f32.gmra.mxu0 %v773
  %v843 = vpop.f32.mrf.mxu0
  %v844 = vadd.f32 0.0, %v843
  %845 = vmatmul.f32.gmra.mxu0 %v777
  %v846 = vpop.f32.mrf.mxu0
  %v847 = vadd.f32 0.0, %v846
  %848 = vmatmul.f32.gmra.mxu0 %v781
  %v849 = vpop.f32.mrf.mxu0
  %v850 = vadd.f32 0.0, %v849
  %851 = vmatmul.f32.gmra.mxu0 %v785
  %v852 = vpop.f32.mrf.mxu0
  %v853 = vadd.f32 0.0, %v852
  %854 = vmatmul.f32.gmra.mxu0 %v789
  %v855 = vpop.f32.mrf.mxu0
  %v856 = vadd.f32 0.0, %v855
  %857 = vdwg.mxu0
  %858 = vmatpush.msra.mxu0 %v696
  %859 = vmatpush.msra.mxu0 %v695
  %860 = vmatpush.msra.mxu0 %v694
  %861 = vmatpush.msra.mxu0 %v693
  %862 = vmatpush.msra.mxu0 %v692
  %863 = vmatpush.msra.mxu0 %v691
  %864 = vmatpush.msra.mxu0 %v690
  %865 = vmatpush.msra.mxu0 %v689
  %866 = vmatpush.msra.mxu0 %v688
  %867 = vmatpush.msra.mxu0 %v687
  %868 = vmatpush.msra.mxu0 %v686
  %869 = vmatpush.msra.mxu0 %v685
  %870 = vmatpush.msra.mxu0 %v684
  %871 = vmatpush.msra.mxu0 %v683
  %872 = vmatpush.msra.mxu0 %v682
  %873 = vmatpush.msra.mxu0 %v681
  %874 = vmatmul.f32.gmra.mxu0 %v730
  %v875 = vpop.f32.mrf.mxu0
  %v876 = vadd.f32 %v811, %v875
  %877 = vmatmul.f32.gmra.mxu0 %v734
  %v878 = vpop.f32.mrf.mxu0
  %v879 = vadd.f32 %v814, %v878
  %880 = vmatmul.f32.gmra.mxu0 %v738
  %v881 = vpop.f32.mrf.mxu0
  %v882 = vadd.f32 %v817, %v881
  %883 = vmatmul.f32.gmra.mxu0 %v742
  %v884 = vpop.f32.mrf.mxu0
  %v885 = vadd.f32 %v820, %v884
  %886 = vmatmul.f32.gmra.mxu0 %v746
  %v887 = vpop.f32.mrf.mxu0
  %v888 = vadd.f32 %v823, %v887
  %889 = vmatmul.f32.gmra.mxu0 %v750
  %v890 = vpop.f32.mrf.mxu0
  %v891 = vadd.f32 %v826, %v890
  %892 = vmatmul.f32.gmra.mxu0 %v754
  %v893 = vpop.f32.mrf.mxu0
  %v894 = vadd.f32 %v829, %v893
  %895 = vmatmul.f32.gmra.mxu0 %v758
  %v896 = vpop.f32.mrf.mxu0
  %v897 = vadd.f32 %v832, %v896
  %898 = vmatmul.f32.gmra.mxu0 %v762
  %v899 = vpop.f32.mrf.mxu0
  %v900 = vadd.f32 %v835, %v899
  %901 = vmatmul.f32.gmra.mxu0 %v766
  %v902 = vpop.f32.mrf.mxu0
  %v903 = vadd.f32 %v838, %v902
  %904 = vmatmul.f32.gmra.mxu0 %v770
  %v905 = vpop.f32.mrf.mxu0
  %v906 = vadd.f32 %v841, %v905
  %907 = vmatmul.f32.gmra.mxu0 %v774
  %v908 = vpop.f32.mrf.mxu0
  %v909 = vadd.f32 %v844, %v908
  %910 = vmatmul.f32.gmra.mxu0 %v778
  %v911 = vpop.f32.mrf.mxu0
  %v912 = vadd.f32 %v847, %v911
  %913 = vmatmul.f32.gmra.mxu0 %v782
  %v914 = vpop.f32.mrf.mxu0
  %v915 = vadd.f32 %v850, %v914
  %916 = vmatmul.f32.gmra.mxu0 %v786
  %v917 = vpop.f32.mrf.mxu0
  %v918 = vadd.f32 %v853, %v917
  %919 = vmatmul.f32.gmra.mxu0 %v790
  %v920 = vpop.f32.mrf.mxu0
  %v921 = vadd.f32 %v856, %v920
  %922 = vdwg.mxu0
  %923 = vmatpush.msra.mxu0 %v712
  %924 = vmatpush.msra.mxu0 %v711
  %925 = vmatpush.msra.mxu0 %v710
  %926 = vmatpush.msra.mxu0 %v709
  %927 = vmatpush.msra.mxu0 %v708
  %928 = vmatpush.msra.mxu0 %v707
  %929 = vmatpush.msra.mxu0 %v706
  %930 = vmatpush.msra.mxu0 %v705
  %931 = vmatpush.msra.mxu0 %v704
  %932 = vmatpush.msra.mxu0 %v703
  %933 = vmatpush.msra.mxu0 %v702
  %934 = vmatpush.msra.mxu0 %v701
  %935 = vmatpush.msra.mxu0 %v700
  %936 = vmatpush.msra.mxu0 %v699
  %937 = vmatpush.msra.mxu0 %v698
  %938 = vmatpush.msra.mxu0 %v697
  %939 = vmatmul.f32.gmra.mxu0 %v731
  %v940 = vpop.f32.mrf.mxu0
  %v941 = vadd.f32 %v876, %v940
  %942 = vmatmul.f32.gmra.mxu0 %v735
  %v943 = vpop.f32.mrf.mxu0
  %v944 = vadd.f32 %v879, %v943
  %945 = vmatmul.f32.gmra.mxu0 %v739
  %v946 = vpop.f32.mrf.mxu0
  %v947 = vadd.f32 %v882, %v946
  %948 = vmatmul.f32.gmra.mxu0 %v743
  %v949 = vpop.f32.mrf.mxu0
  %v950 = vadd.f32 %v885, %v949
  %951 = vmatmul.f32.gmra.mxu0 %v747
  %v952 = vpop.f32.mrf.mxu0
  %v953 = vadd.f32 %v888, %v952
  %954 = vmatmul.f32.gmra.mxu0 %v751
  %v955 = vpop.f32.mrf.mxu0
  %v956 = vadd.f32 %v891, %v955
  %957 = vmatmul.f32.gmra.mxu0 %v755
  %v958 = vpop.f32.mrf.mxu0
  %v959 = vadd.f32 %v894, %v958
  %960 = vmatmul.f32.gmra.mxu0 %v759
  %v961 = vpop.f32.mrf.mxu0
  %v962 = vadd.f32 %v897, %v961
  %963 = vmatmul.f32.gmra.mxu0 %v763
  %v964 = vpop.f32.mrf.mxu0
  %v965 = vadd.f32 %v900, %v964
  %966 = vmatmul.f32.gmra.mxu0 %v767
  %v967 = vpop.f32.mrf.mxu0
  %v968 = vadd.f32 %v903, %v967
  %969 = vmatmul.f32.gmra.mxu0 %v771
  %v970 = vpop.f32.mrf.mxu0
  %v971 = vadd.f32 %v906, %v970
  %972 = vmatmul.f32.gmra.mxu0 %v775
  %v973 = vpop.f32.mrf.mxu0
  %v974 = vadd.f32 %v909, %v973
  %975 = vmatmul.f32.gmra.mxu0 %v779
  %v976 = vpop.f32.mrf.mxu0
  %v977 = vadd.f32 %v912, %v976
  %978 = vmatmul.f32.gmra.mxu0 %v783
  %v979 = vpop.f32.mrf.mxu0
  %v980 = vadd.f32 %v915, %v979
  %981 = vmatmul.f32.gmra.mxu0 %v787
  %v982 = vpop.f32.mrf.mxu0
  %v983 = vadd.f32 %v918, %v982
  %984 = vmatmul.f32.gmra.mxu0 %v791
  %v985 = vpop.f32.mrf.mxu0
  %v986 = vadd.f32 %v921, %v985
  %987 = vdwg.mxu0
  %988 = vmatpush.msra.mxu0 %v728
  %989 = vmatpush.msra.mxu0 %v727
  %990 = vmatpush.msra.mxu0 %v726
  %991 = vmatpush.msra.mxu0 %v725
  %992 = vmatpush.msra.mxu0 %v724
  %993 = vmatpush.msra.mxu0 %v723
  %994 = vmatpush.msra.mxu0 %v722
  %995 = vmatpush.msra.mxu0 %v721
  %996 = vmatpush.msra.mxu0 %v720
  %997 = vmatpush.msra.mxu0 %v719
  %998 = vmatpush.msra.mxu0 %v718
  %999 = vmatpush.msra.mxu0 %v717
  %1000 = vmatpush.msra.mxu0 %v716
  %1001 = vmatpush.msra.mxu0 %v715
  %1002 = vmatpush.msra.mxu0 %v714
  %1003 = vmatpush.msra.mxu0 %v713
  %1004 = vmatmul.f32.gmra.mxu0 %v732
  %v1005 = vpop.f32.mrf.mxu0
  %v1006 = vadd.f32 %v941, %v1005
  %1007 = vmatmul.f32.gmra.mxu0 %v736
  %v1008 = vpop.f32.mrf.mxu0
  %v1009 = vadd.f32 %v944, %v1008
  %1010 = vmatmul.f32.gmra.mxu0 %v740
  %v1011 = vpop.f32.mrf.mxu0
  %v1012 = vadd.f32 %v947, %v1011
  %1013 = vmatmul.f32.gmra.mxu0 %v744
  %v1014 = vpop.f32.mrf.mxu0
  %v1015 = vadd.f32 %v950, %v1014
  %1016 = vmatmul.f32.gmra.mxu0 %v748
  %v1017 = vpop.f32.mrf.mxu0
  %v1018 = vadd.f32 %v953, %v1017
  %1019 = vmatmul.f32.gmra.mxu0 %v752
  %v1020 = vpop.f32.mrf.mxu0
  %v1021 = vadd.f32 %v956, %v1020
  %1022 = vmatmul.f32.gmra.mxu0 %v756
  %v1023 = vpop.f32.mrf.mxu0
  %v1024 = vadd.f32 %v959, %v1023
  %1025 = vmatmul.f32.gmra.mxu0 %v760
  %v1026 = vpop.f32.mrf.mxu0
  %v1027 = vadd.f32 %v962, %v1026
  %1028 = vmatmul.f32.gmra.mxu0 %v764
  %v1029 = vpop.f32.mrf.mxu0
  %v1030 = vadd.f32 %v965, %v1029
  %1031 = vmatmul.f32.gmra.mxu0 %v768
  %v1032 = vpop.f32.mrf.mxu0
  %v1033 = vadd.f32 %v968, %v1032
  %1034 = vmatmul.f32.gmra.mxu0 %v772
  %v1035 = vpop.f32.mrf.mxu0
  %v1036 = vadd.f32 %v971, %v1035
  %1037 = vmatmul.f32.gmra.mxu0 %v776
  %v1038 = vpop.f32.mrf.mxu0
  %v1039 = vadd.f32 %v974, %v1038
  %1040 = vmatmul.f32.gmra.mxu0 %v780
  %v1041 = vpop.f32.mrf.mxu0
  %v1042 = vadd.f32 %v977, %v1041
  %1043 = vmatmul.f32.gmra.mxu0 %v784
  %v1044 = vpop.f32.mrf.mxu0
  %v1045 = vadd.f32 %v980, %v1044
  %1046 = vmatmul.f32.gmra.mxu0 %v788
  %v1047 = vpop.f32.mrf.mxu0
  %v1048 = vadd.f32 %v983, %v1047
  %1049 = vmatmul.f32.gmra.mxu0 %v792
  %v1050 = vpop.f32.mrf.mxu0
  %v1051 = vadd.f32 %v986, %v1050
  %1052 = vdwg.mxu0
  %v1053 = vld [vmem:[%s4] sm:$0xff]
  %s1054 = scalar_lea.vmem %s3, 512
  %v1055 = vld [vmem:[%s1054] sm:$0xff]
  %v1056 = vld [vmem:[%s1054 + $0x8] sm:$0xff]
  %v1057 = vld [vmem:[%s1054 + $0x10] sm:$0xff]
  %v1058 = vld [vmem:[%s1054 + $0x18] sm:$0xff]
  %v1059 = vld [vmem:[%s1054 + $0x20] sm:$0xff]
  %v1060 = vld [vmem:[%s1054 + $0x28] sm:$0xff]
  %v1061 = vld [vmem:[%s1054 + $0x30] sm:$0xff]
  %v1062 = vld [vmem:[%s1054 + $0x38] sm:$0xff]
  %v1063 = vld [vmem:[%s1054 + $0x40] sm:$0xff]
  %v1064 = vld [vmem:[%s1054 + $0x48] sm:$0xff]
  %v1065 = vld [vmem:[%s1054 + $0x50] sm:$0xff]
  %v1066 = vld [vmem:[%s1054 + $0x58] sm:$0xff]
  %v1067 = vld [vmem:[%s1054 + $0x60] sm:$0xff]
  %v1068 = vld [vmem:[%s1054 + $0x68] sm:$0xff]
  %v1069 = vld [vmem:[%s1054 + $0x70] sm:$0xff]
  %v1070 = vld [vmem:[%s1054 + $0x78] sm:$0xff]
  %v1071 = vld [vmem:[%s1054 + $0x80] sm:$0xff]
  %v1072 = vld [vmem:[%s1054 + $0x88] sm:$0xff]
  %v1073 = vld [vmem:[%s1054 + $0x90] sm:$0xff]
  %v1074 = vld [vmem:[%s1054 + $0x98] sm:$0xff]
  %v1075 = vld [vmem:[%s1054 + $0xa0] sm:$0xff]
  %v1076 = vld [vmem:[%s1054 + $0xa8] sm:$0xff]
  %v1077 = vld [vmem:[%s1054 + $0xb0] sm:$0xff]
  %v1078 = vld [vmem:[%s1054 + $0xb8] sm:$0xff]
  %v1079 = vld [vmem:[%s1054 + $0xc0] sm:$0xff]
  %v1080 = vld [vmem:[%s1054 + $0xc8] sm:$0xff]
  %v1081 = vld [vmem:[%s1054 + $0xd0] sm:$0xff]
  %v1082 = vld [vmem:[%s1054 + $0xd8] sm:$0xff]
  %v1083 = vld [vmem:[%s1054 + $0xe0] sm:$0xff]
  %v1084 = vld [vmem:[%s1054 + $0xe8] sm:$0xff]
  %v1085 = vld [vmem:[%s1054 + $0xf0] sm:$0xff]
  %v1086 = vld [vmem:[%s1054 + $0xf8] sm:$0xff]
  %v1087 = vld [vmem:[%s1054 + $0x100] sm:$0xff]
  %v1088 = vld [vmem:[%s1054 + $0x108] sm:$0xff]
  %v1089 = vld [vmem:[%s1054 + $0x110] sm:$0xff]
  %v1090 = vld [vmem:[%s1054 + $0x118] sm:$0xff]
  %v1091 = vld [vmem:[%s1054 + $0x120] sm:$0xff]
  %v1092 = vld [vmem:[%s1054 + $0x128] sm:$0xff]
  %v1093 = vld [vmem:[%s1054 + $0x130] sm:$0xff]
  %v1094 = vld [vmem:[%s1054 + $0x138] sm:$0xff]
  %v1095 = vld [vmem:[%s1054 + $0x140] sm:$0xff]
  %v1096 = vld [vmem:[%s1054 + $0x148] sm:$0xff]
  %v1097 = vld [vmem:[%s1054 + $0x150] sm:$0xff]
  %v1098 = vld [vmem:[%s1054 + $0x158] sm:$0xff]
  %v1099 = vld [vmem:[%s1054 + $0x160] sm:$0xff]
  %v1100 = vld [vmem:[%s1054 + $0x168] sm:$0xff]
  %v1101 = vld [vmem:[%s1054 + $0x170] sm:$0xff]
  %v1102 = vld [vmem:[%s1054 + $0x178] sm:$0xff]
  %v1103 = vld [vmem:[%s1054 + $0x180] sm:$0xff]
  %v1104 = vld [vmem:[%s1054 + $0x188] sm:$0xff]
  %v1105 = vld [vmem:[%s1054 + $0x190] sm:$0xff]
  %v1106 = vld [vmem:[%s1054 + $0x198] sm:$0xff]
  %v1107 = vld [vmem:[%s1054 + $0x1a0] sm:$0xff]
  %v1108 = vld [vmem:[%s1054 + $0x1a8] sm:$0xff]
  %v1109 = vld [vmem:[%s1054 + $0x1b0] sm:$0xff]
  %v1110 = vld [vmem:[%s1054 + $0x1b8] sm:$0xff]
  %v1111 = vld [vmem:[%s1054 + $0x1c0] sm:$0xff]
  %v1112 = vld [vmem:[%s1054 + $0x1c8] sm:$0xff]
  %v1113 = vld [vmem:[%s1054 + $0x1d0] sm:$0xff]
  %v1114 = vld [vmem:[%s1054 + $0x1d8] sm:$0xff]
  %v1115 = vld [vmem:[%s1054 + $0x1e0] sm:$0xff]
  %v1116 = vld [vmem:[%s1054 + $0x1e8] sm:$0xff]
  %v1117 = vld [vmem:[%s1054 + $0x1f0] sm:$0xff]
  %v1118 = vld [vmem:[%s1054 + $0x1f8] sm:$0xff]
  %1119 = vmatpush.msra.mxu0 %v680
  %1120 = vmatpush.msra.mxu0 %v679
  %1121 = vmatpush.msra.mxu0 %v678
  %1122 = vmatpush.msra.mxu0 %v677
  %1123 = vmatpush.msra.mxu0 %v676
  %1124 = vmatpush.msra.mxu0 %v675
  %1125 = vmatpush.msra.mxu0 %v674
  %1126 = vmatpush.msra.mxu0 %v673
  %1127 = vmatpush.msra.mxu0 %v672
  %1128 = vmatpush.msra.mxu0 %v671
  %1129 = vmatpush.msra.mxu0 %v670
  %1130 = vmatpush.msra.mxu0 %v669
  %1131 = vmatpush.msra.mxu0 %v668
  %1132 = vmatpush.msra.mxu0 %v667
  %1133 = vmatpush.msra.mxu0 %v666
  %1134 = vmatpush.msra.mxu0 %v665
  %1135 = vmatmul.f32.gmra.mxu0 %v1055
  %v1136 = vpop.f32.mrf.mxu0
  %v1137 = vadd.f32 0.0, %v1136
  %1138 = vmatmul.f32.gmra.mxu0 %v1059
  %v1139 = vpop.f32.mrf.mxu0
  %v1140 = vadd.f32 0.0, %v1139
  %1141 = vmatmul.f32.gmra.mxu0 %v1063
  %v1142 = vpop.f32.mrf.mxu0
  %v1143 = vadd.f32 0.0, %v1142
  %1144 = vmatmul.f32.gmra.mxu0 %v1067
  %v1145 = vpop.f32.mrf.mxu0
  %v1146 = vadd.f32 0.0, %v1145
  %1147 = vmatmul.f32.gmra.mxu0 %v1071
  %v1148 = vpop.f32.mrf.mxu0
  %v1149 = vadd.f32 0.0, %v1148
  %1150 = vmatmul.f32.gmra.mxu0 %v1075
  %v1151 = vpop.f32.mrf.mxu0
  %v1152 = vadd.f32 0.0, %v1151
  %1153 = vmatmul.f32.gmra.mxu0 %v1079
  %v1154 = vpop.f32.mrf.mxu0
  %v1155 = vadd.f32 0.0, %v1154
  %1156 = vmatmul.f32.gmra.mxu0 %v1083
  %v1157 = vpop.f32.mrf.mxu0
  %v1158 = vadd.f32 0.0, %v1157
  %1159 = vmatmul.f32.gmra.mxu0 %v1087
  %v1160 = vpop.f32.mrf.mxu0
  %v1161 = vadd.f32 0.0, %v1160
  %1162 = vmatmul.f32.gmra.mxu0 %v1091
  %v1163 = vpop.f32.mrf.mxu0
  %v1164 = vadd.f32 0.0, %v1163
  %1165 = vmatmul.f32.gmra.mxu0 %v1095
  %v1166 = vpop.f32.mrf.mxu0
  %v1167 = vadd.f32 0.0, %v1166
  %1168 = vmatmul.f32.gmra.mxu0 %v1099
  %v1169 = vpop.f32.mrf.mxu0
  %v1170 = vadd.f32 0.0, %v1169
  %1171 = vmatmul.f32.gmra.mxu0 %v1103
  %v1172 = vpop.f32.mrf.mxu0
  %v1173 = vadd.f32 0.0, %v1172
  %1174 = vmatmul.f32.gmra.mxu0 %v1107
  %v1175 = vpop.f32.mrf.mxu0
  %v1176 = vadd.f32 0.0, %v1175
  %1177 = vmatmul.f32.gmra.mxu0 %v1111
  %v1178 = vpop.f32.mrf.mxu0
  %v1179 = vadd.f32 0.0, %v1178
  %1180 = vmatmul.f32.gmra.mxu0 %v1115
  %v1181 = vpop.f32.mrf.mxu0
  %v1182 = vadd.f32 0.0, %v1181
  %1183 = vdwg.mxu0
  %1184 = vmatpush.msra.mxu0 %v696
  %1185 = vmatpush.msra.mxu0 %v695
  %1186 = vmatpush.msra.mxu0 %v694
  %1187 = vmatpush.msra.mxu0 %v693
  %1188 = vmatpush.msra.mxu0 %v692
  %1189 = vmatpush.msra.mxu0 %v691
  %1190 = vmatpush.msra.mxu0 %v690
  %1191 = vmatpush.msra.mxu0 %v689
  %1192 = vmatpush.msra.mxu0 %v688
  %1193 = vmatpush.msra.mxu0 %v687
  %1194 = vmatpush.msra.mxu0 %v686
  %1195 = vmatpush.msra.mxu0 %v685
  %1196 = vmatpush.msra.mxu0 %v684
  %1197 = vmatpush.msra.mxu0 %v683
  %1198 = vmatpush.msra.mxu0 %v682
  %1199 = vmatpush.msra.mxu0 %v681
  %1200 = vmatmul.f32.gmra.mxu0 %v1056
  %v1201 = vpop.f32.mrf.mxu0
  %v1202 = vadd.f32 %v1137, %v1201
  %1203 = vmatmul.f32.gmra.mxu0 %v1060
  %v1204 = vpop.f32.mrf.mxu0
  %v1205 = vadd.f32 %v1140, %v1204
  %1206 = vmatmul.f32.gmra.mxu0 %v1064
  %v1207 = vpop.f32.mrf.mxu0
  %v1208 = vadd.f32 %v1143, %v1207
  %1209 = vmatmul.f32.gmra.mxu0 %v1068
  %v1210 = vpop.f32.mrf.mxu0
  %v1211 = vadd.f32 %v1146, %v1210
  %1212 = vmatmul.f32.gmra.mxu0 %v1072
  %v1213 = vpop.f32.mrf.mxu0
  %v1214 = vadd.f32 %v1149, %v1213
  %1215 = vmatmul.f32.gmra.mxu0 %v1076
  %v1216 = vpop.f32.mrf.mxu0
  %v1217 = vadd.f32 %v1152, %v1216
  %1218 = vmatmul.f32.gmra.mxu0 %v1080
  %v1219 = vpop.f32.mrf.mxu0
  %v1220 = vadd.f32 %v1155, %v1219
  %1221 = vmatmul.f32.gmra.mxu0 %v1084
  %v1222 = vpop.f32.mrf.mxu0
  %v1223 = vadd.f32 %v1158, %v1222
  %1224 = vmatmul.f32.gmra.mxu0 %v1088
  %v1225 = vpop.f32.mrf.mxu0
  %v1226 = vadd.f32 %v1161, %v1225
  %1227 = vmatmul.f32.gmra.mxu0 %v1092
  %v1228 = vpop.f32.mrf.mxu0
  %v1229 = vadd.f32 %v1164, %v1228
  %1230 = vmatmul.f32.gmra.mxu0 %v1096
  %v1231 = vpop.f32.mrf.mxu0
  %v1232 = vadd.f32 %v1167, %v1231
  %1233 = vmatmul.f32.gmra.mxu0 %v1100
  %v1234 = vpop.f32.mrf.mxu0
  %v1235 = vadd.f32 %v1170, %v1234
  %1236 = vmatmul.f32.gmra.mxu0 %v1104
  %v1237 = vpop.f32.mrf.mxu0
  %v1238 = vadd.f32 %v1173, %v1237
  %1239 = vmatmul.f32.gmra.mxu0 %v1108
  %v1240 = vpop.f32.mrf.mxu0
  %v1241 = vadd.f32 %v1176, %v1240
  %1242 = vmatmul.f32.gmra.mxu0 %v1112
  %v1243 = vpop.f32.mrf.mxu0
  %v1244 = vadd.f32 %v1179, %v1243
  %1245 = vmatmul.f32.gmra.mxu0 %v1116
  %v1246 = vpop.f32.mrf.mxu0
  %v1247 = vadd.f32 %v1182, %v1246
  %1248 = vdwg.mxu0
  %1249 = vmatpush.msra.mxu0 %v712
  %1250 = vmatpush.msra.mxu0 %v711
  %1251 = vmatpush.msra.mxu0 %v710
  %1252 = vmatpush.msra.mxu0 %v709
  %1253 = vmatpush.msra.mxu0 %v708
  %1254 = vmatpush.msra.mxu0 %v707
  %1255 = vmatpush.msra.mxu0 %v706
  %1256 = vmatpush.msra.mxu0 %v705
  %1257 = vmatpush.msra.mxu0 %v704
  %1258 = vmatpush.msra.mxu0 %v703
  %1259 = vmatpush.msra.mxu0 %v702
  %1260 = vmatpush.msra.mxu0 %v701
  %1261 = vmatpush.msra.mxu0 %v700
  %1262 = vmatpush.msra.mxu0 %v699
  %1263 = vmatpush.msra.mxu0 %v698
  %1264 = vmatpush.msra.mxu0 %v697
  %1265 = vmatmul.f32.gmra.mxu0 %v1057
  %v1266 = vpop.f32.mrf.mxu0
  %v1267 = vadd.f32 %v1202, %v1266
  %1268 = vmatmul.f32.gmra.mxu0 %v1061
  %v1269 = vpop.f32.mrf.mxu0
  %v1270 = vadd.f32 %v1205, %v1269
  %1271 = vmatmul.f32.gmra.mxu0 %v1065
  %v1272 = vpop.f32.mrf.mxu0
  %v1273 = vadd.f32 %v1208, %v1272
  %1274 = vmatmul.f32.gmra.mxu0 %v1069
  %v1275 = vpop.f32.mrf.mxu0
  %v1276 = vadd.f32 %v1211, %v1275
  %1277 = vmatmul.f32.gmra.mxu0 %v1073
  %v1278 = vpop.f32.mrf.mxu0
  %v1279 = vadd.f32 %v1214, %v1278
  %1280 = vmatmul.f32.gmra.mxu0 %v1077
  %v1281 = vpop.f32.mrf.mxu0
  %v1282 = vadd.f32 %v1217, %v1281
  %1283 = vmatmul.f32.gmra.mxu0 %v1081
  %v1284 = vpop.f32.mrf.mxu0
  %v1285 = vadd.f32 %v1220, %v1284
  %1286 = vmatmul.f32.gmra.mxu0 %v1085
  %v1287 = vpop.f32.mrf.mxu0
  %v1288 = vadd.f32 %v1223, %v1287
  %1289 = vmatmul.f32.gmra.mxu0 %v1089
  %v1290 = vpop.f32.mrf.mxu0
  %v1291 = vadd.f32 %v1226, %v1290
  %1292 = vmatmul.f32.gmra.mxu0 %v1093
  %v1293 = vpop.f32.mrf.mxu0
  %v1294 = vadd.f32 %v1229, %v1293
  %1295 = vmatmul.f32.gmra.mxu0 %v1097
  %v1296 = vpop.f32.mrf.mxu0
  %v1297 = vadd.f32 %v1232, %v1296
  %1298 = vmatmul.f32.gmra.mxu0 %v1101
  %v1299 = vpop.f32.mrf.mxu0
  %v1300 = vadd.f32 %v1235, %v1299
  %1301 = vmatmul.f32.gmra.mxu0 %v1105
  %v1302 = vpop.f32.mrf.mxu0
  %v1303 = vadd.f32 %v1238, %v1302
  %1304 = vmatmul.f32.gmra.mxu0 %v1109
  %v1305 = vpop.f32.mrf.mxu0
  %v1306 = vadd.f32 %v1241, %v1305
  %1307 = vmatmul.f32.gmra.mxu0 %v1113
  %v1308 = vpop.f32.mrf.mxu0
  %v1309 = vadd.f32 %v1244, %v1308
  %1310 = vmatmul.f32.gmra.mxu0 %v1117
  %v1311 = vpop.f32.mrf.mxu0
  %v1312 = vadd.f32 %v1247, %v1311
  %1313 = vdwg.mxu0
  %1314 = vmatpush.msra.mxu0 %v728
  %1315 = vmatpush.msra.mxu0 %v727
  %1316 = vmatpush.msra.mxu0 %v726
  %1317 = vmatpush.msra.mxu0 %v725
  %1318 = vmatpush.msra.mxu0 %v724
  %1319 = vmatpush.msra.mxu0 %v723
  %1320 = vmatpush.msra.mxu0 %v722
  %1321 = vmatpush.msra.mxu0 %v721
  %1322 = vmatpush.msra.mxu0 %v720
  %1323 = vmatpush.msra.mxu0 %v719
  %1324 = vmatpush.msra.mxu0 %v718
  %1325 = vmatpush.msra.mxu0 %v717
  %1326 = vmatpush.msra.mxu0 %v716
  %1327 = vmatpush.msra.mxu0 %v715
  %1328 = vmatpush.msra.mxu0 %v714
  %1329 = vmatpush.msra.mxu0 %v713
  %1330 = vmatmul.f32.gmra.mxu0 %v1058
  %v1331 = vpop.f32.mrf.mxu0
  %v1332 = vadd.f32 %v1267, %v1331
  %1333 = vmatmul.f32.gmra.mxu0 %v1062
  %v1334 = vpop.f32.mrf.mxu0
  %v1335 = vadd.f32 %v1270, %v1334
  %1336 = vmatmul.f32.gmra.mxu0 %v1066
  %v1337 = vpop.f32.mrf.mxu0
  %v1338 = vadd.f32 %v1273, %v1337
  %1339 = vmatmul.f32.gmra.mxu0 %v1070
  %v1340 = vpop.f32.mrf.mxu0
  %v1341 = vadd.f32 %v1276, %v1340
  %1342 = vmatmul.f32.gmra.mxu0 %v1074
  %v1343 = vpop.f32.mrf.mxu0
  %v1344 = vadd.f32 %v1279, %v1343
  %1345 = vmatmul.f32.gmra.mxu0 %v1078
  %v1346 = vpop.f32.mrf.mxu0
  %v1347 = vadd.f32 %v1282, %v1346
  %1348 = vmatmul.f32.gmra.mxu0 %v1082
  %v1349 = vpop.f32.mrf.mxu0
  %v1350 = vadd.f32 %v1285, %v1349
  %1351 = vmatmul.f32.gmra.mxu0 %v1086
  %v1352 = vpop.f32.mrf.mxu0
  %v1353 = vadd.f32 %v1288, %v1352
  %1354 = vmatmul.f32.gmra.mxu0 %v1090
  %v1355 = vpop.f32.mrf.mxu0
  %v1356 = vadd.f32 %v1291, %v1355
  %1357 = vmatmul.f32.gmra.mxu0 %v1094
  %v1358 = vpop.f32.mrf.mxu0
  %v1359 = vadd.f32 %v1294, %v1358
  %1360 = vmatmul.f32.gmra.mxu0 %v1098
  %v1361 = vpop.f32.mrf.mxu0
  %v1362 = vadd.f32 %v1297, %v1361
  %1363 = vmatmul.f32.gmra.mxu0 %v1102
  %v1364 = vpop.f32.mrf.mxu0
  %v1365 = vadd.f32 %v1300, %v1364
  %1366 = vmatmul.f32.gmra.mxu0 %v1106
  %v1367 = vpop.f32.mrf.mxu0
  %v1368 = vadd.f32 %v1303, %v1367
  %1369 = vmatmul.f32.gmra.mxu0 %v1110
  %v1370 = vpop.f32.mrf.mxu0
  %v1371 = vadd.f32 %v1306, %v1370
  %1372 = vmatmul.f32.gmra.mxu0 %v1114
  %v1373 = vpop.f32.mrf.mxu0
  %v1374 = vadd.f32 %v1309, %v1373
  %1375 = vmatmul.f32.gmra.mxu0 %v1118
  %v1376 = vpop.f32.mrf.mxu0
  %v1377 = vadd.f32 %v1312, %v1376
  %1378 = vdwg.mxu0
  %s1379 = scalar_lea.vmem %s4, 8
  %v1380 = vld [vmem:[%s1379] sm:$0xff]
  %vm1381 = vcmask 64512
  %v1383 = vsel %vm1381, %v1332, 0
  %v1386 = vsel %vm1381, %v1335, 0
  %v1389 = vsel %vm1381, %v1338, 0
  %v1392 = vsel %vm1381, %v1341, 0
  %v1395 = vsel %vm1381, %v1344, 0
  %v1398 = vsel %vm1381, %v1347, 0
  %v1401 = vsel %vm1381, %v1350, 0
  %v1404 = vsel %vm1381, %v1353, 0
  %v1407 = vsel %vm1381, %v1356, 0
  %v1410 = vsel %vm1381, %v1359, 0
  %v1413 = vsel %vm1381, %v1362, 0
  %v1416 = vsel %vm1381, %v1365, 0
  %v1419 = vsel %vm1381, %v1368, 0
  %v1422 = vsel %vm1381, %v1371, 0
  %v1425 = vsel %vm1381, %v1374, 0
  %v1428 = vsel %vm1381, %v1377, 0
  %1430 = vmatpush.msra.mxu0 0.0
  %1431 = vmatpush.msra.mxu0 0.0
  %1432 = vmatpush.msra.mxu0 0.0
  %1433 = vmatpush.msra.mxu0 0.0
  %1434 = vmatpush.msra.mxu0 0.0
  %1435 = vmatpush.msra.mxu0 0.0
  %1436 = vmatpush.msra.mxu0 0.0
  %1437 = vmatpush.msra.mxu0 0.0
  %1438 = vmatpush.msra.mxu0 0.0
  %1439 = vmatpush.msra.mxu0 0.0
  %1440 = vmatpush.msra.mxu0 0.0
  %1441 = vmatpush.msra.mxu0 0.0
  %1442 = vmatpush.msra.mxu0 0.0
  %1443 = vmatpush.msra.mxu0 0.0
  %1444 = vmatpush.msra.mxu0 0.0
  %1445 = vmatpush.msra.mxu0 %v1380
  %1446 = vmatmul.f32.gmra.mxu0 %v1383
  %v1447 = vpop.f32.mrf.mxu0
  %v1448 = vadd.f32 0.0, %v1447
  %1449 = vmatmul.f32.gmra.mxu0 %v1386
  %v1450 = vpop.f32.mrf.mxu0
  %v1451 = vadd.f32 0.0, %v1450
  %1452 = vmatmul.f32.gmra.mxu0 %v1389
  %v1453 = vpop.f32.mrf.mxu0
  %v1454 = vadd.f32 0.0, %v1453
  %1455 = vmatmul.f32.gmra.mxu0 %v1392
  %v1456 = vpop.f32.mrf.mxu0
  %v1457 = vadd.f32 0.0, %v1456
  %1458 = vmatmul.f32.gmra.mxu0 %v1395
  %v1459 = vpop.f32.mrf.mxu0
  %v1460 = vadd.f32 0.0, %v1459
  %1461 = vmatmul.f32.gmra.mxu0 %v1398
  %v1462 = vpop.f32.mrf.mxu0
  %v1463 = vadd.f32 0.0, %v1462
  %1464 = vmatmul.f32.gmra.mxu0 %v1401
  %v1465 = vpop.f32.mrf.mxu0
  %v1466 = vadd.f32 0.0, %v1465
  %1467 = vmatmul.f32.gmra.mxu0 %v1404
  %v1468 = vpop.f32.mrf.mxu0
  %v1469 = vadd.f32 0.0, %v1468
  %1470 = vmatmul.f32.gmra.mxu0 %v1407
  %v1471 = vpop.f32.mrf.mxu0
  %v1472 = vadd.f32 0.0, %v1471
  %1473 = vmatmul.f32.gmra.mxu0 %v1410
  %v1474 = vpop.f32.mrf.mxu0
  %v1475 = vadd.f32 0.0, %v1474
  %1476 = vmatmul.f32.gmra.mxu0 %v1413
  %v1477 = vpop.f32.mrf.mxu0
  %v1478 = vadd.f32 0.0, %v1477
  %1479 = vmatmul.f32.gmra.mxu0 %v1416
  %v1480 = vpop.f32.mrf.mxu0
  %v1481 = vadd.f32 0.0, %v1480
  %1482 = vmatmul.f32.gmra.mxu0 %v1419
  %v1483 = vpop.f32.mrf.mxu0
  %v1484 = vadd.f32 0.0, %v1483
  %1485 = vmatmul.f32.gmra.mxu0 %v1422
  %v1486 = vpop.f32.mrf.mxu0
  %v1487 = vadd.f32 0.0, %v1486
  %1488 = vmatmul.f32.gmra.mxu0 %v1425
  %v1489 = vpop.f32.mrf.mxu0
  %v1490 = vadd.f32 0.0, %v1489
  %1491 = vmatmul.f32.gmra.mxu0 %v1428
  %v1492 = vpop.f32.mrf.mxu0
  %v1493 = vadd.f32 0.0, %v1492
  %1494 = vdwg.mxu0
  %v1496 = vsel %vm1381, %v1006, 0
  %v1499 = vsel %vm1381, %v1009, 0
  %v1502 = vsel %vm1381, %v1012, 0
  %v1505 = vsel %vm1381, %v1015, 0
  %v1508 = vsel %vm1381, %v1018, 0
  %v1511 = vsel %vm1381, %v1021, 0
  %v1514 = vsel %vm1381, %v1024, 0
  %v1517 = vsel %vm1381, %v1027, 0
  %v1520 = vsel %vm1381, %v1030, 0
  %v1523 = vsel %vm1381, %v1033, 0
  %v1526 = vsel %vm1381, %v1036, 0
  %v1529 = vsel %vm1381, %v1039, 0
  %v1532 = vsel %vm1381, %v1042, 0
  %v1535 = vsel %vm1381, %v1045, 0
  %v1538 = vsel %vm1381, %v1048, 0
  %v1541 = vsel %vm1381, %v1051, 0
  %1543 = vmatpush.msra.mxu0 0.0
  %1544 = vmatpush.msra.mxu0 0.0
  %1545 = vmatpush.msra.mxu0 0.0
  %1546 = vmatpush.msra.mxu0 0.0
  %1547 = vmatpush.msra.mxu0 0.0
  %1548 = vmatpush.msra.mxu0 0.0
  %1549 = vmatpush.msra.mxu0 0.0
  %1550 = vmatpush.msra.mxu0 0.0
  %1551 = vmatpush.msra.mxu0 0.0
  %1552 = vmatpush.msra.mxu0 0.0
  %1553 = vmatpush.msra.mxu0 0.0
  %1554 = vmatpush.msra.mxu0 0.0
  %1555 = vmatpush.msra.mxu0 0.0
  %1556 = vmatpush.msra.mxu0 0.0
  %1557 = vmatpush.msra.mxu0 0.0
  %1558 = vmatpush.msra.mxu0 %v1053
  %1559 = vmatmul.f32.gmra.mxu0 %v1496
  %v1560 = vpop.f32.mrf.mxu0
  %v1561 = vadd.f32 %v1448, %v1560
  %1562 = vmatmul.f32.gmra.mxu0 %v1499
  %v1563 = vpop.f32.mrf.mxu0
  %v1564 = vadd.f32 %v1451, %v1563
  %1565 = vmatmul.f32.gmra.mxu0 %v1502
  %v1566 = vpop.f32.mrf.mxu0
  %v1567 = vadd.f32 %v1454, %v1566
  %1568 = vmatmul.f32.gmra.mxu0 %v1505
  %v1569 = vpop.f32.mrf.mxu0
  %v1570 = vadd.f32 %v1457, %v1569
  %1571 = vmatmul.f32.gmra.mxu0 %v1508
  %v1572 = vpop.f32.mrf.mxu0
  %v1573 = vadd.f32 %v1460, %v1572
  %1574 = vmatmul.f32.gmra.mxu0 %v1511
  %v1575 = vpop.f32.mrf.mxu0
  %v1576 = vadd.f32 %v1463, %v1575
  %1577 = vmatmul.f32.gmra.mxu0 %v1514
  %v1578 = vpop.f32.mrf.mxu0
  %v1579 = vadd.f32 %v1466, %v1578
  %1580 = vmatmul.f32.gmra.mxu0 %v1517
  %v1581 = vpop.f32.mrf.mxu0
  %v1582 = vadd.f32 %v1469, %v1581
  %1583 = vmatmul.f32.gmra.mxu0 %v1520
  %v1584 = vpop.f32.mrf.mxu0
  %v1585 = vadd.f32 %v1472, %v1584
  %1586 = vmatmul.f32.gmra.mxu0 %v1523
  %v1587 = vpop.f32.mrf.mxu0
  %v1588 = vadd.f32 %v1475, %v1587
  %1589 = vmatmul.f32.gmra.mxu0 %v1526
  %v1590 = vpop.f32.mrf.mxu0
  %v1591 = vadd.f32 %v1478, %v1590
  %1592 = vmatmul.f32.gmra.mxu0 %v1529
  %v1593 = vpop.f32.mrf.mxu0
  %v1594 = vadd.f32 %v1481, %v1593
  %1595 = vmatmul.f32.gmra.mxu0 %v1532
  %v1596 = vpop.f32.mrf.mxu0
  %v1597 = vadd.f32 %v1484, %v1596
  %1598 = vmatmul.f32.gmra.mxu0 %v1535
  %v1599 = vpop.f32.mrf.mxu0
  %v1600 = vadd.f32 %v1487, %v1599
  %1601 = vmatmul.f32.gmra.mxu0 %v1538
  %v1602 = vpop.f32.mrf.mxu0
  %v1603 = vadd.f32 %v1490, %v1602
  %1604 = vmatmul.f32.gmra.mxu0 %v1541
  %v1605 = vpop.f32.mrf.mxu0
  %v1606 = vadd.f32 %v1493, %v1605
  %1607 = vdwg.mxu0
  %s1608 = scalar_lea.vmem %s3, 1024
  %v1609 = vld [vmem:[%s1608] sm:$0xff]
  %v1610 = vld [vmem:[%s1608 + $0x8] sm:$0xff]
  %v1611 = vld [vmem:[%s1608 + $0x10] sm:$0xff]
  %v1612 = vld [vmem:[%s1608 + $0x18] sm:$0xff]
  %v1613 = vld [vmem:[%s1608 + $0x20] sm:$0xff]
  %v1614 = vld [vmem:[%s1608 + $0x28] sm:$0xff]
  %v1615 = vld [vmem:[%s1608 + $0x30] sm:$0xff]
  %v1616 = vld [vmem:[%s1608 + $0x38] sm:$0xff]
  %v1617 = vld [vmem:[%s1608 + $0x40] sm:$0xff]
  %v1618 = vld [vmem:[%s1608 + $0x48] sm:$0xff]
  %v1619 = vld [vmem:[%s1608 + $0x50] sm:$0xff]
  %v1620 = vld [vmem:[%s1608 + $0x58] sm:$0xff]
  %v1621 = vld [vmem:[%s1608 + $0x60] sm:$0xff]
  %v1622 = vld [vmem:[%s1608 + $0x68] sm:$0xff]
  %v1623 = vld [vmem:[%s1608 + $0x70] sm:$0xff]
  %v1624 = vld [vmem:[%s1608 + $0x78] sm:$0xff]
  %v1625 = vld [vmem:[%s1608 + $0x80] sm:$0xff]
  %v1626 = vld [vmem:[%s1608 + $0x88] sm:$0xff]
  %v1627 = vld [vmem:[%s1608 + $0x90] sm:$0xff]
  %v1628 = vld [vmem:[%s1608 + $0x98] sm:$0xff]
  %v1629 = vld [vmem:[%s1608 + $0xa0] sm:$0xff]
  %v1630 = vld [vmem:[%s1608 + $0xa8] sm:$0xff]
  %v1631 = vld [vmem:[%s1608 + $0xb0] sm:$0xff]
  %v1632 = vld [vmem:[%s1608 + $0xb8] sm:$0xff]
  %v1633 = vld [vmem:[%s1608 + $0xc0] sm:$0xff]
  %v1634 = vld [vmem:[%s1608 + $0xc8] sm:$0xff]
  %v1635 = vld [vmem:[%s1608 + $0xd0] sm:$0xff]
  %v1636 = vld [vmem:[%s1608 + $0xd8] sm:$0xff]
  %v1637 = vld [vmem:[%s1608 + $0xe0] sm:$0xff]
  %v1638 = vld [vmem:[%s1608 + $0xe8] sm:$0xff]
  %v1639 = vld [vmem:[%s1608 + $0xf0] sm:$0xff]
  %v1640 = vld [vmem:[%s1608 + $0xf8] sm:$0xff]
  %v1641 = vld [vmem:[%s1608 + $0x100] sm:$0xff]
  %v1642 = vld [vmem:[%s1608 + $0x108] sm:$0xff]
  %v1643 = vld [vmem:[%s1608 + $0x110] sm:$0xff]
  %v1644 = vld [vmem:[%s1608 + $0x118] sm:$0xff]
  %v1645 = vld [vmem:[%s1608 + $0x120] sm:$0xff]
  %v1646 = vld [vmem:[%s1608 + $0x128] sm:$0xff]
  %v1647 = vld [vmem:[%s1608 + $0x130] sm:$0xff]
  %v1648 = vld [vmem:[%s1608 + $0x138] sm:$0xff]
  %v1649 = vld [vmem:[%s1608 + $0x140] sm:$0xff]
  %v1650 = vld [vmem:[%s1608 + $0x148] sm:$0xff]
  %v1651 = vld [vmem:[%s1608 + $0x150] sm:$0xff]
  %v1652 = vld [vmem:[%s1608 + $0x158] sm:$0xff]
  %v1653 = vld [vmem:[%s1608 + $0x160] sm:$0xff]
  %v1654 = vld [vmem:[%s1608 + $0x168] sm:$0xff]
  %v1655 = vld [vmem:[%s1608 + $0x170] sm:$0xff]
  %v1656 = vld [vmem:[%s1608 + $0x178] sm:$0xff]
  %v1657 = vld [vmem:[%s1608 + $0x180] sm:$0xff]
  %v1658 = vld [vmem:[%s1608 + $0x188] sm:$0xff]
  %v1659 = vld [vmem:[%s1608 + $0x190] sm:$0xff]
  %v1660 = vld [vmem:[%s1608 + $0x198] sm:$0xff]
  %v1661 = vld [vmem:[%s1608 + $0x1a0] sm:$0xff]
  %v1662 = vld [vmem:[%s1608 + $0x1a8] sm:$0xff]
  %v1663 = vld [vmem:[%s1608 + $0x1b0] sm:$0xff]
  %v1664 = vld [vmem:[%s1608 + $0x1b8] sm:$0xff]
  %v1665 = vld [vmem:[%s1608 + $0x1c0] sm:$0xff]
  %v1666 = vld [vmem:[%s1608 + $0x1c8] sm:$0xff]
  %v1667 = vld [vmem:[%s1608 + $0x1d0] sm:$0xff]
  %v1668 = vld [vmem:[%s1608 + $0x1d8] sm:$0xff]
  %v1669 = vld [vmem:[%s1608 + $0x1e0] sm:$0xff]
  %v1670 = vld [vmem:[%s1608 + $0x1e8] sm:$0xff]
  %v1671 = vld [vmem:[%s1608 + $0x1f0] sm:$0xff]
  %v1672 = vld [vmem:[%s1608 + $0x1f8] sm:$0xff]
  %1673 = vmatpush.msra.mxu0 %v680
  %1674 = vmatpush.msra.mxu0 %v679
  %1675 = vmatpush.msra.mxu0 %v678
  %1676 = vmatpush.msra.mxu0 %v677
  %1677 = vmatpush.msra.mxu0 %v676
  %1678 = vmatpush.msra.mxu0 %v675
  %1679 = vmatpush.msra.mxu0 %v674
  %1680 = vmatpush.msra.mxu0 %v673
  %1681 = vmatpush.msra.mxu0 %v672
  %1682 = vmatpush.msra.mxu0 %v671
  %1683 = vmatpush.msra.mxu0 %v670
  %1684 = vmatpush.msra.mxu0 %v669
  %1685 = vmatpush.msra.mxu0 %v668
  %1686 = vmatpush.msra.mxu0 %v667
  %1687 = vmatpush.msra.mxu0 %v666
  %1688 = vmatpush.msra.mxu0 %v665
  %1689 = vmatmul.f32.gmra.mxu0 %v1609
  %v1690 = vpop.f32.mrf.mxu0
  %v1691 = vadd.f32 0.0, %v1690
  %1692 = vmatmul.f32.gmra.mxu0 %v1613
  %v1693 = vpop.f32.mrf.mxu0
  %v1694 = vadd.f32 0.0, %v1693
  %1695 = vmatmul.f32.gmra.mxu0 %v1617
  %v1696 = vpop.f32.mrf.mxu0
  %v1697 = vadd.f32 0.0, %v1696
  %1698 = vmatmul.f32.gmra.mxu0 %v1621
  %v1699 = vpop.f32.mrf.mxu0
  %v1700 = vadd.f32 0.0, %v1699
  %1701 = vmatmul.f32.gmra.mxu0 %v1625
  %v1702 = vpop.f32.mrf.mxu0
  %v1703 = vadd.f32 0.0, %v1702
  %1704 = vmatmul.f32.gmra.mxu0 %v1629
  %v1705 = vpop.f32.mrf.mxu0
  %v1706 = vadd.f32 0.0, %v1705
  %1707 = vmatmul.f32.gmra.mxu0 %v1633
  %v1708 = vpop.f32.mrf.mxu0
  %v1709 = vadd.f32 0.0, %v1708
  %1710 = vmatmul.f32.gmra.mxu0 %v1637
  %v1711 = vpop.f32.mrf.mxu0
  %v1712 = vadd.f32 0.0, %v1711
  %1713 = vmatmul.f32.gmra.mxu0 %v1641
  %v1714 = vpop.f32.mrf.mxu0
  %v1715 = vadd.f32 0.0, %v1714
  %1716 = vmatmul.f32.gmra.mxu0 %v1645
  %v1717 = vpop.f32.mrf.mxu0
  %v1718 = vadd.f32 0.0, %v1717
  %1719 = vmatmul.f32.gmra.mxu0 %v1649
  %v1720 = vpop.f32.mrf.mxu0
  %v1721 = vadd.f32 0.0, %v1720
  %1722 = vmatmul.f32.gmra.mxu0 %v1653
  %v1723 = vpop.f32.mrf.mxu0
  %v1724 = vadd.f32 0.0, %v1723
  %1725 = vmatmul.f32.gmra.mxu0 %v1657
  %v1726 = vpop.f32.mrf.mxu0
  %v1727 = vadd.f32 0.0, %v1726
  %1728 = vmatmul.f32.gmra.mxu0 %v1661
  %v1729 = vpop.f32.mrf.mxu0
  %v1730 = vadd.f32 0.0, %v1729
  %1731 = vmatmul.f32.gmra.mxu0 %v1665
  %v1732 = vpop.f32.mrf.mxu0
  %v1733 = vadd.f32 0.0, %v1732
  %1734 = vmatmul.f32.gmra.mxu0 %v1669
  %v1735 = vpop.f32.mrf.mxu0
  %v1736 = vadd.f32 0.0, %v1735
  %1737 = vdwg.mxu0
  %1738 = vmatpush.msra.mxu0 %v696
  %1739 = vmatpush.msra.mxu0 %v695
  %1740 = vmatpush.msra.mxu0 %v694
  %1741 = vmatpush.msra.mxu0 %v693
  %1742 = vmatpush.msra.mxu0 %v692
  %1743 = vmatpush.msra.mxu0 %v691
  %1744 = vmatpush.msra.mxu0 %v690
  %1745 = vmatpush.msra.mxu0 %v689
  %1746 = vmatpush.msra.mxu0 %v688
  %1747 = vmatpush.msra.mxu0 %v687
  %1748 = vmatpush.msra.mxu0 %v686
  %1749 = vmatpush.msra.mxu0 %v685
  %1750 = vmatpush.msra.mxu0 %v684
  %1751 = vmatpush.msra.mxu0 %v683
  %1752 = vmatpush.msra.mxu0 %v682
  %1753 = vmatpush.msra.mxu0 %v681
  %1754 = vmatmul.f32.gmra.mxu0 %v1610
  %v1755 = vpop.f32.mrf.mxu0
  %v1756 = vadd.f32 %v1691, %v1755
  %1757 = vmatmul.f32.gmra.mxu0 %v1614
  %v1758 = vpop.f32.mrf.mxu0
  %v1759 = vadd.f32 %v1694, %v1758
  %1760 = vmatmul.f32.gmra.mxu0 %v1618
  %v1761 = vpop.f32.mrf.mxu0
  %v1762 = vadd.f32 %v1697, %v1761
  %1763 = vmatmul.f32.gmra.mxu0 %v1622
  %v1764 = vpop.f32.mrf.mxu0
  %v1765 = vadd.f32 %v1700, %v1764
  %1766 = vmatmul.f32.gmra.mxu0 %v1626
  %v1767 = vpop.f32.mrf.mxu0
  %v1768 = vadd.f32 %v1703, %v1767
  %1769 = vmatmul.f32.gmra.mxu0 %v1630
  %v1770 = vpop.f32.mrf.mxu0
  %v1771 = vadd.f32 %v1706, %v1770
  %1772 = vmatmul.f32.gmra.mxu0 %v1634
  %v1773 = vpop.f32.mrf.mxu0
  %v1774 = vadd.f32 %v1709, %v1773
  %1775 = vmatmul.f32.gmra.mxu0 %v1638
  %v1776 = vpop.f32.mrf.mxu0
  %v1777 = vadd.f32 %v1712, %v1776
  %1778 = vmatmul.f32.gmra.mxu0 %v1642
  %v1779 = vpop.f32.mrf.mxu0
  %v1780 = vadd.f32 %v1715, %v1779
  %1781 = vmatmul.f32.gmra.mxu0 %v1646
  %v1782 = vpop.f32.mrf.mxu0
  %v1783 = vadd.f32 %v1718, %v1782
  %1784 = vmatmul.f32.gmra.mxu0 %v1650
  %v1785 = vpop.f32.mrf.mxu0
  %v1786 = vadd.f32 %v1721, %v1785
  %1787 = vmatmul.f32.gmra.mxu0 %v1654
  %v1788 = vpop.f32.mrf.mxu0
  %v1789 = vadd.f32 %v1724, %v1788
  %1790 = vmatmul.f32.gmra.mxu0 %v1658
  %v1791 = vpop.f32.mrf.mxu0
  %v1792 = vadd.f32 %v1727, %v1791
  %1793 = vmatmul.f32.gmra.mxu0 %v1662
  %v1794 = vpop.f32.mrf.mxu0
  %v1795 = vadd.f32 %v1730, %v1794
  %1796 = vmatmul.f32.gmra.mxu0 %v1666
  %v1797 = vpop.f32.mrf.mxu0
  %v1798 = vadd.f32 %v1733, %v1797
  %1799 = vmatmul.f32.gmra.mxu0 %v1670
  %v1800 = vpop.f32.mrf.mxu0
  %v1801 = vadd.f32 %v1736, %v1800
  %1802 = vdwg.mxu0
  %1803 = vmatpush.msra.mxu0 %v712
  %1804 = vmatpush.msra.mxu0 %v711
  %1805 = vmatpush.msra.mxu0 %v710
  %1806 = vmatpush.msra.mxu0 %v709
  %1807 = vmatpush.msra.mxu0 %v708
  %1808 = vmatpush.msra.mxu0 %v707
  %1809 = vmatpush.msra.mxu0 %v706
  %1810 = vmatpush.msra.mxu0 %v705
  %1811 = vmatpush.msra.mxu0 %v704
  %1812 = vmatpush.msra.mxu0 %v703
  %1813 = vmatpush.msra.mxu0 %v702
  %1814 = vmatpush.msra.mxu0 %v701
  %1815 = vmatpush.msra.mxu0 %v700
  %1816 = vmatpush.msra.mxu0 %v699
  %1817 = vmatpush.msra.mxu0 %v698
  %1818 = vmatpush.msra.mxu0 %v697
  %1819 = vmatmul.f32.gmra.mxu0 %v1611
  %v1820 = vpop.f32.mrf.mxu0
  %v1821 = vadd.f32 %v1756, %v1820
  %1822 = vmatmul.f32.gmra.mxu0 %v1615
  %v1823 = vpop.f32.mrf.mxu0
  %v1824 = vadd.f32 %v1759, %v1823
  %1825 = vmatmul.f32.gmra.mxu0 %v1619
  %v1826 = vpop.f32.mrf.mxu0
  %v1827 = vadd.f32 %v1762, %v1826
  %1828 = vmatmul.f32.gmra.mxu0 %v1623
  %v1829 = vpop.f32.mrf.mxu0
  %v1830 = vadd.f32 %v1765, %v1829
  %1831 = vmatmul.f32.gmra.mxu0 %v1627
  %v1832 = vpop.f32.mrf.mxu0
  %v1833 = vadd.f32 %v1768, %v1832
  %1834 = vmatmul.f32.gmra.mxu0 %v1631
  %v1835 = vpop.f32.mrf.mxu0
  %v1836 = vadd.f32 %v1771, %v1835
  %1837 = vmatmul.f32.gmra.mxu0 %v1635
  %v1838 = vpop.f32.mrf.mxu0
  %v1839 = vadd.f32 %v1774, %v1838
  %1840 = vmatmul.f32.gmra.mxu0 %v1639
  %v1841 = vpop.f32.mrf.mxu0
  %v1842 = vadd.f32 %v1777, %v1841
  %1843 = vmatmul.f32.gmra.mxu0 %v1643
  %v1844 = vpop.f32.mrf.mxu0
  %v1845 = vadd.f32 %v1780, %v1844
  %1846 = vmatmul.f32.gmra.mxu0 %v1647
  %v1847 = vpop.f32.mrf.mxu0
  %v1848 = vadd.f32 %v1783, %v1847
  %1849 = vmatmul.f32.gmra.mxu0 %v1651
  %v1850 = vpop.f32.mrf.mxu0
  %v1851 = vadd.f32 %v1786, %v1850
  %1852 = vmatmul.f32.gmra.mxu0 %v1655
  %v1853 = vpop.f32.mrf.mxu0
  %v1854 = vadd.f32 %v1789, %v1853
  %1855 = vmatmul.f32.gmra.mxu0 %v1659
  %v1856 = vpop.f32.mrf.mxu0
  %v1857 = vadd.f32 %v1792, %v1856
  %1858 = vmatmul.f32.gmra.mxu0 %v1663
  %v1859 = vpop.f32.mrf.mxu0
  %v1860 = vadd.f32 %v1795, %v1859
  %1861 = vmatmul.f32.gmra.mxu0 %v1667
  %v1862 = vpop.f32.mrf.mxu0
  %v1863 = vadd.f32 %v1798, %v1862
  %1864 = vmatmul.f32.gmra.mxu0 %v1671
  %v1865 = vpop.f32.mrf.mxu0
  %v1866 = vadd.f32 %v1801, %v1865
  %1867 = vdwg.mxu0
  %1868 = vmatpush.msra.mxu0 %v728
  %1869 = vmatpush.msra.mxu0 %v727
  %1870 = vmatpush.msra.mxu0 %v726
  %1871 = vmatpush.msra.mxu0 %v725
  %1872 = vmatpush.msra.mxu0 %v724
  %1873 = vmatpush.msra.mxu0 %v723
  %1874 = vmatpush.msra.mxu0 %v722
  %1875 = vmatpush.msra.mxu0 %v721
  %1876 = vmatpush.msra.mxu0 %v720
  %1877 = vmatpush.msra.mxu0 %v719
  %1878 = vmatpush.msra.mxu0 %v718
  %1879 = vmatpush.msra.mxu0 %v717
  %1880 = vmatpush.msra.mxu0 %v716
  %1881 = vmatpush.msra.mxu0 %v715
  %1882 = vmatpush.msra.mxu0 %v714
  %1883 = vmatpush.msra.mxu0 %v713
  %1884 = vmatmul.f32.gmra.mxu0 %v1612
  %v1885 = vpop.f32.mrf.mxu0
  %v1886 = vadd.f32 %v1821, %v1885
  %1887 = vmatmul.f32.gmra.mxu0 %v1616
  %v1888 = vpop.f32.mrf.mxu0
  %v1889 = vadd.f32 %v1824, %v1888
  %1890 = vmatmul.f32.gmra.mxu0 %v1620
  %v1891 = vpop.f32.mrf.mxu0
  %v1892 = vadd.f32 %v1827, %v1891
  %1893 = vmatmul.f32.gmra.mxu0 %v1624
  %v1894 = vpop.f32.mrf.mxu0
  %v1895 = vadd.f32 %v1830, %v1894
  %1896 = vmatmul.f32.gmra.mxu0 %v1628
  %v1897 = vpop.f32.mrf.mxu0
  %v1898 = vadd.f32 %v1833, %v1897
  %1899 = vmatmul.f32.gmra.mxu0 %v1632
  %v1900 = vpop.f32.mrf.mxu0
  %v1901 = vadd.f32 %v1836, %v1900
  %1902 = vmatmul.f32.gmra.mxu0 %v1636
  %v1903 = vpop.f32.mrf.mxu0
  %v1904 = vadd.f32 %v1839, %v1903
  %1905 = vmatmul.f32.gmra.mxu0 %v1640
  %v1906 = vpop.f32.mrf.mxu0
  %v1907 = vadd.f32 %v1842, %v1906
  %1908 = vmatmul.f32.gmra.mxu0 %v1644
  %v1909 = vpop.f32.mrf.mxu0
  %v1910 = vadd.f32 %v1845, %v1909
  %1911 = vmatmul.f32.gmra.mxu0 %v1648
  %v1912 = vpop.f32.mrf.mxu0
  %v1913 = vadd.f32 %v1848, %v1912
  %1914 = vmatmul.f32.gmra.mxu0 %v1652
  %v1915 = vpop.f32.mrf.mxu0
  %v1916 = vadd.f32 %v1851, %v1915
  %1917 = vmatmul.f32.gmra.mxu0 %v1656
  %v1918 = vpop.f32.mrf.mxu0
  %v1919 = vadd.f32 %v1854, %v1918
  %1920 = vmatmul.f32.gmra.mxu0 %v1660
  %v1921 = vpop.f32.mrf.mxu0
  %v1922 = vadd.f32 %v1857, %v1921
  %1923 = vmatmul.f32.gmra.mxu0 %v1664
  %v1924 = vpop.f32.mrf.mxu0
  %v1925 = vadd.f32 %v1860, %v1924
  %1926 = vmatmul.f32.gmra.mxu0 %v1668
  %v1927 = vpop.f32.mrf.mxu0
  %v1928 = vadd.f32 %v1863, %v1927
  %1929 = vmatmul.f32.gmra.mxu0 %v1672
  %v1930 = vpop.f32.mrf.mxu0
  %v1931 = vadd.f32 %v1866, %v1930
  %1932 = vdwg.mxu0
  %s1933 = scalar_lea.vmem %s4, 16
  %v1934 = vld [vmem:[%s1933] sm:$0xff]
  %v1936 = vsel %vm1381, %v1886, 0
  %v1939 = vsel %vm1381, %v1889, 0
  %v1942 = vsel %vm1381, %v1892, 0
  %v1945 = vsel %vm1381, %v1895, 0
  %v1948 = vsel %vm1381, %v1898, 0
  %v1951 = vsel %vm1381, %v1901, 0
  %v1954 = vsel %vm1381, %v1904, 0
  %v1957 = vsel %vm1381, %v1907, 0
  %v1960 = vsel %vm1381, %v1910, 0
  %v1963 = vsel %vm1381, %v1913, 0
  %v1966 = vsel %vm1381, %v1916, 0
  %v1969 = vsel %vm1381, %v1919, 0
  %v1972 = vsel %vm1381, %v1922, 0
  %v1975 = vsel %vm1381, %v1925, 0
  %v1978 = vsel %vm1381, %v1928, 0
  %v1981 = vsel %vm1381, %v1931, 0
  %1983 = vmatpush.msra.mxu0 0.0
  %1984 = vmatpush.msra.mxu0 0.0
  %1985 = vmatpush.msra.mxu0 0.0
  %1986 = vmatpush.msra.mxu0 0.0
  %1987 = vmatpush.msra.mxu0 0.0
  %1988 = vmatpush.msra.mxu0 0.0
  %1989 = vmatpush.msra.mxu0 0.0
  %1990 = vmatpush.msra.mxu0 0.0
  %1991 = vmatpush.msra.mxu0 0.0
  %1992 = vmatpush.msra.mxu0 0.0
  %1993 = vmatpush.msra.mxu0 0.0
  %1994 = vmatpush.msra.mxu0 0.0
  %1995 = vmatpush.msra.mxu0 0.0
  %1996 = vmatpush.msra.mxu0 0.0
  %1997 = vmatpush.msra.mxu0 0.0
  %1998 = vmatpush.msra.mxu0 %v1934
  %1999 = vmatmul.f32.gmra.mxu0 %v1936
  %v2000 = vpop.f32.mrf.mxu0
  %v2001 = vadd.f32 0.0, %v2000
  %2002 = vmatmul.f32.gmra.mxu0 %v1939
  %v2003 = vpop.f32.mrf.mxu0
  %v2004 = vadd.f32 0.0, %v2003
  %2005 = vmatmul.f32.gmra.mxu0 %v1942
  %v2006 = vpop.f32.mrf.mxu0
  %v2007 = vadd.f32 0.0, %v2006
  %2008 = vmatmul.f32.gmra.mxu0 %v1945
  %v2009 = vpop.f32.mrf.mxu0
  %v2010 = vadd.f32 0.0, %v2009
  %2011 = vmatmul.f32.gmra.mxu0 %v1948
  %v2012 = vpop.f32.mrf.mxu0
  %v2013 = vadd.f32 0.0, %v2012
  %2014 = vmatmul.f32.gmra.mxu0 %v1951
  %v2015 = vpop.f32.mrf.mxu0
  %v2016 = vadd.f32 0.0, %v2015
  %2017 = vmatmul.f32.gmra.mxu0 %v1954
  %v2018 = vpop.f32.mrf.mxu0
  %v2019 = vadd.f32 0.0, %v2018
  %2020 = vmatmul.f32.gmra.mxu0 %v1957
  %v2021 = vpop.f32.mrf.mxu0
  %v2022 = vadd.f32 0.0, %v2021
  %2023 = vmatmul.f32.gmra.mxu0 %v1960
  %v2024 = vpop.f32.mrf.mxu0
  %v2025 = vadd.f32 0.0, %v2024
  %2026 = vmatmul.f32.gmra.mxu0 %v1963
  %v2027 = vpop.f32.mrf.mxu0
  %v2028 = vadd.f32 0.0, %v2027
  %2029 = vmatmul.f32.gmra.mxu0 %v1966
  %v2030 = vpop.f32.mrf.mxu0
  %v2031 = vadd.f32 0.0, %v2030
  %2032 = vmatmul.f32.gmra.mxu0 %v1969
  %v2033 = vpop.f32.mrf.mxu0
  %v2034 = vadd.f32 0.0, %v2033
  %2035 = vmatmul.f32.gmra.mxu0 %v1972
  %v2036 = vpop.f32.mrf.mxu0
  %v2037 = vadd.f32 0.0, %v2036
  %2038 = vmatmul.f32.gmra.mxu0 %v1975
  %v2039 = vpop.f32.mrf.mxu0
  %v2040 = vadd.f32 0.0, %v2039
  %2041 = vmatmul.f32.gmra.mxu0 %v1978
  %v2042 = vpop.f32.mrf.mxu0
  %v2043 = vadd.f32 0.0, %v2042
  %2044 = vmatmul.f32.gmra.mxu0 %v1981
  %v2045 = vpop.f32.mrf.mxu0
  %v2046 = vadd.f32 0.0, %v2045
  %2047 = vdwg.mxu0
  %v2048 = vadd.f32 %v1561, %v2001
  %v2049 = vadd.f32 %v1564, %v2004
  %v2050 = vadd.f32 %v1567, %v2007
  %v2051 = vadd.f32 %v1570, %v2010
  %v2052 = vadd.f32 %v1573, %v2013
  %v2053 = vadd.f32 %v1576, %v2016
  %v2054 = vadd.f32 %v1579, %v2019
  %v2055 = vadd.f32 %v1582, %v2022
  %v2056 = vadd.f32 %v1585, %v2025
  %v2057 = vadd.f32 %v1588, %v2028
  %v2058 = vadd.f32 %v1591, %v2031
  %v2059 = vadd.f32 %v1594, %v2034
  %v2060 = vadd.f32 %v1597, %v2037
  %v2061 = vadd.f32 %v1600, %v2040
  %v2062 = vadd.f32 %v1603, %v2043
  %v2063 = vadd.f32 %v1606, %v2046
  %s2064 = scalar_lea.vmem %s3, 1536
  %v2065 = vld [vmem:[%s2064] sm:$0xff]
  %v2066 = vld [vmem:[%s2064 + $0x8] sm:$0xff]
  %v2067 = vld [vmem:[%s2064 + $0x10] sm:$0xff]
  %v2068 = vld [vmem:[%s2064 + $0x18] sm:$0xff]
  %v2069 = vld [vmem:[%s2064 + $0x20] sm:$0xff]
  %v2070 = vld [vmem:[%s2064 + $0x28] sm:$0xff]
  %v2071 = vld [vmem:[%s2064 + $0x30] sm:$0xff]
  %v2072 = vld [vmem:[%s2064 + $0x38] sm:$0xff]
  %v2073 = vld [vmem:[%s2064 + $0x40] sm:$0xff]
  %v2074 = vld [vmem:[%s2064 + $0x48] sm:$0xff]
  %v2075 = vld [vmem:[%s2064 + $0x50] sm:$0xff]
  %v2076 = vld [vmem:[%s2064 + $0x58] sm:$0xff]
  %v2077 = vld [vmem:[%s2064 + $0x60] sm:$0xff]
  %v2078 = vld [vmem:[%s2064 + $0x68] sm:$0xff]
  %v2079 = vld [vmem:[%s2064 + $0x70] sm:$0xff]
  %v2080 = vld [vmem:[%s2064 + $0x78] sm:$0xff]
  %v2081 = vld [vmem:[%s2064 + $0x80] sm:$0xff]
  %v2082 = vld [vmem:[%s2064 + $0x88] sm:$0xff]
  %v2083 = vld [vmem:[%s2064 + $0x90] sm:$0xff]
  %v2084 = vld [vmem:[%s2064 + $0x98] sm:$0xff]
  %v2085 = vld [vmem:[%s2064 + $0xa0] sm:$0xff]
  %v2086 = vld [vmem:[%s2064 + $0xa8] sm:$0xff]
  %v2087 = vld [vmem:[%s2064 + $0xb0] sm:$0xff]
  %v2088 = vld [vmem:[%s2064 + $0xb8] sm:$0xff]
  %v2089 = vld [vmem:[%s2064 + $0xc0] sm:$0xff]
  %v2090 = vld [vmem:[%s2064 + $0xc8] sm:$0xff]
  %v2091 = vld [vmem:[%s2064 + $0xd0] sm:$0xff]
  %v2092 = vld [vmem:[%s2064 + $0xd8] sm:$0xff]
  %v2093 = vld [vmem:[%s2064 + $0xe0] sm:$0xff]
  %v2094 = vld [vmem:[%s2064 + $0xe8] sm:$0xff]
  %v2095 = vld [vmem:[%s2064 + $0xf0] sm:$0xff]
  %v2096 = vld [vmem:[%s2064 + $0xf8] sm:$0xff]
  %v2097 = vld [vmem:[%s2064 + $0x100] sm:$0xff]
  %v2098 = vld [vmem:[%s2064 + $0x108] sm:$0xff]
  %v2099 = vld [vmem:[%s2064 + $0x110] sm:$0xff]
  %v2100 = vld [vmem:[%s2064 + $0x118] sm:$0xff]
  %v2101 = vld [vmem:[%s2064 + $0x120] sm:$0xff]
  %v2102 = vld [vmem:[%s2064 + $0x128] sm:$0xff]
  %v2103 = vld [vmem:[%s2064 + $0x130] sm:$0xff]
  %v2104 = vld [vmem:[%s2064 + $0x138] sm:$0xff]
  %v2105 = vld [vmem:[%s2064 + $0x140] sm:$0xff]
  %v2106 = vld [vmem:[%s2064 + $0x148] sm:$0xff]
  %v2107 = vld [vmem:[%s2064 + $0x150] sm:$0xff]
  %v2108 = vld [vmem:[%s2064 + $0x158] sm:$0xff]
  %v2109 = vld [vmem:[%s2064 + $0x160] sm:$0xff]
  %v2110 = vld [vmem:[%s2064 + $0x168] sm:$0xff]
  %v2111 = vld [vmem:[%s2064 + $0x170] sm:$0xff]
  %v2112 = vld [vmem:[%s2064 + $0x178] sm:$0xff]
  %v2113 = vld [vmem:[%s2064 + $0x180] sm:$0xff]
  %v2114 = vld [vmem:[%s2064 + $0x188] sm:$0xff]
  %v2115 = vld [vmem:[%s2064 + $0x190] sm:$0xff]
  %v2116 = vld [vmem:[%s2064 + $0x198] sm:$0xff]
  %v2117 = vld [vmem:[%s2064 + $0x1a0] sm:$0xff]
  %v2118 = vld [vmem:[%s2064 + $0x1a8] sm:$0xff]
  %v2119 = vld [vmem:[%s2064 + $0x1b0] sm:$0xff]
  %v2120 = vld [vmem:[%s2064 + $0x1b8] sm:$0xff]
  %v2121 = vld [vmem:[%s2064 + $0x1c0] sm:$0xff]
  %v2122 = vld [vmem:[%s2064 + $0x1c8] sm:$0xff]
  %v2123 = vld [vmem:[%s2064 + $0x1d0] sm:$0xff]
  %v2124 = vld [vmem:[%s2064 + $0x1d8] sm:$0xff]
  %v2125 = vld [vmem:[%s2064 + $0x1e0] sm:$0xff]
  %v2126 = vld [vmem:[%s2064 + $0x1e8] sm:$0xff]
  %v2127 = vld [vmem:[%s2064 + $0x1f0] sm:$0xff]
  %v2128 = vld [vmem:[%s2064 + $0x1f8] sm:$0xff]
  %2129 = vmatpush.msra.mxu0 %v680
  %2130 = vmatpush.msra.mxu0 %v679
  %2131 = vmatpush.msra.mxu0 %v678
  %2132 = vmatpush.msra.mxu0 %v677
  %2133 = vmatpush.msra.mxu0 %v676
  %2134 = vmatpush.msra.mxu0 %v675
  %2135 = vmatpush.msra.mxu0 %v674
  %2136 = vmatpush.msra.mxu0 %v673
  %2137 = vmatpush.msra.mxu0 %v672
  %2138 = vmatpush.msra.mxu0 %v671
  %2139 = vmatpush.msra.mxu0 %v670
  %2140 = vmatpush.msra.mxu0 %v669
  %2141 = vmatpush.msra.mxu0 %v668
  %2142 = vmatpush.msra.mxu0 %v667
  %2143 = vmatpush.msra.mxu0 %v666
  %2144 = vmatpush.msra.mxu0 %v665
  %2145 = vmatmul.f32.gmra.mxu0 %v2065
  %v2146 = vpop.f32.mrf.mxu0
  %v2147 = vadd.f32 0.0, %v2146
  %2148 = vmatmul.f32.gmra.mxu0 %v2069
  %v2149 = vpop.f32.mrf.mxu0
  %v2150 = vadd.f32 0.0, %v2149
  %2151 = vmatmul.f32.gmra.mxu0 %v2073
  %v2152 = vpop.f32.mrf.mxu0
  %v2153 = vadd.f32 0.0, %v2152
  %2154 = vmatmul.f32.gmra.mxu0 %v2077
  %v2155 = vpop.f32.mrf.mxu0
  %v2156 = vadd.f32 0.0, %v2155
  %2157 = vmatmul.f32.gmra.mxu0 %v2081
  %v2158 = vpop.f32.mrf.mxu0
  %v2159 = vadd.f32 0.0, %v2158
  %2160 = vmatmul.f32.gmra.mxu0 %v2085
  %v2161 = vpop.f32.mrf.mxu0
  %v2162 = vadd.f32 0.0, %v2161
  %2163 = vmatmul.f32.gmra.mxu0 %v2089
  %v2164 = vpop.f32.mrf.mxu0
  %v2165 = vadd.f32 0.0, %v2164
  %2166 = vmatmul.f32.gmra.mxu0 %v2093
  %v2167 = vpop.f32.mrf.mxu0
  %v2168 = vadd.f32 0.0, %v2167
  %2169 = vmatmul.f32.gmra.mxu0 %v2097
  %v2170 = vpop.f32.mrf.mxu0
  %v2171 = vadd.f32 0.0, %v2170
  %2172 = vmatmul.f32.gmra.mxu0 %v2101
  %v2173 = vpop.f32.mrf.mxu0
  %v2174 = vadd.f32 0.0, %v2173
  %2175 = vmatmul.f32.gmra.mxu0 %v2105
  %v2176 = vpop.f32.mrf.mxu0
  %v2177 = vadd.f32 0.0, %v2176
  %2178 = vmatmul.f32.gmra.mxu0 %v2109
  %v2179 = vpop.f32.mrf.mxu0
  %v2180 = vadd.f32 0.0, %v2179
  %2181 = vmatmul.f32.gmra.mxu0 %v2113
  %v2182 = vpop.f32.mrf.mxu0
  %v2183 = vadd.f32 0.0, %v2182
  %2184 = vmatmul.f32.gmra.mxu0 %v2117
  %v2185 = vpop.f32.mrf.mxu0
  %v2186 = vadd.f32 0.0, %v2185
  %2187 = vmatmul.f32.gmra.mxu0 %v2121
  %v2188 = vpop.f32.mrf.mxu0
  %v2189 = vadd.f32 0.0, %v2188
  %2190 = vmatmul.f32.gmra.mxu0 %v2125
  %v2191 = vpop.f32.mrf.mxu0
  %v2192 = vadd.f32 0.0, %v2191
  %2193 = vdwg.mxu0
  %2194 = vmatpush.msra.mxu0 %v696
  %2195 = vmatpush.msra.mxu0 %v695
  %2196 = vmatpush.msra.mxu0 %v694
  %2197 = vmatpush.msra.mxu0 %v693
  %2198 = vmatpush.msra.mxu0 %v692
  %2199 = vmatpush.msra.mxu0 %v691
  %2200 = vmatpush.msra.mxu0 %v690
  %2201 = vmatpush.msra.mxu0 %v689
  %2202 = vmatpush.msra.mxu0 %v688
  %2203 = vmatpush.msra.mxu0 %v687
  %2204 = vmatpush.msra.mxu0 %v686
  %2205 = vmatpush.msra.mxu0 %v685
  %2206 = vmatpush.msra.mxu0 %v684
  %2207 = vmatpush.msra.mxu0 %v683
  %2208 = vmatpush.msra.mxu0 %v682
  %2209 = vmatpush.msra.mxu0 %v681
  %2210 = vmatmul.f32.gmra.mxu0 %v2066
  %v2211 = vpop.f32.mrf.mxu0
  %v2212 = vadd.f32 %v2147, %v2211
  %2213 = vmatmul.f32.gmra.mxu0 %v2070
  %v2214 = vpop.f32.mrf.mxu0
  %v2215 = vadd.f32 %v2150, %v2214
  %2216 = vmatmul.f32.gmra.mxu0 %v2074
  %v2217 = vpop.f32.mrf.mxu0
  %v2218 = vadd.f32 %v2153, %v2217
  %2219 = vmatmul.f32.gmra.mxu0 %v2078
  %v2220 = vpop.f32.mrf.mxu0
  %v2221 = vadd.f32 %v2156, %v2220
  %2222 = vmatmul.f32.gmra.mxu0 %v2082
  %v2223 = vpop.f32.mrf.mxu0
  %v2224 = vadd.f32 %v2159, %v2223
  %2225 = vmatmul.f32.gmra.mxu0 %v2086
  %v2226 = vpop.f32.mrf.mxu0
  %v2227 = vadd.f32 %v2162, %v2226
  %2228 = vmatmul.f32.gmra.mxu0 %v2090
  %v2229 = vpop.f32.mrf.mxu0
  %v2230 = vadd.f32 %v2165, %v2229
  %2231 = vmatmul.f32.gmra.mxu0 %v2094
  %v2232 = vpop.f32.mrf.mxu0
  %v2233 = vadd.f32 %v2168, %v2232
  %2234 = vmatmul.f32.gmra.mxu0 %v2098
  %v2235 = vpop.f32.mrf.mxu0
  %v2236 = vadd.f32 %v2171, %v2235
  %2237 = vmatmul.f32.gmra.mxu0 %v2102
  %v2238 = vpop.f32.mrf.mxu0
  %v2239 = vadd.f32 %v2174, %v2238
  %2240 = vmatmul.f32.gmra.mxu0 %v2106
  %v2241 = vpop.f32.mrf.mxu0
  %v2242 = vadd.f32 %v2177, %v2241
  %2243 = vmatmul.f32.gmra.mxu0 %v2110
  %v2244 = vpop.f32.mrf.mxu0
  %v2245 = vadd.f32 %v2180, %v2244
  %2246 = vmatmul.f32.gmra.mxu0 %v2114
  %v2247 = vpop.f32.mrf.mxu0
  %v2248 = vadd.f32 %v2183, %v2247
  %2249 = vmatmul.f32.gmra.mxu0 %v2118
  %v2250 = vpop.f32.mrf.mxu0
  %v2251 = vadd.f32 %v2186, %v2250
  %2252 = vmatmul.f32.gmra.mxu0 %v2122
  %v2253 = vpop.f32.mrf.mxu0
  %v2254 = vadd.f32 %v2189, %v2253
  %2255 = vmatmul.f32.gmra.mxu0 %v2126
  %v2256 = vpop.f32.mrf.mxu0
  %v2257 = vadd.f32 %v2192, %v2256
  %2258 = vdwg.mxu0
  %2259 = vmatpush.msra.mxu0 %v712
  %2260 = vmatpush.msra.mxu0 %v711
  %2261 = vmatpush.msra.mxu0 %v710
  %2262 = vmatpush.msra.mxu0 %v709
  %2263 = vmatpush.msra.mxu0 %v708
  %2264 = vmatpush.msra.mxu0 %v707
  %2265 = vmatpush.msra.mxu0 %v706
  %2266 = vmatpush.msra.mxu0 %v705
  %2267 = vmatpush.msra.mxu0 %v704
  %2268 = vmatpush.msra.mxu0 %v703
  %2269 = vmatpush.msra.mxu0 %v702
  %2270 = vmatpush.msra.mxu0 %v701
  %2271 = vmatpush.msra.mxu0 %v700
  %2272 = vmatpush.msra.mxu0 %v699
  %2273 = vmatpush.msra.mxu0 %v698
  %2274 = vmatpush.msra.mxu0 %v697
  %2275 = vmatmul.f32.gmra.mxu0 %v2067
  %v2276 = vpop.f32.mrf.mxu0
  %v2277 = vadd.f32 %v2212, %v2276
  %2278 = vmatmul.f32.gmra.mxu0 %v2071
  %v2279 = vpop.f32.mrf.mxu0
  %v2280 = vadd.f32 %v2215, %v2279
  %2281 = vmatmul.f32.gmra.mxu0 %v2075
  %v2282 = vpop.f32.mrf.mxu0
  %v2283 = vadd.f32 %v2218, %v2282
  %2284 = vmatmul.f32.gmra.mxu0 %v2079
  %v2285 = vpop.f32.mrf.mxu0
  %v2286 = vadd.f32 %v2221, %v2285
  %2287 = vmatmul.f32.gmra.mxu0 %v2083
  %v2288 = vpop.f32.mrf.mxu0
  %v2289 = vadd.f32 %v2224, %v2288
  %2290 = vmatmul.f32.gmra.mxu0 %v2087
  %v2291 = vpop.f32.mrf.mxu0
  %v2292 = vadd.f32 %v2227, %v2291
  %2293 = vmatmul.f32.gmra.mxu0 %v2091
  %v2294 = vpop.f32.mrf.mxu0
  %v2295 = vadd.f32 %v2230, %v2294
  %2296 = vmatmul.f32.gmra.mxu0 %v2095
  %v2297 = vpop.f32.mrf.mxu0
  %v2298 = vadd.f32 %v2233, %v2297
  %2299 = vmatmul.f32.gmra.mxu0 %v2099
  %v2300 = vpop.f32.mrf.mxu0
  %v2301 = vadd.f32 %v2236, %v2300
  %2302 = vmatmul.f32.gmra.mxu0 %v2103
  %v2303 = vpop.f32.mrf.mxu0
  %v2304 = vadd.f32 %v2239, %v2303
  %2305 = vmatmul.f32.gmra.mxu0 %v2107
  %v2306 = vpop.f32.mrf.mxu0
  %v2307 = vadd.f32 %v2242, %v2306
  %2308 = vmatmul.f32.gmra.mxu0 %v2111
  %v2309 = vpop.f32.mrf.mxu0
  %v2310 = vadd.f32 %v2245, %v2309
  %2311 = vmatmul.f32.gmra.mxu0 %v2115
  %v2312 = vpop.f32.mrf.mxu0
  %v2313 = vadd.f32 %v2248, %v2312
  %2314 = vmatmul.f32.gmra.mxu0 %v2119
  %v2315 = vpop.f32.mrf.mxu0
  %v2316 = vadd.f32 %v2251, %v2315
  %2317 = vmatmul.f32.gmra.mxu0 %v2123
  %v2318 = vpop.f32.mrf.mxu0
  %v2319 = vadd.f32 %v2254, %v2318
  %2320 = vmatmul.f32.gmra.mxu0 %v2127
  %v2321 = vpop.f32.mrf.mxu0
  %v2322 = vadd.f32 %v2257, %v2321
  %2323 = vdwg.mxu0
  %2324 = vmatpush.msra.mxu0 %v728
  %2325 = vmatpush.msra.mxu0 %v727
  %2326 = vmatpush.msra.mxu0 %v726
  %2327 = vmatpush.msra.mxu0 %v725
  %2328 = vmatpush.msra.mxu0 %v724
  %2329 = vmatpush.msra.mxu0 %v723
  %2330 = vmatpush.msra.mxu0 %v722
  %2331 = vmatpush.msra.mxu0 %v721
  %2332 = vmatpush.msra.mxu0 %v720
  %2333 = vmatpush.msra.mxu0 %v719
  %2334 = vmatpush.msra.mxu0 %v718
  %2335 = vmatpush.msra.mxu0 %v717
  %2336 = vmatpush.msra.mxu0 %v716
  %2337 = vmatpush.msra.mxu0 %v715
  %2338 = vmatpush.msra.mxu0 %v714
  %2339 = vmatpush.msra.mxu0 %v713
  %2340 = vmatmul.f32.gmra.mxu0 %v2068
  %v2341 = vpop.f32.mrf.mxu0
  %v2342 = vadd.f32 %v2277, %v2341
  %2343 = vmatmul.f32.gmra.mxu0 %v2072
  %v2344 = vpop.f32.mrf.mxu0
  %v2345 = vadd.f32 %v2280, %v2344
  %2346 = vmatmul.f32.gmra.mxu0 %v2076
  %v2347 = vpop.f32.mrf.mxu0
  %v2348 = vadd.f32 %v2283, %v2347
  %2349 = vmatmul.f32.gmra.mxu0 %v2080
  %v2350 = vpop.f32.mrf.mxu0
  %v2351 = vadd.f32 %v2286, %v2350
  %2352 = vmatmul.f32.gmra.mxu0 %v2084
  %v2353 = vpop.f32.mrf.mxu0
  %v2354 = vadd.f32 %v2289, %v2353
  %2355 = vmatmul.f32.gmra.mxu0 %v2088
  %v2356 = vpop.f32.mrf.mxu0
  %v2357 = vadd.f32 %v2292, %v2356
  %2358 = vmatmul.f32.gmra.mxu0 %v2092
  %v2359 = vpop.f32.mrf.mxu0
  %v2360 = vadd.f32 %v2295, %v2359
  %2361 = vmatmul.f32.gmra.mxu0 %v2096
  %v2362 = vpop.f32.mrf.mxu0
  %v2363 = vadd.f32 %v2298, %v2362
  %2364 = vmatmul.f32.gmra.mxu0 %v2100
  %v2365 = vpop.f32.mrf.mxu0
  %v2366 = vadd.f32 %v2301, %v2365
  %2367 = vmatmul.f32.gmra.mxu0 %v2104
  %v2368 = vpop.f32.mrf.mxu0
  %v2369 = vadd.f32 %v2304, %v2368
  %2370 = vmatmul.f32.gmra.mxu0 %v2108
  %v2371 = vpop.f32.mrf.mxu0
  %v2372 = vadd.f32 %v2307, %v2371
  %2373 = vmatmul.f32.gmra.mxu0 %v2112
  %v2374 = vpop.f32.mrf.mxu0
  %v2375 = vadd.f32 %v2310, %v2374
  %2376 = vmatmul.f32.gmra.mxu0 %v2116
  %v2377 = vpop.f32.mrf.mxu0
  %v2378 = vadd.f32 %v2313, %v2377
  %2379 = vmatmul.f32.gmra.mxu0 %v2120
  %v2380 = vpop.f32.mrf.mxu0
  %v2381 = vadd.f32 %v2316, %v2380
  %2382 = vmatmul.f32.gmra.mxu0 %v2124
  %v2383 = vpop.f32.mrf.mxu0
  %v2384 = vadd.f32 %v2319, %v2383
  %2385 = vmatmul.f32.gmra.mxu0 %v2128
  %v2386 = vpop.f32.mrf.mxu0
  %v2387 = vadd.f32 %v2322, %v2386
  %2388 = vdwg.mxu0
  %s2389 = scalar_lea.vmem %s4, 24
  %v2390 = vld [vmem:[%s2389] sm:$0xff]
  %v2392 = vsel %vm1381, %v2342, 0
  %v2395 = vsel %vm1381, %v2345, 0
  %v2398 = vsel %vm1381, %v2348, 0
  %v2401 = vsel %vm1381, %v2351, 0
  %v2404 = vsel %vm1381, %v2354, 0
  %v2407 = vsel %vm1381, %v2357, 0
  %v2410 = vsel %vm1381, %v2360, 0
  %v2413 = vsel %vm1381, %v2363, 0
  %v2416 = vsel %vm1381, %v2366, 0
  %v2419 = vsel %vm1381, %v2369, 0
  %v2422 = vsel %vm1381, %v2372, 0
  %v2425 = vsel %vm1381, %v2375, 0
  %v2428 = vsel %vm1381, %v2378, 0
  %v2431 = vsel %vm1381, %v2381, 0
  %v2434 = vsel %vm1381, %v2384, 0
  %v2437 = vsel %vm1381, %v2387, 0
  %2439 = vmatpush.msra.mxu0 0.0
  %2440 = vmatpush.msra.mxu0 0.0
  %2441 = vmatpush.msra.mxu0 0.0
  %2442 = vmatpush.msra.mxu0 0.0
  %2443 = vmatpush.msra.mxu0 0.0
  %2444 = vmatpush.msra.mxu0 0.0
  %2445 = vmatpush.msra.mxu0 0.0
  %2446 = vmatpush.msra.mxu0 0.0
  %2447 = vmatpush.msra.mxu0 0.0
  %2448 = vmatpush.msra.mxu0 0.0
  %2449 = vmatpush.msra.mxu0 0.0
  %2450 = vmatpush.msra.mxu0 0.0
  %2451 = vmatpush.msra.mxu0 0.0
  %2452 = vmatpush.msra.mxu0 0.0
  %2453 = vmatpush.msra.mxu0 0.0
  %2454 = vmatpush.msra.mxu0 %v2390
  %2455 = vmatmul.f32.gmra.mxu0 %v2392
  %v2456 = vpop.f32.mrf.mxu0
  %v2457 = vadd.f32 0.0, %v2456
  %2458 = vmatmul.f32.gmra.mxu0 %v2395
  %v2459 = vpop.f32.mrf.mxu0
  %v2460 = vadd.f32 0.0, %v2459
  %2461 = vmatmul.f32.gmra.mxu0 %v2398
  %v2462 = vpop.f32.mrf.mxu0
  %v2463 = vadd.f32 0.0, %v2462
  %2464 = vmatmul.f32.gmra.mxu0 %v2401
  %v2465 = vpop.f32.mrf.mxu0
  %v2466 = vadd.f32 0.0, %v2465
  %2467 = vmatmul.f32.gmra.mxu0 %v2404
  %v2468 = vpop.f32.mrf.mxu0
  %v2469 = vadd.f32 0.0, %v2468
  %2470 = vmatmul.f32.gmra.mxu0 %v2407
  %v2471 = vpop.f32.mrf.mxu0
  %v2472 = vadd.f32 0.0, %v2471
  %2473 = vmatmul.f32.gmra.mxu0 %v2410
  %v2474 = vpop.f32.mrf.mxu0
  %v2475 = vadd.f32 0.0, %v2474
  %2476 = vmatmul.f32.gmra.mxu0 %v2413
  %v2477 = vpop.f32.mrf.mxu0
  %v2478 = vadd.f32 0.0, %v2477
  %2479 = vmatmul.f32.gmra.mxu0 %v2416
  %v2480 = vpop.f32.mrf.mxu0
  %v2481 = vadd.f32 0.0, %v2480
  %2482 = vmatmul.f32.gmra.mxu0 %v2419
  %v2483 = vpop.f32.mrf.mxu0
  %v2484 = vadd.f32 0.0, %v2483
  %2485 = vmatmul.f32.gmra.mxu0 %v2422
  %v2486 = vpop.f32.mrf.mxu0
  %v2487 = vadd.f32 0.0, %v2486
  %2488 = vmatmul.f32.gmra.mxu0 %v2425
  %v2489 = vpop.f32.mrf.mxu0
  %v2490 = vadd.f32 0.0, %v2489
  %2491 = vmatmul.f32.gmra.mxu0 %v2428
  %v2492 = vpop.f32.mrf.mxu0
  %v2493 = vadd.f32 0.0, %v2492
  %2494 = vmatmul.f32.gmra.mxu0 %v2431
  %v2495 = vpop.f32.mrf.mxu0
  %v2496 = vadd.f32 0.0, %v2495
  %2497 = vmatmul.f32.gmra.mxu0 %v2434
  %v2498 = vpop.f32.mrf.mxu0
  %v2499 = vadd.f32 0.0, %v2498
  %2500 = vmatmul.f32.gmra.mxu0 %v2437
  %v2501 = vpop.f32.mrf.mxu0
  %v2502 = vadd.f32 0.0, %v2501
  %2503 = vdwg.mxu0
  %v2504 = vadd.f32 %v2048, %v2457
  %v2505 = vadd.f32 %v2049, %v2460
  %v2506 = vadd.f32 %v2050, %v2463
  %v2507 = vadd.f32 %v2051, %v2466
  %v2508 = vadd.f32 %v2052, %v2469
  %v2509 = vadd.f32 %v2053, %v2472
  %v2510 = vadd.f32 %v2054, %v2475
  %v2511 = vadd.f32 %v2055, %v2478
  %v2512 = vadd.f32 %v2056, %v2481
  %v2513 = vadd.f32 %v2057, %v2484
  %v2514 = vadd.f32 %v2058, %v2487
  %v2515 = vadd.f32 %v2059, %v2490
  %v2516 = vadd.f32 %v2060, %v2493
  %v2517 = vadd.f32 %v2061, %v2496
  %v2518 = vadd.f32 %v2062, %v2499
  %v2519 = vadd.f32 %v2063, %v2502
  %s2520 = scalar_lea.vmem %s3, 2048
  %v2521 = vld [vmem:[%s2520] sm:$0xff]
  %v2522 = vld [vmem:[%s2520 + $0x8] sm:$0xff]
  %v2523 = vld [vmem:[%s2520 + $0x10] sm:$0xff]
  %v2524 = vld [vmem:[%s2520 + $0x18] sm:$0xff]
  %v2525 = vld [vmem:[%s2520 + $0x20] sm:$0xff]
  %v2526 = vld [vmem:[%s2520 + $0x28] sm:$0xff]
  %v2527 = vld [vmem:[%s2520 + $0x30] sm:$0xff]
  %v2528 = vld [vmem:[%s2520 + $0x38] sm:$0xff]
  %v2529 = vld [vmem:[%s2520 + $0x40] sm:$0xff]
  %v2530 = vld [vmem:[%s2520 + $0x48] sm:$0xff]
  %v2531 = vld [vmem:[%s2520 + $0x50] sm:$0xff]
  %v2532 = vld [vmem:[%s2520 + $0x58] sm:$0xff]
  %v2533 = vld [vmem:[%s2520 + $0x60] sm:$0xff]
  %v2534 = vld [vmem:[%s2520 + $0x68] sm:$0xff]
  %v2535 = vld [vmem:[%s2520 + $0x70] sm:$0xff]
  %v2536 = vld [vmem:[%s2520 + $0x78] sm:$0xff]
  %v2537 = vld [vmem:[%s2520 + $0x80] sm:$0xff]
  %v2538 = vld [vmem:[%s2520 + $0x88] sm:$0xff]
  %v2539 = vld [vmem:[%s2520 + $0x90] sm:$0xff]
  %v2540 = vld [vmem:[%s2520 + $0x98] sm:$0xff]
  %v2541 = vld [vmem:[%s2520 + $0xa0] sm:$0xff]
  %v2542 = vld [vmem:[%s2520 + $0xa8] sm:$0xff]
  %v2543 = vld [vmem:[%s2520 + $0xb0] sm:$0xff]
  %v2544 = vld [vmem:[%s2520 + $0xb8] sm:$0xff]
  %v2545 = vld [vmem:[%s2520 + $0xc0] sm:$0xff]
  %v2546 = vld [vmem:[%s2520 + $0xc8] sm:$0xff]
  %v2547 = vld [vmem:[%s2520 + $0xd0] sm:$0xff]
  %v2548 = vld [vmem:[%s2520 + $0xd8] sm:$0xff]
  %v2549 = vld [vmem:[%s2520 + $0xe0] sm:$0xff]
  %v2550 = vld [vmem:[%s2520 + $0xe8] sm:$0xff]
  %v2551 = vld [vmem:[%s2520 + $0xf0] sm:$0xff]
  %v2552 = vld [vmem:[%s2520 + $0xf8] sm:$0xff]
  %v2553 = vld [vmem:[%s2520 + $0x100] sm:$0xff]
  %v2554 = vld [vmem:[%s2520 + $0x108] sm:$0xff]
  %v2555 = vld [vmem:[%s2520 + $0x110] sm:$0xff]
  %v2556 = vld [vmem:[%s2520 + $0x118] sm:$0xff]
  %v2557 = vld [vmem:[%s2520 + $0x120] sm:$0xff]
  %v2558 = vld [vmem:[%s2520 + $0x128] sm:$0xff]
  %v2559 = vld [vmem:[%s2520 + $0x130] sm:$0xff]
  %v2560 = vld [vmem:[%s2520 + $0x138] sm:$0xff]
  %v2561 = vld [vmem:[%s2520 + $0x140] sm:$0xff]
  %v2562 = vld [vmem:[%s2520 + $0x148] sm:$0xff]
  %v2563 = vld [vmem:[%s2520 + $0x150] sm:$0xff]
  %v2564 = vld [vmem:[%s2520 + $0x158] sm:$0xff]
  %v2565 = vld [vmem:[%s2520 + $0x160] sm:$0xff]
  %v2566 = vld [vmem:[%s2520 + $0x168] sm:$0xff]
  %v2567 = vld [vmem:[%s2520 + $0x170] sm:$0xff]
  %v2568 = vld [vmem:[%s2520 + $0x178] sm:$0xff]
  %v2569 = vld [vmem:[%s2520 + $0x180] sm:$0xff]
  %v2570 = vld [vmem:[%s2520 + $0x188] sm:$0xff]
  %v2571 = vld [vmem:[%s2520 + $0x190] sm:$0xff]
  %v2572 = vld [vmem:[%s2520 + $0x198] sm:$0xff]
  %v2573 = vld [vmem:[%s2520 + $0x1a0] sm:$0xff]
  %v2574 = vld [vmem:[%s2520 + $0x1a8] sm:$0xff]
  %v2575 = vld [vmem:[%s2520 + $0x1b0] sm:$0xff]
  %v2576 = vld [vmem:[%s2520 + $0x1b8] sm:$0xff]
  %v2577 = vld [vmem:[%s2520 + $0x1c0] sm:$0xff]
  %v2578 = vld [vmem:[%s2520 + $0x1c8] sm:$0xff]
  %v2579 = vld [vmem:[%s2520 + $0x1d0] sm:$0xff]
  %v2580 = vld [vmem:[%s2520 + $0x1d8] sm:$0xff]
  %v2581 = vld [vmem:[%s2520 + $0x1e0] sm:$0xff]
  %v2582 = vld [vmem:[%s2520 + $0x1e8] sm:$0xff]
  %v2583 = vld [vmem:[%s2520 + $0x1f0] sm:$0xff]
  %v2584 = vld [vmem:[%s2520 + $0x1f8] sm:$0xff]
  %2585 = vmatpush.msra.mxu0 %v680
  %2586 = vmatpush.msra.mxu0 %v679
  %2587 = vmatpush.msra.mxu0 %v678
  %2588 = vmatpush.msra.mxu0 %v677
  %2589 = vmatpush.msra.mxu0 %v676
  %2590 = vmatpush.msra.mxu0 %v675
  %2591 = vmatpush.msra.mxu0 %v674
  %2592 = vmatpush.msra.mxu0 %v673
  %2593 = vmatpush.msra.mxu0 %v672
  %2594 = vmatpush.msra.mxu0 %v671
  %2595 = vmatpush.msra.mxu0 %v670
  %2596 = vmatpush.msra.mxu0 %v669
  %2597 = vmatpush.msra.mxu0 %v668
  %2598 = vmatpush.msra.mxu0 %v667
  %2599 = vmatpush.msra.mxu0 %v666
  %2600 = vmatpush.msra.mxu0 %v665
  %2601 = vmatmul.f32.gmra.mxu0 %v2521
  %v2602 = vpop.f32.mrf.mxu0
  %v2603 = vadd.f32 0.0, %v2602
  %2604 = vmatmul.f32.gmra.mxu0 %v2525
  %v2605 = vpop.f32.mrf.mxu0
  %v2606 = vadd.f32 0.0, %v2605
  %2607 = vmatmul.f32.gmra.mxu0 %v2529
  %v2608 = vpop.f32.mrf.mxu0
  %v2609 = vadd.f32 0.0, %v2608
  %2610 = vmatmul.f32.gmra.mxu0 %v2533
  %v2611 = vpop.f32.mrf.mxu0
  %v2612 = vadd.f32 0.0, %v2611
  %2613 = vmatmul.f32.gmra.mxu0 %v2537
  %v2614 = vpop.f32.mrf.mxu0
  %v2615 = vadd.f32 0.0, %v2614
  %2616 = vmatmul.f32.gmra.mxu0 %v2541
  %v2617 = vpop.f32.mrf.mxu0
  %v2618 = vadd.f32 0.0, %v2617
  %2619 = vmatmul.f32.gmra.mxu0 %v2545
  %v2620 = vpop.f32.mrf.mxu0
  %v2621 = vadd.f32 0.0, %v2620
  %2622 = vmatmul.f32.gmra.mxu0 %v2549
  %v2623 = vpop.f32.mrf.mxu0
  %v2624 = vadd.f32 0.0, %v2623
  %2625 = vmatmul.f32.gmra.mxu0 %v2553
  %v2626 = vpop.f32.mrf.mxu0
  %v2627 = vadd.f32 0.0, %v2626
  %2628 = vmatmul.f32.gmra.mxu0 %v2557
  %v2629 = vpop.f32.mrf.mxu0
  %v2630 = vadd.f32 0.0, %v2629
  %2631 = vmatmul.f32.gmra.mxu0 %v2561
  %v2632 = vpop.f32.mrf.mxu0
  %v2633 = vadd.f32 0.0, %v2632
  %2634 = vmatmul.f32.gmra.mxu0 %v2565
  %v2635 = vpop.f32.mrf.mxu0
  %v2636 = vadd.f32 0.0, %v2635
  %2637 = vmatmul.f32.gmra.mxu0 %v2569
  %v2638 = vpop.f32.mrf.mxu0
  %v2639 = vadd.f32 0.0, %v2638
  %2640 = vmatmul.f32.gmra.mxu0 %v2573
  %v2641 = vpop.f32.mrf.mxu0
  %v2642 = vadd.f32 0.0, %v2641
  %2643 = vmatmul.f32.gmra.mxu0 %v2577
  %v2644 = vpop.f32.mrf.mxu0
  %v2645 = vadd.f32 0.0, %v2644
  %2646 = vmatmul.f32.gmra.mxu0 %v2581
  %v2647 = vpop.f32.mrf.mxu0
  %v2648 = vadd.f32 0.0, %v2647
  %2649 = vdwg.mxu0
  %2650 = vmatpush.msra.mxu0 %v696
  %2651 = vmatpush.msra.mxu0 %v695
  %2652 = vmatpush.msra.mxu0 %v694
  %2653 = vmatpush.msra.mxu0 %v693
  %2654 = vmatpush.msra.mxu0 %v692
  %2655 = vmatpush.msra.mxu0 %v691
  %2656 = vmatpush.msra.mxu0 %v690
  %2657 = vmatpush.msra.mxu0 %v689
  %2658 = vmatpush.msra.mxu0 %v688
  %2659 = vmatpush.msra.mxu0 %v687
  %2660 = vmatpush.msra.mxu0 %v686
  %2661 = vmatpush.msra.mxu0 %v685
  %2662 = vmatpush.msra.mxu0 %v684
  %2663 = vmatpush.msra.mxu0 %v683
  %2664 = vmatpush.msra.mxu0 %v682
  %2665 = vmatpush.msra.mxu0 %v681
  %2666 = vmatmul.f32.gmra.mxu0 %v2522
  %v2667 = vpop.f32.mrf.mxu0
  %v2668 = vadd.f32 %v2603, %v2667
  %2669 = vmatmul.f32.gmra.mxu0 %v2526
  %v2670 = vpop.f32.mrf.mxu0
  %v2671 = vadd.f32 %v2606, %v2670
  %2672 = vmatmul.f32.gmra.mxu0 %v2530
  %v2673 = vpop.f32.mrf.mxu0
  %v2674 = vadd.f32 %v2609, %v2673
  %2675 = vmatmul.f32.gmra.mxu0 %v2534
  %v2676 = vpop.f32.mrf.mxu0
  %v2677 = vadd.f32 %v2612, %v2676
  %2678 = vmatmul.f32.gmra.mxu0 %v2538
  %v2679 = vpop.f32.mrf.mxu0
  %v2680 = vadd.f32 %v2615, %v2679
  %2681 = vmatmul.f32.gmra.mxu0 %v2542
  %v2682 = vpop.f32.mrf.mxu0
  %v2683 = vadd.f32 %v2618, %v2682
  %2684 = vmatmul.f32.gmra.mxu0 %v2546
  %v2685 = vpop.f32.mrf.mxu0
  %v2686 = vadd.f32 %v2621, %v2685
  %2687 = vmatmul.f32.gmra.mxu0 %v2550
  %v2688 = vpop.f32.mrf.mxu0
  %v2689 = vadd.f32 %v2624, %v2688
  %2690 = vmatmul.f32.gmra.mxu0 %v2554
  %v2691 = vpop.f32.mrf.mxu0
  %v2692 = vadd.f32 %v2627, %v2691
  %2693 = vmatmul.f32.gmra.mxu0 %v2558
  %v2694 = vpop.f32.mrf.mxu0
  %v2695 = vadd.f32 %v2630, %v2694
  %2696 = vmatmul.f32.gmra.mxu0 %v2562
  %v2697 = vpop.f32.mrf.mxu0
  %v2698 = vadd.f32 %v2633, %v2697
  %2699 = vmatmul.f32.gmra.mxu0 %v2566
  %v2700 = vpop.f32.mrf.mxu0
  %v2701 = vadd.f32 %v2636, %v2700
  %2702 = vmatmul.f32.gmra.mxu0 %v2570
  %v2703 = vpop.f32.mrf.mxu0
  %v2704 = vadd.f32 %v2639, %v2703
  %2705 = vmatmul.f32.gmra.mxu0 %v2574
  %v2706 = vpop.f32.mrf.mxu0
  %v2707 = vadd.f32 %v2642, %v2706
  %2708 = vmatmul.f32.gmra.mxu0 %v2578
  %v2709 = vpop.f32.mrf.mxu0
  %v2710 = vadd.f32 %v2645, %v2709
  %2711 = vmatmul.f32.gmra.mxu0 %v2582
  %v2712 = vpop.f32.mrf.mxu0
  %v2713 = vadd.f32 %v2648, %v2712
  %2714 = vdwg.mxu0
  %2715 = vmatpush.msra.mxu0 %v712
  %2716 = vmatpush.msra.mxu0 %v711
  %2717 = vmatpush.msra.mxu0 %v710
  %2718 = vmatpush.msra.mxu0 %v709
  %2719 = vmatpush.msra.mxu0 %v708
  %2720 = vmatpush.msra.mxu0 %v707
  %2721 = vmatpush.msra.mxu0 %v706
  %2722 = vmatpush.msra.mxu0 %v705
  %2723 = vmatpush.msra.mxu0 %v704
  %2724 = vmatpush.msra.mxu0 %v703
  %2725 = vmatpush.msra.mxu0 %v702
  %2726 = vmatpush.msra.mxu0 %v701
  %2727 = vmatpush.msra.mxu0 %v700
  %2728 = vmatpush.msra.mxu0 %v699
  %2729 = vmatpush.msra.mxu0 %v698
  %2730 = vmatpush.msra.mxu0 %v697
  %2731 = vmatmul.f32.gmra.mxu0 %v2523
  %v2732 = vpop.f32.mrf.mxu0
  %v2733 = vadd.f32 %v2668, %v2732
  %2734 = vmatmul.f32.gmra.mxu0 %v2527
  %v2735 = vpop.f32.mrf.mxu0
  %v2736 = vadd.f32 %v2671, %v2735
  %2737 = vmatmul.f32.gmra.mxu0 %v2531
  %v2738 = vpop.f32.mrf.mxu0
  %v2739 = vadd.f32 %v2674, %v2738
  %2740 = vmatmul.f32.gmra.mxu0 %v2535
  %v2741 = vpop.f32.mrf.mxu0
  %v2742 = vadd.f32 %v2677, %v2741
  %2743 = vmatmul.f32.gmra.mxu0 %v2539
  %v2744 = vpop.f32.mrf.mxu0
  %v2745 = vadd.f32 %v2680, %v2744
  %2746 = vmatmul.f32.gmra.mxu0 %v2543
  %v2747 = vpop.f32.mrf.mxu0
  %v2748 = vadd.f32 %v2683, %v2747
  %2749 = vmatmul.f32.gmra.mxu0 %v2547
  %v2750 = vpop.f32.mrf.mxu0
  %v2751 = vadd.f32 %v2686, %v2750
  %2752 = vmatmul.f32.gmra.mxu0 %v2551
  %v2753 = vpop.f32.mrf.mxu0
  %v2754 = vadd.f32 %v2689, %v2753
  %2755 = vmatmul.f32.gmra.mxu0 %v2555
  %v2756 = vpop.f32.mrf.mxu0
  %v2757 = vadd.f32 %v2692, %v2756
  %2758 = vmatmul.f32.gmra.mxu0 %v2559
  %v2759 = vpop.f32.mrf.mxu0
  %v2760 = vadd.f32 %v2695, %v2759
  %2761 = vmatmul.f32.gmra.mxu0 %v2563
  %v2762 = vpop.f32.mrf.mxu0
  %v2763 = vadd.f32 %v2698, %v2762
  %2764 = vmatmul.f32.gmra.mxu0 %v2567
  %v2765 = vpop.f32.mrf.mxu0
  %v2766 = vadd.f32 %v2701, %v2765
  %2767 = vmatmul.f32.gmra.mxu0 %v2571
  %v2768 = vpop.f32.mrf.mxu0
  %v2769 = vadd.f32 %v2704, %v2768
  %2770 = vmatmul.f32.gmra.mxu0 %v2575
  %v2771 = vpop.f32.mrf.mxu0
  %v2772 = vadd.f32 %v2707, %v2771
  %2773 = vmatmul.f32.gmra.mxu0 %v2579
  %v2774 = vpop.f32.mrf.mxu0
  %v2775 = vadd.f32 %v2710, %v2774
  %2776 = vmatmul.f32.gmra.mxu0 %v2583
  %v2777 = vpop.f32.mrf.mxu0
  %v2778 = vadd.f32 %v2713, %v2777
  %2779 = vdwg.mxu0
  %2780 = vmatpush.msra.mxu0 %v728
  %2781 = vmatpush.msra.mxu0 %v727
  %2782 = vmatpush.msra.mxu0 %v726
  %2783 = vmatpush.msra.mxu0 %v725
  %2784 = vmatpush.msra.mxu0 %v724
  %2785 = vmatpush.msra.mxu0 %v723
  %2786 = vmatpush.msra.mxu0 %v722
  %2787 = vmatpush.msra.mxu0 %v721
  %2788 = vmatpush.msra.mxu0 %v720
  %2789 = vmatpush.msra.mxu0 %v719
  %2790 = vmatpush.msra.mxu0 %v718
  %2791 = vmatpush.msra.mxu0 %v717
  %2792 = vmatpush.msra.mxu0 %v716
  %2793 = vmatpush.msra.mxu0 %v715
  %2794 = vmatpush.msra.mxu0 %v714
  %2795 = vmatpush.msra.mxu0 %v713
  %2796 = vmatmul.f32.gmra.mxu0 %v2524
  %v2797 = vpop.f32.mrf.mxu0
  %v2798 = vadd.f32 %v2733, %v2797
  %2799 = vmatmul.f32.gmra.mxu0 %v2528
  %v2800 = vpop.f32.mrf.mxu0
  %v2801 = vadd.f32 %v2736, %v2800
  %2802 = vmatmul.f32.gmra.mxu0 %v2532
  %v2803 = vpop.f32.mrf.mxu0
  %v2804 = vadd.f32 %v2739, %v2803
  %2805 = vmatmul.f32.gmra.mxu0 %v2536
  %v2806 = vpop.f32.mrf.mxu0
  %v2807 = vadd.f32 %v2742, %v2806
  %2808 = vmatmul.f32.gmra.mxu0 %v2540
  %v2809 = vpop.f32.mrf.mxu0
  %v2810 = vadd.f32 %v2745, %v2809
  %2811 = vmatmul.f32.gmra.mxu0 %v2544
  %v2812 = vpop.f32.mrf.mxu0
  %v2813 = vadd.f32 %v2748, %v2812
  %2814 = vmatmul.f32.gmra.mxu0 %v2548
  %v2815 = vpop.f32.mrf.mxu0
  %v2816 = vadd.f32 %v2751, %v2815
  %2817 = vmatmul.f32.gmra.mxu0 %v2552
  %v2818 = vpop.f32.mrf.mxu0
  %v2819 = vadd.f32 %v2754, %v2818
  %2820 = vmatmul.f32.gmra.mxu0 %v2556
  %v2821 = vpop.f32.mrf.mxu0
  %v2822 = vadd.f32 %v2757, %v2821
  %2823 = vmatmul.f32.gmra.mxu0 %v2560
  %v2824 = vpop.f32.mrf.mxu0
  %v2825 = vadd.f32 %v2760, %v2824
  %2826 = vmatmul.f32.gmra.mxu0 %v2564
  %v2827 = vpop.f32.mrf.mxu0
  %v2828 = vadd.f32 %v2763, %v2827
  %2829 = vmatmul.f32.gmra.mxu0 %v2568
  %v2830 = vpop.f32.mrf.mxu0
  %v2831 = vadd.f32 %v2766, %v2830
  %2832 = vmatmul.f32.gmra.mxu0 %v2572
  %v2833 = vpop.f32.mrf.mxu0
  %v2834 = vadd.f32 %v2769, %v2833
  %2835 = vmatmul.f32.gmra.mxu0 %v2576
  %v2836 = vpop.f32.mrf.mxu0
  %v2837 = vadd.f32 %v2772, %v2836
  %2838 = vmatmul.f32.gmra.mxu0 %v2580
  %v2839 = vpop.f32.mrf.mxu0
  %v2840 = vadd.f32 %v2775, %v2839
  %2841 = vmatmul.f32.gmra.mxu0 %v2584
  %v2842 = vpop.f32.mrf.mxu0
  %v2843 = vadd.f32 %v2778, %v2842
  %2844 = vdwg.mxu0
  %s2845 = scalar_lea.vmem %s4, 32
  %v2846 = vld [vmem:[%s2845] sm:$0xff]
  %v2848 = vsel %vm1381, %v2798, 0
  %v2851 = vsel %vm1381, %v2801, 0
  %v2854 = vsel %vm1381, %v2804, 0
  %v2857 = vsel %vm1381, %v2807, 0
  %v2860 = vsel %vm1381, %v2810, 0
  %v2863 = vsel %vm1381, %v2813, 0
  %v2866 = vsel %vm1381, %v2816, 0
  %v2869 = vsel %vm1381, %v2819, 0
  %v2872 = vsel %vm1381, %v2822, 0
  %v2875 = vsel %vm1381, %v2825, 0
  %v2878 = vsel %vm1381, %v2828, 0
  %v2881 = vsel %vm1381, %v2831, 0
  %v2884 = vsel %vm1381, %v2834, 0
  %v2887 = vsel %vm1381, %v2837, 0
  %v2890 = vsel %vm1381, %v2840, 0
  %v2893 = vsel %vm1381, %v2843, 0
  %2895 = vmatpush.msra.mxu0 0.0
  %2896 = vmatpush.msra.mxu0 0.0
  %2897 = vmatpush.msra.mxu0 0.0
  %2898 = vmatpush.msra.mxu0 0.0
  %2899 = vmatpush.msra.mxu0 0.0
  %2900 = vmatpush.msra.mxu0 0.0
  %2901 = vmatpush.msra.mxu0 0.0
  %2902 = vmatpush.msra.mxu0 0.0
  %2903 = vmatpush.msra.mxu0 0.0
  %2904 = vmatpush.msra.mxu0 0.0
  %2905 = vmatpush.msra.mxu0 0.0
  %2906 = vmatpush.msra.mxu0 0.0
  %2907 = vmatpush.msra.mxu0 0.0
  %2908 = vmatpush.msra.mxu0 0.0
  %2909 = vmatpush.msra.mxu0 0.0
  %2910 = vmatpush.msra.mxu0 %v2846
  %2911 = vmatmul.f32.gmra.mxu0 %v2848
  %v2912 = vpop.f32.mrf.mxu0
  %v2913 = vadd.f32 0.0, %v2912
  %2914 = vmatmul.f32.gmra.mxu0 %v2851
  %v2915 = vpop.f32.mrf.mxu0
  %v2916 = vadd.f32 0.0, %v2915
  %2917 = vmatmul.f32.gmra.mxu0 %v2854
  %v2918 = vpop.f32.mrf.mxu0
  %v2919 = vadd.f32 0.0, %v2918
  %2920 = vmatmul.f32.gmra.mxu0 %v2857
  %v2921 = vpop.f32.mrf.mxu0
  %v2922 = vadd.f32 0.0, %v2921
  %2923 = vmatmul.f32.gmra.mxu0 %v2860
  %v2924 = vpop.f32.mrf.mxu0
  %v2925 = vadd.f32 0.0, %v2924
  %2926 = vmatmul.f32.gmra.mxu0 %v2863
  %v2927 = vpop.f32.mrf.mxu0
  %v2928 = vadd.f32 0.0, %v2927
  %2929 = vmatmul.f32.gmra.mxu0 %v2866
  %v2930 = vpop.f32.mrf.mxu0
  %v2931 = vadd.f32 0.0, %v2930
  %2932 = vmatmul.f32.gmra.mxu0 %v2869
  %v2933 = vpop.f32.mrf.mxu0
  %v2934 = vadd.f32 0.0, %v2933
  %2935 = vmatmul.f32.gmra.mxu0 %v2872
  %v2936 = vpop.f32.mrf.mxu0
  %v2937 = vadd.f32 0.0, %v2936
  %2938 = vmatmul.f32.gmra.mxu0 %v2875
  %v2939 = vpop.f32.mrf.mxu0
  %v2940 = vadd.f32 0.0, %v2939
  %2941 = vmatmul.f32.gmra.mxu0 %v2878
  %v2942 = vpop.f32.mrf.mxu0
  %v2943 = vadd.f32 0.0, %v2942
  %2944 = vmatmul.f32.gmra.mxu0 %v2881
  %v2945 = vpop.f32.mrf.mxu0
  %v2946 = vadd.f32 0.0, %v2945
  %2947 = vmatmul.f32.gmra.mxu0 %v2884
  %v2948 = vpop.f32.mrf.mxu0
  %v2949 = vadd.f32 0.0, %v2948
  %2950 = vmatmul.f32.gmra.mxu0 %v2887
  %v2951 = vpop.f32.mrf.mxu0
  %v2952 = vadd.f32 0.0, %v2951
  %2953 = vmatmul.f32.gmra.mxu0 %v2890
  %v2954 = vpop.f32.mrf.mxu0
  %v2955 = vadd.f32 0.0, %v2954
  %2956 = vmatmul.f32.gmra.mxu0 %v2893
  %v2957 = vpop.f32.mrf.mxu0
  %v2958 = vadd.f32 0.0, %v2957
  %2959 = vdwg.mxu0
  %v2960 = vadd.f32 %v2504, %v2913
  %v2961 = vadd.f32 %v2505, %v2916
  %v2962 = vadd.f32 %v2506, %v2919
  %v2963 = vadd.f32 %v2507, %v2922
  %v2964 = vadd.f32 %v2508, %v2925
  %v2965 = vadd.f32 %v2509, %v2928
  %v2966 = vadd.f32 %v2510, %v2931
  %v2967 = vadd.f32 %v2511, %v2934
  %v2968 = vadd.f32 %v2512, %v2937
  %v2969 = vadd.f32 %v2513, %v2940
  %v2970 = vadd.f32 %v2514, %v2943
  %v2971 = vadd.f32 %v2515, %v2946
  %v2972 = vadd.f32 %v2516, %v2949
  %v2973 = vadd.f32 %v2517, %v2952
  %v2974 = vadd.f32 %v2518, %v2955
  %v2975 = vadd.f32 %v2519, %v2958
  %s2976 = scalar_lea.vmem %s3, 2560
  %v2977 = vld [vmem:[%s2976] sm:$0xff]
  %v2978 = vld [vmem:[%s2976 + $0x8] sm:$0xff]
  %v2979 = vld [vmem:[%s2976 + $0x10] sm:$0xff]
  %v2980 = vld [vmem:[%s2976 + $0x18] sm:$0xff]
  %v2981 = vld [vmem:[%s2976 + $0x20] sm:$0xff]
  %v2982 = vld [vmem:[%s2976 + $0x28] sm:$0xff]
  %v2983 = vld [vmem:[%s2976 + $0x30] sm:$0xff]
  %v2984 = vld [vmem:[%s2976 + $0x38] sm:$0xff]
  %v2985 = vld [vmem:[%s2976 + $0x40] sm:$0xff]
  %v2986 = vld [vmem:[%s2976 + $0x48] sm:$0xff]
  %v2987 = vld [vmem:[%s2976 + $0x50] sm:$0xff]
  %v2988 = vld [vmem:[%s2976 + $0x58] sm:$0xff]
  %v2989 = vld [vmem:[%s2976 + $0x60] sm:$0xff]
  %v2990 = vld [vmem:[%s2976 + $0x68] sm:$0xff]
  %v2991 = vld [vmem:[%s2976 + $0x70] sm:$0xff]
  %v2992 = vld [vmem:[%s2976 + $0x78] sm:$0xff]
  %v2993 = vld [vmem:[%s2976 + $0x80] sm:$0xff]
  %v2994 = vld [vmem:[%s2976 + $0x88] sm:$0xff]
  %v2995 = vld [vmem:[%s2976 + $0x90] sm:$0xff]
  %v2996 = vld [vmem:[%s2976 + $0x98] sm:$0xff]
  %v2997 = vld [vmem:[%s2976 + $0xa0] sm:$0xff]
  %v2998 = vld [vmem:[%s2976 + $0xa8] sm:$0xff]
  %v2999 = vld [vmem:[%s2976 + $0xb0] sm:$0xff]
  %v3000 = vld [vmem:[%s2976 + $0xb8] sm:$0xff]
  %v3001 = vld [vmem:[%s2976 + $0xc0] sm:$0xff]
  %v3002 = vld [vmem:[%s2976 + $0xc8] sm:$0xff]
  %v3003 = vld [vmem:[%s2976 + $0xd0] sm:$0xff]
  %v3004 = vld [vmem:[%s2976 + $0xd8] sm:$0xff]
  %v3005 = vld [vmem:[%s2976 + $0xe0] sm:$0xff]
  %v3006 = vld [vmem:[%s2976 + $0xe8] sm:$0xff]
  %v3007 = vld [vmem:[%s2976 + $0xf0] sm:$0xff]
  %v3008 = vld [vmem:[%s2976 + $0xf8] sm:$0xff]
  %v3009 = vld [vmem:[%s2976 + $0x100] sm:$0xff]
  %v3010 = vld [vmem:[%s2976 + $0x108] sm:$0xff]
  %v3011 = vld [vmem:[%s2976 + $0x110] sm:$0xff]
  %v3012 = vld [vmem:[%s2976 + $0x118] sm:$0xff]
  %v3013 = vld [vmem:[%s2976 + $0x120] sm:$0xff]
  %v3014 = vld [vmem:[%s2976 + $0x128] sm:$0xff]
  %v3015 = vld [vmem:[%s2976 + $0x130] sm:$0xff]
  %v3016 = vld [vmem:[%s2976 + $0x138] sm:$0xff]
  %v3017 = vld [vmem:[%s2976 + $0x140] sm:$0xff]
  %v3018 = vld [vmem:[%s2976 + $0x148] sm:$0xff]
  %v3019 = vld [vmem:[%s2976 + $0x150] sm:$0xff]
  %v3020 = vld [vmem:[%s2976 + $0x158] sm:$0xff]
  %v3021 = vld [vmem:[%s2976 + $0x160] sm:$0xff]
  %v3022 = vld [vmem:[%s2976 + $0x168] sm:$0xff]
  %v3023 = vld [vmem:[%s2976 + $0x170] sm:$0xff]
  %v3024 = vld [vmem:[%s2976 + $0x178] sm:$0xff]
  %v3025 = vld [vmem:[%s2976 + $0x180] sm:$0xff]
  %v3026 = vld [vmem:[%s2976 + $0x188] sm:$0xff]
  %v3027 = vld [vmem:[%s2976 + $0x190] sm:$0xff]
  %v3028 = vld [vmem:[%s2976 + $0x198] sm:$0xff]
  %v3029 = vld [vmem:[%s2976 + $0x1a0] sm:$0xff]
  %v3030 = vld [vmem:[%s2976 + $0x1a8] sm:$0xff]
  %v3031 = vld [vmem:[%s2976 + $0x1b0] sm:$0xff]
  %v3032 = vld [vmem:[%s2976 + $0x1b8] sm:$0xff]
  %v3033 = vld [vmem:[%s2976 + $0x1c0] sm:$0xff]
  %v3034 = vld [vmem:[%s2976 + $0x1c8] sm:$0xff]
  %v3035 = vld [vmem:[%s2976 + $0x1d0] sm:$0xff]
  %v3036 = vld [vmem:[%s2976 + $0x1d8] sm:$0xff]
  %v3037 = vld [vmem:[%s2976 + $0x1e0] sm:$0xff]
  %v3038 = vld [vmem:[%s2976 + $0x1e8] sm:$0xff]
  %v3039 = vld [vmem:[%s2976 + $0x1f0] sm:$0xff]
  %v3040 = vld [vmem:[%s2976 + $0x1f8] sm:$0xff]
  %3041 = vmatpush.msra.mxu0 %v680
  %3042 = vmatpush.msra.mxu0 %v679
  %3043 = vmatpush.msra.mxu0 %v678
  %3044 = vmatpush.msra.mxu0 %v677
  %3045 = vmatpush.msra.mxu0 %v676
  %3046 = vmatpush.msra.mxu0 %v675
  %3047 = vmatpush.msra.mxu0 %v674
  %3048 = vmatpush.msra.mxu0 %v673
  %3049 = vmatpush.msra.mxu0 %v672
  %3050 = vmatpush.msra.mxu0 %v671
  %3051 = vmatpush.msra.mxu0 %v670
  %3052 = vmatpush.msra.mxu0 %v669
  %3053 = vmatpush.msra.mxu0 %v668
  %3054 = vmatpush.msra.mxu0 %v667
  %3055 = vmatpush.msra.mxu0 %v666
  %3056 = vmatpush.msra.mxu0 %v665
  %3057 = vmatmul.f32.gmra.mxu0 %v2977
  %v3058 = vpop.f32.mrf.mxu0
  %v3059 = vadd.f32 0.0, %v3058
  %3060 = vmatmul.f32.gmra.mxu0 %v2981
  %v3061 = vpop.f32.mrf.mxu0
  %v3062 = vadd.f32 0.0, %v3061
  %3063 = vmatmul.f32.gmra.mxu0 %v2985
  %v3064 = vpop.f32.mrf.mxu0
  %v3065 = vadd.f32 0.0, %v3064
  %3066 = vmatmul.f32.gmra.mxu0 %v2989
  %v3067 = vpop.f32.mrf.mxu0
  %v3068 = vadd.f32 0.0, %v3067
  %3069 = vmatmul.f32.gmra.mxu0 %v2993
  %v3070 = vpop.f32.mrf.mxu0
  %v3071 = vadd.f32 0.0, %v3070
  %3072 = vmatmul.f32.gmra.mxu0 %v2997
  %v3073 = vpop.f32.mrf.mxu0
  %v3074 = vadd.f32 0.0, %v3073
  %3075 = vmatmul.f32.gmra.mxu0 %v3001
  %v3076 = vpop.f32.mrf.mxu0
  %v3077 = vadd.f32 0.0, %v3076
  %3078 = vmatmul.f32.gmra.mxu0 %v3005
  %v3079 = vpop.f32.mrf.mxu0
  %v3080 = vadd.f32 0.0, %v3079
  %3081 = vmatmul.f32.gmra.mxu0 %v3009
  %v3082 = vpop.f32.mrf.mxu0
  %v3083 = vadd.f32 0.0, %v3082
  %3084 = vmatmul.f32.gmra.mxu0 %v3013
  %v3085 = vpop.f32.mrf.mxu0
  %v3086 = vadd.f32 0.0, %v3085
  %3087 = vmatmul.f32.gmra.mxu0 %v3017
  %v3088 = vpop.f32.mrf.mxu0
  %v3089 = vadd.f32 0.0, %v3088
  %3090 = vmatmul.f32.gmra.mxu0 %v3021
  %v3091 = vpop.f32.mrf.mxu0
  %v3092 = vadd.f32 0.0, %v3091
  %3093 = vmatmul.f32.gmra.mxu0 %v3025
  %v3094 = vpop.f32.mrf.mxu0
  %v3095 = vadd.f32 0.0, %v3094
  %3096 = vmatmul.f32.gmra.mxu0 %v3029
  %v3097 = vpop.f32.mrf.mxu0
  %v3098 = vadd.f32 0.0, %v3097
  %3099 = vmatmul.f32.gmra.mxu0 %v3033
  %v3100 = vpop.f32.mrf.mxu0
  %v3101 = vadd.f32 0.0, %v3100
  %3102 = vmatmul.f32.gmra.mxu0 %v3037
  %v3103 = vpop.f32.mrf.mxu0
  %v3104 = vadd.f32 0.0, %v3103
  %3105 = vdwg.mxu0
  %3106 = vmatpush.msra.mxu0 %v696
  %3107 = vmatpush.msra.mxu0 %v695
  %3108 = vmatpush.msra.mxu0 %v694
  %3109 = vmatpush.msra.mxu0 %v693
  %3110 = vmatpush.msra.mxu0 %v692
  %3111 = vmatpush.msra.mxu0 %v691
  %3112 = vmatpush.msra.mxu0 %v690
  %3113 = vmatpush.msra.mxu0 %v689
  %3114 = vmatpush.msra.mxu0 %v688
  %3115 = vmatpush.msra.mxu0 %v687
  %3116 = vmatpush.msra.mxu0 %v686
  %3117 = vmatpush.msra.mxu0 %v685
  %3118 = vmatpush.msra.mxu0 %v684
  %3119 = vmatpush.msra.mxu0 %v683
  %3120 = vmatpush.msra.mxu0 %v682
  %3121 = vmatpush.msra.mxu0 %v681
  %3122 = vmatmul.f32.gmra.mxu0 %v2978
  %v3123 = vpop.f32.mrf.mxu0
  %v3124 = vadd.f32 %v3059, %v3123
  %3125 = vmatmul.f32.gmra.mxu0 %v2982
  %v3126 = vpop.f32.mrf.mxu0
  %v3127 = vadd.f32 %v3062, %v3126
  %3128 = vmatmul.f32.gmra.mxu0 %v2986
  %v3129 = vpop.f32.mrf.mxu0
  %v3130 = vadd.f32 %v3065, %v3129
  %3131 = vmatmul.f32.gmra.mxu0 %v2990
  %v3132 = vpop.f32.mrf.mxu0
  %v3133 = vadd.f32 %v3068, %v3132
  %3134 = vmatmul.f32.gmra.mxu0 %v2994
  %v3135 = vpop.f32.mrf.mxu0
  %v3136 = vadd.f32 %v3071, %v3135
  %3137 = vmatmul.f32.gmra.mxu0 %v2998
  %v3138 = vpop.f32.mrf.mxu0
  %v3139 = vadd.f32 %v3074, %v3138
  %3140 = vmatmul.f32.gmra.mxu0 %v3002
  %v3141 = vpop.f32.mrf.mxu0
  %v3142 = vadd.f32 %v3077, %v3141
  %3143 = vmatmul.f32.gmra.mxu0 %v3006
  %v3144 = vpop.f32.mrf.mxu0
  %v3145 = vadd.f32 %v3080, %v3144
  %3146 = vmatmul.f32.gmra.mxu0 %v3010
  %v3147 = vpop.f32.mrf.mxu0
  %v3148 = vadd.f32 %v3083, %v3147
  %3149 = vmatmul.f32.gmra.mxu0 %v3014
  %v3150 = vpop.f32.mrf.mxu0
  %v3151 = vadd.f32 %v3086, %v3150
  %3152 = vmatmul.f32.gmra.mxu0 %v3018
  %v3153 = vpop.f32.mrf.mxu0
  %v3154 = vadd.f32 %v3089, %v3153
  %3155 = vmatmul.f32.gmra.mxu0 %v3022
  %v3156 = vpop.f32.mrf.mxu0
  %v3157 = vadd.f32 %v3092, %v3156
  %3158 = vmatmul.f32.gmra.mxu0 %v3026
  %v3159 = vpop.f32.mrf.mxu0
  %v3160 = vadd.f32 %v3095, %v3159
  %3161 = vmatmul.f32.gmra.mxu0 %v3030
  %v3162 = vpop.f32.mrf.mxu0
  %v3163 = vadd.f32 %v3098, %v3162
  %3164 = vmatmul.f32.gmra.mxu0 %v3034
  %v3165 = vpop.f32.mrf.mxu0
  %v3166 = vadd.f32 %v3101, %v3165
  %3167 = vmatmul.f32.gmra.mxu0 %v3038
  %v3168 = vpop.f32.mrf.mxu0
  %v3169 = vadd.f32 %v3104, %v3168
  %3170 = vdwg.mxu0
  %3171 = vmatpush.msra.mxu0 %v712
  %3172 = vmatpush.msra.mxu0 %v711
  %3173 = vmatpush.msra.mxu0 %v710
  %3174 = vmatpush.msra.mxu0 %v709
  %3175 = vmatpush.msra.mxu0 %v708
  %3176 = vmatpush.msra.mxu0 %v707
  %3177 = vmatpush.msra.mxu0 %v706
  %3178 = vmatpush.msra.mxu0 %v705
  %3179 = vmatpush.msra.mxu0 %v704
  %3180 = vmatpush.msra.mxu0 %v703
  %3181 = vmatpush.msra.mxu0 %v702
  %3182 = vmatpush.msra.mxu0 %v701
  %3183 = vmatpush.msra.mxu0 %v700
  %3184 = vmatpush.msra.mxu0 %v699
  %3185 = vmatpush.msra.mxu0 %v698
  %3186 = vmatpush.msra.mxu0 %v697
  %3187 = vmatmul.f32.gmra.mxu0 %v2979
  %v3188 = vpop.f32.mrf.mxu0
  %v3189 = vadd.f32 %v3124, %v3188
  %3190 = vmatmul.f32.gmra.mxu0 %v2983
  %v3191 = vpop.f32.mrf.mxu0
  %v3192 = vadd.f32 %v3127, %v3191
  %3193 = vmatmul.f32.gmra.mxu0 %v2987
  %v3194 = vpop.f32.mrf.mxu0
  %v3195 = vadd.f32 %v3130, %v3194
  %3196 = vmatmul.f32.gmra.mxu0 %v2991
  %v3197 = vpop.f32.mrf.mxu0
  %v3198 = vadd.f32 %v3133, %v3197
  %3199 = vmatmul.f32.gmra.mxu0 %v2995
  %v3200 = vpop.f32.mrf.mxu0
  %v3201 = vadd.f32 %v3136, %v3200
  %3202 = vmatmul.f32.gmra.mxu0 %v2999
  %v3203 = vpop.f32.mrf.mxu0
  %v3204 = vadd.f32 %v3139, %v3203
  %3205 = vmatmul.f32.gmra.mxu0 %v3003
  %v3206 = vpop.f32.mrf.mxu0
  %v3207 = vadd.f32 %v3142, %v3206
  %3208 = vmatmul.f32.gmra.mxu0 %v3007
  %v3209 = vpop.f32.mrf.mxu0
  %v3210 = vadd.f32 %v3145, %v3209
  %3211 = vmatmul.f32.gmra.mxu0 %v3011
  %v3212 = vpop.f32.mrf.mxu0
  %v3213 = vadd.f32 %v3148, %v3212
  %3214 = vmatmul.f32.gmra.mxu0 %v3015
  %v3215 = vpop.f32.mrf.mxu0
  %v3216 = vadd.f32 %v3151, %v3215
  %3217 = vmatmul.f32.gmra.mxu0 %v3019
  %v3218 = vpop.f32.mrf.mxu0
  %v3219 = vadd.f32 %v3154, %v3218
  %3220 = vmatmul.f32.gmra.mxu0 %v3023
  %v3221 = vpop.f32.mrf.mxu0
  %v3222 = vadd.f32 %v3157, %v3221
  %3223 = vmatmul.f32.gmra.mxu0 %v3027
  %v3224 = vpop.f32.mrf.mxu0
  %v3225 = vadd.f32 %v3160, %v3224
  %3226 = vmatmul.f32.gmra.mxu0 %v3031
  %v3227 = vpop.f32.mrf.mxu0
  %v3228 = vadd.f32 %v3163, %v3227
  %3229 = vmatmul.f32.gmra.mxu0 %v3035
  %v3230 = vpop.f32.mrf.mxu0
  %v3231 = vadd.f32 %v3166, %v3230
  %3232 = vmatmul.f32.gmra.mxu0 %v3039
  %v3233 = vpop.f32.mrf.mxu0
  %v3234 = vadd.f32 %v3169, %v3233
  %3235 = vdwg.mxu0
  %3236 = vmatpush.msra.mxu0 %v728
  %3237 = vmatpush.msra.mxu0 %v727
  %3238 = vmatpush.msra.mxu0 %v726
  %3239 = vmatpush.msra.mxu0 %v725
  %3240 = vmatpush.msra.mxu0 %v724
  %3241 = vmatpush.msra.mxu0 %v723
  %3242 = vmatpush.msra.mxu0 %v722
  %3243 = vmatpush.msra.mxu0 %v721
  %3244 = vmatpush.msra.mxu0 %v720
  %3245 = vmatpush.msra.mxu0 %v719
  %3246 = vmatpush.msra.mxu0 %v718
  %3247 = vmatpush.msra.mxu0 %v717
  %3248 = vmatpush.msra.mxu0 %v716
  %3249 = vmatpush.msra.mxu0 %v715
  %3250 = vmatpush.msra.mxu0 %v714
  %3251 = vmatpush.msra.mxu0 %v713
  %3252 = vmatmul.f32.gmra.mxu0 %v2980
  %v3253 = vpop.f32.mrf.mxu0
  %v3254 = vadd.f32 %v3189, %v3253
  %3255 = vmatmul.f32.gmra.mxu0 %v2984
  %v3256 = vpop.f32.mrf.mxu0
  %v3257 = vadd.f32 %v3192, %v3256
  %3258 = vmatmul.f32.gmra.mxu0 %v2988
  %v3259 = vpop.f32.mrf.mxu0
  %v3260 = vadd.f32 %v3195, %v3259
  %3261 = vmatmul.f32.gmra.mxu0 %v2992
  %v3262 = vpop.f32.mrf.mxu0
  %v3263 = vadd.f32 %v3198, %v3262
  %3264 = vmatmul.f32.gmra.mxu0 %v2996
  %v3265 = vpop.f32.mrf.mxu0
  %v3266 = vadd.f32 %v3201, %v3265
  %3267 = vmatmul.f32.gmra.mxu0 %v3000
  %v3268 = vpop.f32.mrf.mxu0
  %v3269 = vadd.f32 %v3204, %v3268
  %3270 = vmatmul.f32.gmra.mxu0 %v3004
  %v3271 = vpop.f32.mrf.mxu0
  %v3272 = vadd.f32 %v3207, %v3271
  %3273 = vmatmul.f32.gmra.mxu0 %v3008
  %v3274 = vpop.f32.mrf.mxu0
  %v3275 = vadd.f32 %v3210, %v3274
  %3276 = vmatmul.f32.gmra.mxu0 %v3012
  %v3277 = vpop.f32.mrf.mxu0
  %v3278 = vadd.f32 %v3213, %v3277
  %3279 = vmatmul.f32.gmra.mxu0 %v3016
  %v3280 = vpop.f32.mrf.mxu0
  %v3281 = vadd.f32 %v3216, %v3280
  %3282 = vmatmul.f32.gmra.mxu0 %v3020
  %v3283 = vpop.f32.mrf.mxu0
  %v3284 = vadd.f32 %v3219, %v3283
  %3285 = vmatmul.f32.gmra.mxu0 %v3024
  %v3286 = vpop.f32.mrf.mxu0
  %v3287 = vadd.f32 %v3222, %v3286
  %3288 = vmatmul.f32.gmra.mxu0 %v3028
  %v3289 = vpop.f32.mrf.mxu0
  %v3290 = vadd.f32 %v3225, %v3289
  %3291 = vmatmul.f32.gmra.mxu0 %v3032
  %v3292 = vpop.f32.mrf.mxu0
  %v3293 = vadd.f32 %v3228, %v3292
  %3294 = vmatmul.f32.gmra.mxu0 %v3036
  %v3295 = vpop.f32.mrf.mxu0
  %v3296 = vadd.f32 %v3231, %v3295
  %3297 = vmatmul.f32.gmra.mxu0 %v3040
  %v3298 = vpop.f32.mrf.mxu0
  %v3299 = vadd.f32 %v3234, %v3298
  %3300 = vdwg.mxu0
  %s3301 = scalar_lea.vmem %s4, 40
  %v3302 = vld [vmem:[%s3301] sm:$0xff]
  %v3304 = vsel %vm1381, %v3254, 0
  %v3307 = vsel %vm1381, %v3257, 0
  %v3310 = vsel %vm1381, %v3260, 0
  %v3313 = vsel %vm1381, %v3263, 0
  %v3316 = vsel %vm1381, %v3266, 0
  %v3319 = vsel %vm1381, %v3269, 0
  %v3322 = vsel %vm1381, %v3272, 0
  %v3325 = vsel %vm1381, %v3275, 0
  %v3328 = vsel %vm1381, %v3278, 0
  %v3331 = vsel %vm1381, %v3281, 0
  %v3334 = vsel %vm1381, %v3284, 0
  %v3337 = vsel %vm1381, %v3287, 0
  %v3340 = vsel %vm1381, %v3290, 0
  %v3343 = vsel %vm1381, %v3293, 0
  %v3346 = vsel %vm1381, %v3296, 0
  %v3349 = vsel %vm1381, %v3299, 0
  %3351 = vmatpush.msra.mxu0 0.0
  %3352 = vmatpush.msra.mxu0 0.0
  %3353 = vmatpush.msra.mxu0 0.0
  %3354 = vmatpush.msra.mxu0 0.0
  %3355 = vmatpush.msra.mxu0 0.0
  %3356 = vmatpush.msra.mxu0 0.0
  %3357 = vmatpush.msra.mxu0 0.0
  %3358 = vmatpush.msra.mxu0 0.0
  %3359 = vmatpush.msra.mxu0 0.0
  %3360 = vmatpush.msra.mxu0 0.0
  %3361 = vmatpush.msra.mxu0 0.0
  %3362 = vmatpush.msra.mxu0 0.0
  %3363 = vmatpush.msra.mxu0 0.0
  %3364 = vmatpush.msra.mxu0 0.0
  %3365 = vmatpush.msra.mxu0 0.0
  %3366 = vmatpush.msra.mxu0 %v3302
  %3367 = vmatmul.f32.gmra.mxu0 %v3304
  %v3368 = vpop.f32.mrf.mxu0
  %v3369 = vadd.f32 0.0, %v3368
  %3370 = vmatmul.f32.gmra.mxu0 %v3307
  %v3371 = vpop.f32.mrf.mxu0
  %v3372 = vadd.f32 0.0, %v3371
  %3373 = vmatmul.f32.gmra.mxu0 %v3310
  %v3374 = vpop.f32.mrf.mxu0
  %v3375 = vadd.f32 0.0, %v3374
  %3376 = vmatmul.f32.gmra.mxu0 %v3313
  %v3377 = vpop.f32.mrf.mxu0
  %v3378 = vadd.f32 0.0, %v3377
  %3379 = vmatmul.f32.gmra.mxu0 %v3316
  %v3380 = vpop.f32.mrf.mxu0
  %v3381 = vadd.f32 0.0, %v3380
  %3382 = vmatmul.f32.gmra.mxu0 %v3319
  %v3383 = vpop.f32.mrf.mxu0
  %v3384 = vadd.f32 0.0, %v3383
  %3385 = vmatmul.f32.gmra.mxu0 %v3322
  %v3386 = vpop.f32.mrf.mxu0
  %v3387 = vadd.f32 0.0, %v3386
  %3388 = vmatmul.f32.gmra.mxu0 %v3325
  %v3389 = vpop.f32.mrf.mxu0
  %v3390 = vadd.f32 0.0, %v3389
  %3391 = vmatmul.f32.gmra.mxu0 %v3328
  %v3392 = vpop.f32.mrf.mxu0
  %v3393 = vadd.f32 0.0, %v3392
  %3394 = vmatmul.f32.gmra.mxu0 %v3331
  %v3395 = vpop.f32.mrf.mxu0
  %v3396 = vadd.f32 0.0, %v3395
  %3397 = vmatmul.f32.gmra.mxu0 %v3334
  %v3398 = vpop.f32.mrf.mxu0
  %v3399 = vadd.f32 0.0, %v3398
  %3400 = vmatmul.f32.gmra.mxu0 %v3337
  %v3401 = vpop.f32.mrf.mxu0
  %v3402 = vadd.f32 0.0, %v3401
  %3403 = vmatmul.f32.gmra.mxu0 %v3340
  %v3404 = vpop.f32.mrf.mxu0
  %v3405 = vadd.f32 0.0, %v3404
  %3406 = vmatmul.f32.gmra.mxu0 %v3343
  %v3407 = vpop.f32.mrf.mxu0
  %v3408 = vadd.f32 0.0, %v3407
  %3409 = vmatmul.f32.gmra.mxu0 %v3346
  %v3410 = vpop.f32.mrf.mxu0
  %v3411 = vadd.f32 0.0, %v3410
  %3412 = vmatmul.f32.gmra.mxu0 %v3349
  %v3413 = vpop.f32.mrf.mxu0
  %v3414 = vadd.f32 0.0, %v3413
  %3415 = vdwg.mxu0
  %v3416 = vadd.f32 %v2960, %v3369
  %v3417 = vadd.f32 %v2961, %v3372
  %v3418 = vadd.f32 %v2962, %v3375
  %v3419 = vadd.f32 %v2963, %v3378
  %v3420 = vadd.f32 %v2964, %v3381
  %v3421 = vadd.f32 %v2965, %v3384
  %v3422 = vadd.f32 %v2966, %v3387
  %v3423 = vadd.f32 %v2967, %v3390
  %v3424 = vadd.f32 %v2968, %v3393
  %v3425 = vadd.f32 %v2969, %v3396
  %v3426 = vadd.f32 %v2970, %v3399
  %v3427 = vadd.f32 %v2971, %v3402
  %v3428 = vadd.f32 %v2972, %v3405
  %v3429 = vadd.f32 %v2973, %v3408
  %v3430 = vadd.f32 %v2974, %v3411
  %v3431 = vadd.f32 %v2975, %v3414
  %s3432 = scalar_lea.vmem %s3, 3072
  %v3433 = vld [vmem:[%s3432] sm:$0xff]
  %v3434 = vld [vmem:[%s3432 + $0x8] sm:$0xff]
  %v3435 = vld [vmem:[%s3432 + $0x10] sm:$0xff]
  %v3436 = vld [vmem:[%s3432 + $0x18] sm:$0xff]
  %v3437 = vld [vmem:[%s3432 + $0x20] sm:$0xff]
  %v3438 = vld [vmem:[%s3432 + $0x28] sm:$0xff]
  %v3439 = vld [vmem:[%s3432 + $0x30] sm:$0xff]
  %v3440 = vld [vmem:[%s3432 + $0x38] sm:$0xff]
  %v3441 = vld [vmem:[%s3432 + $0x40] sm:$0xff]
  %v3442 = vld [vmem:[%s3432 + $0x48] sm:$0xff]
  %v3443 = vld [vmem:[%s3432 + $0x50] sm:$0xff]
  %v3444 = vld [vmem:[%s3432 + $0x58] sm:$0xff]
  %v3445 = vld [vmem:[%s3432 + $0x60] sm:$0xff]
  %v3446 = vld [vmem:[%s3432 + $0x68] sm:$0xff]
  %v3447 = vld [vmem:[%s3432 + $0x70] sm:$0xff]
  %v3448 = vld [vmem:[%s3432 + $0x78] sm:$0xff]
  %v3449 = vld [vmem:[%s3432 + $0x80] sm:$0xff]
  %v3450 = vld [vmem:[%s3432 + $0x88] sm:$0xff]
  %v3451 = vld [vmem:[%s3432 + $0x90] sm:$0xff]
  %v3452 = vld [vmem:[%s3432 + $0x98] sm:$0xff]
  %v3453 = vld [vmem:[%s3432 + $0xa0] sm:$0xff]
  %v3454 = vld [vmem:[%s3432 + $0xa8] sm:$0xff]
  %v3455 = vld [vmem:[%s3432 + $0xb0] sm:$0xff]
  %v3456 = vld [vmem:[%s3432 + $0xb8] sm:$0xff]
  %v3457 = vld [vmem:[%s3432 + $0xc0] sm:$0xff]
  %v3458 = vld [vmem:[%s3432 + $0xc8] sm:$0xff]
  %v3459 = vld [vmem:[%s3432 + $0xd0] sm:$0xff]
  %v3460 = vld [vmem:[%s3432 + $0xd8] sm:$0xff]
  %v3461 = vld [vmem:[%s3432 + $0xe0] sm:$0xff]
  %v3462 = vld [vmem:[%s3432 + $0xe8] sm:$0xff]
  %v3463 = vld [vmem:[%s3432 + $0xf0] sm:$0xff]
  %v3464 = vld [vmem:[%s3432 + $0xf8] sm:$0xff]
  %v3465 = vld [vmem:[%s3432 + $0x100] sm:$0xff]
  %v3466 = vld [vmem:[%s3432 + $0x108] sm:$0xff]
  %v3467 = vld [vmem:[%s3432 + $0x110] sm:$0xff]
  %v3468 = vld [vmem:[%s3432 + $0x118] sm:$0xff]
  %v3469 = vld [vmem:[%s3432 + $0x120] sm:$0xff]
  %v3470 = vld [vmem:[%s3432 + $0x128] sm:$0xff]
  %v3471 = vld [vmem:[%s3432 + $0x130] sm:$0xff]
  %v3472 = vld [vmem:[%s3432 + $0x138] sm:$0xff]
  %v3473 = vld [vmem:[%s3432 + $0x140] sm:$0xff]
  %v3474 = vld [vmem:[%s3432 + $0x148] sm:$0xff]
  %v3475 = vld [vmem:[%s3432 + $0x150] sm:$0xff]
  %v3476 = vld [vmem:[%s3432 + $0x158] sm:$0xff]
  %v3477 = vld [vmem:[%s3432 + $0x160] sm:$0xff]
  %v3478 = vld [vmem:[%s3432 + $0x168] sm:$0xff]
  %v3479 = vld [vmem:[%s3432 + $0x170] sm:$0xff]
  %v3480 = vld [vmem:[%s3432 + $0x178] sm:$0xff]
  %v3481 = vld [vmem:[%s3432 + $0x180] sm:$0xff]
  %v3482 = vld [vmem:[%s3432 + $0x188] sm:$0xff]
  %v3483 = vld [vmem:[%s3432 + $0x190] sm:$0xff]
  %v3484 = vld [vmem:[%s3432 + $0x198] sm:$0xff]
  %v3485 = vld [vmem:[%s3432 + $0x1a0] sm:$0xff]
  %v3486 = vld [vmem:[%s3432 + $0x1a8] sm:$0xff]
  %v3487 = vld [vmem:[%s3432 + $0x1b0] sm:$0xff]
  %v3488 = vld [vmem:[%s3432 + $0x1b8] sm:$0xff]
  %v3489 = vld [vmem:[%s3432 + $0x1c0] sm:$0xff]
  %v3490 = vld [vmem:[%s3432 + $0x1c8] sm:$0xff]
  %v3491 = vld [vmem:[%s3432 + $0x1d0] sm:$0xff]
  %v3492 = vld [vmem:[%s3432 + $0x1d8] sm:$0xff]
  %v3493 = vld [vmem:[%s3432 + $0x1e0] sm:$0xff]
  %v3494 = vld [vmem:[%s3432 + $0x1e8] sm:$0xff]
  %v3495 = vld [vmem:[%s3432 + $0x1f0] sm:$0xff]
  %v3496 = vld [vmem:[%s3432 + $0x1f8] sm:$0xff]
  %3497 = vmatpush.msra.mxu0 %v680
  %3498 = vmatpush.msra.mxu0 %v679
  %3499 = vmatpush.msra.mxu0 %v678
  %3500 = vmatpush.msra.mxu0 %v677
  %3501 = vmatpush.msra.mxu0 %v676
  %3502 = vmatpush.msra.mxu0 %v675
  %3503 = vmatpush.msra.mxu0 %v674
  %3504 = vmatpush.msra.mxu0 %v673
  %3505 = vmatpush.msra.mxu0 %v672
  %3506 = vmatpush.msra.mxu0 %v671
  %3507 = vmatpush.msra.mxu0 %v670
  %3508 = vmatpush.msra.mxu0 %v669
  %3509 = vmatpush.msra.mxu0 %v668
  %3510 = vmatpush.msra.mxu0 %v667
  %3511 = vmatpush.msra.mxu0 %v666
  %3512 = vmatpush.msra.mxu0 %v665
  %3513 = vmatmul.f32.gmra.mxu0 %v3433
  %v3514 = vpop.f32.mrf.mxu0
  %v3515 = vadd.f32 0.0, %v3514
  %3516 = vmatmul.f32.gmra.mxu0 %v3437
  %v3517 = vpop.f32.mrf.mxu0
  %v3518 = vadd.f32 0.0, %v3517
  %3519 = vmatmul.f32.gmra.mxu0 %v3441
  %v3520 = vpop.f32.mrf.mxu0
  %v3521 = vadd.f32 0.0, %v3520
  %3522 = vmatmul.f32.gmra.mxu0 %v3445
  %v3523 = vpop.f32.mrf.mxu0
  %v3524 = vadd.f32 0.0, %v3523
  %3525 = vmatmul.f32.gmra.mxu0 %v3449
  %v3526 = vpop.f32.mrf.mxu0
  %v3527 = vadd.f32 0.0, %v3526
  %3528 = vmatmul.f32.gmra.mxu0 %v3453
  %v3529 = vpop.f32.mrf.mxu0
  %v3530 = vadd.f32 0.0, %v3529
  %3531 = vmatmul.f32.gmra.mxu0 %v3457
  %v3532 = vpop.f32.mrf.mxu0
  %v3533 = vadd.f32 0.0, %v3532
  %3534 = vmatmul.f32.gmra.mxu0 %v3461
  %v3535 = vpop.f32.mrf.mxu0
  %v3536 = vadd.f32 0.0, %v3535
  %3537 = vmatmul.f32.gmra.mxu0 %v3465
  %v3538 = vpop.f32.mrf.mxu0
  %v3539 = vadd.f32 0.0, %v3538
  %3540 = vmatmul.f32.gmra.mxu0 %v3469
  %v3541 = vpop.f32.mrf.mxu0
  %v3542 = vadd.f32 0.0, %v3541
  %3543 = vmatmul.f32.gmra.mxu0 %v3473
  %v3544 = vpop.f32.mrf.mxu0
  %v3545 = vadd.f32 0.0, %v3544
  %3546 = vmatmul.f32.gmra.mxu0 %v3477
  %v3547 = vpop.f32.mrf.mxu0
  %v3548 = vadd.f32 0.0, %v3547
  %3549 = vmatmul.f32.gmra.mxu0 %v3481
  %v3550 = vpop.f32.mrf.mxu0
  %v3551 = vadd.f32 0.0, %v3550
  %3552 = vmatmul.f32.gmra.mxu0 %v3485
  %v3553 = vpop.f32.mrf.mxu0
  %v3554 = vadd.f32 0.0, %v3553
  %3555 = vmatmul.f32.gmra.mxu0 %v3489
  %v3556 = vpop.f32.mrf.mxu0
  %v3557 = vadd.f32 0.0, %v3556
  %3558 = vmatmul.f32.gmra.mxu0 %v3493
  %v3559 = vpop.f32.mrf.mxu0
  %v3560 = vadd.f32 0.0, %v3559
  %3561 = vdwg.mxu0
  %3562 = vmatpush.msra.mxu0 %v696
  %3563 = vmatpush.msra.mxu0 %v695
  %3564 = vmatpush.msra.mxu0 %v694
  %3565 = vmatpush.msra.mxu0 %v693
  %3566 = vmatpush.msra.mxu0 %v692
  %3567 = vmatpush.msra.mxu0 %v691
  %3568 = vmatpush.msra.mxu0 %v690
  %3569 = vmatpush.msra.mxu0 %v689
  %3570 = vmatpush.msra.mxu0 %v688
  %3571 = vmatpush.msra.mxu0 %v687
  %3572 = vmatpush.msra.mxu0 %v686
  %3573 = vmatpush.msra.mxu0 %v685
  %3574 = vmatpush.msra.mxu0 %v684
  %3575 = vmatpush.msra.mxu0 %v683
  %3576 = vmatpush.msra.mxu0 %v682
  %3577 = vmatpush.msra.mxu0 %v681
  %3578 = vmatmul.f32.gmra.mxu0 %v3434
  %v3579 = vpop.f32.mrf.mxu0
  %v3580 = vadd.f32 %v3515, %v3579
  %3581 = vmatmul.f32.gmra.mxu0 %v3438
  %v3582 = vpop.f32.mrf.mxu0
  %v3583 = vadd.f32 %v3518, %v3582
  %3584 = vmatmul.f32.gmra.mxu0 %v3442
  %v3585 = vpop.f32.mrf.mxu0
  %v3586 = vadd.f32 %v3521, %v3585
  %3587 = vmatmul.f32.gmra.mxu0 %v3446
  %v3588 = vpop.f32.mrf.mxu0
  %v3589 = vadd.f32 %v3524, %v3588
  %3590 = vmatmul.f32.gmra.mxu0 %v3450
  %v3591 = vpop.f32.mrf.mxu0
  %v3592 = vadd.f32 %v3527, %v3591
  %3593 = vmatmul.f32.gmra.mxu0 %v3454
  %v3594 = vpop.f32.mrf.mxu0
  %v3595 = vadd.f32 %v3530, %v3594
  %3596 = vmatmul.f32.gmra.mxu0 %v3458
  %v3597 = vpop.f32.mrf.mxu0
  %v3598 = vadd.f32 %v3533, %v3597
  %3599 = vmatmul.f32.gmra.mxu0 %v3462
  %v3600 = vpop.f32.mrf.mxu0
  %v3601 = vadd.f32 %v3536, %v3600
  %3602 = vmatmul.f32.gmra.mxu0 %v3466
  %v3603 = vpop.f32.mrf.mxu0
  %v3604 = vadd.f32 %v3539, %v3603
  %3605 = vmatmul.f32.gmra.mxu0 %v3470
  %v3606 = vpop.f32.mrf.mxu0
  %v3607 = vadd.f32 %v3542, %v3606
  %3608 = vmatmul.f32.gmra.mxu0 %v3474
  %v3609 = vpop.f32.mrf.mxu0
  %v3610 = vadd.f32 %v3545, %v3609
  %3611 = vmatmul.f32.gmra.mxu0 %v3478
  %v3612 = vpop.f32.mrf.mxu0
  %v3613 = vadd.f32 %v3548, %v3612
  %3614 = vmatmul.f32.gmra.mxu0 %v3482
  %v3615 = vpop.f32.mrf.mxu0
  %v3616 = vadd.f32 %v3551, %v3615
  %3617 = vmatmul.f32.gmra.mxu0 %v3486
  %v3618 = vpop.f32.mrf.mxu0
  %v3619 = vadd.f32 %v3554, %v3618
  %3620 = vmatmul.f32.gmra.mxu0 %v3490
  %v3621 = vpop.f32.mrf.mxu0
  %v3622 = vadd.f32 %v3557, %v3621
  %3623 = vmatmul.f32.gmra.mxu0 %v3494
  %v3624 = vpop.f32.mrf.mxu0
  %v3625 = vadd.f32 %v3560, %v3624
  %3626 = vdwg.mxu0
  %3627 = vmatpush.msra.mxu0 %v712
  %3628 = vmatpush.msra.mxu0 %v711
  %3629 = vmatpush.msra.mxu0 %v710
  %3630 = vmatpush.msra.mxu0 %v709
  %3631 = vmatpush.msra.mxu0 %v708
  %3632 = vmatpush.msra.mxu0 %v707
  %3633 = vmatpush.msra.mxu0 %v706
  %3634 = vmatpush.msra.mxu0 %v705
  %3635 = vmatpush.msra.mxu0 %v704
  %3636 = vmatpush.msra.mxu0 %v703
  %3637 = vmatpush.msra.mxu0 %v702
  %3638 = vmatpush.msra.mxu0 %v701
  %3639 = vmatpush.msra.mxu0 %v700
  %3640 = vmatpush.msra.mxu0 %v699
  %3641 = vmatpush.msra.mxu0 %v698
  %3642 = vmatpush.msra.mxu0 %v697
  %3643 = vmatmul.f32.gmra.mxu0 %v3435
  %v3644 = vpop.f32.mrf.mxu0
  %v3645 = vadd.f32 %v3580, %v3644
  %3646 = vmatmul.f32.gmra.mxu0 %v3439
  %v3647 = vpop.f32.mrf.mxu0
  %v3648 = vadd.f32 %v3583, %v3647
  %3649 = vmatmul.f32.gmra.mxu0 %v3443
  %v3650 = vpop.f32.mrf.mxu0
  %v3651 = vadd.f32 %v3586, %v3650
  %3652 = vmatmul.f32.gmra.mxu0 %v3447
  %v3653 = vpop.f32.mrf.mxu0
  %v3654 = vadd.f32 %v3589, %v3653
  %3655 = vmatmul.f32.gmra.mxu0 %v3451
  %v3656 = vpop.f32.mrf.mxu0
  %v3657 = vadd.f32 %v3592, %v3656
  %3658 = vmatmul.f32.gmra.mxu0 %v3455
  %v3659 = vpop.f32.mrf.mxu0
  %v3660 = vadd.f32 %v3595, %v3659
  %3661 = vmatmul.f32.gmra.mxu0 %v3459
  %v3662 = vpop.f32.mrf.mxu0
  %v3663 = vadd.f32 %v3598, %v3662
  %3664 = vmatmul.f32.gmra.mxu0 %v3463
  %v3665 = vpop.f32.mrf.mxu0
  %v3666 = vadd.f32 %v3601, %v3665
  %3667 = vmatmul.f32.gmra.mxu0 %v3467
  %v3668 = vpop.f32.mrf.mxu0
  %v3669 = vadd.f32 %v3604, %v3668
  %3670 = vmatmul.f32.gmra.mxu0 %v3471
  %v3671 = vpop.f32.mrf.mxu0
  %v3672 = vadd.f32 %v3607, %v3671
  %3673 = vmatmul.f32.gmra.mxu0 %v3475
  %v3674 = vpop.f32.mrf.mxu0
  %v3675 = vadd.f32 %v3610, %v3674
  %3676 = vmatmul.f32.gmra.mxu0 %v3479
  %v3677 = vpop.f32.mrf.mxu0
  %v3678 = vadd.f32 %v3613, %v3677
  %3679 = vmatmul.f32.gmra.mxu0 %v3483
  %v3680 = vpop.f32.mrf.mxu0
  %v3681 = vadd.f32 %v3616, %v3680
  %3682 = vmatmul.f32.gmra.mxu0 %v3487
  %v3683 = vpop.f32.mrf.mxu0
  %v3684 = vadd.f32 %v3619, %v3683
  %3685 = vmatmul.f32.gmra.mxu0 %v3491
  %v3686 = vpop.f32.mrf.mxu0
  %v3687 = vadd.f32 %v3622, %v3686
  %3688 = vmatmul.f32.gmra.mxu0 %v3495
  %v3689 = vpop.f32.mrf.mxu0
  %v3690 = vadd.f32 %v3625, %v3689
  %3691 = vdwg.mxu0
  %3692 = vmatpush.msra.mxu0 %v728
  %3693 = vmatpush.msra.mxu0 %v727
  %3694 = vmatpush.msra.mxu0 %v726
  %3695 = vmatpush.msra.mxu0 %v725
  %3696 = vmatpush.msra.mxu0 %v724
  %3697 = vmatpush.msra.mxu0 %v723
  %3698 = vmatpush.msra.mxu0 %v722
  %3699 = vmatpush.msra.mxu0 %v721
  %3700 = vmatpush.msra.mxu0 %v720
  %3701 = vmatpush.msra.mxu0 %v719
  %3702 = vmatpush.msra.mxu0 %v718
  %3703 = vmatpush.msra.mxu0 %v717
  %3704 = vmatpush.msra.mxu0 %v716
  %3705 = vmatpush.msra.mxu0 %v715
  %3706 = vmatpush.msra.mxu0 %v714
  %3707 = vmatpush.msra.mxu0 %v713
  %3708 = vmatmul.f32.gmra.mxu0 %v3436
  %v3709 = vpop.f32.mrf.mxu0
  %v3710 = vadd.f32 %v3645, %v3709
  %3711 = vmatmul.f32.gmra.mxu0 %v3440
  %v3712 = vpop.f32.mrf.mxu0
  %v3713 = vadd.f32 %v3648, %v3712
  %3714 = vmatmul.f32.gmra.mxu0 %v3444
  %v3715 = vpop.f32.mrf.mxu0
  %v3716 = vadd.f32 %v3651, %v3715
  %3717 = vmatmul.f32.gmra.mxu0 %v3448
  %v3718 = vpop.f32.mrf.mxu0
  %v3719 = vadd.f32 %v3654, %v3718
  %3720 = vmatmul.f32.gmra.mxu0 %v3452
  %v3721 = vpop.f32.mrf.mxu0
  %v3722 = vadd.f32 %v3657, %v3721
  %3723 = vmatmul.f32.gmra.mxu0 %v3456
  %v3724 = vpop.f32.mrf.mxu0
  %v3725 = vadd.f32 %v3660, %v3724
  %3726 = vmatmul.f32.gmra.mxu0 %v3460
  %v3727 = vpop.f32.mrf.mxu0
  %v3728 = vadd.f32 %v3663, %v3727
  %3729 = vmatmul.f32.gmra.mxu0 %v3464
  %v3730 = vpop.f32.mrf.mxu0
  %v3731 = vadd.f32 %v3666, %v3730
  %3732 = vmatmul.f32.gmra.mxu0 %v3468
  %v3733 = vpop.f32.mrf.mxu0
  %v3734 = vadd.f32 %v3669, %v3733
  %3735 = vmatmul.f32.gmra.mxu0 %v3472
  %v3736 = vpop.f32.mrf.mxu0
  %v3737 = vadd.f32 %v3672, %v3736
  %3738 = vmatmul.f32.gmra.mxu0 %v3476
  %v3739 = vpop.f32.mrf.mxu0
  %v3740 = vadd.f32 %v3675, %v3739
  %3741 = vmatmul.f32.gmra.mxu0 %v3480
  %v3742 = vpop.f32.mrf.mxu0
  %v3743 = vadd.f32 %v3678, %v3742
  %3744 = vmatmul.f32.gmra.mxu0 %v3484
  %v3745 = vpop.f32.mrf.mxu0
  %v3746 = vadd.f32 %v3681, %v3745
  %3747 = vmatmul.f32.gmra.mxu0 %v3488
  %v3748 = vpop.f32.mrf.mxu0
  %v3749 = vadd.f32 %v3684, %v3748
  %3750 = vmatmul.f32.gmra.mxu0 %v3492
  %v3751 = vpop.f32.mrf.mxu0
  %v3752 = vadd.f32 %v3687, %v3751
  %3753 = vmatmul.f32.gmra.mxu0 %v3496
  %v3754 = vpop.f32.mrf.mxu0
  %v3755 = vadd.f32 %v3690, %v3754
  %3756 = vdwg.mxu0
  %s3757 = scalar_lea.vmem %s4, 48
  %v3758 = vld [vmem:[%s3757] sm:$0xff]
  %v3760 = vsel %vm1381, %v3710, 0
  %v3763 = vsel %vm1381, %v3713, 0
  %v3766 = vsel %vm1381, %v3716, 0
  %v3769 = vsel %vm1381, %v3719, 0
  %v3772 = vsel %vm1381, %v3722, 0
  %v3775 = vsel %vm1381, %v3725, 0
  %v3778 = vsel %vm1381, %v3728, 0
  %v3781 = vsel %vm1381, %v3731, 0
  %v3784 = vsel %vm1381, %v3734, 0
  %v3787 = vsel %vm1381, %v3737, 0
  %v3790 = vsel %vm1381, %v3740, 0
  %v3793 = vsel %vm1381, %v3743, 0
  %v3796 = vsel %vm1381, %v3746, 0
  %v3799 = vsel %vm1381, %v3749, 0
  %v3802 = vsel %vm1381, %v3752, 0
  %v3805 = vsel %vm1381, %v3755, 0
  %3807 = vmatpush.msra.mxu0 0.0
  %3808 = vmatpush.msra.mxu0 0.0
  %3809 = vmatpush.msra.mxu0 0.0
  %3810 = vmatpush.msra.mxu0 0.0
  %3811 = vmatpush.msra.mxu0 0.0
  %3812 = vmatpush.msra.mxu0 0.0
  %3813 = vmatpush.msra.mxu0 0.0
  %3814 = vmatpush.msra.mxu0 0.0
  %3815 = vmatpush.msra.mxu0 0.0
  %3816 = vmatpush.msra.mxu0 0.0
  %3817 = vmatpush.msra.mxu0 0.0
  %3818 = vmatpush.msra.mxu0 0.0
  %3819 = vmatpush.msra.mxu0 0.0
  %3820 = vmatpush.msra.mxu0 0.0
  %3821 = vmatpush.msra.mxu0 0.0
  %3822 = vmatpush.msra.mxu0 %v3758
  %3823 = vmatmul.f32.gmra.mxu0 %v3760
  %v3824 = vpop.f32.mrf.mxu0
  %v3825 = vadd.f32 0.0, %v3824
  %3826 = vmatmul.f32.gmra.mxu0 %v3763
  %v3827 = vpop.f32.mrf.mxu0
  %v3828 = vadd.f32 0.0, %v3827
  %3829 = vmatmul.f32.gmra.mxu0 %v3766
  %v3830 = vpop.f32.mrf.mxu0
  %v3831 = vadd.f32 0.0, %v3830
  %3832 = vmatmul.f32.gmra.mxu0 %v3769
  %v3833 = vpop.f32.mrf.mxu0
  %v3834 = vadd.f32 0.0, %v3833
  %3835 = vmatmul.f32.gmra.mxu0 %v3772
  %v3836 = vpop.f32.mrf.mxu0
  %v3837 = vadd.f32 0.0, %v3836
  %3838 = vmatmul.f32.gmra.mxu0 %v3775
  %v3839 = vpop.f32.mrf.mxu0
  %v3840 = vadd.f32 0.0, %v3839
  %3841 = vmatmul.f32.gmra.mxu0 %v3778
  %v3842 = vpop.f32.mrf.mxu0
  %v3843 = vadd.f32 0.0, %v3842
  %3844 = vmatmul.f32.gmra.mxu0 %v3781
  %v3845 = vpop.f32.mrf.mxu0
  %v3846 = vadd.f32 0.0, %v3845
  %3847 = vmatmul.f32.gmra.mxu0 %v3784
  %v3848 = vpop.f32.mrf.mxu0
  %v3849 = vadd.f32 0.0, %v3848
  %3850 = vmatmul.f32.gmra.mxu0 %v3787
  %v3851 = vpop.f32.mrf.mxu0
  %v3852 = vadd.f32 0.0, %v3851
  %3853 = vmatmul.f32.gmra.mxu0 %v3790
  %v3854 = vpop.f32.mrf.mxu0
  %v3855 = vadd.f32 0.0, %v3854
  %3856 = vmatmul.f32.gmra.mxu0 %v3793
  %v3857 = vpop.f32.mrf.mxu0
  %v3858 = vadd.f32 0.0, %v3857
  %3859 = vmatmul.f32.gmra.mxu0 %v3796
  %v3860 = vpop.f32.mrf.mxu0
  %v3861 = vadd.f32 0.0, %v3860
  %3862 = vmatmul.f32.gmra.mxu0 %v3799
  %v3863 = vpop.f32.mrf.mxu0
  %v3864 = vadd.f32 0.0, %v3863
  %3865 = vmatmul.f32.gmra.mxu0 %v3802
  %v3866 = vpop.f32.mrf.mxu0
  %v3867 = vadd.f32 0.0, %v3866
  %3868 = vmatmul.f32.gmra.mxu0 %v3805
  %v3869 = vpop.f32.mrf.mxu0
  %v3870 = vadd.f32 0.0, %v3869
  %3871 = vdwg.mxu0
  %v3872 = vadd.f32 %v3416, %v3825
  %v3873 = vadd.f32 %v3417, %v3828
  %v3874 = vadd.f32 %v3418, %v3831
  %v3875 = vadd.f32 %v3419, %v3834
  %v3876 = vadd.f32 %v3420, %v3837
  %v3877 = vadd.f32 %v3421, %v3840
  %v3878 = vadd.f32 %v3422, %v3843
  %v3879 = vadd.f32 %v3423, %v3846
  %v3880 = vadd.f32 %v3424, %v3849
  %v3881 = vadd.f32 %v3425, %v3852
  %v3882 = vadd.f32 %v3426, %v3855
  %v3883 = vadd.f32 %v3427, %v3858
  %v3884 = vadd.f32 %v3428, %v3861
  %v3885 = vadd.f32 %v3429, %v3864
  %v3886 = vadd.f32 %v3430, %v3867
  %v3887 = vadd.f32 %v3431, %v3870
  %s3888 = scalar_lea.vmem %s3, 3584
  %v3889 = vld [vmem:[%s3888] sm:$0xff]
  %v3890 = vld [vmem:[%s3888 + $0x8] sm:$0xff]
  %v3891 = vld [vmem:[%s3888 + $0x10] sm:$0xff]
  %v3892 = vld [vmem:[%s3888 + $0x18] sm:$0xff]
  %v3893 = vld [vmem:[%s3888 + $0x20] sm:$0xff]
  %v3894 = vld [vmem:[%s3888 + $0x28] sm:$0xff]
  %v3895 = vld [vmem:[%s3888 + $0x30] sm:$0xff]
  %v3896 = vld [vmem:[%s3888 + $0x38] sm:$0xff]
  %v3897 = vld [vmem:[%s3888 + $0x40] sm:$0xff]
  %v3898 = vld [vmem:[%s3888 + $0x48] sm:$0xff]
  %v3899 = vld [vmem:[%s3888 + $0x50] sm:$0xff]
  %v3900 = vld [vmem:[%s3888 + $0x58] sm:$0xff]
  %v3901 = vld [vmem:[%s3888 + $0x60] sm:$0xff]
  %v3902 = vld [vmem:[%s3888 + $0x68] sm:$0xff]
  %v3903 = vld [vmem:[%s3888 + $0x70] sm:$0xff]
  %v3904 = vld [vmem:[%s3888 + $0x78] sm:$0xff]
  %v3905 = vld [vmem:[%s3888 + $0x80] sm:$0xff]
  %v3906 = vld [vmem:[%s3888 + $0x88] sm:$0xff]
  %v3907 = vld [vmem:[%s3888 + $0x90] sm:$0xff]
  %v3908 = vld [vmem:[%s3888 + $0x98] sm:$0xff]
  %v3909 = vld [vmem:[%s3888 + $0xa0] sm:$0xff]
  %v3910 = vld [vmem:[%s3888 + $0xa8] sm:$0xff]
  %v3911 = vld [vmem:[%s3888 + $0xb0] sm:$0xff]
  %v3912 = vld [vmem:[%s3888 + $0xb8] sm:$0xff]
  %v3913 = vld [vmem:[%s3888 + $0xc0] sm:$0xff]
  %v3914 = vld [vmem:[%s3888 + $0xc8] sm:$0xff]
  %v3915 = vld [vmem:[%s3888 + $0xd0] sm:$0xff]
  %v3916 = vld [vmem:[%s3888 + $0xd8] sm:$0xff]
  %v3917 = vld [vmem:[%s3888 + $0xe0] sm:$0xff]
  %v3918 = vld [vmem:[%s3888 + $0xe8] sm:$0xff]
  %v3919 = vld [vmem:[%s3888 + $0xf0] sm:$0xff]
  %v3920 = vld [vmem:[%s3888 + $0xf8] sm:$0xff]
  %v3921 = vld [vmem:[%s3888 + $0x100] sm:$0xff]
  %v3922 = vld [vmem:[%s3888 + $0x108] sm:$0xff]
  %v3923 = vld [vmem:[%s3888 + $0x110] sm:$0xff]
  %v3924 = vld [vmem:[%s3888 + $0x118] sm:$0xff]
  %v3925 = vld [vmem:[%s3888 + $0x120] sm:$0xff]
  %v3926 = vld [vmem:[%s3888 + $0x128] sm:$0xff]
  %v3927 = vld [vmem:[%s3888 + $0x130] sm:$0xff]
  %v3928 = vld [vmem:[%s3888 + $0x138] sm:$0xff]
  %v3929 = vld [vmem:[%s3888 + $0x140] sm:$0xff]
  %v3930 = vld [vmem:[%s3888 + $0x148] sm:$0xff]
  %v3931 = vld [vmem:[%s3888 + $0x150] sm:$0xff]
  %v3932 = vld [vmem:[%s3888 + $0x158] sm:$0xff]
  %v3933 = vld [vmem:[%s3888 + $0x160] sm:$0xff]
  %v3934 = vld [vmem:[%s3888 + $0x168] sm:$0xff]
  %v3935 = vld [vmem:[%s3888 + $0x170] sm:$0xff]
  %v3936 = vld [vmem:[%s3888 + $0x178] sm:$0xff]
  %v3937 = vld [vmem:[%s3888 + $0x180] sm:$0xff]
  %v3938 = vld [vmem:[%s3888 + $0x188] sm:$0xff]
  %v3939 = vld [vmem:[%s3888 + $0x190] sm:$0xff]
  %v3940 = vld [vmem:[%s3888 + $0x198] sm:$0xff]
  %v3941 = vld [vmem:[%s3888 + $0x1a0] sm:$0xff]
  %v3942 = vld [vmem:[%s3888 + $0x1a8] sm:$0xff]
  %v3943 = vld [vmem:[%s3888 + $0x1b0] sm:$0xff]
  %v3944 = vld [vmem:[%s3888 + $0x1b8] sm:$0xff]
  %v3945 = vld [vmem:[%s3888 + $0x1c0] sm:$0xff]
  %v3946 = vld [vmem:[%s3888 + $0x1c8] sm:$0xff]
  %v3947 = vld [vmem:[%s3888 + $0x1d0] sm:$0xff]
  %v3948 = vld [vmem:[%s3888 + $0x1d8] sm:$0xff]
  %v3949 = vld [vmem:[%s3888 + $0x1e0] sm:$0xff]
  %v3950 = vld [vmem:[%s3888 + $0x1e8] sm:$0xff]
  %v3951 = vld [vmem:[%s3888 + $0x1f0] sm:$0xff]
  %v3952 = vld [vmem:[%s3888 + $0x1f8] sm:$0xff]
  %3953 = vmatpush.msra.mxu0 %v680
  %3954 = vmatpush.msra.mxu0 %v679
  %3955 = vmatpush.msra.mxu0 %v678
  %3956 = vmatpush.msra.mxu0 %v677
  %3957 = vmatpush.msra.mxu0 %v676
  %3958 = vmatpush.msra.mxu0 %v675
  %3959 = vmatpush.msra.mxu0 %v674
  %3960 = vmatpush.msra.mxu0 %v673
  %3961 = vmatpush.msra.mxu0 %v672
  %3962 = vmatpush.msra.mxu0 %v671
  %3963 = vmatpush.msra.mxu0 %v670
  %3964 = vmatpush.msra.mxu0 %v669
  %3965 = vmatpush.msra.mxu0 %v668
  %3966 = vmatpush.msra.mxu0 %v667
  %3967 = vmatpush.msra.mxu0 %v666
  %3968 = vmatpush.msra.mxu0 %v665
  %3969 = vmatmul.f32.gmra.mxu0 %v3889
  %v3970 = vpop.f32.mrf.mxu0
  %v3971 = vadd.f32 0.0, %v3970
  %3972 = vmatmul.f32.gmra.mxu0 %v3893
  %v3973 = vpop.f32.mrf.mxu0
  %v3974 = vadd.f32 0.0, %v3973
  %3975 = vmatmul.f32.gmra.mxu0 %v3897
  %v3976 = vpop.f32.mrf.mxu0
  %v3977 = vadd.f32 0.0, %v3976
  %3978 = vmatmul.f32.gmra.mxu0 %v3901
  %v3979 = vpop.f32.mrf.mxu0
  %v3980 = vadd.f32 0.0, %v3979
  %3981 = vmatmul.f32.gmra.mxu0 %v3905
  %v3982 = vpop.f32.mrf.mxu0
  %v3983 = vadd.f32 0.0, %v3982
  %3984 = vmatmul.f32.gmra.mxu0 %v3909
  %v3985 = vpop.f32.mrf.mxu0
  %v3986 = vadd.f32 0.0, %v3985
  %3987 = vmatmul.f32.gmra.mxu0 %v3913
  %v3988 = vpop.f32.mrf.mxu0
  %v3989 = vadd.f32 0.0, %v3988
  %3990 = vmatmul.f32.gmra.mxu0 %v3917
  %v3991 = vpop.f32.mrf.mxu0
  %v3992 = vadd.f32 0.0, %v3991
  %3993 = vmatmul.f32.gmra.mxu0 %v3921
  %v3994 = vpop.f32.mrf.mxu0
  %v3995 = vadd.f32 0.0, %v3994
  %3996 = vmatmul.f32.gmra.mxu0 %v3925
  %v3997 = vpop.f32.mrf.mxu0
  %v3998 = vadd.f32 0.0, %v3997
  %3999 = vmatmul.f32.gmra.mxu0 %v3929
  %v4000 = vpop.f32.mrf.mxu0
  %v4001 = vadd.f32 0.0, %v4000
  %4002 = vmatmul.f32.gmra.mxu0 %v3933
  %v4003 = vpop.f32.mrf.mxu0
  %v4004 = vadd.f32 0.0, %v4003
  %4005 = vmatmul.f32.gmra.mxu0 %v3937
  %v4006 = vpop.f32.mrf.mxu0
  %v4007 = vadd.f32 0.0, %v4006
  %4008 = vmatmul.f32.gmra.mxu0 %v3941
  %v4009 = vpop.f32.mrf.mxu0
  %v4010 = vadd.f32 0.0, %v4009
  %4011 = vmatmul.f32.gmra.mxu0 %v3945
  %v4012 = vpop.f32.mrf.mxu0
  %v4013 = vadd.f32 0.0, %v4012
  %4014 = vmatmul.f32.gmra.mxu0 %v3949
  %v4015 = vpop.f32.mrf.mxu0
  %v4016 = vadd.f32 0.0, %v4015
  %4017 = vdwg.mxu0
  %4018 = vmatpush.msra.mxu0 %v696
  %4019 = vmatpush.msra.mxu0 %v695
  %4020 = vmatpush.msra.mxu0 %v694
  %4021 = vmatpush.msra.mxu0 %v693
  %4022 = vmatpush.msra.mxu0 %v692
  %4023 = vmatpush.msra.mxu0 %v691
  %4024 = vmatpush.msra.mxu0 %v690
  %4025 = vmatpush.msra.mxu0 %v689
  %4026 = vmatpush.msra.mxu0 %v688
  %4027 = vmatpush.msra.mxu0 %v687
  %4028 = vmatpush.msra.mxu0 %v686
  %4029 = vmatpush.msra.mxu0 %v685
  %4030 = vmatpush.msra.mxu0 %v684
  %4031 = vmatpush.msra.mxu0 %v683
  %4032 = vmatpush.msra.mxu0 %v682
  %4033 = vmatpush.msra.mxu0 %v681
  %4034 = vmatmul.f32.gmra.mxu0 %v3890
  %v4035 = vpop.f32.mrf.mxu0
  %v4036 = vadd.f32 %v3971, %v4035
  %4037 = vmatmul.f32.gmra.mxu0 %v3894
  %v4038 = vpop.f32.mrf.mxu0
  %v4039 = vadd.f32 %v3974, %v4038
  %4040 = vmatmul.f32.gmra.mxu0 %v3898
  %v4041 = vpop.f32.mrf.mxu0
  %v4042 = vadd.f32 %v3977, %v4041
  %4043 = vmatmul.f32.gmra.mxu0 %v3902
  %v4044 = vpop.f32.mrf.mxu0
  %v4045 = vadd.f32 %v3980, %v4044
  %4046 = vmatmul.f32.gmra.mxu0 %v3906
  %v4047 = vpop.f32.mrf.mxu0
  %v4048 = vadd.f32 %v3983, %v4047
  %4049 = vmatmul.f32.gmra.mxu0 %v3910
  %v4050 = vpop.f32.mrf.mxu0
  %v4051 = vadd.f32 %v3986, %v4050
  %4052 = vmatmul.f32.gmra.mxu0 %v3914
  %v4053 = vpop.f32.mrf.mxu0
  %v4054 = vadd.f32 %v3989, %v4053
  %4055 = vmatmul.f32.gmra.mxu0 %v3918
  %v4056 = vpop.f32.mrf.mxu0
  %v4057 = vadd.f32 %v3992, %v4056
  %4058 = vmatmul.f32.gmra.mxu0 %v3922
  %v4059 = vpop.f32.mrf.mxu0
  %v4060 = vadd.f32 %v3995, %v4059
  %4061 = vmatmul.f32.gmra.mxu0 %v3926
  %v4062 = vpop.f32.mrf.mxu0
  %v4063 = vadd.f32 %v3998, %v4062
  %4064 = vmatmul.f32.gmra.mxu0 %v3930
  %v4065 = vpop.f32.mrf.mxu0
  %v4066 = vadd.f32 %v4001, %v4065
  %4067 = vmatmul.f32.gmra.mxu0 %v3934
  %v4068 = vpop.f32.mrf.mxu0
  %v4069 = vadd.f32 %v4004, %v4068
  %4070 = vmatmul.f32.gmra.mxu0 %v3938
  %v4071 = vpop.f32.mrf.mxu0
  %v4072 = vadd.f32 %v4007, %v4071
  %4073 = vmatmul.f32.gmra.mxu0 %v3942
  %v4074 = vpop.f32.mrf.mxu0
  %v4075 = vadd.f32 %v4010, %v4074
  %4076 = vmatmul.f32.gmra.mxu0 %v3946
  %v4077 = vpop.f32.mrf.mxu0
  %v4078 = vadd.f32 %v4013, %v4077
  %4079 = vmatmul.f32.gmra.mxu0 %v3950
  %v4080 = vpop.f32.mrf.mxu0
  %v4081 = vadd.f32 %v4016, %v4080
  %4082 = vdwg.mxu0
  %4083 = vmatpush.msra.mxu0 %v712
  %4084 = vmatpush.msra.mxu0 %v711
  %4085 = vmatpush.msra.mxu0 %v710
  %4086 = vmatpush.msra.mxu0 %v709
  %4087 = vmatpush.msra.mxu0 %v708
  %4088 = vmatpush.msra.mxu0 %v707
  %4089 = vmatpush.msra.mxu0 %v706
  %4090 = vmatpush.msra.mxu0 %v705
  %4091 = vmatpush.msra.mxu0 %v704
  %4092 = vmatpush.msra.mxu0 %v703
  %4093 = vmatpush.msra.mxu0 %v702
  %4094 = vmatpush.msra.mxu0 %v701
  %4095 = vmatpush.msra.mxu0 %v700
  %4096 = vmatpush.msra.mxu0 %v699
  %4097 = vmatpush.msra.mxu0 %v698
  %4098 = vmatpush.msra.mxu0 %v697
  %4099 = vmatmul.f32.gmra.mxu0 %v3891
  %v4100 = vpop.f32.mrf.mxu0
  %v4101 = vadd.f32 %v4036, %v4100
  %4102 = vmatmul.f32.gmra.mxu0 %v3895
  %v4103 = vpop.f32.mrf.mxu0
  %v4104 = vadd.f32 %v4039, %v4103
  %4105 = vmatmul.f32.gmra.mxu0 %v3899
  %v4106 = vpop.f32.mrf.mxu0
  %v4107 = vadd.f32 %v4042, %v4106
  %4108 = vmatmul.f32.gmra.mxu0 %v3903
  %v4109 = vpop.f32.mrf.mxu0
  %v4110 = vadd.f32 %v4045, %v4109
  %4111 = vmatmul.f32.gmra.mxu0 %v3907
  %v4112 = vpop.f32.mrf.mxu0
  %v4113 = vadd.f32 %v4048, %v4112
  %4114 = vmatmul.f32.gmra.mxu0 %v3911
  %v4115 = vpop.f32.mrf.mxu0
  %v4116 = vadd.f32 %v4051, %v4115
  %4117 = vmatmul.f32.gmra.mxu0 %v3915
  %v4118 = vpop.f32.mrf.mxu0
  %v4119 = vadd.f32 %v4054, %v4118
  %4120 = vmatmul.f32.gmra.mxu0 %v3919
  %v4121 = vpop.f32.mrf.mxu0
  %v4122 = vadd.f32 %v4057, %v4121
  %4123 = vmatmul.f32.gmra.mxu0 %v3923
  %v4124 = vpop.f32.mrf.mxu0
  %v4125 = vadd.f32 %v4060, %v4124
  %4126 = vmatmul.f32.gmra.mxu0 %v3927
  %v4127 = vpop.f32.mrf.mxu0
  %v4128 = vadd.f32 %v4063, %v4127
  %4129 = vmatmul.f32.gmra.mxu0 %v3931
  %v4130 = vpop.f32.mrf.mxu0
  %v4131 = vadd.f32 %v4066, %v4130
  %4132 = vmatmul.f32.gmra.mxu0 %v3935
  %v4133 = vpop.f32.mrf.mxu0
  %v4134 = vadd.f32 %v4069, %v4133
  %4135 = vmatmul.f32.gmra.mxu0 %v3939
  %v4136 = vpop.f32.mrf.mxu0
  %v4137 = vadd.f32 %v4072, %v4136
  %4138 = vmatmul.f32.gmra.mxu0 %v3943
  %v4139 = vpop.f32.mrf.mxu0
  %v4140 = vadd.f32 %v4075, %v4139
  %4141 = vmatmul.f32.gmra.mxu0 %v3947
  %v4142 = vpop.f32.mrf.mxu0
  %v4143 = vadd.f32 %v4078, %v4142
  %4144 = vmatmul.f32.gmra.mxu0 %v3951
  %v4145 = vpop.f32.mrf.mxu0
  %v4146 = vadd.f32 %v4081, %v4145
  %4147 = vdwg.mxu0
  %4148 = vmatpush.msra.mxu0 %v728
  %4149 = vmatpush.msra.mxu0 %v727
  %4150 = vmatpush.msra.mxu0 %v726
  %4151 = vmatpush.msra.mxu0 %v725
  %4152 = vmatpush.msra.mxu0 %v724
  %4153 = vmatpush.msra.mxu0 %v723
  %4154 = vmatpush.msra.mxu0 %v722
  %4155 = vmatpush.msra.mxu0 %v721
  %4156 = vmatpush.msra.mxu0 %v720
  %4157 = vmatpush.msra.mxu0 %v719
  %4158 = vmatpush.msra.mxu0 %v718
  %4159 = vmatpush.msra.mxu0 %v717
  %4160 = vmatpush.msra.mxu0 %v716
  %4161 = vmatpush.msra.mxu0 %v715
  %4162 = vmatpush.msra.mxu0 %v714
  %4163 = vmatpush.msra.mxu0 %v713
  %4164 = vmatmul.f32.gmra.mxu0 %v3892
  %v4165 = vpop.f32.mrf.mxu0
  %v4166 = vadd.f32 %v4101, %v4165
  %4167 = vmatmul.f32.gmra.mxu0 %v3896
  %v4168 = vpop.f32.mrf.mxu0
  %v4169 = vadd.f32 %v4104, %v4168
  %4170 = vmatmul.f32.gmra.mxu0 %v3900
  %v4171 = vpop.f32.mrf.mxu0
  %v4172 = vadd.f32 %v4107, %v4171
  %4173 = vmatmul.f32.gmra.mxu0 %v3904
  %v4174 = vpop.f32.mrf.mxu0
  %v4175 = vadd.f32 %v4110, %v4174
  %4176 = vmatmul.f32.gmra.mxu0 %v3908
  %v4177 = vpop.f32.mrf.mxu0
  %v4178 = vadd.f32 %v4113, %v4177
  %4179 = vmatmul.f32.gmra.mxu0 %v3912
  %v4180 = vpop.f32.mrf.mxu0
  %v4181 = vadd.f32 %v4116, %v4180
  %4182 = vmatmul.f32.gmra.mxu0 %v3916
  %v4183 = vpop.f32.mrf.mxu0
  %v4184 = vadd.f32 %v4119, %v4183
  %4185 = vmatmul.f32.gmra.mxu0 %v3920
  %v4186 = vpop.f32.mrf.mxu0
  %v4187 = vadd.f32 %v4122, %v4186
  %4188 = vmatmul.f32.gmra.mxu0 %v3924
  %v4189 = vpop.f32.mrf.mxu0
  %v4190 = vadd.f32 %v4125, %v4189
  %4191 = vmatmul.f32.gmra.mxu0 %v3928
  %v4192 = vpop.f32.mrf.mxu0
  %v4193 = vadd.f32 %v4128, %v4192
  %4194 = vmatmul.f32.gmra.mxu0 %v3932
  %v4195 = vpop.f32.mrf.mxu0
  %v4196 = vadd.f32 %v4131, %v4195
  %4197 = vmatmul.f32.gmra.mxu0 %v3936
  %v4198 = vpop.f32.mrf.mxu0
  %v4199 = vadd.f32 %v4134, %v4198
  %4200 = vmatmul.f32.gmra.mxu0 %v3940
  %v4201 = vpop.f32.mrf.mxu0
  %v4202 = vadd.f32 %v4137, %v4201
  %4203 = vmatmul.f32.gmra.mxu0 %v3944
  %v4204 = vpop.f32.mrf.mxu0
  %v4205 = vadd.f32 %v4140, %v4204
  %4206 = vmatmul.f32.gmra.mxu0 %v3948
  %v4207 = vpop.f32.mrf.mxu0
  %v4208 = vadd.f32 %v4143, %v4207
  %4209 = vmatmul.f32.gmra.mxu0 %v3952
  %v4210 = vpop.f32.mrf.mxu0
  %v4211 = vadd.f32 %v4146, %v4210
  %4212 = vdwg.mxu0
  %s4213 = scalar_lea.vmem %s4, 56
  %v4214 = vld [vmem:[%s4213] sm:$0xff]
  %v4216 = vsel %vm1381, %v4166, 0
  %v4219 = vsel %vm1381, %v4169, 0
  %v4222 = vsel %vm1381, %v4172, 0
  %v4225 = vsel %vm1381, %v4175, 0
  %v4228 = vsel %vm1381, %v4178, 0
  %v4231 = vsel %vm1381, %v4181, 0
  %v4234 = vsel %vm1381, %v4184, 0
  %v4237 = vsel %vm1381, %v4187, 0
  %v4240 = vsel %vm1381, %v4190, 0
  %v4243 = vsel %vm1381, %v4193, 0
  %v4246 = vsel %vm1381, %v4196, 0
  %v4249 = vsel %vm1381, %v4199, 0
  %v4252 = vsel %vm1381, %v4202, 0
  %v4255 = vsel %vm1381, %v4205, 0
  %v4258 = vsel %vm1381, %v4208, 0
  %v4261 = vsel %vm1381, %v4211, 0
  %4263 = vmatpush.msra.mxu0 0.0
  %4264 = vmatpush.msra.mxu0 0.0
  %4265 = vmatpush.msra.mxu0 0.0
  %4266 = vmatpush.msra.mxu0 0.0
  %4267 = vmatpush.msra.mxu0 0.0
  %4268 = vmatpush.msra.mxu0 0.0
  %4269 = vmatpush.msra.mxu0 0.0
  %4270 = vmatpush.msra.mxu0 0.0
  %4271 = vmatpush.msra.mxu0 0.0
  %4272 = vmatpush.msra.mxu0 0.0
  %4273 = vmatpush.msra.mxu0 0.0
  %4274 = vmatpush.msra.mxu0 0.0
  %4275 = vmatpush.msra.mxu0 0.0
  %4276 = vmatpush.msra.mxu0 0.0
  %4277 = vmatpush.msra.mxu0 0.0
  %4278 = vmatpush.msra.mxu0 %v4214
  %4279 = vmatmul.f32.gmra.mxu0 %v4216
  %v4280 = vpop.f32.mrf.mxu0
  %v4281 = vadd.f32 0.0, %v4280
  %4282 = vmatmul.f32.gmra.mxu0 %v4219
  %v4283 = vpop.f32.mrf.mxu0
  %v4284 = vadd.f32 0.0, %v4283
  %4285 = vmatmul.f32.gmra.mxu0 %v4222
  %v4286 = vpop.f32.mrf.mxu0
  %v4287 = vadd.f32 0.0, %v4286
  %4288 = vmatmul.f32.gmra.mxu0 %v4225
  %v4289 = vpop.f32.mrf.mxu0
  %v4290 = vadd.f32 0.0, %v4289
  %4291 = vmatmul.f32.gmra.mxu0 %v4228
  %v4292 = vpop.f32.mrf.mxu0
  %v4293 = vadd.f32 0.0, %v4292
  %4294 = vmatmul.f32.gmra.mxu0 %v4231
  %v4295 = vpop.f32.mrf.mxu0
  %v4296 = vadd.f32 0.0, %v4295
  %4297 = vmatmul.f32.gmra.mxu0 %v4234
  %v4298 = vpop.f32.mrf.mxu0
  %v4299 = vadd.f32 0.0, %v4298
  %4300 = vmatmul.f32.gmra.mxu0 %v4237
  %v4301 = vpop.f32.mrf.mxu0
  %v4302 = vadd.f32 0.0, %v4301
  %4303 = vmatmul.f32.gmra.mxu0 %v4240
  %v4304 = vpop.f32.mrf.mxu0
  %v4305 = vadd.f32 0.0, %v4304
  %4306 = vmatmul.f32.gmra.mxu0 %v4243
  %v4307 = vpop.f32.mrf.mxu0
  %v4308 = vadd.f32 0.0, %v4307
  %4309 = vmatmul.f32.gmra.mxu0 %v4246
  %v4310 = vpop.f32.mrf.mxu0
  %v4311 = vadd.f32 0.0, %v4310
  %4312 = vmatmul.f32.gmra.mxu0 %v4249
  %v4313 = vpop.f32.mrf.mxu0
  %v4314 = vadd.f32 0.0, %v4313
  %4315 = vmatmul.f32.gmra.mxu0 %v4252
  %v4316 = vpop.f32.mrf.mxu0
  %v4317 = vadd.f32 0.0, %v4316
  %4318 = vmatmul.f32.gmra.mxu0 %v4255
  %v4319 = vpop.f32.mrf.mxu0
  %v4320 = vadd.f32 0.0, %v4319
  %4321 = vmatmul.f32.gmra.mxu0 %v4258
  %v4322 = vpop.f32.mrf.mxu0
  %v4323 = vadd.f32 0.0, %v4322
  %4324 = vmatmul.f32.gmra.mxu0 %v4261
  %v4325 = vpop.f32.mrf.mxu0
  %v4326 = vadd.f32 0.0, %v4325
  %4327 = vdwg.mxu0
  %v4328 = vadd.f32 %v3872, %v4281
  %v4329 = vadd.f32 %v3873, %v4284
  %v4330 = vadd.f32 %v3874, %v4287
  %v4331 = vadd.f32 %v3875, %v4290
  %v4332 = vadd.f32 %v3876, %v4293
  %v4333 = vadd.f32 %v3877, %v4296
  %v4334 = vadd.f32 %v3878, %v4299
  %v4335 = vadd.f32 %v3879, %v4302
  %v4336 = vadd.f32 %v3880, %v4305
  %v4337 = vadd.f32 %v3881, %v4308
  %v4338 = vadd.f32 %v3882, %v4311
  %v4339 = vadd.f32 %v3883, %v4314
  %v4340 = vadd.f32 %v3884, %v4317
  %v4341 = vadd.f32 %v3885, %v4320
  %v4342 = vadd.f32 %v3886, %v4323
  %v4343 = vadd.f32 %v3887, %v4326
  %s4344 = scalar_lea.vmem %s3, 4096
  %v4345 = vld [vmem:[%s4344] sm:$0xff]
  %v4346 = vld [vmem:[%s4344 + $0x8] sm:$0xff]
  %v4347 = vld [vmem:[%s4344 + $0x10] sm:$0xff]
  %v4348 = vld [vmem:[%s4344 + $0x18] sm:$0xff]
  %v4349 = vld [vmem:[%s4344 + $0x20] sm:$0xff]
  %v4350 = vld [vmem:[%s4344 + $0x28] sm:$0xff]
  %v4351 = vld [vmem:[%s4344 + $0x30] sm:$0xff]
  %v4352 = vld [vmem:[%s4344 + $0x38] sm:$0xff]
  %v4353 = vld [vmem:[%s4344 + $0x40] sm:$0xff]
  %v4354 = vld [vmem:[%s4344 + $0x48] sm:$0xff]
  %v4355 = vld [vmem:[%s4344 + $0x50] sm:$0xff]
  %v4356 = vld [vmem:[%s4344 + $0x58] sm:$0xff]
  %v4357 = vld [vmem:[%s4344 + $0x60] sm:$0xff]
  %v4358 = vld [vmem:[%s4344 + $0x68] sm:$0xff]
  %v4359 = vld [vmem:[%s4344 + $0x70] sm:$0xff]
  %v4360 = vld [vmem:[%s4344 + $0x78] sm:$0xff]
  %v4361 = vld [vmem:[%s4344 + $0x80] sm:$0xff]
  %v4362 = vld [vmem:[%s4344 + $0x88] sm:$0xff]
  %v4363 = vld [vmem:[%s4344 + $0x90] sm:$0xff]
  %v4364 = vld [vmem:[%s4344 + $0x98] sm:$0xff]
  %v4365 = vld [vmem:[%s4344 + $0xa0] sm:$0xff]
  %v4366 = vld [vmem:[%s4344 + $0xa8] sm:$0xff]
  %v4367 = vld [vmem:[%s4344 + $0xb0] sm:$0xff]
  %v4368 = vld [vmem:[%s4344 + $0xb8] sm:$0xff]
  %v4369 = vld [vmem:[%s4344 + $0xc0] sm:$0xff]
  %v4370 = vld [vmem:[%s4344 + $0xc8] sm:$0xff]
  %v4371 = vld [vmem:[%s4344 + $0xd0] sm:$0xff]
  %v4372 = vld [vmem:[%s4344 + $0xd8] sm:$0xff]
  %v4373 = vld [vmem:[%s4344 + $0xe0] sm:$0xff]
  %v4374 = vld [vmem:[%s4344 + $0xe8] sm:$0xff]
  %v4375 = vld [vmem:[%s4344 + $0xf0] sm:$0xff]
  %v4376 = vld [vmem:[%s4344 + $0xf8] sm:$0xff]
  %v4377 = vld [vmem:[%s4344 + $0x100] sm:$0xff]
  %v4378 = vld [vmem:[%s4344 + $0x108] sm:$0xff]
  %v4379 = vld [vmem:[%s4344 + $0x110] sm:$0xff]
  %v4380 = vld [vmem:[%s4344 + $0x118] sm:$0xff]
  %v4381 = vld [vmem:[%s4344 + $0x120] sm:$0xff]
  %v4382 = vld [vmem:[%s4344 + $0x128] sm:$0xff]
  %v4383 = vld [vmem:[%s4344 + $0x130] sm:$0xff]
  %v4384 = vld [vmem:[%s4344 + $0x138] sm:$0xff]
  %v4385 = vld [vmem:[%s4344 + $0x140] sm:$0xff]
  %v4386 = vld [vmem:[%s4344 + $0x148] sm:$0xff]
  %v4387 = vld [vmem:[%s4344 + $0x150] sm:$0xff]
  %v4388 = vld [vmem:[%s4344 + $0x158] sm:$0xff]
  %v4389 = vld [vmem:[%s4344 + $0x160] sm:$0xff]
  %v4390 = vld [vmem:[%s4344 + $0x168] sm:$0xff]
  %v4391 = vld [vmem:[%s4344 + $0x170] sm:$0xff]
  %v4392 = vld [vmem:[%s4344 + $0x178] sm:$0xff]
  %v4393 = vld [vmem:[%s4344 + $0x180] sm:$0xff]
  %v4394 = vld [vmem:[%s4344 + $0x188] sm:$0xff]
  %v4395 = vld [vmem:[%s4344 + $0x190] sm:$0xff]
  %v4396 = vld [vmem:[%s4344 + $0x198] sm:$0xff]
  %v4397 = vld [vmem:[%s4344 + $0x1a0] sm:$0xff]
  %v4398 = vld [vmem:[%s4344 + $0x1a8] sm:$0xff]
  %v4399 = vld [vmem:[%s4344 + $0x1b0] sm:$0xff]
  %v4400 = vld [vmem:[%s4344 + $0x1b8] sm:$0xff]
  %v4401 = vld [vmem:[%s4344 + $0x1c0] sm:$0xff]
  %v4402 = vld [vmem:[%s4344 + $0x1c8] sm:$0xff]
  %v4403 = vld [vmem:[%s4344 + $0x1d0] sm:$0xff]
  %v4404 = vld [vmem:[%s4344 + $0x1d8] sm:$0xff]
  %v4405 = vld [vmem:[%s4344 + $0x1e0] sm:$0xff]
  %v4406 = vld [vmem:[%s4344 + $0x1e8] sm:$0xff]
  %v4407 = vld [vmem:[%s4344 + $0x1f0] sm:$0xff]
  %v4408 = vld [vmem:[%s4344 + $0x1f8] sm:$0xff]
  %4409 = vmatpush.msra.mxu0 %v680
  %4410 = vmatpush.msra.mxu0 %v679
  %4411 = vmatpush.msra.mxu0 %v678
  %4412 = vmatpush.msra.mxu0 %v677
  %4413 = vmatpush.msra.mxu0 %v676
  %4414 = vmatpush.msra.mxu0 %v675
  %4415 = vmatpush.msra.mxu0 %v674
  %4416 = vmatpush.msra.mxu0 %v673
  %4417 = vmatpush.msra.mxu0 %v672
  %4418 = vmatpush.msra.mxu0 %v671
  %4419 = vmatpush.msra.mxu0 %v670
  %4420 = vmatpush.msra.mxu0 %v669
  %4421 = vmatpush.msra.mxu0 %v668
  %4422 = vmatpush.msra.mxu0 %v667
  %4423 = vmatpush.msra.mxu0 %v666
  %4424 = vmatpush.msra.mxu0 %v665
  %4425 = vmatmul.f32.gmra.mxu0 %v4345
  %v4426 = vpop.f32.mrf.mxu0
  %v4427 = vadd.f32 0.0, %v4426
  %4428 = vmatmul.f32.gmra.mxu0 %v4349
  %v4429 = vpop.f32.mrf.mxu0
  %v4430 = vadd.f32 0.0, %v4429
  %4431 = vmatmul.f32.gmra.mxu0 %v4353
  %v4432 = vpop.f32.mrf.mxu0
  %v4433 = vadd.f32 0.0, %v4432
  %4434 = vmatmul.f32.gmra.mxu0 %v4357
  %v4435 = vpop.f32.mrf.mxu0
  %v4436 = vadd.f32 0.0, %v4435
  %4437 = vmatmul.f32.gmra.mxu0 %v4361
  %v4438 = vpop.f32.mrf.mxu0
  %v4439 = vadd.f32 0.0, %v4438
  %4440 = vmatmul.f32.gmra.mxu0 %v4365
  %v4441 = vpop.f32.mrf.mxu0
  %v4442 = vadd.f32 0.0, %v4441
  %4443 = vmatmul.f32.gmra.mxu0 %v4369
  %v4444 = vpop.f32.mrf.mxu0
  %v4445 = vadd.f32 0.0, %v4444
  %4446 = vmatmul.f32.gmra.mxu0 %v4373
  %v4447 = vpop.f32.mrf.mxu0
  %v4448 = vadd.f32 0.0, %v4447
  %4449 = vmatmul.f32.gmra.mxu0 %v4377
  %v4450 = vpop.f32.mrf.mxu0
  %v4451 = vadd.f32 0.0, %v4450
  %4452 = vmatmul.f32.gmra.mxu0 %v4381
  %v4453 = vpop.f32.mrf.mxu0
  %v4454 = vadd.f32 0.0, %v4453
  %4455 = vmatmul.f32.gmra.mxu0 %v4385
  %v4456 = vpop.f32.mrf.mxu0
  %v4457 = vadd.f32 0.0, %v4456
  %4458 = vmatmul.f32.gmra.mxu0 %v4389
  %v4459 = vpop.f32.mrf.mxu0
  %v4460 = vadd.f32 0.0, %v4459
  %4461 = vmatmul.f32.gmra.mxu0 %v4393
  %v4462 = vpop.f32.mrf.mxu0
  %v4463 = vadd.f32 0.0, %v4462
  %4464 = vmatmul.f32.gmra.mxu0 %v4397
  %v4465 = vpop.f32.mrf.mxu0
  %v4466 = vadd.f32 0.0, %v4465
  %4467 = vmatmul.f32.gmra.mxu0 %v4401
  %v4468 = vpop.f32.mrf.mxu0
  %v4469 = vadd.f32 0.0, %v4468
  %4470 = vmatmul.f32.gmra.mxu0 %v4405
  %v4471 = vpop.f32.mrf.mxu0
  %v4472 = vadd.f32 0.0, %v4471
  %4473 = vdwg.mxu0
  %4474 = vmatpush.msra.mxu0 %v696
  %4475 = vmatpush.msra.mxu0 %v695
  %4476 = vmatpush.msra.mxu0 %v694
  %4477 = vmatpush.msra.mxu0 %v693
  %4478 = vmatpush.msra.mxu0 %v692
  %4479 = vmatpush.msra.mxu0 %v691
  %4480 = vmatpush.msra.mxu0 %v690
  %4481 = vmatpush.msra.mxu0 %v689
  %4482 = vmatpush.msra.mxu0 %v688
  %4483 = vmatpush.msra.mxu0 %v687
  %4484 = vmatpush.msra.mxu0 %v686
  %4485 = vmatpush.msra.mxu0 %v685
  %4486 = vmatpush.msra.mxu0 %v684
  %4487 = vmatpush.msra.mxu0 %v683
  %4488 = vmatpush.msra.mxu0 %v682
  %4489 = vmatpush.msra.mxu0 %v681
  %4490 = vmatmul.f32.gmra.mxu0 %v4346
  %v4491 = vpop.f32.mrf.mxu0
  %v4492 = vadd.f32 %v4427, %v4491
  %4493 = vmatmul.f32.gmra.mxu0 %v4350
  %v4494 = vpop.f32.mrf.mxu0
  %v4495 = vadd.f32 %v4430, %v4494
  %4496 = vmatmul.f32.gmra.mxu0 %v4354
  %v4497 = vpop.f32.mrf.mxu0
  %v4498 = vadd.f32 %v4433, %v4497
  %4499 = vmatmul.f32.gmra.mxu0 %v4358
  %v4500 = vpop.f32.mrf.mxu0
  %v4501 = vadd.f32 %v4436, %v4500
  %4502 = vmatmul.f32.gmra.mxu0 %v4362
  %v4503 = vpop.f32.mrf.mxu0
  %v4504 = vadd.f32 %v4439, %v4503
  %4505 = vmatmul.f32.gmra.mxu0 %v4366
  %v4506 = vpop.f32.mrf.mxu0
  %v4507 = vadd.f32 %v4442, %v4506
  %4508 = vmatmul.f32.gmra.mxu0 %v4370
  %v4509 = vpop.f32.mrf.mxu0
  %v4510 = vadd.f32 %v4445, %v4509
  %4511 = vmatmul.f32.gmra.mxu0 %v4374
  %v4512 = vpop.f32.mrf.mxu0
  %v4513 = vadd.f32 %v4448, %v4512
  %4514 = vmatmul.f32.gmra.mxu0 %v4378
  %v4515 = vpop.f32.mrf.mxu0
  %v4516 = vadd.f32 %v4451, %v4515
  %4517 = vmatmul.f32.gmra.mxu0 %v4382
  %v4518 = vpop.f32.mrf.mxu0
  %v4519 = vadd.f32 %v4454, %v4518
  %4520 = vmatmul.f32.gmra.mxu0 %v4386
  %v4521 = vpop.f32.mrf.mxu0
  %v4522 = vadd.f32 %v4457, %v4521
  %4523 = vmatmul.f32.gmra.mxu0 %v4390
  %v4524 = vpop.f32.mrf.mxu0
  %v4525 = vadd.f32 %v4460, %v4524
  %4526 = vmatmul.f32.gmra.mxu0 %v4394
  %v4527 = vpop.f32.mrf.mxu0
  %v4528 = vadd.f32 %v4463, %v4527
  %4529 = vmatmul.f32.gmra.mxu0 %v4398
  %v4530 = vpop.f32.mrf.mxu0
  %v4531 = vadd.f32 %v4466, %v4530
  %4532 = vmatmul.f32.gmra.mxu0 %v4402
  %v4533 = vpop.f32.mrf.mxu0
  %v4534 = vadd.f32 %v4469, %v4533
  %4535 = vmatmul.f32.gmra.mxu0 %v4406
  %v4536 = vpop.f32.mrf.mxu0
  %v4537 = vadd.f32 %v4472, %v4536
  %4538 = vdwg.mxu0
  %4539 = vmatpush.msra.mxu0 %v712
  %4540 = vmatpush.msra.mxu0 %v711
  %4541 = vmatpush.msra.mxu0 %v710
  %4542 = vmatpush.msra.mxu0 %v709
  %4543 = vmatpush.msra.mxu0 %v708
  %4544 = vmatpush.msra.mxu0 %v707
  %4545 = vmatpush.msra.mxu0 %v706
  %4546 = vmatpush.msra.mxu0 %v705
  %4547 = vmatpush.msra.mxu0 %v704
  %4548 = vmatpush.msra.mxu0 %v703
  %4549 = vmatpush.msra.mxu0 %v702
  %4550 = vmatpush.msra.mxu0 %v701
  %4551 = vmatpush.msra.mxu0 %v700
  %4552 = vmatpush.msra.mxu0 %v699
  %4553 = vmatpush.msra.mxu0 %v698
  %4554 = vmatpush.msra.mxu0 %v697
  %4555 = vmatmul.f32.gmra.mxu0 %v4347
  %v4556 = vpop.f32.mrf.mxu0
  %v4557 = vadd.f32 %v4492, %v4556
  %4558 = vmatmul.f32.gmra.mxu0 %v4351
  %v4559 = vpop.f32.mrf.mxu0
  %v4560 = vadd.f32 %v4495, %v4559
  %4561 = vmatmul.f32.gmra.mxu0 %v4355
  %v4562 = vpop.f32.mrf.mxu0
  %v4563 = vadd.f32 %v4498, %v4562
  %4564 = vmatmul.f32.gmra.mxu0 %v4359
  %v4565 = vpop.f32.mrf.mxu0
  %v4566 = vadd.f32 %v4501, %v4565
  %4567 = vmatmul.f32.gmra.mxu0 %v4363
  %v4568 = vpop.f32.mrf.mxu0
  %v4569 = vadd.f32 %v4504, %v4568
  %4570 = vmatmul.f32.gmra.mxu0 %v4367
  %v4571 = vpop.f32.mrf.mxu0
  %v4572 = vadd.f32 %v4507, %v4571
  %4573 = vmatmul.f32.gmra.mxu0 %v4371
  %v4574 = vpop.f32.mrf.mxu0
  %v4575 = vadd.f32 %v4510, %v4574
  %4576 = vmatmul.f32.gmra.mxu0 %v4375
  %v4577 = vpop.f32.mrf.mxu0
  %v4578 = vadd.f32 %v4513, %v4577
  %4579 = vmatmul.f32.gmra.mxu0 %v4379
  %v4580 = vpop.f32.mrf.mxu0
  %v4581 = vadd.f32 %v4516, %v4580
  %4582 = vmatmul.f32.gmra.mxu0 %v4383
  %v4583 = vpop.f32.mrf.mxu0
  %v4584 = vadd.f32 %v4519, %v4583
  %4585 = vmatmul.f32.gmra.mxu0 %v4387
  %v4586 = vpop.f32.mrf.mxu0
  %v4587 = vadd.f32 %v4522, %v4586
  %4588 = vmatmul.f32.gmra.mxu0 %v4391
  %v4589 = vpop.f32.mrf.mxu0
  %v4590 = vadd.f32 %v4525, %v4589
  %4591 = vmatmul.f32.gmra.mxu0 %v4395
  %v4592 = vpop.f32.mrf.mxu0
  %v4593 = vadd.f32 %v4528, %v4592
  %4594 = vmatmul.f32.gmra.mxu0 %v4399
  %v4595 = vpop.f32.mrf.mxu0
  %v4596 = vadd.f32 %v4531, %v4595
  %4597 = vmatmul.f32.gmra.mxu0 %v4403
  %v4598 = vpop.f32.mrf.mxu0
  %v4599 = vadd.f32 %v4534, %v4598
  %4600 = vmatmul.f32.gmra.mxu0 %v4407
  %v4601 = vpop.f32.mrf.mxu0
  %v4602 = vadd.f32 %v4537, %v4601
  %4603 = vdwg.mxu0
  %4604 = vmatpush.msra.mxu0 %v728
  %4605 = vmatpush.msra.mxu0 %v727
  %4606 = vmatpush.msra.mxu0 %v726
  %4607 = vmatpush.msra.mxu0 %v725
  %4608 = vmatpush.msra.mxu0 %v724
  %4609 = vmatpush.msra.mxu0 %v723
  %4610 = vmatpush.msra.mxu0 %v722
  %4611 = vmatpush.msra.mxu0 %v721
  %4612 = vmatpush.msra.mxu0 %v720
  %4613 = vmatpush.msra.mxu0 %v719
  %4614 = vmatpush.msra.mxu0 %v718
  %4615 = vmatpush.msra.mxu0 %v717
  %4616 = vmatpush.msra.mxu0 %v716
  %4617 = vmatpush.msra.mxu0 %v715
  %4618 = vmatpush.msra.mxu0 %v714
  %4619 = vmatpush.msra.mxu0 %v713
  %4620 = vmatmul.f32.gmra.mxu0 %v4348
  %v4621 = vpop.f32.mrf.mxu0
  %v4622 = vadd.f32 %v4557, %v4621
  %4623 = vmatmul.f32.gmra.mxu0 %v4352
  %v4624 = vpop.f32.mrf.mxu0
  %v4625 = vadd.f32 %v4560, %v4624
  %4626 = vmatmul.f32.gmra.mxu0 %v4356
  %v4627 = vpop.f32.mrf.mxu0
  %v4628 = vadd.f32 %v4563, %v4627
  %4629 = vmatmul.f32.gmra.mxu0 %v4360
  %v4630 = vpop.f32.mrf.mxu0
  %v4631 = vadd.f32 %v4566, %v4630
  %4632 = vmatmul.f32.gmra.mxu0 %v4364
  %v4633 = vpop.f32.mrf.mxu0
  %v4634 = vadd.f32 %v4569, %v4633
  %4635 = vmatmul.f32.gmra.mxu0 %v4368
  %v4636 = vpop.f32.mrf.mxu0
  %v4637 = vadd.f32 %v4572, %v4636
  %4638 = vmatmul.f32.gmra.mxu0 %v4372
  %v4639 = vpop.f32.mrf.mxu0
  %v4640 = vadd.f32 %v4575, %v4639
  %4641 = vmatmul.f32.gmra.mxu0 %v4376
  %v4642 = vpop.f32.mrf.mxu0
  %v4643 = vadd.f32 %v4578, %v4642
  %4644 = vmatmul.f32.gmra.mxu0 %v4380
  %v4645 = vpop.f32.mrf.mxu0
  %v4646 = vadd.f32 %v4581, %v4645
  %4647 = vmatmul.f32.gmra.mxu0 %v4384
  %v4648 = vpop.f32.mrf.mxu0
  %v4649 = vadd.f32 %v4584, %v4648
  %4650 = vmatmul.f32.gmra.mxu0 %v4388
  %v4651 = vpop.f32.mrf.mxu0
  %v4652 = vadd.f32 %v4587, %v4651
  %4653 = vmatmul.f32.gmra.mxu0 %v4392
  %v4654 = vpop.f32.mrf.mxu0
  %v4655 = vadd.f32 %v4590, %v4654
  %4656 = vmatmul.f32.gmra.mxu0 %v4396
  %v4657 = vpop.f32.mrf.mxu0
  %v4658 = vadd.f32 %v4593, %v4657
  %4659 = vmatmul.f32.gmra.mxu0 %v4400
  %v4660 = vpop.f32.mrf.mxu0
  %v4661 = vadd.f32 %v4596, %v4660
  %4662 = vmatmul.f32.gmra.mxu0 %v4404
  %v4663 = vpop.f32.mrf.mxu0
  %v4664 = vadd.f32 %v4599, %v4663
  %4665 = vmatmul.f32.gmra.mxu0 %v4408
  %v4666 = vpop.f32.mrf.mxu0
  %v4667 = vadd.f32 %v4602, %v4666
  %4668 = vdwg.mxu0
  %s4669 = scalar_lea.vmem %s4, 64
  %v4670 = vld [vmem:[%s4669] sm:$0xff]
  %v4672 = vsel %vm1381, %v4622, 0
  %v4675 = vsel %vm1381, %v4625, 0
  %v4678 = vsel %vm1381, %v4628, 0
  %v4681 = vsel %vm1381, %v4631, 0
  %v4684 = vsel %vm1381, %v4634, 0
  %v4687 = vsel %vm1381, %v4637, 0
  %v4690 = vsel %vm1381, %v4640, 0
  %v4693 = vsel %vm1381, %v4643, 0
  %v4696 = vsel %vm1381, %v4646, 0
  %v4699 = vsel %vm1381, %v4649, 0
  %v4702 = vsel %vm1381, %v4652, 0
  %v4705 = vsel %vm1381, %v4655, 0
  %v4708 = vsel %vm1381, %v4658, 0
  %v4711 = vsel %vm1381, %v4661, 0
  %v4714 = vsel %vm1381, %v4664, 0
  %v4717 = vsel %vm1381, %v4667, 0
  %4719 = vmatpush.msra.mxu0 0.0
  %4720 = vmatpush.msra.mxu0 0.0
  %4721 = vmatpush.msra.mxu0 0.0
  %4722 = vmatpush.msra.mxu0 0.0
  %4723 = vmatpush.msra.mxu0 0.0
  %4724 = vmatpush.msra.mxu0 0.0
  %4725 = vmatpush.msra.mxu0 0.0
  %4726 = vmatpush.msra.mxu0 0.0
  %4727 = vmatpush.msra.mxu0 0.0
  %4728 = vmatpush.msra.mxu0 0.0
  %4729 = vmatpush.msra.mxu0 0.0
  %4730 = vmatpush.msra.mxu0 0.0
  %4731 = vmatpush.msra.mxu0 0.0
  %4732 = vmatpush.msra.mxu0 0.0
  %4733 = vmatpush.msra.mxu0 0.0
  %4734 = vmatpush.msra.mxu0 %v4670
  %4735 = vmatmul.f32.gmra.mxu0 %v4672
  %v4736 = vpop.f32.mrf.mxu0
  %v4737 = vadd.f32 0.0, %v4736
  %4738 = vmatmul.f32.gmra.mxu0 %v4675
  %v4739 = vpop.f32.mrf.mxu0
  %v4740 = vadd.f32 0.0, %v4739
  %4741 = vmatmul.f32.gmra.mxu0 %v4678
  %v4742 = vpop.f32.mrf.mxu0
  %v4743 = vadd.f32 0.0, %v4742
  %4744 = vmatmul.f32.gmra.mxu0 %v4681
  %v4745 = vpop.f32.mrf.mxu0
  %v4746 = vadd.f32 0.0, %v4745
  %4747 = vmatmul.f32.gmra.mxu0 %v4684
  %v4748 = vpop.f32.mrf.mxu0
  %v4749 = vadd.f32 0.0, %v4748
  %4750 = vmatmul.f32.gmra.mxu0 %v4687
  %v4751 = vpop.f32.mrf.mxu0
  %v4752 = vadd.f32 0.0, %v4751
  %4753 = vmatmul.f32.gmra.mxu0 %v4690
  %v4754 = vpop.f32.mrf.mxu0
  %v4755 = vadd.f32 0.0, %v4754
  %4756 = vmatmul.f32.gmra.mxu0 %v4693
  %v4757 = vpop.f32.mrf.mxu0
  %v4758 = vadd.f32 0.0, %v4757
  %4759 = vmatmul.f32.gmra.mxu0 %v4696
  %v4760 = vpop.f32.mrf.mxu0
  %v4761 = vadd.f32 0.0, %v4760
  %4762 = vmatmul.f32.gmra.mxu0 %v4699
  %v4763 = vpop.f32.mrf.mxu0
  %v4764 = vadd.f32 0.0, %v4763
  %4765 = vmatmul.f32.gmra.mxu0 %v4702
  %v4766 = vpop.f32.mrf.mxu0
  %v4767 = vadd.f32 0.0, %v4766
  %4768 = vmatmul.f32.gmra.mxu0 %v4705
  %v4769 = vpop.f32.mrf.mxu0
  %v4770 = vadd.f32 0.0, %v4769
  %4771 = vmatmul.f32.gmra.mxu0 %v4708
  %v4772 = vpop.f32.mrf.mxu0
  %v4773 = vadd.f32 0.0, %v4772
  %4774 = vmatmul.f32.gmra.mxu0 %v4711
  %v4775 = vpop.f32.mrf.mxu0
  %v4776 = vadd.f32 0.0, %v4775
  %4777 = vmatmul.f32.gmra.mxu0 %v4714
  %v4778 = vpop.f32.mrf.mxu0
  %v4779 = vadd.f32 0.0, %v4778
  %4780 = vmatmul.f32.gmra.mxu0 %v4717
  %v4781 = vpop.f32.mrf.mxu0
  %v4782 = vadd.f32 0.0, %v4781
  %4783 = vdwg.mxu0
  %v4784 = vadd.f32 %v4328, %v4737
  %v4785 = vadd.f32 %v4329, %v4740
  %v4786 = vadd.f32 %v4330, %v4743
  %v4787 = vadd.f32 %v4331, %v4746
  %v4788 = vadd.f32 %v4332, %v4749
  %v4789 = vadd.f32 %v4333, %v4752
  %v4790 = vadd.f32 %v4334, %v4755
  %v4791 = vadd.f32 %v4335, %v4758
  %v4792 = vadd.f32 %v4336, %v4761
  %v4793 = vadd.f32 %v4337, %v4764
  %v4794 = vadd.f32 %v4338, %v4767
  %v4795 = vadd.f32 %v4339, %v4770
  %v4796 = vadd.f32 %v4340, %v4773
  %v4797 = vadd.f32 %v4341, %v4776
  %v4798 = vadd.f32 %v4342, %v4779
  %v4799 = vadd.f32 %v4343, %v4782
  %s4800 = scalar_lea.vmem %s3, 4608
  %v4801 = vld [vmem:[%s4800] sm:$0xff]
  %v4802 = vld [vmem:[%s4800 + $0x8] sm:$0xff]
  %v4803 = vld [vmem:[%s4800 + $0x10] sm:$0xff]
  %v4804 = vld [vmem:[%s4800 + $0x18] sm:$0xff]
  %v4805 = vld [vmem:[%s4800 + $0x20] sm:$0xff]
  %v4806 = vld [vmem:[%s4800 + $0x28] sm:$0xff]
  %v4807 = vld [vmem:[%s4800 + $0x30] sm:$0xff]
  %v4808 = vld [vmem:[%s4800 + $0x38] sm:$0xff]
  %v4809 = vld [vmem:[%s4800 + $0x40] sm:$0xff]
  %v4810 = vld [vmem:[%s4800 + $0x48] sm:$0xff]
  %v4811 = vld [vmem:[%s4800 + $0x50] sm:$0xff]
  %v4812 = vld [vmem:[%s4800 + $0x58] sm:$0xff]
  %v4813 = vld [vmem:[%s4800 + $0x60] sm:$0xff]
  %v4814 = vld [vmem:[%s4800 + $0x68] sm:$0xff]
  %v4815 = vld [vmem:[%s4800 + $0x70] sm:$0xff]
  %v4816 = vld [vmem:[%s4800 + $0x78] sm:$0xff]
  %v4817 = vld [vmem:[%s4800 + $0x80] sm:$0xff]
  %v4818 = vld [vmem:[%s4800 + $0x88] sm:$0xff]
  %v4819 = vld [vmem:[%s4800 + $0x90] sm:$0xff]
  %v4820 = vld [vmem:[%s4800 + $0x98] sm:$0xff]
  %v4821 = vld [vmem:[%s4800 + $0xa0] sm:$0xff]
  %v4822 = vld [vmem:[%s4800 + $0xa8] sm:$0xff]
  %v4823 = vld [vmem:[%s4800 + $0xb0] sm:$0xff]
  %v4824 = vld [vmem:[%s4800 + $0xb8] sm:$0xff]
  %v4825 = vld [vmem:[%s4800 + $0xc0] sm:$0xff]
  %v4826 = vld [vmem:[%s4800 + $0xc8] sm:$0xff]
  %v4827 = vld [vmem:[%s4800 + $0xd0] sm:$0xff]
  %v4828 = vld [vmem:[%s4800 + $0xd8] sm:$0xff]
  %v4829 = vld [vmem:[%s4800 + $0xe0] sm:$0xff]
  %v4830 = vld [vmem:[%s4800 + $0xe8] sm:$0xff]
  %v4831 = vld [vmem:[%s4800 + $0xf0] sm:$0xff]
  %v4832 = vld [vmem:[%s4800 + $0xf8] sm:$0xff]
  %v4833 = vld [vmem:[%s4800 + $0x100] sm:$0xff]
  %v4834 = vld [vmem:[%s4800 + $0x108] sm:$0xff]
  %v4835 = vld [vmem:[%s4800 + $0x110] sm:$0xff]
  %v4836 = vld [vmem:[%s4800 + $0x118] sm:$0xff]
  %v4837 = vld [vmem:[%s4800 + $0x120] sm:$0xff]
  %v4838 = vld [vmem:[%s4800 + $0x128] sm:$0xff]
  %v4839 = vld [vmem:[%s4800 + $0x130] sm:$0xff]
  %v4840 = vld [vmem:[%s4800 + $0x138] sm:$0xff]
  %v4841 = vld [vmem:[%s4800 + $0x140] sm:$0xff]
  %v4842 = vld [vmem:[%s4800 + $0x148] sm:$0xff]
  %v4843 = vld [vmem:[%s4800 + $0x150] sm:$0xff]
  %v4844 = vld [vmem:[%s4800 + $0x158] sm:$0xff]
  %v4845 = vld [vmem:[%s4800 + $0x160] sm:$0xff]
  %v4846 = vld [vmem:[%s4800 + $0x168] sm:$0xff]
  %v4847 = vld [vmem:[%s4800 + $0x170] sm:$0xff]
  %v4848 = vld [vmem:[%s4800 + $0x178] sm:$0xff]
  %v4849 = vld [vmem:[%s4800 + $0x180] sm:$0xff]
  %v4850 = vld [vmem:[%s4800 + $0x188] sm:$0xff]
  %v4851 = vld [vmem:[%s4800 + $0x190] sm:$0xff]
  %v4852 = vld [vmem:[%s4800 + $0x198] sm:$0xff]
  %v4853 = vld [vmem:[%s4800 + $0x1a0] sm:$0xff]
  %v4854 = vld [vmem:[%s4800 + $0x1a8] sm:$0xff]
  %v4855 = vld [vmem:[%s4800 + $0x1b0] sm:$0xff]
  %v4856 = vld [vmem:[%s4800 + $0x1b8] sm:$0xff]
  %v4857 = vld [vmem:[%s4800 + $0x1c0] sm:$0xff]
  %v4858 = vld [vmem:[%s4800 + $0x1c8] sm:$0xff]
  %v4859 = vld [vmem:[%s4800 + $0x1d0] sm:$0xff]
  %v4860 = vld [vmem:[%s4800 + $0x1d8] sm:$0xff]
  %v4861 = vld [vmem:[%s4800 + $0x1e0] sm:$0xff]
  %v4862 = vld [vmem:[%s4800 + $0x1e8] sm:$0xff]
  %v4863 = vld [vmem:[%s4800 + $0x1f0] sm:$0xff]
  %v4864 = vld [vmem:[%s4800 + $0x1f8] sm:$0xff]
  %4865 = vmatpush.msra.mxu0 %v680
  %4866 = vmatpush.msra.mxu0 %v679
  %4867 = vmatpush.msra.mxu0 %v678
  %4868 = vmatpush.msra.mxu0 %v677
  %4869 = vmatpush.msra.mxu0 %v676
  %4870 = vmatpush.msra.mxu0 %v675
  %4871 = vmatpush.msra.mxu0 %v674
  %4872 = vmatpush.msra.mxu0 %v673
  %4873 = vmatpush.msra.mxu0 %v672
  %4874 = vmatpush.msra.mxu0 %v671
  %4875 = vmatpush.msra.mxu0 %v670
  %4876 = vmatpush.msra.mxu0 %v669
  %4877 = vmatpush.msra.mxu0 %v668
  %4878 = vmatpush.msra.mxu0 %v667
  %4879 = vmatpush.msra.mxu0 %v666
  %4880 = vmatpush.msra.mxu0 %v665
  %4881 = vmatmul.f32.gmra.mxu0 %v4801
  %v4882 = vpop.f32.mrf.mxu0
  %v4883 = vadd.f32 0.0, %v4882
  %4884 = vmatmul.f32.gmra.mxu0 %v4805
  %v4885 = vpop.f32.mrf.mxu0
  %v4886 = vadd.f32 0.0, %v4885
  %4887 = vmatmul.f32.gmra.mxu0 %v4809
  %v4888 = vpop.f32.mrf.mxu0
  %v4889 = vadd.f32 0.0, %v4888
  %4890 = vmatmul.f32.gmra.mxu0 %v4813
  %v4891 = vpop.f32.mrf.mxu0
  %v4892 = vadd.f32 0.0, %v4891
  %4893 = vmatmul.f32.gmra.mxu0 %v4817
  %v4894 = vpop.f32.mrf.mxu0
  %v4895 = vadd.f32 0.0, %v4894
  %4896 = vmatmul.f32.gmra.mxu0 %v4821
  %v4897 = vpop.f32.mrf.mxu0
  %v4898 = vadd.f32 0.0, %v4897
  %4899 = vmatmul.f32.gmra.mxu0 %v4825
  %v4900 = vpop.f32.mrf.mxu0
  %v4901 = vadd.f32 0.0, %v4900
  %4902 = vmatmul.f32.gmra.mxu0 %v4829
  %v4903 = vpop.f32.mrf.mxu0
  %v4904 = vadd.f32 0.0, %v4903
  %4905 = vmatmul.f32.gmra.mxu0 %v4833
  %v4906 = vpop.f32.mrf.mxu0
  %v4907 = vadd.f32 0.0, %v4906
  %4908 = vmatmul.f32.gmra.mxu0 %v4837
  %v4909 = vpop.f32.mrf.mxu0
  %v4910 = vadd.f32 0.0, %v4909
  %4911 = vmatmul.f32.gmra.mxu0 %v4841
  %v4912 = vpop.f32.mrf.mxu0
  %v4913 = vadd.f32 0.0, %v4912
  %4914 = vmatmul.f32.gmra.mxu0 %v4845
  %v4915 = vpop.f32.mrf.mxu0
  %v4916 = vadd.f32 0.0, %v4915
  %4917 = vmatmul.f32.gmra.mxu0 %v4849
  %v4918 = vpop.f32.mrf.mxu0
  %v4919 = vadd.f32 0.0, %v4918
  %4920 = vmatmul.f32.gmra.mxu0 %v4853
  %v4921 = vpop.f32.mrf.mxu0
  %v4922 = vadd.f32 0.0, %v4921
  %4923 = vmatmul.f32.gmra.mxu0 %v4857
  %v4924 = vpop.f32.mrf.mxu0
  %v4925 = vadd.f32 0.0, %v4924
  %4926 = vmatmul.f32.gmra.mxu0 %v4861
  %v4927 = vpop.f32.mrf.mxu0
  %v4928 = vadd.f32 0.0, %v4927
  %4929 = vdwg.mxu0
  %4930 = vmatpush.msra.mxu0 %v696
  %4931 = vmatpush.msra.mxu0 %v695
  %4932 = vmatpush.msra.mxu0 %v694
  %4933 = vmatpush.msra.mxu0 %v693
  %4934 = vmatpush.msra.mxu0 %v692
  %4935 = vmatpush.msra.mxu0 %v691
  %4936 = vmatpush.msra.mxu0 %v690
  %4937 = vmatpush.msra.mxu0 %v689
  %4938 = vmatpush.msra.mxu0 %v688
  %4939 = vmatpush.msra.mxu0 %v687
  %4940 = vmatpush.msra.mxu0 %v686
  %4941 = vmatpush.msra.mxu0 %v685
  %4942 = vmatpush.msra.mxu0 %v684
  %4943 = vmatpush.msra.mxu0 %v683
  %4944 = vmatpush.msra.mxu0 %v682
  %4945 = vmatpush.msra.mxu0 %v681
  %4946 = vmatmul.f32.gmra.mxu0 %v4802
  %v4947 = vpop.f32.mrf.mxu0
  %v4948 = vadd.f32 %v4883, %v4947
  %4949 = vmatmul.f32.gmra.mxu0 %v4806
  %v4950 = vpop.f32.mrf.mxu0
  %v4951 = vadd.f32 %v4886, %v4950
  %4952 = vmatmul.f32.gmra.mxu0 %v4810
  %v4953 = vpop.f32.mrf.mxu0
  %v4954 = vadd.f32 %v4889, %v4953
  %4955 = vmatmul.f32.gmra.mxu0 %v4814
  %v4956 = vpop.f32.mrf.mxu0
  %v4957 = vadd.f32 %v4892, %v4956
  %4958 = vmatmul.f32.gmra.mxu0 %v4818
  %v4959 = vpop.f32.mrf.mxu0
  %v4960 = vadd.f32 %v4895, %v4959
  %4961 = vmatmul.f32.gmra.mxu0 %v4822
  %v4962 = vpop.f32.mrf.mxu0
  %v4963 = vadd.f32 %v4898, %v4962
  %4964 = vmatmul.f32.gmra.mxu0 %v4826
  %v4965 = vpop.f32.mrf.mxu0
  %v4966 = vadd.f32 %v4901, %v4965
  %4967 = vmatmul.f32.gmra.mxu0 %v4830
  %v4968 = vpop.f32.mrf.mxu0
  %v4969 = vadd.f32 %v4904, %v4968
  %4970 = vmatmul.f32.gmra.mxu0 %v4834
  %v4971 = vpop.f32.mrf.mxu0
  %v4972 = vadd.f32 %v4907, %v4971
  %4973 = vmatmul.f32.gmra.mxu0 %v4838
  %v4974 = vpop.f32.mrf.mxu0
  %v4975 = vadd.f32 %v4910, %v4974
  %4976 = vmatmul.f32.gmra.mxu0 %v4842
  %v4977 = vpop.f32.mrf.mxu0
  %v4978 = vadd.f32 %v4913, %v4977
  %4979 = vmatmul.f32.gmra.mxu0 %v4846
  %v4980 = vpop.f32.mrf.mxu0
  %v4981 = vadd.f32 %v4916, %v4980
  %4982 = vmatmul.f32.gmra.mxu0 %v4850
  %v4983 = vpop.f32.mrf.mxu0
  %v4984 = vadd.f32 %v4919, %v4983
  %4985 = vmatmul.f32.gmra.mxu0 %v4854
  %v4986 = vpop.f32.mrf.mxu0
  %v4987 = vadd.f32 %v4922, %v4986
  %4988 = vmatmul.f32.gmra.mxu0 %v4858
  %v4989 = vpop.f32.mrf.mxu0
  %v4990 = vadd.f32 %v4925, %v4989
  %4991 = vmatmul.f32.gmra.mxu0 %v4862
  %v4992 = vpop.f32.mrf.mxu0
  %v4993 = vadd.f32 %v4928, %v4992
  %4994 = vdwg.mxu0
  %4995 = vmatpush.msra.mxu0 %v712
  %4996 = vmatpush.msra.mxu0 %v711
  %4997 = vmatpush.msra.mxu0 %v710
  %4998 = vmatpush.msra.mxu0 %v709
  %4999 = vmatpush.msra.mxu0 %v708
  %5000 = vmatpush.msra.mxu0 %v707
  %5001 = vmatpush.msra.mxu0 %v706
  %5002 = vmatpush.msra.mxu0 %v705
  %5003 = vmatpush.msra.mxu0 %v704
  %5004 = vmatpush.msra.mxu0 %v703
  %5005 = vmatpush.msra.mxu0 %v702
  %5006 = vmatpush.msra.mxu0 %v701
  %5007 = vmatpush.msra.mxu0 %v700
  %5008 = vmatpush.msra.mxu0 %v699
  %5009 = vmatpush.msra.mxu0 %v698
  %5010 = vmatpush.msra.mxu0 %v697
  %5011 = vmatmul.f32.gmra.mxu0 %v4803
  %v5012 = vpop.f32.mrf.mxu0
  %v5013 = vadd.f32 %v4948, %v5012
  %5014 = vmatmul.f32.gmra.mxu0 %v4807
  %v5015 = vpop.f32.mrf.mxu0
  %v5016 = vadd.f32 %v4951, %v5015
  %5017 = vmatmul.f32.gmra.mxu0 %v4811
  %v5018 = vpop.f32.mrf.mxu0
  %v5019 = vadd.f32 %v4954, %v5018
  %5020 = vmatmul.f32.gmra.mxu0 %v4815
  %v5021 = vpop.f32.mrf.mxu0
  %v5022 = vadd.f32 %v4957, %v5021
  %5023 = vmatmul.f32.gmra.mxu0 %v4819
  %v5024 = vpop.f32.mrf.mxu0
  %v5025 = vadd.f32 %v4960, %v5024
  %5026 = vmatmul.f32.gmra.mxu0 %v4823
  %v5027 = vpop.f32.mrf.mxu0
  %v5028 = vadd.f32 %v4963, %v5027
  %5029 = vmatmul.f32.gmra.mxu0 %v4827
  %v5030 = vpop.f32.mrf.mxu0
  %v5031 = vadd.f32 %v4966, %v5030
  %5032 = vmatmul.f32.gmra.mxu0 %v4831
  %v5033 = vpop.f32.mrf.mxu0
  %v5034 = vadd.f32 %v4969, %v5033
  %5035 = vmatmul.f32.gmra.mxu0 %v4835
  %v5036 = vpop.f32.mrf.mxu0
  %v5037 = vadd.f32 %v4972, %v5036
  %5038 = vmatmul.f32.gmra.mxu0 %v4839
  %v5039 = vpop.f32.mrf.mxu0
  %v5040 = vadd.f32 %v4975, %v5039
  %5041 = vmatmul.f32.gmra.mxu0 %v4843
  %v5042 = vpop.f32.mrf.mxu0
  %v5043 = vadd.f32 %v4978, %v5042
  %5044 = vmatmul.f32.gmra.mxu0 %v4847
  %v5045 = vpop.f32.mrf.mxu0
  %v5046 = vadd.f32 %v4981, %v5045
  %5047 = vmatmul.f32.gmra.mxu0 %v4851
  %v5048 = vpop.f32.mrf.mxu0
  %v5049 = vadd.f32 %v4984, %v5048
  %5050 = vmatmul.f32.gmra.mxu0 %v4855
  %v5051 = vpop.f32.mrf.mxu0
  %v5052 = vadd.f32 %v4987, %v5051
  %5053 = vmatmul.f32.gmra.mxu0 %v4859
  %v5054 = vpop.f32.mrf.mxu0
  %v5055 = vadd.f32 %v4990, %v5054
  %5056 = vmatmul.f32.gmra.mxu0 %v4863
  %v5057 = vpop.f32.mrf.mxu0
  %v5058 = vadd.f32 %v4993, %v5057
  %5059 = vdwg.mxu0
  %5060 = vmatpush.msra.mxu0 %v728
  %5061 = vmatpush.msra.mxu0 %v727
  %5062 = vmatpush.msra.mxu0 %v726
  %5063 = vmatpush.msra.mxu0 %v725
  %5064 = vmatpush.msra.mxu0 %v724
  %5065 = vmatpush.msra.mxu0 %v723
  %5066 = vmatpush.msra.mxu0 %v722
  %5067 = vmatpush.msra.mxu0 %v721
  %5068 = vmatpush.msra.mxu0 %v720
  %5069 = vmatpush.msra.mxu0 %v719
  %5070 = vmatpush.msra.mxu0 %v718
  %5071 = vmatpush.msra.mxu0 %v717
  %5072 = vmatpush.msra.mxu0 %v716
  %5073 = vmatpush.msra.mxu0 %v715
  %5074 = vmatpush.msra.mxu0 %v714
  %5075 = vmatpush.msra.mxu0 %v713
  %5076 = vmatmul.f32.gmra.mxu0 %v4804
  %v5077 = vpop.f32.mrf.mxu0
  %v5078 = vadd.f32 %v5013, %v5077
  %5079 = vmatmul.f32.gmra.mxu0 %v4808
  %v5080 = vpop.f32.mrf.mxu0
  %v5081 = vadd.f32 %v5016, %v5080
  %5082 = vmatmul.f32.gmra.mxu0 %v4812
  %v5083 = vpop.f32.mrf.mxu0
  %v5084 = vadd.f32 %v5019, %v5083
  %5085 = vmatmul.f32.gmra.mxu0 %v4816
  %v5086 = vpop.f32.mrf.mxu0
  %v5087 = vadd.f32 %v5022, %v5086
  %5088 = vmatmul.f32.gmra.mxu0 %v4820
  %v5089 = vpop.f32.mrf.mxu0
  %v5090 = vadd.f32 %v5025, %v5089
  %5091 = vmatmul.f32.gmra.mxu0 %v4824
  %v5092 = vpop.f32.mrf.mxu0
  %v5093 = vadd.f32 %v5028, %v5092
  %5094 = vmatmul.f32.gmra.mxu0 %v4828
  %v5095 = vpop.f32.mrf.mxu0
  %v5096 = vadd.f32 %v5031, %v5095
  %5097 = vmatmul.f32.gmra.mxu0 %v4832
  %v5098 = vpop.f32.mrf.mxu0
  %v5099 = vadd.f32 %v5034, %v5098
  %5100 = vmatmul.f32.gmra.mxu0 %v4836
  %v5101 = vpop.f32.mrf.mxu0
  %v5102 = vadd.f32 %v5037, %v5101
  %5103 = vmatmul.f32.gmra.mxu0 %v4840
  %v5104 = vpop.f32.mrf.mxu0
  %v5105 = vadd.f32 %v5040, %v5104
  %5106 = vmatmul.f32.gmra.mxu0 %v4844
  %v5107 = vpop.f32.mrf.mxu0
  %v5108 = vadd.f32 %v5043, %v5107
  %5109 = vmatmul.f32.gmra.mxu0 %v4848
  %v5110 = vpop.f32.mrf.mxu0
  %v5111 = vadd.f32 %v5046, %v5110
  %5112 = vmatmul.f32.gmra.mxu0 %v4852
  %v5113 = vpop.f32.mrf.mxu0
  %v5114 = vadd.f32 %v5049, %v5113
  %5115 = vmatmul.f32.gmra.mxu0 %v4856
  %v5116 = vpop.f32.mrf.mxu0
  %v5117 = vadd.f32 %v5052, %v5116
  %5118 = vmatmul.f32.gmra.mxu0 %v4860
  %v5119 = vpop.f32.mrf.mxu0
  %v5120 = vadd.f32 %v5055, %v5119
  %5121 = vmatmul.f32.gmra.mxu0 %v4864
  %v5122 = vpop.f32.mrf.mxu0
  %v5123 = vadd.f32 %v5058, %v5122
  %5124 = vdwg.mxu0
  %s5125 = scalar_lea.vmem %s4, 72
  %v5126 = vld [vmem:[%s5125] sm:$0xff]
  %v5128 = vsel %vm1381, %v5078, 0
  %v5131 = vsel %vm1381, %v5081, 0
  %v5134 = vsel %vm1381, %v5084, 0
  %v5137 = vsel %vm1381, %v5087, 0
  %v5140 = vsel %vm1381, %v5090, 0
  %v5143 = vsel %vm1381, %v5093, 0
  %v5146 = vsel %vm1381, %v5096, 0
  %v5149 = vsel %vm1381, %v5099, 0
  %v5152 = vsel %vm1381, %v5102, 0
  %v5155 = vsel %vm1381, %v5105, 0
  %v5158 = vsel %vm1381, %v5108, 0
  %v5161 = vsel %vm1381, %v5111, 0
  %v5164 = vsel %vm1381, %v5114, 0
  %v5167 = vsel %vm1381, %v5117, 0
  %v5170 = vsel %vm1381, %v5120, 0
  %v5173 = vsel %vm1381, %v5123, 0
  %5175 = vmatpush.msra.mxu0 0.0
  %5176 = vmatpush.msra.mxu0 0.0
  %5177 = vmatpush.msra.mxu0 0.0
  %5178 = vmatpush.msra.mxu0 0.0
  %5179 = vmatpush.msra.mxu0 0.0
  %5180 = vmatpush.msra.mxu0 0.0
  %5181 = vmatpush.msra.mxu0 0.0
  %5182 = vmatpush.msra.mxu0 0.0
  %5183 = vmatpush.msra.mxu0 0.0
  %5184 = vmatpush.msra.mxu0 0.0
  %5185 = vmatpush.msra.mxu0 0.0
  %5186 = vmatpush.msra.mxu0 0.0
  %5187 = vmatpush.msra.mxu0 0.0
  %5188 = vmatpush.msra.mxu0 0.0
  %5189 = vmatpush.msra.mxu0 0.0
  %5190 = vmatpush.msra.mxu0 %v5126
  %5191 = vmatmul.f32.gmra.mxu0 %v5128
  %v5192 = vpop.f32.mrf.mxu0
  %v5193 = vadd.f32 0.0, %v5192
  %5194 = vmatmul.f32.gmra.mxu0 %v5131
  %v5195 = vpop.f32.mrf.mxu0
  %v5196 = vadd.f32 0.0, %v5195
  %5197 = vmatmul.f32.gmra.mxu0 %v5134
  %v5198 = vpop.f32.mrf.mxu0
  %v5199 = vadd.f32 0.0, %v5198
  %5200 = vmatmul.f32.gmra.mxu0 %v5137
  %v5201 = vpop.f32.mrf.mxu0
  %v5202 = vadd.f32 0.0, %v5201
  %5203 = vmatmul.f32.gmra.mxu0 %v5140
  %v5204 = vpop.f32.mrf.mxu0
  %v5205 = vadd.f32 0.0, %v5204
  %5206 = vmatmul.f32.gmra.mxu0 %v5143
  %v5207 = vpop.f32.mrf.mxu0
  %v5208 = vadd.f32 0.0, %v5207
  %5209 = vmatmul.f32.gmra.mxu0 %v5146
  %v5210 = vpop.f32.mrf.mxu0
  %v5211 = vadd.f32 0.0, %v5210
  %5212 = vmatmul.f32.gmra.mxu0 %v5149
  %v5213 = vpop.f32.mrf.mxu0
  %v5214 = vadd.f32 0.0, %v5213
  %5215 = vmatmul.f32.gmra.mxu0 %v5152
  %v5216 = vpop.f32.mrf.mxu0
  %v5217 = vadd.f32 0.0, %v5216
  %5218 = vmatmul.f32.gmra.mxu0 %v5155
  %v5219 = vpop.f32.mrf.mxu0
  %v5220 = vadd.f32 0.0, %v5219
  %5221 = vmatmul.f32.gmra.mxu0 %v5158
  %v5222 = vpop.f32.mrf.mxu0
  %v5223 = vadd.f32 0.0, %v5222
  %5224 = vmatmul.f32.gmra.mxu0 %v5161
  %v5225 = vpop.f32.mrf.mxu0
  %v5226 = vadd.f32 0.0, %v5225
  %5227 = vmatmul.f32.gmra.mxu0 %v5164
  %v5228 = vpop.f32.mrf.mxu0
  %v5229 = vadd.f32 0.0, %v5228
  %5230 = vmatmul.f32.gmra.mxu0 %v5167
  %v5231 = vpop.f32.mrf.mxu0
  %v5232 = vadd.f32 0.0, %v5231
  %5233 = vmatmul.f32.gmra.mxu0 %v5170
  %v5234 = vpop.f32.mrf.mxu0
  %v5235 = vadd.f32 0.0, %v5234
  %5236 = vmatmul.f32.gmra.mxu0 %v5173
  %v5237 = vpop.f32.mrf.mxu0
  %v5238 = vadd.f32 0.0, %v5237
  %5239 = vdwg.mxu0
  %v5240 = vadd.f32 %v4784, %v5193
  %v5241 = vadd.f32 %v4785, %v5196
  %v5242 = vadd.f32 %v4786, %v5199
  %v5243 = vadd.f32 %v4787, %v5202
  %v5244 = vadd.f32 %v4788, %v5205
  %v5245 = vadd.f32 %v4789, %v5208
  %v5246 = vadd.f32 %v4790, %v5211
  %v5247 = vadd.f32 %v4791, %v5214
  %v5248 = vadd.f32 %v4792, %v5217
  %v5249 = vadd.f32 %v4793, %v5220
  %v5250 = vadd.f32 %v4794, %v5223
  %v5251 = vadd.f32 %v4795, %v5226
  %v5252 = vadd.f32 %v4796, %v5229
  %v5253 = vadd.f32 %v4797, %v5232
  %v5254 = vadd.f32 %v4798, %v5235
  %v5255 = vadd.f32 %v4799, %v5238
  %s5256 = scalar_lea.vmem %s3, 5120
  %v5257 = vld [vmem:[%s5256] sm:$0xff]
  %v5258 = vld [vmem:[%s5256 + $0x8] sm:$0xff]
  %v5259 = vld [vmem:[%s5256 + $0x10] sm:$0xff]
  %v5260 = vld [vmem:[%s5256 + $0x18] sm:$0xff]
  %v5261 = vld [vmem:[%s5256 + $0x20] sm:$0xff]
  %v5262 = vld [vmem:[%s5256 + $0x28] sm:$0xff]
  %v5263 = vld [vmem:[%s5256 + $0x30] sm:$0xff]
  %v5264 = vld [vmem:[%s5256 + $0x38] sm:$0xff]
  %v5265 = vld [vmem:[%s5256 + $0x40] sm:$0xff]
  %v5266 = vld [vmem:[%s5256 + $0x48] sm:$0xff]
  %v5267 = vld [vmem:[%s5256 + $0x50] sm:$0xff]
  %v5268 = vld [vmem:[%s5256 + $0x58] sm:$0xff]
  %v5269 = vld [vmem:[%s5256 + $0x60] sm:$0xff]
  %v5270 = vld [vmem:[%s5256 + $0x68] sm:$0xff]
  %v5271 = vld [vmem:[%s5256 + $0x70] sm:$0xff]
  %v5272 = vld [vmem:[%s5256 + $0x78] sm:$0xff]
  %v5273 = vld [vmem:[%s5256 + $0x80] sm:$0xff]
  %v5274 = vld [vmem:[%s5256 + $0x88] sm:$0xff]
  %v5275 = vld [vmem:[%s5256 + $0x90] sm:$0xff]
  %v5276 = vld [vmem:[%s5256 + $0x98] sm:$0xff]
  %v5277 = vld [vmem:[%s5256 + $0xa0] sm:$0xff]
  %v5278 = vld [vmem:[%s5256 + $0xa8] sm:$0xff]
  %v5279 = vld [vmem:[%s5256 + $0xb0] sm:$0xff]
  %v5280 = vld [vmem:[%s5256 + $0xb8] sm:$0xff]
  %v5281 = vld [vmem:[%s5256 + $0xc0] sm:$0xff]
  %v5282 = vld [vmem:[%s5256 + $0xc8] sm:$0xff]
  %v5283 = vld [vmem:[%s5256 + $0xd0] sm:$0xff]
  %v5284 = vld [vmem:[%s5256 + $0xd8] sm:$0xff]
  %v5285 = vld [vmem:[%s5256 + $0xe0] sm:$0xff]
  %v5286 = vld [vmem:[%s5256 + $0xe8] sm:$0xff]
  %v5287 = vld [vmem:[%s5256 + $0xf0] sm:$0xff]
  %v5288 = vld [vmem:[%s5256 + $0xf8] sm:$0xff]
  %v5289 = vld [vmem:[%s5256 + $0x100] sm:$0xff]
  %v5290 = vld [vmem:[%s5256 + $0x108] sm:$0xff]
  %v5291 = vld [vmem:[%s5256 + $0x110] sm:$0xff]
  %v5292 = vld [vmem:[%s5256 + $0x118] sm:$0xff]
  %v5293 = vld [vmem:[%s5256 + $0x120] sm:$0xff]
  %v5294 = vld [vmem:[%s5256 + $0x128] sm:$0xff]
  %v5295 = vld [vmem:[%s5256 + $0x130] sm:$0xff]
  %v5296 = vld [vmem:[%s5256 + $0x138] sm:$0xff]
  %v5297 = vld [vmem:[%s5256 + $0x140] sm:$0xff]
  %v5298 = vld [vmem:[%s5256 + $0x148] sm:$0xff]
  %v5299 = vld [vmem:[%s5256 + $0x150] sm:$0xff]
  %v5300 = vld [vmem:[%s5256 + $0x158] sm:$0xff]
  %v5301 = vld [vmem:[%s5256 + $0x160] sm:$0xff]
  %v5302 = vld [vmem:[%s5256 + $0x168] sm:$0xff]
  %v5303 = vld [vmem:[%s5256 + $0x170] sm:$0xff]
  %v5304 = vld [vmem:[%s5256 + $0x178] sm:$0xff]
  %v5305 = vld [vmem:[%s5256 + $0x180] sm:$0xff]
  %v5306 = vld [vmem:[%s5256 + $0x188] sm:$0xff]
  %v5307 = vld [vmem:[%s5256 + $0x190] sm:$0xff]
  %v5308 = vld [vmem:[%s5256 + $0x198] sm:$0xff]
  %v5309 = vld [vmem:[%s5256 + $0x1a0] sm:$0xff]
  %v5310 = vld [vmem:[%s5256 + $0x1a8] sm:$0xff]
  %v5311 = vld [vmem:[%s5256 + $0x1b0] sm:$0xff]
  %v5312 = vld [vmem:[%s5256 + $0x1b8] sm:$0xff]
  %v5313 = vld [vmem:[%s5256 + $0x1c0] sm:$0xff]
  %v5314 = vld [vmem:[%s5256 + $0x1c8] sm:$0xff]
  %v5315 = vld [vmem:[%s5256 + $0x1d0] sm:$0xff]
  %v5316 = vld [vmem:[%s5256 + $0x1d8] sm:$0xff]
  %v5317 = vld [vmem:[%s5256 + $0x1e0] sm:$0xff]
  %v5318 = vld [vmem:[%s5256 + $0x1e8] sm:$0xff]
  %v5319 = vld [vmem:[%s5256 + $0x1f0] sm:$0xff]
  %v5320 = vld [vmem:[%s5256 + $0x1f8] sm:$0xff]
  %5321 = vmatpush.msra.mxu0 %v680
  %5322 = vmatpush.msra.mxu0 %v679
  %5323 = vmatpush.msra.mxu0 %v678
  %5324 = vmatpush.msra.mxu0 %v677
  %5325 = vmatpush.msra.mxu0 %v676
  %5326 = vmatpush.msra.mxu0 %v675
  %5327 = vmatpush.msra.mxu0 %v674
  %5328 = vmatpush.msra.mxu0 %v673
  %5329 = vmatpush.msra.mxu0 %v672
  %5330 = vmatpush.msra.mxu0 %v671
  %5331 = vmatpush.msra.mxu0 %v670
  %5332 = vmatpush.msra.mxu0 %v669
  %5333 = vmatpush.msra.mxu0 %v668
  %5334 = vmatpush.msra.mxu0 %v667
  %5335 = vmatpush.msra.mxu0 %v666
  %5336 = vmatpush.msra.mxu0 %v665
  %5337 = vmatmul.f32.gmra.mxu0 %v5257
  %v5338 = vpop.f32.mrf.mxu0
  %v5339 = vadd.f32 0.0, %v5338
  %5340 = vmatmul.f32.gmra.mxu0 %v5261
  %v5341 = vpop.f32.mrf.mxu0
  %v5342 = vadd.f32 0.0, %v5341
  %5343 = vmatmul.f32.gmra.mxu0 %v5265
  %v5344 = vpop.f32.mrf.mxu0
  %v5345 = vadd.f32 0.0, %v5344
  %5346 = vmatmul.f32.gmra.mxu0 %v5269
  %v5347 = vpop.f32.mrf.mxu0
  %v5348 = vadd.f32 0.0, %v5347
  %5349 = vmatmul.f32.gmra.mxu0 %v5273
  %v5350 = vpop.f32.mrf.mxu0
  %v5351 = vadd.f32 0.0, %v5350
  %5352 = vmatmul.f32.gmra.mxu0 %v5277
  %v5353 = vpop.f32.mrf.mxu0
  %v5354 = vadd.f32 0.0, %v5353
  %5355 = vmatmul.f32.gmra.mxu0 %v5281
  %v5356 = vpop.f32.mrf.mxu0
  %v5357 = vadd.f32 0.0, %v5356
  %5358 = vmatmul.f32.gmra.mxu0 %v5285
  %v5359 = vpop.f32.mrf.mxu0
  %v5360 = vadd.f32 0.0, %v5359
  %5361 = vmatmul.f32.gmra.mxu0 %v5289
  %v5362 = vpop.f32.mrf.mxu0
  %v5363 = vadd.f32 0.0, %v5362
  %5364 = vmatmul.f32.gmra.mxu0 %v5293
  %v5365 = vpop.f32.mrf.mxu0
  %v5366 = vadd.f32 0.0, %v5365
  %5367 = vmatmul.f32.gmra.mxu0 %v5297
  %v5368 = vpop.f32.mrf.mxu0
  %v5369 = vadd.f32 0.0, %v5368
  %5370 = vmatmul.f32.gmra.mxu0 %v5301
  %v5371 = vpop.f32.mrf.mxu0
  %v5372 = vadd.f32 0.0, %v5371
  %5373 = vmatmul.f32.gmra.mxu0 %v5305
  %v5374 = vpop.f32.mrf.mxu0
  %v5375 = vadd.f32 0.0, %v5374
  %5376 = vmatmul.f32.gmra.mxu0 %v5309
  %v5377 = vpop.f32.mrf.mxu0
  %v5378 = vadd.f32 0.0, %v5377
  %5379 = vmatmul.f32.gmra.mxu0 %v5313
  %v5380 = vpop.f32.mrf.mxu0
  %v5381 = vadd.f32 0.0, %v5380
  %5382 = vmatmul.f32.gmra.mxu0 %v5317
  %v5383 = vpop.f32.mrf.mxu0
  %v5384 = vadd.f32 0.0, %v5383
  %5385 = vdwg.mxu0
  %5386 = vmatpush.msra.mxu0 %v696
  %5387 = vmatpush.msra.mxu0 %v695
  %5388 = vmatpush.msra.mxu0 %v694
  %5389 = vmatpush.msra.mxu0 %v693
  %5390 = vmatpush.msra.mxu0 %v692
  %5391 = vmatpush.msra.mxu0 %v691
  %5392 = vmatpush.msra.mxu0 %v690
  %5393 = vmatpush.msra.mxu0 %v689
  %5394 = vmatpush.msra.mxu0 %v688
  %5395 = vmatpush.msra.mxu0 %v687
  %5396 = vmatpush.msra.mxu0 %v686
  %5397 = vmatpush.msra.mxu0 %v685
  %5398 = vmatpush.msra.mxu0 %v684
  %5399 = vmatpush.msra.mxu0 %v683
  %5400 = vmatpush.msra.mxu0 %v682
  %5401 = vmatpush.msra.mxu0 %v681
  %5402 = vmatmul.f32.gmra.mxu0 %v5258
  %v5403 = vpop.f32.mrf.mxu0
  %v5404 = vadd.f32 %v5339, %v5403
  %5405 = vmatmul.f32.gmra.mxu0 %v5262
  %v5406 = vpop.f32.mrf.mxu0
  %v5407 = vadd.f32 %v5342, %v5406
  %5408 = vmatmul.f32.gmra.mxu0 %v5266
  %v5409 = vpop.f32.mrf.mxu0
  %v5410 = vadd.f32 %v5345, %v5409
  %5411 = vmatmul.f32.gmra.mxu0 %v5270
  %v5412 = vpop.f32.mrf.mxu0
  %v5413 = vadd.f32 %v5348, %v5412
  %5414 = vmatmul.f32.gmra.mxu0 %v5274
  %v5415 = vpop.f32.mrf.mxu0
  %v5416 = vadd.f32 %v5351, %v5415
  %5417 = vmatmul.f32.gmra.mxu0 %v5278
  %v5418 = vpop.f32.mrf.mxu0
  %v5419 = vadd.f32 %v5354, %v5418
  %5420 = vmatmul.f32.gmra.mxu0 %v5282
  %v5421 = vpop.f32.mrf.mxu0
  %v5422 = vadd.f32 %v5357, %v5421
  %5423 = vmatmul.f32.gmra.mxu0 %v5286
  %v5424 = vpop.f32.mrf.mxu0
  %v5425 = vadd.f32 %v5360, %v5424
  %5426 = vmatmul.f32.gmra.mxu0 %v5290
  %v5427 = vpop.f32.mrf.mxu0
  %v5428 = vadd.f32 %v5363, %v5427
  %5429 = vmatmul.f32.gmra.mxu0 %v5294
  %v5430 = vpop.f32.mrf.mxu0
  %v5431 = vadd.f32 %v5366, %v5430
  %5432 = vmatmul.f32.gmra.mxu0 %v5298
  %v5433 = vpop.f32.mrf.mxu0
  %v5434 = vadd.f32 %v5369, %v5433
  %5435 = vmatmul.f32.gmra.mxu0 %v5302
  %v5436 = vpop.f32.mrf.mxu0
  %v5437 = vadd.f32 %v5372, %v5436
  %5438 = vmatmul.f32.gmra.mxu0 %v5306
  %v5439 = vpop.f32.mrf.mxu0
  %v5440 = vadd.f32 %v5375, %v5439
  %5441 = vmatmul.f32.gmra.mxu0 %v5310
  %v5442 = vpop.f32.mrf.mxu0
  %v5443 = vadd.f32 %v5378, %v5442
  %5444 = vmatmul.f32.gmra.mxu0 %v5314
  %v5445 = vpop.f32.mrf.mxu0
  %v5446 = vadd.f32 %v5381, %v5445
  %5447 = vmatmul.f32.gmra.mxu0 %v5318
  %v5448 = vpop.f32.mrf.mxu0
  %v5449 = vadd.f32 %v5384, %v5448
  %5450 = vdwg.mxu0
  %5451 = vmatpush.msra.mxu0 %v712
  %5452 = vmatpush.msra.mxu0 %v711
  %5453 = vmatpush.msra.mxu0 %v710
  %5454 = vmatpush.msra.mxu0 %v709
  %5455 = vmatpush.msra.mxu0 %v708
  %5456 = vmatpush.msra.mxu0 %v707
  %5457 = vmatpush.msra.mxu0 %v706
  %5458 = vmatpush.msra.mxu0 %v705
  %5459 = vmatpush.msra.mxu0 %v704
  %5460 = vmatpush.msra.mxu0 %v703
  %5461 = vmatpush.msra.mxu0 %v702
  %5462 = vmatpush.msra.mxu0 %v701
  %5463 = vmatpush.msra.mxu0 %v700
  %5464 = vmatpush.msra.mxu0 %v699
  %5465 = vmatpush.msra.mxu0 %v698
  %5466 = vmatpush.msra.mxu0 %v697
  %5467 = vmatmul.f32.gmra.mxu0 %v5259
  %v5468 = vpop.f32.mrf.mxu0
  %v5469 = vadd.f32 %v5404, %v5468
  %5470 = vmatmul.f32.gmra.mxu0 %v5263
  %v5471 = vpop.f32.mrf.mxu0
  %v5472 = vadd.f32 %v5407, %v5471
  %5473 = vmatmul.f32.gmra.mxu0 %v5267
  %v5474 = vpop.f32.mrf.mxu0
  %v5475 = vadd.f32 %v5410, %v5474
  %5476 = vmatmul.f32.gmra.mxu0 %v5271
  %v5477 = vpop.f32.mrf.mxu0
  %v5478 = vadd.f32 %v5413, %v5477
  %5479 = vmatmul.f32.gmra.mxu0 %v5275
  %v5480 = vpop.f32.mrf.mxu0
  %v5481 = vadd.f32 %v5416, %v5480
  %5482 = vmatmul.f32.gmra.mxu0 %v5279
  %v5483 = vpop.f32.mrf.mxu0
  %v5484 = vadd.f32 %v5419, %v5483
  %5485 = vmatmul.f32.gmra.mxu0 %v5283
  %v5486 = vpop.f32.mrf.mxu0
  %v5487 = vadd.f32 %v5422, %v5486
  %5488 = vmatmul.f32.gmra.mxu0 %v5287
  %v5489 = vpop.f32.mrf.mxu0
  %v5490 = vadd.f32 %v5425, %v5489
  %5491 = vmatmul.f32.gmra.mxu0 %v5291
  %v5492 = vpop.f32.mrf.mxu0
  %v5493 = vadd.f32 %v5428, %v5492
  %5494 = vmatmul.f32.gmra.mxu0 %v5295
  %v5495 = vpop.f32.mrf.mxu0
  %v5496 = vadd.f32 %v5431, %v5495
  %5497 = vmatmul.f32.gmra.mxu0 %v5299
  %v5498 = vpop.f32.mrf.mxu0
  %v5499 = vadd.f32 %v5434, %v5498
  %5500 = vmatmul.f32.gmra.mxu0 %v5303
  %v5501 = vpop.f32.mrf.mxu0
  %v5502 = vadd.f32 %v5437, %v5501
  %5503 = vmatmul.f32.gmra.mxu0 %v5307
  %v5504 = vpop.f32.mrf.mxu0
  %v5505 = vadd.f32 %v5440, %v5504
  %5506 = vmatmul.f32.gmra.mxu0 %v5311
  %v5507 = vpop.f32.mrf.mxu0
  %v5508 = vadd.f32 %v5443, %v5507
  %5509 = vmatmul.f32.gmra.mxu0 %v5315
  %v5510 = vpop.f32.mrf.mxu0
  %v5511 = vadd.f32 %v5446, %v5510
  %5512 = vmatmul.f32.gmra.mxu0 %v5319
  %v5513 = vpop.f32.mrf.mxu0
  %v5514 = vadd.f32 %v5449, %v5513
  %5515 = vdwg.mxu0
  %5516 = vmatpush.msra.mxu0 %v728
  %5517 = vmatpush.msra.mxu0 %v727
  %5518 = vmatpush.msra.mxu0 %v726
  %5519 = vmatpush.msra.mxu0 %v725
  %5520 = vmatpush.msra.mxu0 %v724
  %5521 = vmatpush.msra.mxu0 %v723
  %5522 = vmatpush.msra.mxu0 %v722
  %5523 = vmatpush.msra.mxu0 %v721
  %5524 = vmatpush.msra.mxu0 %v720
  %5525 = vmatpush.msra.mxu0 %v719
  %5526 = vmatpush.msra.mxu0 %v718
  %5527 = vmatpush.msra.mxu0 %v717
  %5528 = vmatpush.msra.mxu0 %v716
  %5529 = vmatpush.msra.mxu0 %v715
  %5530 = vmatpush.msra.mxu0 %v714
  %5531 = vmatpush.msra.mxu0 %v713
  %5532 = vmatmul.f32.gmra.mxu0 %v5260
  %v5533 = vpop.f32.mrf.mxu0
  %v5534 = vadd.f32 %v5469, %v5533
  %5535 = vmatmul.f32.gmra.mxu0 %v5264
  %v5536 = vpop.f32.mrf.mxu0
  %v5537 = vadd.f32 %v5472, %v5536
  %5538 = vmatmul.f32.gmra.mxu0 %v5268
  %v5539 = vpop.f32.mrf.mxu0
  %v5540 = vadd.f32 %v5475, %v5539
  %5541 = vmatmul.f32.gmra.mxu0 %v5272
  %v5542 = vpop.f32.mrf.mxu0
  %v5543 = vadd.f32 %v5478, %v5542
  %5544 = vmatmul.f32.gmra.mxu0 %v5276
  %v5545 = vpop.f32.mrf.mxu0
  %v5546 = vadd.f32 %v5481, %v5545
  %5547 = vmatmul.f32.gmra.mxu0 %v5280
  %v5548 = vpop.f32.mrf.mxu0
  %v5549 = vadd.f32 %v5484, %v5548
  %5550 = vmatmul.f32.gmra.mxu0 %v5284
  %v5551 = vpop.f32.mrf.mxu0
  %v5552 = vadd.f32 %v5487, %v5551
  %5553 = vmatmul.f32.gmra.mxu0 %v5288
  %v5554 = vpop.f32.mrf.mxu0
  %v5555 = vadd.f32 %v5490, %v5554
  %5556 = vmatmul.f32.gmra.mxu0 %v5292
  %v5557 = vpop.f32.mrf.mxu0
  %v5558 = vadd.f32 %v5493, %v5557
  %5559 = vmatmul.f32.gmra.mxu0 %v5296
  %v5560 = vpop.f32.mrf.mxu0
  %v5561 = vadd.f32 %v5496, %v5560
  %5562 = vmatmul.f32.gmra.mxu0 %v5300
  %v5563 = vpop.f32.mrf.mxu0
  %v5564 = vadd.f32 %v5499, %v5563
  %5565 = vmatmul.f32.gmra.mxu0 %v5304
  %v5566 = vpop.f32.mrf.mxu0
  %v5567 = vadd.f32 %v5502, %v5566
  %5568 = vmatmul.f32.gmra.mxu0 %v5308
  %v5569 = vpop.f32.mrf.mxu0
  %v5570 = vadd.f32 %v5505, %v5569
  %5571 = vmatmul.f32.gmra.mxu0 %v5312
  %v5572 = vpop.f32.mrf.mxu0
  %v5573 = vadd.f32 %v5508, %v5572
  %5574 = vmatmul.f32.gmra.mxu0 %v5316
  %v5575 = vpop.f32.mrf.mxu0
  %v5576 = vadd.f32 %v5511, %v5575
  %5577 = vmatmul.f32.gmra.mxu0 %v5320
  %v5578 = vpop.f32.mrf.mxu0
  %v5579 = vadd.f32 %v5514, %v5578
  %5580 = vdwg.mxu0
  %s5581 = scalar_lea.vmem %s4, 80
  %v5582 = vld [vmem:[%s5581] sm:$0xff]
  %v5584 = vsel %vm1381, %v5534, 0
  %v5587 = vsel %vm1381, %v5537, 0
  %v5590 = vsel %vm1381, %v5540, 0
  %v5593 = vsel %vm1381, %v5543, 0
  %v5596 = vsel %vm1381, %v5546, 0
  %v5599 = vsel %vm1381, %v5549, 0
  %v5602 = vsel %vm1381, %v5552, 0
  %v5605 = vsel %vm1381, %v5555, 0
  %v5608 = vsel %vm1381, %v5558, 0
  %v5611 = vsel %vm1381, %v5561, 0
  %v5614 = vsel %vm1381, %v5564, 0
  %v5617 = vsel %vm1381, %v5567, 0
  %v5620 = vsel %vm1381, %v5570, 0
  %v5623 = vsel %vm1381, %v5573, 0
  %v5626 = vsel %vm1381, %v5576, 0
  %v5629 = vsel %vm1381, %v5579, 0
  %5631 = vmatpush.msra.mxu0 0.0
  %5632 = vmatpush.msra.mxu0 0.0
  %5633 = vmatpush.msra.mxu0 0.0
  %5634 = vmatpush.msra.mxu0 0.0
  %5635 = vmatpush.msra.mxu0 0.0
  %5636 = vmatpush.msra.mxu0 0.0
  %5637 = vmatpush.msra.mxu0 0.0
  %5638 = vmatpush.msra.mxu0 0.0
  %5639 = vmatpush.msra.mxu0 0.0
  %5640 = vmatpush.msra.mxu0 0.0
  %5641 = vmatpush.msra.mxu0 0.0
  %5642 = vmatpush.msra.mxu0 0.0
  %5643 = vmatpush.msra.mxu0 0.0
  %5644 = vmatpush.msra.mxu0 0.0
  %5645 = vmatpush.msra.mxu0 0.0
  %5646 = vmatpush.msra.mxu0 %v5582
  %5647 = vmatmul.f32.gmra.mxu0 %v5584
  %v5648 = vpop.f32.mrf.mxu0
  %v5649 = vadd.f32 0.0, %v5648
  %5650 = vmatmul.f32.gmra.mxu0 %v5587
  %v5651 = vpop.f32.mrf.mxu0
  %v5652 = vadd.f32 0.0, %v5651
  %5653 = vmatmul.f32.gmra.mxu0 %v5590
  %v5654 = vpop.f32.mrf.mxu0
  %v5655 = vadd.f32 0.0, %v5654
  %5656 = vmatmul.f32.gmra.mxu0 %v5593
  %v5657 = vpop.f32.mrf.mxu0
  %v5658 = vadd.f32 0.0, %v5657
  %5659 = vmatmul.f32.gmra.mxu0 %v5596
  %v5660 = vpop.f32.mrf.mxu0
  %v5661 = vadd.f32 0.0, %v5660
  %5662 = vmatmul.f32.gmra.mxu0 %v5599
  %v5663 = vpop.f32.mrf.mxu0
  %v5664 = vadd.f32 0.0, %v5663
  %5665 = vmatmul.f32.gmra.mxu0 %v5602
  %v5666 = vpop.f32.mrf.mxu0
  %v5667 = vadd.f32 0.0, %v5666
  %5668 = vmatmul.f32.gmra.mxu0 %v5605
  %v5669 = vpop.f32.mrf.mxu0
  %v5670 = vadd.f32 0.0, %v5669
  %5671 = vmatmul.f32.gmra.mxu0 %v5608
  %v5672 = vpop.f32.mrf.mxu0
  %v5673 = vadd.f32 0.0, %v5672
  %5674 = vmatmul.f32.gmra.mxu0 %v5611
  %v5675 = vpop.f32.mrf.mxu0
  %v5676 = vadd.f32 0.0, %v5675
  %5677 = vmatmul.f32.gmra.mxu0 %v5614
  %v5678 = vpop.f32.mrf.mxu0
  %v5679 = vadd.f32 0.0, %v5678
  %5680 = vmatmul.f32.gmra.mxu0 %v5617
  %v5681 = vpop.f32.mrf.mxu0
  %v5682 = vadd.f32 0.0, %v5681
  %5683 = vmatmul.f32.gmra.mxu0 %v5620
  %v5684 = vpop.f32.mrf.mxu0
  %v5685 = vadd.f32 0.0, %v5684
  %5686 = vmatmul.f32.gmra.mxu0 %v5623
  %v5687 = vpop.f32.mrf.mxu0
  %v5688 = vadd.f32 0.0, %v5687
  %5689 = vmatmul.f32.gmra.mxu0 %v5626
  %v5690 = vpop.f32.mrf.mxu0
  %v5691 = vadd.f32 0.0, %v5690
  %5692 = vmatmul.f32.gmra.mxu0 %v5629
  %v5693 = vpop.f32.mrf.mxu0
  %v5694 = vadd.f32 0.0, %v5693
  %5695 = vdwg.mxu0
  %v5696 = vadd.f32 %v5240, %v5649
  %v5697 = vadd.f32 %v5241, %v5652
  %v5698 = vadd.f32 %v5242, %v5655
  %v5699 = vadd.f32 %v5243, %v5658
  %v5700 = vadd.f32 %v5244, %v5661
  %v5701 = vadd.f32 %v5245, %v5664
  %v5702 = vadd.f32 %v5246, %v5667
  %v5703 = vadd.f32 %v5247, %v5670
  %v5704 = vadd.f32 %v5248, %v5673
  %v5705 = vadd.f32 %v5249, %v5676
  %v5706 = vadd.f32 %v5250, %v5679
  %v5707 = vadd.f32 %v5251, %v5682
  %v5708 = vadd.f32 %v5252, %v5685
  %v5709 = vadd.f32 %v5253, %v5688
  %v5710 = vadd.f32 %v5254, %v5691
  %v5711 = vadd.f32 %v5255, %v5694
  %s5712 = scalar_lea.vmem %s3, 5632
  %v5713 = vld [vmem:[%s5712] sm:$0xff]
  %v5714 = vld [vmem:[%s5712 + $0x8] sm:$0xff]
  %v5715 = vld [vmem:[%s5712 + $0x10] sm:$0xff]
  %v5716 = vld [vmem:[%s5712 + $0x18] sm:$0xff]
  %v5717 = vld [vmem:[%s5712 + $0x20] sm:$0xff]
  %v5718 = vld [vmem:[%s5712 + $0x28] sm:$0xff]
  %v5719 = vld [vmem:[%s5712 + $0x30] sm:$0xff]
  %v5720 = vld [vmem:[%s5712 + $0x38] sm:$0xff]
  %v5721 = vld [vmem:[%s5712 + $0x40] sm:$0xff]
  %v5722 = vld [vmem:[%s5712 + $0x48] sm:$0xff]
  %v5723 = vld [vmem:[%s5712 + $0x50] sm:$0xff]
  %v5724 = vld [vmem:[%s5712 + $0x58] sm:$0xff]
  %v5725 = vld [vmem:[%s5712 + $0x60] sm:$0xff]
  %v5726 = vld [vmem:[%s5712 + $0x68] sm:$0xff]
  %v5727 = vld [vmem:[%s5712 + $0x70] sm:$0xff]
  %v5728 = vld [vmem:[%s5712 + $0x78] sm:$0xff]
  %v5729 = vld [vmem:[%s5712 + $0x80] sm:$0xff]
  %v5730 = vld [vmem:[%s5712 + $0x88] sm:$0xff]
  %v5731 = vld [vmem:[%s5712 + $0x90] sm:$0xff]
  %v5732 = vld [vmem:[%s5712 + $0x98] sm:$0xff]
  %v5733 = vld [vmem:[%s5712 + $0xa0] sm:$0xff]
  %v5734 = vld [vmem:[%s5712 + $0xa8] sm:$0xff]
  %v5735 = vld [vmem:[%s5712 + $0xb0] sm:$0xff]
  %v5736 = vld [vmem:[%s5712 + $0xb8] sm:$0xff]
  %v5737 = vld [vmem:[%s5712 + $0xc0] sm:$0xff]
  %v5738 = vld [vmem:[%s5712 + $0xc8] sm:$0xff]
  %v5739 = vld [vmem:[%s5712 + $0xd0] sm:$0xff]
  %v5740 = vld [vmem:[%s5712 + $0xd8] sm:$0xff]
  %v5741 = vld [vmem:[%s5712 + $0xe0] sm:$0xff]
  %v5742 = vld [vmem:[%s5712 + $0xe8] sm:$0xff]
  %v5743 = vld [vmem:[%s5712 + $0xf0] sm:$0xff]
  %v5744 = vld [vmem:[%s5712 + $0xf8] sm:$0xff]
  %v5745 = vld [vmem:[%s5712 + $0x100] sm:$0xff]
  %v5746 = vld [vmem:[%s5712 + $0x108] sm:$0xff]
  %v5747 = vld [vmem:[%s5712 + $0x110] sm:$0xff]
  %v5748 = vld [vmem:[%s5712 + $0x118] sm:$0xff]
  %v5749 = vld [vmem:[%s5712 + $0x120] sm:$0xff]
  %v5750 = vld [vmem:[%s5712 + $0x128] sm:$0xff]
  %v5751 = vld [vmem:[%s5712 + $0x130] sm:$0xff]
  %v5752 = vld [vmem:[%s5712 + $0x138] sm:$0xff]
  %v5753 = vld [vmem:[%s5712 + $0x140] sm:$0xff]
  %v5754 = vld [vmem:[%s5712 + $0x148] sm:$0xff]
  %v5755 = vld [vmem:[%s5712 + $0x150] sm:$0xff]
  %v5756 = vld [vmem:[%s5712 + $0x158] sm:$0xff]
  %v5757 = vld [vmem:[%s5712 + $0x160] sm:$0xff]
  %v5758 = vld [vmem:[%s5712 + $0x168] sm:$0xff]
  %v5759 = vld [vmem:[%s5712 + $0x170] sm:$0xff]
  %v5760 = vld [vmem:[%s5712 + $0x178] sm:$0xff]
  %v5761 = vld [vmem:[%s5712 + $0x180] sm:$0xff]
  %v5762 = vld [vmem:[%s5712 + $0x188] sm:$0xff]
  %v5763 = vld [vmem:[%s5712 + $0x190] sm:$0xff]
  %v5764 = vld [vmem:[%s5712 + $0x198] sm:$0xff]
  %v5765 = vld [vmem:[%s5712 + $0x1a0] sm:$0xff]
  %v5766 = vld [vmem:[%s5712 + $0x1a8] sm:$0xff]
  %v5767 = vld [vmem:[%s5712 + $0x1b0] sm:$0xff]
  %v5768 = vld [vmem:[%s5712 + $0x1b8] sm:$0xff]
  %v5769 = vld [vmem:[%s5712 + $0x1c0] sm:$0xff]
  %v5770 = vld [vmem:[%s5712 + $0x1c8] sm:$0xff]
  %v5771 = vld [vmem:[%s5712 + $0x1d0] sm:$0xff]
  %v5772 = vld [vmem:[%s5712 + $0x1d8] sm:$0xff]
  %v5773 = vld [vmem:[%s5712 + $0x1e0] sm:$0xff]
  %v5774 = vld [vmem:[%s5712 + $0x1e8] sm:$0xff]
  %v5775 = vld [vmem:[%s5712 + $0x1f0] sm:$0xff]
  %v5776 = vld [vmem:[%s5712 + $0x1f8] sm:$0xff]
  %5777 = vmatpush.msra.mxu0 %v680
  %5778 = vmatpush.msra.mxu0 %v679
  %5779 = vmatpush.msra.mxu0 %v678
  %5780 = vmatpush.msra.mxu0 %v677
  %5781 = vmatpush.msra.mxu0 %v676
  %5782 = vmatpush.msra.mxu0 %v675
  %5783 = vmatpush.msra.mxu0 %v674
  %5784 = vmatpush.msra.mxu0 %v673
  %5785 = vmatpush.msra.mxu0 %v672
  %5786 = vmatpush.msra.mxu0 %v671
  %5787 = vmatpush.msra.mxu0 %v670
  %5788 = vmatpush.msra.mxu0 %v669
  %5789 = vmatpush.msra.mxu0 %v668
  %5790 = vmatpush.msra.mxu0 %v667
  %5791 = vmatpush.msra.mxu0 %v666
  %5792 = vmatpush.msra.mxu0 %v665
  %5793 = vmatmul.f32.gmra.mxu0 %v5713
  %v5794 = vpop.f32.mrf.mxu0
  %v5795 = vadd.f32 0.0, %v5794
  %5796 = vmatmul.f32.gmra.mxu0 %v5717
  %v5797 = vpop.f32.mrf.mxu0
  %v5798 = vadd.f32 0.0, %v5797
  %5799 = vmatmul.f32.gmra.mxu0 %v5721
  %v5800 = vpop.f32.mrf.mxu0
  %v5801 = vadd.f32 0.0, %v5800
  %5802 = vmatmul.f32.gmra.mxu0 %v5725
  %v5803 = vpop.f32.mrf.mxu0
  %v5804 = vadd.f32 0.0, %v5803
  %5805 = vmatmul.f32.gmra.mxu0 %v5729
  %v5806 = vpop.f32.mrf.mxu0
  %v5807 = vadd.f32 0.0, %v5806
  %5808 = vmatmul.f32.gmra.mxu0 %v5733
  %v5809 = vpop.f32.mrf.mxu0
  %v5810 = vadd.f32 0.0, %v5809
  %5811 = vmatmul.f32.gmra.mxu0 %v5737
  %v5812 = vpop.f32.mrf.mxu0
  %v5813 = vadd.f32 0.0, %v5812
  %5814 = vmatmul.f32.gmra.mxu0 %v5741
  %v5815 = vpop.f32.mrf.mxu0
  %v5816 = vadd.f32 0.0, %v5815
  %5817 = vmatmul.f32.gmra.mxu0 %v5745
  %v5818 = vpop.f32.mrf.mxu0
  %v5819 = vadd.f32 0.0, %v5818
  %5820 = vmatmul.f32.gmra.mxu0 %v5749
  %v5821 = vpop.f32.mrf.mxu0
  %v5822 = vadd.f32 0.0, %v5821
  %5823 = vmatmul.f32.gmra.mxu0 %v5753
  %v5824 = vpop.f32.mrf.mxu0
  %v5825 = vadd.f32 0.0, %v5824
  %5826 = vmatmul.f32.gmra.mxu0 %v5757
  %v5827 = vpop.f32.mrf.mxu0
  %v5828 = vadd.f32 0.0, %v5827
  %5829 = vmatmul.f32.gmra.mxu0 %v5761
  %v5830 = vpop.f32.mrf.mxu0
  %v5831 = vadd.f32 0.0, %v5830
  %5832 = vmatmul.f32.gmra.mxu0 %v5765
  %v5833 = vpop.f32.mrf.mxu0
  %v5834 = vadd.f32 0.0, %v5833
  %5835 = vmatmul.f32.gmra.mxu0 %v5769
  %v5836 = vpop.f32.mrf.mxu0
  %v5837 = vadd.f32 0.0, %v5836
  %5838 = vmatmul.f32.gmra.mxu0 %v5773
  %v5839 = vpop.f32.mrf.mxu0
  %v5840 = vadd.f32 0.0, %v5839
  %5841 = vdwg.mxu0
  %5842 = vmatpush.msra.mxu0 %v696
  %5843 = vmatpush.msra.mxu0 %v695
  %5844 = vmatpush.msra.mxu0 %v694
  %5845 = vmatpush.msra.mxu0 %v693
  %5846 = vmatpush.msra.mxu0 %v692
  %5847 = vmatpush.msra.mxu0 %v691
  %5848 = vmatpush.msra.mxu0 %v690
  %5849 = vmatpush.msra.mxu0 %v689
  %5850 = vmatpush.msra.mxu0 %v688
  %5851 = vmatpush.msra.mxu0 %v687
  %5852 = vmatpush.msra.mxu0 %v686
  %5853 = vmatpush.msra.mxu0 %v685
  %5854 = vmatpush.msra.mxu0 %v684
  %5855 = vmatpush.msra.mxu0 %v683
  %5856 = vmatpush.msra.mxu0 %v682
  %5857 = vmatpush.msra.mxu0 %v681
  %5858 = vmatmul.f32.gmra.mxu0 %v5714
  %v5859 = vpop.f32.mrf.mxu0
  %v5860 = vadd.f32 %v5795, %v5859
  %5861 = vmatmul.f32.gmra.mxu0 %v5718
  %v5862 = vpop.f32.mrf.mxu0
  %v5863 = vadd.f32 %v5798, %v5862
  %5864 = vmatmul.f32.gmra.mxu0 %v5722
  %v5865 = vpop.f32.mrf.mxu0
  %v5866 = vadd.f32 %v5801, %v5865
  %5867 = vmatmul.f32.gmra.mxu0 %v5726
  %v5868 = vpop.f32.mrf.mxu0
  %v5869 = vadd.f32 %v5804, %v5868
  %5870 = vmatmul.f32.gmra.mxu0 %v5730
  %v5871 = vpop.f32.mrf.mxu0
  %v5872 = vadd.f32 %v5807, %v5871
  %5873 = vmatmul.f32.gmra.mxu0 %v5734
  %v5874 = vpop.f32.mrf.mxu0
  %v5875 = vadd.f32 %v5810, %v5874
  %5876 = vmatmul.f32.gmra.mxu0 %v5738
  %v5877 = vpop.f32.mrf.mxu0
  %v5878 = vadd.f32 %v5813, %v5877
  %5879 = vmatmul.f32.gmra.mxu0 %v5742
  %v5880 = vpop.f32.mrf.mxu0
  %v5881 = vadd.f32 %v5816, %v5880
  %5882 = vmatmul.f32.gmra.mxu0 %v5746
  %v5883 = vpop.f32.mrf.mxu0
  %v5884 = vadd.f32 %v5819, %v5883
  %5885 = vmatmul.f32.gmra.mxu0 %v5750
  %v5886 = vpop.f32.mrf.mxu0
  %v5887 = vadd.f32 %v5822, %v5886
  %5888 = vmatmul.f32.gmra.mxu0 %v5754
  %v5889 = vpop.f32.mrf.mxu0
  %v5890 = vadd.f32 %v5825, %v5889
  %5891 = vmatmul.f32.gmra.mxu0 %v5758
  %v5892 = vpop.f32.mrf.mxu0
  %v5893 = vadd.f32 %v5828, %v5892
  %5894 = vmatmul.f32.gmra.mxu0 %v5762
  %v5895 = vpop.f32.mrf.mxu0
  %v5896 = vadd.f32 %v5831, %v5895
  %5897 = vmatmul.f32.gmra.mxu0 %v5766
  %v5898 = vpop.f32.mrf.mxu0
  %v5899 = vadd.f32 %v5834, %v5898
  %5900 = vmatmul.f32.gmra.mxu0 %v5770
  %v5901 = vpop.f32.mrf.mxu0
  %v5902 = vadd.f32 %v5837, %v5901
  %5903 = vmatmul.f32.gmra.mxu0 %v5774
  %v5904 = vpop.f32.mrf.mxu0
  %v5905 = vadd.f32 %v5840, %v5904
  %5906 = vdwg.mxu0
  %5907 = vmatpush.msra.mxu0 %v712
  %5908 = vmatpush.msra.mxu0 %v711
  %5909 = vmatpush.msra.mxu0 %v710
  %5910 = vmatpush.msra.mxu0 %v709
  %5911 = vmatpush.msra.mxu0 %v708
  %5912 = vmatpush.msra.mxu0 %v707
  %5913 = vmatpush.msra.mxu0 %v706
  %5914 = vmatpush.msra.mxu0 %v705
  %5915 = vmatpush.msra.mxu0 %v704
  %5916 = vmatpush.msra.mxu0 %v703
  %5917 = vmatpush.msra.mxu0 %v702
  %5918 = vmatpush.msra.mxu0 %v701
  %5919 = vmatpush.msra.mxu0 %v700
  %5920 = vmatpush.msra.mxu0 %v699
  %5921 = vmatpush.msra.mxu0 %v698
  %5922 = vmatpush.msra.mxu0 %v697
  %5923 = vmatmul.f32.gmra.mxu0 %v5715
  %v5924 = vpop.f32.mrf.mxu0
  %v5925 = vadd.f32 %v5860, %v5924
  %5926 = vmatmul.f32.gmra.mxu0 %v5719
  %v5927 = vpop.f32.mrf.mxu0
  %v5928 = vadd.f32 %v5863, %v5927
  %5929 = vmatmul.f32.gmra.mxu0 %v5723
  %v5930 = vpop.f32.mrf.mxu0
  %v5931 = vadd.f32 %v5866, %v5930
  %5932 = vmatmul.f32.gmra.mxu0 %v5727
  %v5933 = vpop.f32.mrf.mxu0
  %v5934 = vadd.f32 %v5869, %v5933
  %5935 = vmatmul.f32.gmra.mxu0 %v5731
  %v5936 = vpop.f32.mrf.mxu0
  %v5937 = vadd.f32 %v5872, %v5936
  %5938 = vmatmul.f32.gmra.mxu0 %v5735
  %v5939 = vpop.f32.mrf.mxu0
  %v5940 = vadd.f32 %v5875, %v5939
  %5941 = vmatmul.f32.gmra.mxu0 %v5739
  %v5942 = vpop.f32.mrf.mxu0
  %v5943 = vadd.f32 %v5878, %v5942
  %5944 = vmatmul.f32.gmra.mxu0 %v5743
  %v5945 = vpop.f32.mrf.mxu0
  %v5946 = vadd.f32 %v5881, %v5945
  %5947 = vmatmul.f32.gmra.mxu0 %v5747
  %v5948 = vpop.f32.mrf.mxu0
  %v5949 = vadd.f32 %v5884, %v5948
  %5950 = vmatmul.f32.gmra.mxu0 %v5751
  %v5951 = vpop.f32.mrf.mxu0
  %v5952 = vadd.f32 %v5887, %v5951
  %5953 = vmatmul.f32.gmra.mxu0 %v5755
  %v5954 = vpop.f32.mrf.mxu0
  %v5955 = vadd.f32 %v5890, %v5954
  %5956 = vmatmul.f32.gmra.mxu0 %v5759
  %v5957 = vpop.f32.mrf.mxu0
  %v5958 = vadd.f32 %v5893, %v5957
  %5959 = vmatmul.f32.gmra.mxu0 %v5763
  %v5960 = vpop.f32.mrf.mxu0
  %v5961 = vadd.f32 %v5896, %v5960
  %5962 = vmatmul.f32.gmra.mxu0 %v5767
  %v5963 = vpop.f32.mrf.mxu0
  %v5964 = vadd.f32 %v5899, %v5963
  %5965 = vmatmul.f32.gmra.mxu0 %v5771
  %v5966 = vpop.f32.mrf.mxu0
  %v5967 = vadd.f32 %v5902, %v5966
  %5968 = vmatmul.f32.gmra.mxu0 %v5775
  %v5969 = vpop.f32.mrf.mxu0
  %v5970 = vadd.f32 %v5905, %v5969
  %5971 = vdwg.mxu0
  %5972 = vmatpush.msra.mxu0 %v728
  %5973 = vmatpush.msra.mxu0 %v727
  %5974 = vmatpush.msra.mxu0 %v726
  %5975 = vmatpush.msra.mxu0 %v725
  %5976 = vmatpush.msra.mxu0 %v724
  %5977 = vmatpush.msra.mxu0 %v723
  %5978 = vmatpush.msra.mxu0 %v722
  %5979 = vmatpush.msra.mxu0 %v721
  %5980 = vmatpush.msra.mxu0 %v720
  %5981 = vmatpush.msra.mxu0 %v719
  %5982 = vmatpush.msra.mxu0 %v718
  %5983 = vmatpush.msra.mxu0 %v717
  %5984 = vmatpush.msra.mxu0 %v716
  %5985 = vmatpush.msra.mxu0 %v715
  %5986 = vmatpush.msra.mxu0 %v714
  %5987 = vmatpush.msra.mxu0 %v713
  %5988 = vmatmul.f32.gmra.mxu0 %v5716
  %v5989 = vpop.f32.mrf.mxu0
  %v5990 = vadd.f32 %v5925, %v5989
  %5991 = vmatmul.f32.gmra.mxu0 %v5720
  %v5992 = vpop.f32.mrf.mxu0
  %v5993 = vadd.f32 %v5928, %v5992
  %5994 = vmatmul.f32.gmra.mxu0 %v5724
  %v5995 = vpop.f32.mrf.mxu0
  %v5996 = vadd.f32 %v5931, %v5995
  %5997 = vmatmul.f32.gmra.mxu0 %v5728
  %v5998 = vpop.f32.mrf.mxu0
  %v5999 = vadd.f32 %v5934, %v5998
  %6000 = vmatmul.f32.gmra.mxu0 %v5732
  %v6001 = vpop.f32.mrf.mxu0
  %v6002 = vadd.f32 %v5937, %v6001
  %6003 = vmatmul.f32.gmra.mxu0 %v5736
  %v6004 = vpop.f32.mrf.mxu0
  %v6005 = vadd.f32 %v5940, %v6004
  %6006 = vmatmul.f32.gmra.mxu0 %v5740
  %v6007 = vpop.f32.mrf.mxu0
  %v6008 = vadd.f32 %v5943, %v6007
  %6009 = vmatmul.f32.gmra.mxu0 %v5744
  %v6010 = vpop.f32.mrf.mxu0
  %v6011 = vadd.f32 %v5946, %v6010
  %6012 = vmatmul.f32.gmra.mxu0 %v5748
  %v6013 = vpop.f32.mrf.mxu0
  %v6014 = vadd.f32 %v5949, %v6013
  %6015 = vmatmul.f32.gmra.mxu0 %v5752
  %v6016 = vpop.f32.mrf.mxu0
  %v6017 = vadd.f32 %v5952, %v6016
  %6018 = vmatmul.f32.gmra.mxu0 %v5756
  %v6019 = vpop.f32.mrf.mxu0
  %v6020 = vadd.f32 %v5955, %v6019
  %6021 = vmatmul.f32.gmra.mxu0 %v5760
  %v6022 = vpop.f32.mrf.mxu0
  %v6023 = vadd.f32 %v5958, %v6022
  %6024 = vmatmul.f32.gmra.mxu0 %v5764
  %v6025 = vpop.f32.mrf.mxu0
  %v6026 = vadd.f32 %v5961, %v6025
  %6027 = vmatmul.f32.gmra.mxu0 %v5768
  %v6028 = vpop.f32.mrf.mxu0
  %v6029 = vadd.f32 %v5964, %v6028
  %6030 = vmatmul.f32.gmra.mxu0 %v5772
  %v6031 = vpop.f32.mrf.mxu0
  %v6032 = vadd.f32 %v5967, %v6031
  %6033 = vmatmul.f32.gmra.mxu0 %v5776
  %v6034 = vpop.f32.mrf.mxu0
  %v6035 = vadd.f32 %v5970, %v6034
  %6036 = vdwg.mxu0
  %s6037 = scalar_lea.vmem %s4, 88
  %v6038 = vld [vmem:[%s6037] sm:$0xff]
  %v6040 = vsel %vm1381, %v5990, 0
  %v6043 = vsel %vm1381, %v5993, 0
  %v6046 = vsel %vm1381, %v5996, 0
  %v6049 = vsel %vm1381, %v5999, 0
  %v6052 = vsel %vm1381, %v6002, 0
  %v6055 = vsel %vm1381, %v6005, 0
  %v6058 = vsel %vm1381, %v6008, 0
  %v6061 = vsel %vm1381, %v6011, 0
  %v6064 = vsel %vm1381, %v6014, 0
  %v6067 = vsel %vm1381, %v6017, 0
  %v6070 = vsel %vm1381, %v6020, 0
  %v6073 = vsel %vm1381, %v6023, 0
  %v6076 = vsel %vm1381, %v6026, 0
  %v6079 = vsel %vm1381, %v6029, 0
  %v6082 = vsel %vm1381, %v6032, 0
  %v6085 = vsel %vm1381, %v6035, 0
  %6087 = vmatpush.msra.mxu0 0.0
  %6088 = vmatpush.msra.mxu0 0.0
  %6089 = vmatpush.msra.mxu0 0.0
  %6090 = vmatpush.msra.mxu0 0.0
  %6091 = vmatpush.msra.mxu0 0.0
  %6092 = vmatpush.msra.mxu0 0.0
  %6093 = vmatpush.msra.mxu0 0.0
  %6094 = vmatpush.msra.mxu0 0.0
  %6095 = vmatpush.msra.mxu0 0.0
  %6096 = vmatpush.msra.mxu0 0.0
  %6097 = vmatpush.msra.mxu0 0.0
  %6098 = vmatpush.msra.mxu0 0.0
  %6099 = vmatpush.msra.mxu0 0.0
  %6100 = vmatpush.msra.mxu0 0.0
  %6101 = vmatpush.msra.mxu0 0.0
  %6102 = vmatpush.msra.mxu0 %v6038
  %6103 = vmatmul.f32.gmra.mxu0 %v6040
  %v6104 = vpop.f32.mrf.mxu0
  %v6105 = vadd.f32 0.0, %v6104
  %6106 = vmatmul.f32.gmra.mxu0 %v6043
  %v6107 = vpop.f32.mrf.mxu0
  %v6108 = vadd.f32 0.0, %v6107
  %6109 = vmatmul.f32.gmra.mxu0 %v6046
  %v6110 = vpop.f32.mrf.mxu0
  %v6111 = vadd.f32 0.0, %v6110
  %6112 = vmatmul.f32.gmra.mxu0 %v6049
  %v6113 = vpop.f32.mrf.mxu0
  %v6114 = vadd.f32 0.0, %v6113
  %6115 = vmatmul.f32.gmra.mxu0 %v6052
  %v6116 = vpop.f32.mrf.mxu0
  %v6117 = vadd.f32 0.0, %v6116
  %6118 = vmatmul.f32.gmra.mxu0 %v6055
  %v6119 = vpop.f32.mrf.mxu0
  %v6120 = vadd.f32 0.0, %v6119
  %6121 = vmatmul.f32.gmra.mxu0 %v6058
  %v6122 = vpop.f32.mrf.mxu0
  %v6123 = vadd.f32 0.0, %v6122
  %6124 = vmatmul.f32.gmra.mxu0 %v6061
  %v6125 = vpop.f32.mrf.mxu0
  %v6126 = vadd.f32 0.0, %v6125
  %6127 = vmatmul.f32.gmra.mxu0 %v6064
  %v6128 = vpop.f32.mrf.mxu0
  %v6129 = vadd.f32 0.0, %v6128
  %6130 = vmatmul.f32.gmra.mxu0 %v6067
  %v6131 = vpop.f32.mrf.mxu0
  %v6132 = vadd.f32 0.0, %v6131
  %6133 = vmatmul.f32.gmra.mxu0 %v6070
  %v6134 = vpop.f32.mrf.mxu0
  %v6135 = vadd.f32 0.0, %v6134
  %6136 = vmatmul.f32.gmra.mxu0 %v6073
  %v6137 = vpop.f32.mrf.mxu0
  %v6138 = vadd.f32 0.0, %v6137
  %6139 = vmatmul.f32.gmra.mxu0 %v6076
  %v6140 = vpop.f32.mrf.mxu0
  %v6141 = vadd.f32 0.0, %v6140
  %6142 = vmatmul.f32.gmra.mxu0 %v6079
  %v6143 = vpop.f32.mrf.mxu0
  %v6144 = vadd.f32 0.0, %v6143
  %6145 = vmatmul.f32.gmra.mxu0 %v6082
  %v6146 = vpop.f32.mrf.mxu0
  %v6147 = vadd.f32 0.0, %v6146
  %6148 = vmatmul.f32.gmra.mxu0 %v6085
  %v6149 = vpop.f32.mrf.mxu0
  %v6150 = vadd.f32 0.0, %v6149
  %6151 = vdwg.mxu0
  %v6152 = vadd.f32 %v5696, %v6105
  %v6153 = vadd.f32 %v5697, %v6108
  %v6154 = vadd.f32 %v5698, %v6111
  %v6155 = vadd.f32 %v5699, %v6114
  %v6156 = vadd.f32 %v5700, %v6117
  %v6157 = vadd.f32 %v5701, %v6120
  %v6158 = vadd.f32 %v5702, %v6123
  %v6159 = vadd.f32 %v5703, %v6126
  %v6160 = vadd.f32 %v5704, %v6129
  %v6161 = vadd.f32 %v5705, %v6132
  %v6162 = vadd.f32 %v5706, %v6135
  %v6163 = vadd.f32 %v5707, %v6138
  %v6164 = vadd.f32 %v5708, %v6141
  %v6165 = vadd.f32 %v5709, %v6144
  %v6166 = vadd.f32 %v5710, %v6147
  %v6167 = vadd.f32 %v5711, %v6150
  %s6168 = scalar_lea.vmem %s3, 6144
  %v6169 = vld [vmem:[%s6168] sm:$0xff]
  %v6170 = vld [vmem:[%s6168 + $0x8] sm:$0xff]
  %v6171 = vld [vmem:[%s6168 + $0x10] sm:$0xff]
  %v6172 = vld [vmem:[%s6168 + $0x18] sm:$0xff]
  %v6173 = vld [vmem:[%s6168 + $0x20] sm:$0xff]
  %v6174 = vld [vmem:[%s6168 + $0x28] sm:$0xff]
  %v6175 = vld [vmem:[%s6168 + $0x30] sm:$0xff]
  %v6176 = vld [vmem:[%s6168 + $0x38] sm:$0xff]
  %v6177 = vld [vmem:[%s6168 + $0x40] sm:$0xff]
  %v6178 = vld [vmem:[%s6168 + $0x48] sm:$0xff]
  %v6179 = vld [vmem:[%s6168 + $0x50] sm:$0xff]
  %v6180 = vld [vmem:[%s6168 + $0x58] sm:$0xff]
  %v6181 = vld [vmem:[%s6168 + $0x60] sm:$0xff]
  %v6182 = vld [vmem:[%s6168 + $0x68] sm:$0xff]
  %v6183 = vld [vmem:[%s6168 + $0x70] sm:$0xff]
  %v6184 = vld [vmem:[%s6168 + $0x78] sm:$0xff]
  %v6185 = vld [vmem:[%s6168 + $0x80] sm:$0xff]
  %v6186 = vld [vmem:[%s6168 + $0x88] sm:$0xff]
  %v6187 = vld [vmem:[%s6168 + $0x90] sm:$0xff]
  %v6188 = vld [vmem:[%s6168 + $0x98] sm:$0xff]
  %v6189 = vld [vmem:[%s6168 + $0xa0] sm:$0xff]
  %v6190 = vld [vmem:[%s6168 + $0xa8] sm:$0xff]
  %v6191 = vld [vmem:[%s6168 + $0xb0] sm:$0xff]
  %v6192 = vld [vmem:[%s6168 + $0xb8] sm:$0xff]
  %v6193 = vld [vmem:[%s6168 + $0xc0] sm:$0xff]
  %v6194 = vld [vmem:[%s6168 + $0xc8] sm:$0xff]
  %v6195 = vld [vmem:[%s6168 + $0xd0] sm:$0xff]
  %v6196 = vld [vmem:[%s6168 + $0xd8] sm:$0xff]
  %v6197 = vld [vmem:[%s6168 + $0xe0] sm:$0xff]
  %v6198 = vld [vmem:[%s6168 + $0xe8] sm:$0xff]
  %v6199 = vld [vmem:[%s6168 + $0xf0] sm:$0xff]
  %v6200 = vld [vmem:[%s6168 + $0xf8] sm:$0xff]
  %v6201 = vld [vmem:[%s6168 + $0x100] sm:$0xff]
  %v6202 = vld [vmem:[%s6168 + $0x108] sm:$0xff]
  %v6203 = vld [vmem:[%s6168 + $0x110] sm:$0xff]
  %v6204 = vld [vmem:[%s6168 + $0x118] sm:$0xff]
  %v6205 = vld [vmem:[%s6168 + $0x120] sm:$0xff]
  %v6206 = vld [vmem:[%s6168 + $0x128] sm:$0xff]
  %v6207 = vld [vmem:[%s6168 + $0x130] sm:$0xff]
  %v6208 = vld [vmem:[%s6168 + $0x138] sm:$0xff]
  %v6209 = vld [vmem:[%s6168 + $0x140] sm:$0xff]
  %v6210 = vld [vmem:[%s6168 + $0x148] sm:$0xff]
  %v6211 = vld [vmem:[%s6168 + $0x150] sm:$0xff]
  %v6212 = vld [vmem:[%s6168 + $0x158] sm:$0xff]
  %v6213 = vld [vmem:[%s6168 + $0x160] sm:$0xff]
  %v6214 = vld [vmem:[%s6168 + $0x168] sm:$0xff]
  %v6215 = vld [vmem:[%s6168 + $0x170] sm:$0xff]
  %v6216 = vld [vmem:[%s6168 + $0x178] sm:$0xff]
  %v6217 = vld [vmem:[%s6168 + $0x180] sm:$0xff]
  %v6218 = vld [vmem:[%s6168 + $0x188] sm:$0xff]
  %v6219 = vld [vmem:[%s6168 + $0x190] sm:$0xff]
  %v6220 = vld [vmem:[%s6168 + $0x198] sm:$0xff]
  %v6221 = vld [vmem:[%s6168 + $0x1a0] sm:$0xff]
  %v6222 = vld [vmem:[%s6168 + $0x1a8] sm:$0xff]
  %v6223 = vld [vmem:[%s6168 + $0x1b0] sm:$0xff]
  %v6224 = vld [vmem:[%s6168 + $0x1b8] sm:$0xff]
  %v6225 = vld [vmem:[%s6168 + $0x1c0] sm:$0xff]
  %v6226 = vld [vmem:[%s6168 + $0x1c8] sm:$0xff]
  %v6227 = vld [vmem:[%s6168 + $0x1d0] sm:$0xff]
  %v6228 = vld [vmem:[%s6168 + $0x1d8] sm:$0xff]
  %v6229 = vld [vmem:[%s6168 + $0x1e0] sm:$0xff]
  %v6230 = vld [vmem:[%s6168 + $0x1e8] sm:$0xff]
  %v6231 = vld [vmem:[%s6168 + $0x1f0] sm:$0xff]
  %v6232 = vld [vmem:[%s6168 + $0x1f8] sm:$0xff]
  %6233 = vmatpush.msra.mxu0 %v680
  %6234 = vmatpush.msra.mxu0 %v679
  %6235 = vmatpush.msra.mxu0 %v678
  %6236 = vmatpush.msra.mxu0 %v677
  %6237 = vmatpush.msra.mxu0 %v676
  %6238 = vmatpush.msra.mxu0 %v675
  %6239 = vmatpush.msra.mxu0 %v674
  %6240 = vmatpush.msra.mxu0 %v673
  %6241 = vmatpush.msra.mxu0 %v672
  %6242 = vmatpush.msra.mxu0 %v671
  %6243 = vmatpush.msra.mxu0 %v670
  %6244 = vmatpush.msra.mxu0 %v669
  %6245 = vmatpush.msra.mxu0 %v668
  %6246 = vmatpush.msra.mxu0 %v667
  %6247 = vmatpush.msra.mxu0 %v666
  %6248 = vmatpush.msra.mxu0 %v665
  %6249 = vmatmul.f32.gmra.mxu0 %v6169
  %v6250 = vpop.f32.mrf.mxu0
  %v6251 = vadd.f32 0.0, %v6250
  %6252 = vmatmul.f32.gmra.mxu0 %v6173
  %v6253 = vpop.f32.mrf.mxu0
  %v6254 = vadd.f32 0.0, %v6253
  %6255 = vmatmul.f32.gmra.mxu0 %v6177
  %v6256 = vpop.f32.mrf.mxu0
  %v6257 = vadd.f32 0.0, %v6256
  %6258 = vmatmul.f32.gmra.mxu0 %v6181
  %v6259 = vpop.f32.mrf.mxu0
  %v6260 = vadd.f32 0.0, %v6259
  %6261 = vmatmul.f32.gmra.mxu0 %v6185
  %v6262 = vpop.f32.mrf.mxu0
  %v6263 = vadd.f32 0.0, %v6262
  %6264 = vmatmul.f32.gmra.mxu0 %v6189
  %v6265 = vpop.f32.mrf.mxu0
  %v6266 = vadd.f32 0.0, %v6265
  %6267 = vmatmul.f32.gmra.mxu0 %v6193
  %v6268 = vpop.f32.mrf.mxu0
  %v6269 = vadd.f32 0.0, %v6268
  %6270 = vmatmul.f32.gmra.mxu0 %v6197
  %v6271 = vpop.f32.mrf.mxu0
  %v6272 = vadd.f32 0.0, %v6271
  %6273 = vmatmul.f32.gmra.mxu0 %v6201
  %v6274 = vpop.f32.mrf.mxu0
  %v6275 = vadd.f32 0.0, %v6274
  %6276 = vmatmul.f32.gmra.mxu0 %v6205
  %v6277 = vpop.f32.mrf.mxu0
  %v6278 = vadd.f32 0.0, %v6277
  %6279 = vmatmul.f32.gmra.mxu0 %v6209
  %v6280 = vpop.f32.mrf.mxu0
  %v6281 = vadd.f32 0.0, %v6280
  %6282 = vmatmul.f32.gmra.mxu0 %v6213
  %v6283 = vpop.f32.mrf.mxu0
  %v6284 = vadd.f32 0.0, %v6283
  %6285 = vmatmul.f32.gmra.mxu0 %v6217
  %v6286 = vpop.f32.mrf.mxu0
  %v6287 = vadd.f32 0.0, %v6286
  %6288 = vmatmul.f32.gmra.mxu0 %v6221
  %v6289 = vpop.f32.mrf.mxu0
  %v6290 = vadd.f32 0.0, %v6289
  %6291 = vmatmul.f32.gmra.mxu0 %v6225
  %v6292 = vpop.f32.mrf.mxu0
  %v6293 = vadd.f32 0.0, %v6292
  %6294 = vmatmul.f32.gmra.mxu0 %v6229
  %v6295 = vpop.f32.mrf.mxu0
  %v6296 = vadd.f32 0.0, %v6295
  %6297 = vdwg.mxu0
  %6298 = vmatpush.msra.mxu0 %v696
  %6299 = vmatpush.msra.mxu0 %v695
  %6300 = vmatpush.msra.mxu0 %v694
  %6301 = vmatpush.msra.mxu0 %v693
  %6302 = vmatpush.msra.mxu0 %v692
  %6303 = vmatpush.msra.mxu0 %v691
  %6304 = vmatpush.msra.mxu0 %v690
  %6305 = vmatpush.msra.mxu0 %v689
  %6306 = vmatpush.msra.mxu0 %v688
  %6307 = vmatpush.msra.mxu0 %v687
  %6308 = vmatpush.msra.mxu0 %v686
  %6309 = vmatpush.msra.mxu0 %v685
  %6310 = vmatpush.msra.mxu0 %v684
  %6311 = vmatpush.msra.mxu0 %v683
  %6312 = vmatpush.msra.mxu0 %v682
  %6313 = vmatpush.msra.mxu0 %v681
  %6314 = vmatmul.f32.gmra.mxu0 %v6170
  %v6315 = vpop.f32.mrf.mxu0
  %v6316 = vadd.f32 %v6251, %v6315
  %6317 = vmatmul.f32.gmra.mxu0 %v6174
  %v6318 = vpop.f32.mrf.mxu0
  %v6319 = vadd.f32 %v6254, %v6318
  %6320 = vmatmul.f32.gmra.mxu0 %v6178
  %v6321 = vpop.f32.mrf.mxu0
  %v6322 = vadd.f32 %v6257, %v6321
  %6323 = vmatmul.f32.gmra.mxu0 %v6182
  %v6324 = vpop.f32.mrf.mxu0
  %v6325 = vadd.f32 %v6260, %v6324
  %6326 = vmatmul.f32.gmra.mxu0 %v6186
  %v6327 = vpop.f32.mrf.mxu0
  %v6328 = vadd.f32 %v6263, %v6327
  %6329 = vmatmul.f32.gmra.mxu0 %v6190
  %v6330 = vpop.f32.mrf.mxu0
  %v6331 = vadd.f32 %v6266, %v6330
  %6332 = vmatmul.f32.gmra.mxu0 %v6194
  %v6333 = vpop.f32.mrf.mxu0
  %v6334 = vadd.f32 %v6269, %v6333
  %6335 = vmatmul.f32.gmra.mxu0 %v6198
  %v6336 = vpop.f32.mrf.mxu0
  %v6337 = vadd.f32 %v6272, %v6336
  %6338 = vmatmul.f32.gmra.mxu0 %v6202
  %v6339 = vpop.f32.mrf.mxu0
  %v6340 = vadd.f32 %v6275, %v6339
  %6341 = vmatmul.f32.gmra.mxu0 %v6206
  %v6342 = vpop.f32.mrf.mxu0
  %v6343 = vadd.f32 %v6278, %v6342
  %6344 = vmatmul.f32.gmra.mxu0 %v6210
  %v6345 = vpop.f32.mrf.mxu0
  %v6346 = vadd.f32 %v6281, %v6345
  %6347 = vmatmul.f32.gmra.mxu0 %v6214
  %v6348 = vpop.f32.mrf.mxu0
  %v6349 = vadd.f32 %v6284, %v6348
  %6350 = vmatmul.f32.gmra.mxu0 %v6218
  %v6351 = vpop.f32.mrf.mxu0
  %v6352 = vadd.f32 %v6287, %v6351
  %6353 = vmatmul.f32.gmra.mxu0 %v6222
  %v6354 = vpop.f32.mrf.mxu0
  %v6355 = vadd.f32 %v6290, %v6354
  %6356 = vmatmul.f32.gmra.mxu0 %v6226
  %v6357 = vpop.f32.mrf.mxu0
  %v6358 = vadd.f32 %v6293, %v6357
  %6359 = vmatmul.f32.gmra.mxu0 %v6230
  %v6360 = vpop.f32.mrf.mxu0
  %v6361 = vadd.f32 %v6296, %v6360
  %6362 = vdwg.mxu0
  %6363 = vmatpush.msra.mxu0 %v712
  %6364 = vmatpush.msra.mxu0 %v711
  %6365 = vmatpush.msra.mxu0 %v710
  %6366 = vmatpush.msra.mxu0 %v709
  %6367 = vmatpush.msra.mxu0 %v708
  %6368 = vmatpush.msra.mxu0 %v707
  %6369 = vmatpush.msra.mxu0 %v706
  %6370 = vmatpush.msra.mxu0 %v705
  %6371 = vmatpush.msra.mxu0 %v704
  %6372 = vmatpush.msra.mxu0 %v703
  %6373 = vmatpush.msra.mxu0 %v702
  %6374 = vmatpush.msra.mxu0 %v701
  %6375 = vmatpush.msra.mxu0 %v700
  %6376 = vmatpush.msra.mxu0 %v699
  %6377 = vmatpush.msra.mxu0 %v698
  %6378 = vmatpush.msra.mxu0 %v697
  %6379 = vmatmul.f32.gmra.mxu0 %v6171
  %v6380 = vpop.f32.mrf.mxu0
  %v6381 = vadd.f32 %v6316, %v6380
  %6382 = vmatmul.f32.gmra.mxu0 %v6175
  %v6383 = vpop.f32.mrf.mxu0
  %v6384 = vadd.f32 %v6319, %v6383
  %6385 = vmatmul.f32.gmra.mxu0 %v6179
  %v6386 = vpop.f32.mrf.mxu0
  %v6387 = vadd.f32 %v6322, %v6386
  %6388 = vmatmul.f32.gmra.mxu0 %v6183
  %v6389 = vpop.f32.mrf.mxu0
  %v6390 = vadd.f32 %v6325, %v6389
  %6391 = vmatmul.f32.gmra.mxu0 %v6187
  %v6392 = vpop.f32.mrf.mxu0
  %v6393 = vadd.f32 %v6328, %v6392
  %6394 = vmatmul.f32.gmra.mxu0 %v6191
  %v6395 = vpop.f32.mrf.mxu0
  %v6396 = vadd.f32 %v6331, %v6395
  %6397 = vmatmul.f32.gmra.mxu0 %v6195
  %v6398 = vpop.f32.mrf.mxu0
  %v6399 = vadd.f32 %v6334, %v6398
  %6400 = vmatmul.f32.gmra.mxu0 %v6199
  %v6401 = vpop.f32.mrf.mxu0
  %v6402 = vadd.f32 %v6337, %v6401
  %6403 = vmatmul.f32.gmra.mxu0 %v6203
  %v6404 = vpop.f32.mrf.mxu0
  %v6405 = vadd.f32 %v6340, %v6404
  %6406 = vmatmul.f32.gmra.mxu0 %v6207
  %v6407 = vpop.f32.mrf.mxu0
  %v6408 = vadd.f32 %v6343, %v6407
  %6409 = vmatmul.f32.gmra.mxu0 %v6211
  %v6410 = vpop.f32.mrf.mxu0
  %v6411 = vadd.f32 %v6346, %v6410
  %6412 = vmatmul.f32.gmra.mxu0 %v6215
  %v6413 = vpop.f32.mrf.mxu0
  %v6414 = vadd.f32 %v6349, %v6413
  %6415 = vmatmul.f32.gmra.mxu0 %v6219
  %v6416 = vpop.f32.mrf.mxu0
  %v6417 = vadd.f32 %v6352, %v6416
  %6418 = vmatmul.f32.gmra.mxu0 %v6223
  %v6419 = vpop.f32.mrf.mxu0
  %v6420 = vadd.f32 %v6355, %v6419
  %6421 = vmatmul.f32.gmra.mxu0 %v6227
  %v6422 = vpop.f32.mrf.mxu0
  %v6423 = vadd.f32 %v6358, %v6422
  %6424 = vmatmul.f32.gmra.mxu0 %v6231
  %v6425 = vpop.f32.mrf.mxu0
  %v6426 = vadd.f32 %v6361, %v6425
  %6427 = vdwg.mxu0
  %6428 = vmatpush.msra.mxu0 %v728
  %6429 = vmatpush.msra.mxu0 %v727
  %6430 = vmatpush.msra.mxu0 %v726
  %6431 = vmatpush.msra.mxu0 %v725
  %6432 = vmatpush.msra.mxu0 %v724
  %6433 = vmatpush.msra.mxu0 %v723
  %6434 = vmatpush.msra.mxu0 %v722
  %6435 = vmatpush.msra.mxu0 %v721
  %6436 = vmatpush.msra.mxu0 %v720
  %6437 = vmatpush.msra.mxu0 %v719
  %6438 = vmatpush.msra.mxu0 %v718
  %6439 = vmatpush.msra.mxu0 %v717
  %6440 = vmatpush.msra.mxu0 %v716
  %6441 = vmatpush.msra.mxu0 %v715
  %6442 = vmatpush.msra.mxu0 %v714
  %6443 = vmatpush.msra.mxu0 %v713
  %6444 = vmatmul.f32.gmra.mxu0 %v6172
  %v6445 = vpop.f32.mrf.mxu0
  %v6446 = vadd.f32 %v6381, %v6445
  %6447 = vmatmul.f32.gmra.mxu0 %v6176
  %v6448 = vpop.f32.mrf.mxu0
  %v6449 = vadd.f32 %v6384, %v6448
  %6450 = vmatmul.f32.gmra.mxu0 %v6180
  %v6451 = vpop.f32.mrf.mxu0
  %v6452 = vadd.f32 %v6387, %v6451
  %6453 = vmatmul.f32.gmra.mxu0 %v6184
  %v6454 = vpop.f32.mrf.mxu0
  %v6455 = vadd.f32 %v6390, %v6454
  %6456 = vmatmul.f32.gmra.mxu0 %v6188
  %v6457 = vpop.f32.mrf.mxu0
  %v6458 = vadd.f32 %v6393, %v6457
  %6459 = vmatmul.f32.gmra.mxu0 %v6192
  %v6460 = vpop.f32.mrf.mxu0
  %v6461 = vadd.f32 %v6396, %v6460
  %6462 = vmatmul.f32.gmra.mxu0 %v6196
  %v6463 = vpop.f32.mrf.mxu0
  %v6464 = vadd.f32 %v6399, %v6463
  %6465 = vmatmul.f32.gmra.mxu0 %v6200
  %v6466 = vpop.f32.mrf.mxu0
  %v6467 = vadd.f32 %v6402, %v6466
  %6468 = vmatmul.f32.gmra.mxu0 %v6204
  %v6469 = vpop.f32.mrf.mxu0
  %v6470 = vadd.f32 %v6405, %v6469
  %6471 = vmatmul.f32.gmra.mxu0 %v6208
  %v6472 = vpop.f32.mrf.mxu0
  %v6473 = vadd.f32 %v6408, %v6472
  %6474 = vmatmul.f32.gmra.mxu0 %v6212
  %v6475 = vpop.f32.mrf.mxu0
  %v6476 = vadd.f32 %v6411, %v6475
  %6477 = vmatmul.f32.gmra.mxu0 %v6216
  %v6478 = vpop.f32.mrf.mxu0
  %v6479 = vadd.f32 %v6414, %v6478
  %6480 = vmatmul.f32.gmra.mxu0 %v6220
  %v6481 = vpop.f32.mrf.mxu0
  %v6482 = vadd.f32 %v6417, %v6481
  %6483 = vmatmul.f32.gmra.mxu0 %v6224
  %v6484 = vpop.f32.mrf.mxu0
  %v6485 = vadd.f32 %v6420, %v6484
  %6486 = vmatmul.f32.gmra.mxu0 %v6228
  %v6487 = vpop.f32.mrf.mxu0
  %v6488 = vadd.f32 %v6423, %v6487
  %6489 = vmatmul.f32.gmra.mxu0 %v6232
  %v6490 = vpop.f32.mrf.mxu0
  %v6491 = vadd.f32 %v6426, %v6490
  %6492 = vdwg.mxu0
  %s6493 = scalar_lea.vmem %s4, 96
  %v6494 = vld [vmem:[%s6493] sm:$0xff]
  %v6496 = vsel %vm1381, %v6446, 0
  %v6499 = vsel %vm1381, %v6449, 0
  %v6502 = vsel %vm1381, %v6452, 0
  %v6505 = vsel %vm1381, %v6455, 0
  %v6508 = vsel %vm1381, %v6458, 0
  %v6511 = vsel %vm1381, %v6461, 0
  %v6514 = vsel %vm1381, %v6464, 0
  %v6517 = vsel %vm1381, %v6467, 0
  %v6520 = vsel %vm1381, %v6470, 0
  %v6523 = vsel %vm1381, %v6473, 0
  %v6526 = vsel %vm1381, %v6476, 0
  %v6529 = vsel %vm1381, %v6479, 0
  %v6532 = vsel %vm1381, %v6482, 0
  %v6535 = vsel %vm1381, %v6485, 0
  %v6538 = vsel %vm1381, %v6488, 0
  %v6541 = vsel %vm1381, %v6491, 0
  %6543 = vmatpush.msra.mxu0 0.0
  %6544 = vmatpush.msra.mxu0 0.0
  %6545 = vmatpush.msra.mxu0 0.0
  %6546 = vmatpush.msra.mxu0 0.0
  %6547 = vmatpush.msra.mxu0 0.0
  %6548 = vmatpush.msra.mxu0 0.0
  %6549 = vmatpush.msra.mxu0 0.0
  %6550 = vmatpush.msra.mxu0 0.0
  %6551 = vmatpush.msra.mxu0 0.0
  %6552 = vmatpush.msra.mxu0 0.0
  %6553 = vmatpush.msra.mxu0 0.0
  %6554 = vmatpush.msra.mxu0 0.0
  %6555 = vmatpush.msra.mxu0 0.0
  %6556 = vmatpush.msra.mxu0 0.0
  %6557 = vmatpush.msra.mxu0 0.0
  %6558 = vmatpush.msra.mxu0 %v6494
  %6559 = vmatmul.f32.gmra.mxu0 %v6496
  %v6560 = vpop.f32.mrf.mxu0
  %v6561 = vadd.f32 0.0, %v6560
  %6562 = vmatmul.f32.gmra.mxu0 %v6499
  %v6563 = vpop.f32.mrf.mxu0
  %v6564 = vadd.f32 0.0, %v6563
  %6565 = vmatmul.f32.gmra.mxu0 %v6502
  %v6566 = vpop.f32.mrf.mxu0
  %v6567 = vadd.f32 0.0, %v6566
  %6568 = vmatmul.f32.gmra.mxu0 %v6505
  %v6569 = vpop.f32.mrf.mxu0
  %v6570 = vadd.f32 0.0, %v6569
  %6571 = vmatmul.f32.gmra.mxu0 %v6508
  %v6572 = vpop.f32.mrf.mxu0
  %v6573 = vadd.f32 0.0, %v6572
  %6574 = vmatmul.f32.gmra.mxu0 %v6511
  %v6575 = vpop.f32.mrf.mxu0
  %v6576 = vadd.f32 0.0, %v6575
  %6577 = vmatmul.f32.gmra.mxu0 %v6514
  %v6578 = vpop.f32.mrf.mxu0
  %v6579 = vadd.f32 0.0, %v6578
  %6580 = vmatmul.f32.gmra.mxu0 %v6517
  %v6581 = vpop.f32.mrf.mxu0
  %v6582 = vadd.f32 0.0, %v6581
  %6583 = vmatmul.f32.gmra.mxu0 %v6520
  %v6584 = vpop.f32.mrf.mxu0
  %v6585 = vadd.f32 0.0, %v6584
  %6586 = vmatmul.f32.gmra.mxu0 %v6523
  %v6587 = vpop.f32.mrf.mxu0
  %v6588 = vadd.f32 0.0, %v6587
  %6589 = vmatmul.f32.gmra.mxu0 %v6526
  %v6590 = vpop.f32.mrf.mxu0
  %v6591 = vadd.f32 0.0, %v6590
  %6592 = vmatmul.f32.gmra.mxu0 %v6529
  %v6593 = vpop.f32.mrf.mxu0
  %v6594 = vadd.f32 0.0, %v6593
  %6595 = vmatmul.f32.gmra.mxu0 %v6532
  %v6596 = vpop.f32.mrf.mxu0
  %v6597 = vadd.f32 0.0, %v6596
  %6598 = vmatmul.f32.gmra.mxu0 %v6535
  %v6599 = vpop.f32.mrf.mxu0
  %v6600 = vadd.f32 0.0, %v6599
  %6601 = vmatmul.f32.gmra.mxu0 %v6538
  %v6602 = vpop.f32.mrf.mxu0
  %v6603 = vadd.f32 0.0, %v6602
  %6604 = vmatmul.f32.gmra.mxu0 %v6541
  %v6605 = vpop.f32.mrf.mxu0
  %v6606 = vadd.f32 0.0, %v6605
  %6607 = vdwg.mxu0
  %v6608 = vadd.f32 %v6152, %v6561
  %v6609 = vadd.f32 %v6153, %v6564
  %v6610 = vadd.f32 %v6154, %v6567
  %v6611 = vadd.f32 %v6155, %v6570
  %v6612 = vadd.f32 %v6156, %v6573
  %v6613 = vadd.f32 %v6157, %v6576
  %v6614 = vadd.f32 %v6158, %v6579
  %v6615 = vadd.f32 %v6159, %v6582
  %v6616 = vadd.f32 %v6160, %v6585
  %v6617 = vadd.f32 %v6161, %v6588
  %v6618 = vadd.f32 %v6162, %v6591
  %v6619 = vadd.f32 %v6163, %v6594
  %v6620 = vadd.f32 %v6164, %v6597
  %v6621 = vadd.f32 %v6165, %v6600
  %v6622 = vadd.f32 %v6166, %v6603
  %v6623 = vadd.f32 %v6167, %v6606
  %s6624 = scalar_lea.vmem %s3, 6656
  %v6625 = vld [vmem:[%s6624] sm:$0xff]
  %v6626 = vld [vmem:[%s6624 + $0x8] sm:$0xff]
  %v6627 = vld [vmem:[%s6624 + $0x10] sm:$0xff]
  %v6628 = vld [vmem:[%s6624 + $0x18] sm:$0xff]
  %v6629 = vld [vmem:[%s6624 + $0x20] sm:$0xff]
  %v6630 = vld [vmem:[%s6624 + $0x28] sm:$0xff]
  %v6631 = vld [vmem:[%s6624 + $0x30] sm:$0xff]
  %v6632 = vld [vmem:[%s6624 + $0x38] sm:$0xff]
  %v6633 = vld [vmem:[%s6624 + $0x40] sm:$0xff]
  %v6634 = vld [vmem:[%s6624 + $0x48] sm:$0xff]
  %v6635 = vld [vmem:[%s6624 + $0x50] sm:$0xff]
  %v6636 = vld [vmem:[%s6624 + $0x58] sm:$0xff]
  %v6637 = vld [vmem:[%s6624 + $0x60] sm:$0xff]
  %v6638 = vld [vmem:[%s6624 + $0x68] sm:$0xff]
  %v6639 = vld [vmem:[%s6624 + $0x70] sm:$0xff]
  %v6640 = vld [vmem:[%s6624 + $0x78] sm:$0xff]
  %v6641 = vld [vmem:[%s6624 + $0x80] sm:$0xff]
  %v6642 = vld [vmem:[%s6624 + $0x88] sm:$0xff]
  %v6643 = vld [vmem:[%s6624 + $0x90] sm:$0xff]
  %v6644 = vld [vmem:[%s6624 + $0x98] sm:$0xff]
  %v6645 = vld [vmem:[%s6624 + $0xa0] sm:$0xff]
  %v6646 = vld [vmem:[%s6624 + $0xa8] sm:$0xff]
  %v6647 = vld [vmem:[%s6624 + $0xb0] sm:$0xff]
  %v6648 = vld [vmem:[%s6624 + $0xb8] sm:$0xff]
  %v6649 = vld [vmem:[%s6624 + $0xc0] sm:$0xff]
  %v6650 = vld [vmem:[%s6624 + $0xc8] sm:$0xff]
  %v6651 = vld [vmem:[%s6624 + $0xd0] sm:$0xff]
  %v6652 = vld [vmem:[%s6624 + $0xd8] sm:$0xff]
  %v6653 = vld [vmem:[%s6624 + $0xe0] sm:$0xff]
  %v6654 = vld [vmem:[%s6624 + $0xe8] sm:$0xff]
  %v6655 = vld [vmem:[%s6624 + $0xf0] sm:$0xff]
  %v6656 = vld [vmem:[%s6624 + $0xf8] sm:$0xff]
  %v6657 = vld [vmem:[%s6624 + $0x100] sm:$0xff]
  %v6658 = vld [vmem:[%s6624 + $0x108] sm:$0xff]
  %v6659 = vld [vmem:[%s6624 + $0x110] sm:$0xff]
  %v6660 = vld [vmem:[%s6624 + $0x118] sm:$0xff]
  %v6661 = vld [vmem:[%s6624 + $0x120] sm:$0xff]
  %v6662 = vld [vmem:[%s6624 + $0x128] sm:$0xff]
  %v6663 = vld [vmem:[%s6624 + $0x130] sm:$0xff]
  %v6664 = vld [vmem:[%s6624 + $0x138] sm:$0xff]
  %v6665 = vld [vmem:[%s6624 + $0x140] sm:$0xff]
  %v6666 = vld [vmem:[%s6624 + $0x148] sm:$0xff]
  %v6667 = vld [vmem:[%s6624 + $0x150] sm:$0xff]
  %v6668 = vld [vmem:[%s6624 + $0x158] sm:$0xff]
  %v6669 = vld [vmem:[%s6624 + $0x160] sm:$0xff]
  %v6670 = vld [vmem:[%s6624 + $0x168] sm:$0xff]
  %v6671 = vld [vmem:[%s6624 + $0x170] sm:$0xff]
  %v6672 = vld [vmem:[%s6624 + $0x178] sm:$0xff]
  %v6673 = vld [vmem:[%s6624 + $0x180] sm:$0xff]
  %v6674 = vld [vmem:[%s6624 + $0x188] sm:$0xff]
  %v6675 = vld [vmem:[%s6624 + $0x190] sm:$0xff]
  %v6676 = vld [vmem:[%s6624 + $0x198] sm:$0xff]
  %v6677 = vld [vmem:[%s6624 + $0x1a0] sm:$0xff]
  %v6678 = vld [vmem:[%s6624 + $0x1a8] sm:$0xff]
  %v6679 = vld [vmem:[%s6624 + $0x1b0] sm:$0xff]
  %v6680 = vld [vmem:[%s6624 + $0x1b8] sm:$0xff]
  %v6681 = vld [vmem:[%s6624 + $0x1c0] sm:$0xff]
  %v6682 = vld [vmem:[%s6624 + $0x1c8] sm:$0xff]
  %v6683 = vld [vmem:[%s6624 + $0x1d0] sm:$0xff]
  %v6684 = vld [vmem:[%s6624 + $0x1d8] sm:$0xff]
  %v6685 = vld [vmem:[%s6624 + $0x1e0] sm:$0xff]
  %v6686 = vld [vmem:[%s6624 + $0x1e8] sm:$0xff]
  %v6687 = vld [vmem:[%s6624 + $0x1f0] sm:$0xff]
  %v6688 = vld [vmem:[%s6624 + $0x1f8] sm:$0xff]
  %6689 = vmatpush.msra.mxu0 %v680
  %6690 = vmatpush.msra.mxu0 %v679
  %6691 = vmatpush.msra.mxu0 %v678
  %6692 = vmatpush.msra.mxu0 %v677
  %6693 = vmatpush.msra.mxu0 %v676
  %6694 = vmatpush.msra.mxu0 %v675
  %6695 = vmatpush.msra.mxu0 %v674
  %6696 = vmatpush.msra.mxu0 %v673
  %6697 = vmatpush.msra.mxu0 %v672
  %6698 = vmatpush.msra.mxu0 %v671
  %6699 = vmatpush.msra.mxu0 %v670
  %6700 = vmatpush.msra.mxu0 %v669
  %6701 = vmatpush.msra.mxu0 %v668
  %6702 = vmatpush.msra.mxu0 %v667
  %6703 = vmatpush.msra.mxu0 %v666
  %6704 = vmatpush.msra.mxu0 %v665
  %6705 = vmatmul.f32.gmra.mxu0 %v6625
  %v6706 = vpop.f32.mrf.mxu0
  %v6707 = vadd.f32 0.0, %v6706
  %6708 = vmatmul.f32.gmra.mxu0 %v6629
  %v6709 = vpop.f32.mrf.mxu0
  %v6710 = vadd.f32 0.0, %v6709
  %6711 = vmatmul.f32.gmra.mxu0 %v6633
  %v6712 = vpop.f32.mrf.mxu0
  %v6713 = vadd.f32 0.0, %v6712
  %6714 = vmatmul.f32.gmra.mxu0 %v6637
  %v6715 = vpop.f32.mrf.mxu0
  %v6716 = vadd.f32 0.0, %v6715
  %6717 = vmatmul.f32.gmra.mxu0 %v6641
  %v6718 = vpop.f32.mrf.mxu0
  %v6719 = vadd.f32 0.0, %v6718
  %6720 = vmatmul.f32.gmra.mxu0 %v6645
  %v6721 = vpop.f32.mrf.mxu0
  %v6722 = vadd.f32 0.0, %v6721
  %6723 = vmatmul.f32.gmra.mxu0 %v6649
  %v6724 = vpop.f32.mrf.mxu0
  %v6725 = vadd.f32 0.0, %v6724
  %6726 = vmatmul.f32.gmra.mxu0 %v6653
  %v6727 = vpop.f32.mrf.mxu0
  %v6728 = vadd.f32 0.0, %v6727
  %6729 = vmatmul.f32.gmra.mxu0 %v6657
  %v6730 = vpop.f32.mrf.mxu0
  %v6731 = vadd.f32 0.0, %v6730
  %6732 = vmatmul.f32.gmra.mxu0 %v6661
  %v6733 = vpop.f32.mrf.mxu0
  %v6734 = vadd.f32 0.0, %v6733
  %6735 = vmatmul.f32.gmra.mxu0 %v6665
  %v6736 = vpop.f32.mrf.mxu0
  %v6737 = vadd.f32 0.0, %v6736
  %6738 = vmatmul.f32.gmra.mxu0 %v6669
  %v6739 = vpop.f32.mrf.mxu0
  %v6740 = vadd.f32 0.0, %v6739
  %6741 = vmatmul.f32.gmra.mxu0 %v6673
  %v6742 = vpop.f32.mrf.mxu0
  %v6743 = vadd.f32 0.0, %v6742
  %6744 = vmatmul.f32.gmra.mxu0 %v6677
  %v6745 = vpop.f32.mrf.mxu0
  %v6746 = vadd.f32 0.0, %v6745
  %6747 = vmatmul.f32.gmra.mxu0 %v6681
  %v6748 = vpop.f32.mrf.mxu0
  %v6749 = vadd.f32 0.0, %v6748
  %6750 = vmatmul.f32.gmra.mxu0 %v6685
  %v6751 = vpop.f32.mrf.mxu0
  %v6752 = vadd.f32 0.0, %v6751
  %6753 = vdwg.mxu0
  %6754 = vmatpush.msra.mxu0 %v696
  %6755 = vmatpush.msra.mxu0 %v695
  %6756 = vmatpush.msra.mxu0 %v694
  %6757 = vmatpush.msra.mxu0 %v693
  %6758 = vmatpush.msra.mxu0 %v692
  %6759 = vmatpush.msra.mxu0 %v691
  %6760 = vmatpush.msra.mxu0 %v690
  %6761 = vmatpush.msra.mxu0 %v689
  %6762 = vmatpush.msra.mxu0 %v688
  %6763 = vmatpush.msra.mxu0 %v687
  %6764 = vmatpush.msra.mxu0 %v686
  %6765 = vmatpush.msra.mxu0 %v685
  %6766 = vmatpush.msra.mxu0 %v684
  %6767 = vmatpush.msra.mxu0 %v683
  %6768 = vmatpush.msra.mxu0 %v682
  %6769 = vmatpush.msra.mxu0 %v681
  %6770 = vmatmul.f32.gmra.mxu0 %v6626
  %v6771 = vpop.f32.mrf.mxu0
  %v6772 = vadd.f32 %v6707, %v6771
  %6773 = vmatmul.f32.gmra.mxu0 %v6630
  %v6774 = vpop.f32.mrf.mxu0
  %v6775 = vadd.f32 %v6710, %v6774
  %6776 = vmatmul.f32.gmra.mxu0 %v6634
  %v6777 = vpop.f32.mrf.mxu0
  %v6778 = vadd.f32 %v6713, %v6777
  %6779 = vmatmul.f32.gmra.mxu0 %v6638
  %v6780 = vpop.f32.mrf.mxu0
  %v6781 = vadd.f32 %v6716, %v6780
  %6782 = vmatmul.f32.gmra.mxu0 %v6642
  %v6783 = vpop.f32.mrf.mxu0
  %v6784 = vadd.f32 %v6719, %v6783
  %6785 = vmatmul.f32.gmra.mxu0 %v6646
  %v6786 = vpop.f32.mrf.mxu0
  %v6787 = vadd.f32 %v6722, %v6786
  %6788 = vmatmul.f32.gmra.mxu0 %v6650
  %v6789 = vpop.f32.mrf.mxu0
  %v6790 = vadd.f32 %v6725, %v6789
  %6791 = vmatmul.f32.gmra.mxu0 %v6654
  %v6792 = vpop.f32.mrf.mxu0
  %v6793 = vadd.f32 %v6728, %v6792
  %6794 = vmatmul.f32.gmra.mxu0 %v6658
  %v6795 = vpop.f32.mrf.mxu0
  %v6796 = vadd.f32 %v6731, %v6795
  %6797 = vmatmul.f32.gmra.mxu0 %v6662
  %v6798 = vpop.f32.mrf.mxu0
  %v6799 = vadd.f32 %v6734, %v6798
  %6800 = vmatmul.f32.gmra.mxu0 %v6666
  %v6801 = vpop.f32.mrf.mxu0
  %v6802 = vadd.f32 %v6737, %v6801
  %6803 = vmatmul.f32.gmra.mxu0 %v6670
  %v6804 = vpop.f32.mrf.mxu0
  %v6805 = vadd.f32 %v6740, %v6804
  %6806 = vmatmul.f32.gmra.mxu0 %v6674
  %v6807 = vpop.f32.mrf.mxu0
  %v6808 = vadd.f32 %v6743, %v6807
  %6809 = vmatmul.f32.gmra.mxu0 %v6678
  %v6810 = vpop.f32.mrf.mxu0
  %v6811 = vadd.f32 %v6746, %v6810
  %6812 = vmatmul.f32.gmra.mxu0 %v6682
  %v6813 = vpop.f32.mrf.mxu0
  %v6814 = vadd.f32 %v6749, %v6813
  %6815 = vmatmul.f32.gmra.mxu0 %v6686
  %v6816 = vpop.f32.mrf.mxu0
  %v6817 = vadd.f32 %v6752, %v6816
  %6818 = vdwg.mxu0
  %6819 = vmatpush.msra.mxu0 %v712
  %6820 = vmatpush.msra.mxu0 %v711
  %6821 = vmatpush.msra.mxu0 %v710
  %6822 = vmatpush.msra.mxu0 %v709
  %6823 = vmatpush.msra.mxu0 %v708
  %6824 = vmatpush.msra.mxu0 %v707
  %6825 = vmatpush.msra.mxu0 %v706
  %6826 = vmatpush.msra.mxu0 %v705
  %6827 = vmatpush.msra.mxu0 %v704
  %6828 = vmatpush.msra.mxu0 %v703
  %6829 = vmatpush.msra.mxu0 %v702
  %6830 = vmatpush.msra.mxu0 %v701
  %6831 = vmatpush.msra.mxu0 %v700
  %6832 = vmatpush.msra.mxu0 %v699
  %6833 = vmatpush.msra.mxu0 %v698
  %6834 = vmatpush.msra.mxu0 %v697
  %6835 = vmatmul.f32.gmra.mxu0 %v6627
  %v6836 = vpop.f32.mrf.mxu0
  %v6837 = vadd.f32 %v6772, %v6836
  %6838 = vmatmul.f32.gmra.mxu0 %v6631
  %v6839 = vpop.f32.mrf.mxu0
  %v6840 = vadd.f32 %v6775, %v6839
  %6841 = vmatmul.f32.gmra.mxu0 %v6635
  %v6842 = vpop.f32.mrf.mxu0
  %v6843 = vadd.f32 %v6778, %v6842
  %6844 = vmatmul.f32.gmra.mxu0 %v6639
  %v6845 = vpop.f32.mrf.mxu0
  %v6846 = vadd.f32 %v6781, %v6845
  %6847 = vmatmul.f32.gmra.mxu0 %v6643
  %v6848 = vpop.f32.mrf.mxu0
  %v6849 = vadd.f32 %v6784, %v6848
  %6850 = vmatmul.f32.gmra.mxu0 %v6647
  %v6851 = vpop.f32.mrf.mxu0
  %v6852 = vadd.f32 %v6787, %v6851
  %6853 = vmatmul.f32.gmra.mxu0 %v6651
  %v6854 = vpop.f32.mrf.mxu0
  %v6855 = vadd.f32 %v6790, %v6854
  %6856 = vmatmul.f32.gmra.mxu0 %v6655
  %v6857 = vpop.f32.mrf.mxu0
  %v6858 = vadd.f32 %v6793, %v6857
  %6859 = vmatmul.f32.gmra.mxu0 %v6659
  %v6860 = vpop.f32.mrf.mxu0
  %v6861 = vadd.f32 %v6796, %v6860
  %6862 = vmatmul.f32.gmra.mxu0 %v6663
  %v6863 = vpop.f32.mrf.mxu0
  %v6864 = vadd.f32 %v6799, %v6863
  %6865 = vmatmul.f32.gmra.mxu0 %v6667
  %v6866 = vpop.f32.mrf.mxu0
  %v6867 = vadd.f32 %v6802, %v6866
  %6868 = vmatmul.f32.gmra.mxu0 %v6671
  %v6869 = vpop.f32.mrf.mxu0
  %v6870 = vadd.f32 %v6805, %v6869
  %6871 = vmatmul.f32.gmra.mxu0 %v6675
  %v6872 = vpop.f32.mrf.mxu0
  %v6873 = vadd.f32 %v6808, %v6872
  %6874 = vmatmul.f32.gmra.mxu0 %v6679
  %v6875 = vpop.f32.mrf.mxu0
  %v6876 = vadd.f32 %v6811, %v6875
  %6877 = vmatmul.f32.gmra.mxu0 %v6683
  %v6878 = vpop.f32.mrf.mxu0
  %v6879 = vadd.f32 %v6814, %v6878
  %6880 = vmatmul.f32.gmra.mxu0 %v6687
  %v6881 = vpop.f32.mrf.mxu0
  %v6882 = vadd.f32 %v6817, %v6881
  %6883 = vdwg.mxu0
  %6884 = vmatpush.msra.mxu0 %v728
  %6885 = vmatpush.msra.mxu0 %v727
  %6886 = vmatpush.msra.mxu0 %v726
  %6887 = vmatpush.msra.mxu0 %v725
  %6888 = vmatpush.msra.mxu0 %v724
  %6889 = vmatpush.msra.mxu0 %v723
  %6890 = vmatpush.msra.mxu0 %v722
  %6891 = vmatpush.msra.mxu0 %v721
  %6892 = vmatpush.msra.mxu0 %v720
  %6893 = vmatpush.msra.mxu0 %v719
  %6894 = vmatpush.msra.mxu0 %v718
  %6895 = vmatpush.msra.mxu0 %v717
  %6896 = vmatpush.msra.mxu0 %v716
  %6897 = vmatpush.msra.mxu0 %v715
  %6898 = vmatpush.msra.mxu0 %v714
  %6899 = vmatpush.msra.mxu0 %v713
  %6900 = vmatmul.f32.gmra.mxu0 %v6628
  %v6901 = vpop.f32.mrf.mxu0
  %v6902 = vadd.f32 %v6837, %v6901
  %6903 = vmatmul.f32.gmra.mxu0 %v6632
  %v6904 = vpop.f32.mrf.mxu0
  %v6905 = vadd.f32 %v6840, %v6904
  %6906 = vmatmul.f32.gmra.mxu0 %v6636
  %v6907 = vpop.f32.mrf.mxu0
  %v6908 = vadd.f32 %v6843, %v6907
  %6909 = vmatmul.f32.gmra.mxu0 %v6640
  %v6910 = vpop.f32.mrf.mxu0
  %v6911 = vadd.f32 %v6846, %v6910
  %6912 = vmatmul.f32.gmra.mxu0 %v6644
  %v6913 = vpop.f32.mrf.mxu0
  %v6914 = vadd.f32 %v6849, %v6913
  %6915 = vmatmul.f32.gmra.mxu0 %v6648
  %v6916 = vpop.f32.mrf.mxu0
  %v6917 = vadd.f32 %v6852, %v6916
  %6918 = vmatmul.f32.gmra.mxu0 %v6652
  %v6919 = vpop.f32.mrf.mxu0
  %v6920 = vadd.f32 %v6855, %v6919
  %6921 = vmatmul.f32.gmra.mxu0 %v6656
  %v6922 = vpop.f32.mrf.mxu0
  %v6923 = vadd.f32 %v6858, %v6922
  %6924 = vmatmul.f32.gmra.mxu0 %v6660
  %v6925 = vpop.f32.mrf.mxu0
  %v6926 = vadd.f32 %v6861, %v6925
  %6927 = vmatmul.f32.gmra.mxu0 %v6664
  %v6928 = vpop.f32.mrf.mxu0
  %v6929 = vadd.f32 %v6864, %v6928
  %6930 = vmatmul.f32.gmra.mxu0 %v6668
  %v6931 = vpop.f32.mrf.mxu0
  %v6932 = vadd.f32 %v6867, %v6931
  %6933 = vmatmul.f32.gmra.mxu0 %v6672
  %v6934 = vpop.f32.mrf.mxu0
  %v6935 = vadd.f32 %v6870, %v6934
  %6936 = vmatmul.f32.gmra.mxu0 %v6676
  %v6937 = vpop.f32.mrf.mxu0
  %v6938 = vadd.f32 %v6873, %v6937
  %6939 = vmatmul.f32.gmra.mxu0 %v6680
  %v6940 = vpop.f32.mrf.mxu0
  %v6941 = vadd.f32 %v6876, %v6940
  %6942 = vmatmul.f32.gmra.mxu0 %v6684
  %v6943 = vpop.f32.mrf.mxu0
  %v6944 = vadd.f32 %v6879, %v6943
  %6945 = vmatmul.f32.gmra.mxu0 %v6688
  %v6946 = vpop.f32.mrf.mxu0
  %v6947 = vadd.f32 %v6882, %v6946
  %6948 = vdwg.mxu0
  %s6949 = scalar_lea.vmem %s4, 104
  %v6950 = vld [vmem:[%s6949] sm:$0xff]
  %v6952 = vsel %vm1381, %v6902, 0
  %v6955 = vsel %vm1381, %v6905, 0
  %v6958 = vsel %vm1381, %v6908, 0
  %v6961 = vsel %vm1381, %v6911, 0
  %v6964 = vsel %vm1381, %v6914, 0
  %v6967 = vsel %vm1381, %v6917, 0
  %v6970 = vsel %vm1381, %v6920, 0
  %v6973 = vsel %vm1381, %v6923, 0
  %v6976 = vsel %vm1381, %v6926, 0
  %v6979 = vsel %vm1381, %v6929, 0
  %v6982 = vsel %vm1381, %v6932, 0
  %v6985 = vsel %vm1381, %v6935, 0
  %v6988 = vsel %vm1381, %v6938, 0
  %v6991 = vsel %vm1381, %v6941, 0
  %v6994 = vsel %vm1381, %v6944, 0
  %v6997 = vsel %vm1381, %v6947, 0
  %6999 = vmatpush.msra.mxu0 0.0
  %7000 = vmatpush.msra.mxu0 0.0
  %7001 = vmatpush.msra.mxu0 0.0
  %7002 = vmatpush.msra.mxu0 0.0
  %7003 = vmatpush.msra.mxu0 0.0
  %7004 = vmatpush.msra.mxu0 0.0
  %7005 = vmatpush.msra.mxu0 0.0
  %7006 = vmatpush.msra.mxu0 0.0
  %7007 = vmatpush.msra.mxu0 0.0
  %7008 = vmatpush.msra.mxu0 0.0
  %7009 = vmatpush.msra.mxu0 0.0
  %7010 = vmatpush.msra.mxu0 0.0
  %7011 = vmatpush.msra.mxu0 0.0
  %7012 = vmatpush.msra.mxu0 0.0
  %7013 = vmatpush.msra.mxu0 0.0
  %7014 = vmatpush.msra.mxu0 %v6950
  %7015 = vmatmul.f32.gmra.mxu0 %v6952
  %v7016 = vpop.f32.mrf.mxu0
  %v7017 = vadd.f32 0.0, %v7016
  %7018 = vmatmul.f32.gmra.mxu0 %v6955
  %v7019 = vpop.f32.mrf.mxu0
  %v7020 = vadd.f32 0.0, %v7019
  %7021 = vmatmul.f32.gmra.mxu0 %v6958
  %v7022 = vpop.f32.mrf.mxu0
  %v7023 = vadd.f32 0.0, %v7022
  %7024 = vmatmul.f32.gmra.mxu0 %v6961
  %v7025 = vpop.f32.mrf.mxu0
  %v7026 = vadd.f32 0.0, %v7025
  %7027 = vmatmul.f32.gmra.mxu0 %v6964
  %v7028 = vpop.f32.mrf.mxu0
  %v7029 = vadd.f32 0.0, %v7028
  %7030 = vmatmul.f32.gmra.mxu0 %v6967
  %v7031 = vpop.f32.mrf.mxu0
  %v7032 = vadd.f32 0.0, %v7031
  %7033 = vmatmul.f32.gmra.mxu0 %v6970
  %v7034 = vpop.f32.mrf.mxu0
  %v7035 = vadd.f32 0.0, %v7034
  %7036 = vmatmul.f32.gmra.mxu0 %v6973
  %v7037 = vpop.f32.mrf.mxu0
  %v7038 = vadd.f32 0.0, %v7037
  %7039 = vmatmul.f32.gmra.mxu0 %v6976
  %v7040 = vpop.f32.mrf.mxu0
  %v7041 = vadd.f32 0.0, %v7040
  %7042 = vmatmul.f32.gmra.mxu0 %v6979
  %v7043 = vpop.f32.mrf.mxu0
  %v7044 = vadd.f32 0.0, %v7043
  %7045 = vmatmul.f32.gmra.mxu0 %v6982
  %v7046 = vpop.f32.mrf.mxu0
  %v7047 = vadd.f32 0.0, %v7046
  %7048 = vmatmul.f32.gmra.mxu0 %v6985
  %v7049 = vpop.f32.mrf.mxu0
  %v7050 = vadd.f32 0.0, %v7049
  %7051 = vmatmul.f32.gmra.mxu0 %v6988
  %v7052 = vpop.f32.mrf.mxu0
  %v7053 = vadd.f32 0.0, %v7052
  %7054 = vmatmul.f32.gmra.mxu0 %v6991
  %v7055 = vpop.f32.mrf.mxu0
  %v7056 = vadd.f32 0.0, %v7055
  %7057 = vmatmul.f32.gmra.mxu0 %v6994
  %v7058 = vpop.f32.mrf.mxu0
  %v7059 = vadd.f32 0.0, %v7058
  %7060 = vmatmul.f32.gmra.mxu0 %v6997
  %v7061 = vpop.f32.mrf.mxu0
  %v7062 = vadd.f32 0.0, %v7061
  %7063 = vdwg.mxu0
  %v7064 = vadd.f32 %v6608, %v7017
  %v7065 = vadd.f32 %v6609, %v7020
  %v7066 = vadd.f32 %v6610, %v7023
  %v7067 = vadd.f32 %v6611, %v7026
  %v7068 = vadd.f32 %v6612, %v7029
  %v7069 = vadd.f32 %v6613, %v7032
  %v7070 = vadd.f32 %v6614, %v7035
  %v7071 = vadd.f32 %v6615, %v7038
  %v7072 = vadd.f32 %v6616, %v7041
  %v7073 = vadd.f32 %v6617, %v7044
  %v7074 = vadd.f32 %v6618, %v7047
  %v7075 = vadd.f32 %v6619, %v7050
  %v7076 = vadd.f32 %v6620, %v7053
  %v7077 = vadd.f32 %v6621, %v7056
  %v7078 = vadd.f32 %v6622, %v7059
  %v7079 = vadd.f32 %v6623, %v7062
  %s7080 = scalar_lea.vmem %s3, 7168
  %v7081 = vld [vmem:[%s7080] sm:$0xff]
  %v7082 = vld [vmem:[%s7080 + $0x8] sm:$0xff]
  %v7083 = vld [vmem:[%s7080 + $0x10] sm:$0xff]
  %v7084 = vld [vmem:[%s7080 + $0x18] sm:$0xff]
  %v7085 = vld [vmem:[%s7080 + $0x20] sm:$0xff]
  %v7086 = vld [vmem:[%s7080 + $0x28] sm:$0xff]
  %v7087 = vld [vmem:[%s7080 + $0x30] sm:$0xff]
  %v7088 = vld [vmem:[%s7080 + $0x38] sm:$0xff]
  %v7089 = vld [vmem:[%s7080 + $0x40] sm:$0xff]
  %v7090 = vld [vmem:[%s7080 + $0x48] sm:$0xff]
  %v7091 = vld [vmem:[%s7080 + $0x50] sm:$0xff]
  %v7092 = vld [vmem:[%s7080 + $0x58] sm:$0xff]
  %v7093 = vld [vmem:[%s7080 + $0x60] sm:$0xff]
  %v7094 = vld [vmem:[%s7080 + $0x68] sm:$0xff]
  %v7095 = vld [vmem:[%s7080 + $0x70] sm:$0xff]
  %v7096 = vld [vmem:[%s7080 + $0x78] sm:$0xff]
  %v7097 = vld [vmem:[%s7080 + $0x80] sm:$0xff]
  %v7098 = vld [vmem:[%s7080 + $0x88] sm:$0xff]
  %v7099 = vld [vmem:[%s7080 + $0x90] sm:$0xff]
  %v7100 = vld [vmem:[%s7080 + $0x98] sm:$0xff]
  %v7101 = vld [vmem:[%s7080 + $0xa0] sm:$0xff]
  %v7102 = vld [vmem:[%s7080 + $0xa8] sm:$0xff]
  %v7103 = vld [vmem:[%s7080 + $0xb0] sm:$0xff]
  %v7104 = vld [vmem:[%s7080 + $0xb8] sm:$0xff]
  %v7105 = vld [vmem:[%s7080 + $0xc0] sm:$0xff]
  %v7106 = vld [vmem:[%s7080 + $0xc8] sm:$0xff]
  %v7107 = vld [vmem:[%s7080 + $0xd0] sm:$0xff]
  %v7108 = vld [vmem:[%s7080 + $0xd8] sm:$0xff]
  %v7109 = vld [vmem:[%s7080 + $0xe0] sm:$0xff]
  %v7110 = vld [vmem:[%s7080 + $0xe8] sm:$0xff]
  %v7111 = vld [vmem:[%s7080 + $0xf0] sm:$0xff]
  %v7112 = vld [vmem:[%s7080 + $0xf8] sm:$0xff]
  %v7113 = vld [vmem:[%s7080 + $0x100] sm:$0xff]
  %v7114 = vld [vmem:[%s7080 + $0x108] sm:$0xff]
  %v7115 = vld [vmem:[%s7080 + $0x110] sm:$0xff]
  %v7116 = vld [vmem:[%s7080 + $0x118] sm:$0xff]
  %v7117 = vld [vmem:[%s7080 + $0x120] sm:$0xff]
  %v7118 = vld [vmem:[%s7080 + $0x128] sm:$0xff]
  %v7119 = vld [vmem:[%s7080 + $0x130] sm:$0xff]
  %v7120 = vld [vmem:[%s7080 + $0x138] sm:$0xff]
  %v7121 = vld [vmem:[%s7080 + $0x140] sm:$0xff]
  %v7122 = vld [vmem:[%s7080 + $0x148] sm:$0xff]
  %v7123 = vld [vmem:[%s7080 + $0x150] sm:$0xff]
  %v7124 = vld [vmem:[%s7080 + $0x158] sm:$0xff]
  %v7125 = vld [vmem:[%s7080 + $0x160] sm:$0xff]
  %v7126 = vld [vmem:[%s7080 + $0x168] sm:$0xff]
  %v7127 = vld [vmem:[%s7080 + $0x170] sm:$0xff]
  %v7128 = vld [vmem:[%s7080 + $0x178] sm:$0xff]
  %v7129 = vld [vmem:[%s7080 + $0x180] sm:$0xff]
  %v7130 = vld [vmem:[%s7080 + $0x188] sm:$0xff]
  %v7131 = vld [vmem:[%s7080 + $0x190] sm:$0xff]
  %v7132 = vld [vmem:[%s7080 + $0x198] sm:$0xff]
  %v7133 = vld [vmem:[%s7080 + $0x1a0] sm:$0xff]
  %v7134 = vld [vmem:[%s7080 + $0x1a8] sm:$0xff]
  %v7135 = vld [vmem:[%s7080 + $0x1b0] sm:$0xff]
  %v7136 = vld [vmem:[%s7080 + $0x1b8] sm:$0xff]
  %v7137 = vld [vmem:[%s7080 + $0x1c0] sm:$0xff]
  %v7138 = vld [vmem:[%s7080 + $0x1c8] sm:$0xff]
  %v7139 = vld [vmem:[%s7080 + $0x1d0] sm:$0xff]
  %v7140 = vld [vmem:[%s7080 + $0x1d8] sm:$0xff]
  %v7141 = vld [vmem:[%s7080 + $0x1e0] sm:$0xff]
  %v7142 = vld [vmem:[%s7080 + $0x1e8] sm:$0xff]
  %v7143 = vld [vmem:[%s7080 + $0x1f0] sm:$0xff]
  %v7144 = vld [vmem:[%s7080 + $0x1f8] sm:$0xff]
  %7145 = vmatpush.msra.mxu0 %v680
  %7146 = vmatpush.msra.mxu0 %v679
  %7147 = vmatpush.msra.mxu0 %v678
  %7148 = vmatpush.msra.mxu0 %v677
  %7149 = vmatpush.msra.mxu0 %v676
  %7150 = vmatpush.msra.mxu0 %v675
  %7151 = vmatpush.msra.mxu0 %v674
  %7152 = vmatpush.msra.mxu0 %v673
  %7153 = vmatpush.msra.mxu0 %v672
  %7154 = vmatpush.msra.mxu0 %v671
  %7155 = vmatpush.msra.mxu0 %v670
  %7156 = vmatpush.msra.mxu0 %v669
  %7157 = vmatpush.msra.mxu0 %v668
  %7158 = vmatpush.msra.mxu0 %v667
  %7159 = vmatpush.msra.mxu0 %v666
  %7160 = vmatpush.msra.mxu0 %v665
  %7161 = vmatmul.f32.gmra.mxu0 %v7081
  %v7162 = vpop.f32.mrf.mxu0
  %v7163 = vadd.f32 0.0, %v7162
  %7164 = vmatmul.f32.gmra.mxu0 %v7085
  %v7165 = vpop.f32.mrf.mxu0
  %v7166 = vadd.f32 0.0, %v7165
  %7167 = vmatmul.f32.gmra.mxu0 %v7089
  %v7168 = vpop.f32.mrf.mxu0
  %v7169 = vadd.f32 0.0, %v7168
  %7170 = vmatmul.f32.gmra.mxu0 %v7093
  %v7171 = vpop.f32.mrf.mxu0
  %v7172 = vadd.f32 0.0, %v7171
  %7173 = vmatmul.f32.gmra.mxu0 %v7097
  %v7174 = vpop.f32.mrf.mxu0
  %v7175 = vadd.f32 0.0, %v7174
  %7176 = vmatmul.f32.gmra.mxu0 %v7101
  %v7177 = vpop.f32.mrf.mxu0
  %v7178 = vadd.f32 0.0, %v7177
  %7179 = vmatmul.f32.gmra.mxu0 %v7105
  %v7180 = vpop.f32.mrf.mxu0
  %v7181 = vadd.f32 0.0, %v7180
  %7182 = vmatmul.f32.gmra.mxu0 %v7109
  %v7183 = vpop.f32.mrf.mxu0
  %v7184 = vadd.f32 0.0, %v7183
  %7185 = vmatmul.f32.gmra.mxu0 %v7113
  %v7186 = vpop.f32.mrf.mxu0
  %v7187 = vadd.f32 0.0, %v7186
  %7188 = vmatmul.f32.gmra.mxu0 %v7117
  %v7189 = vpop.f32.mrf.mxu0
  %v7190 = vadd.f32 0.0, %v7189
  %7191 = vmatmul.f32.gmra.mxu0 %v7121
  %v7192 = vpop.f32.mrf.mxu0
  %v7193 = vadd.f32 0.0, %v7192
  %7194 = vmatmul.f32.gmra.mxu0 %v7125
  %v7195 = vpop.f32.mrf.mxu0
  %v7196 = vadd.f32 0.0, %v7195
  %7197 = vmatmul.f32.gmra.mxu0 %v7129
  %v7198 = vpop.f32.mrf.mxu0
  %v7199 = vadd.f32 0.0, %v7198
  %7200 = vmatmul.f32.gmra.mxu0 %v7133
  %v7201 = vpop.f32.mrf.mxu0
  %v7202 = vadd.f32 0.0, %v7201
  %7203 = vmatmul.f32.gmra.mxu0 %v7137
  %v7204 = vpop.f32.mrf.mxu0
  %v7205 = vadd.f32 0.0, %v7204
  %7206 = vmatmul.f32.gmra.mxu0 %v7141
  %v7207 = vpop.f32.mrf.mxu0
  %v7208 = vadd.f32 0.0, %v7207
  %7209 = vdwg.mxu0
  %7210 = vmatpush.msra.mxu0 %v696
  %7211 = vmatpush.msra.mxu0 %v695
  %7212 = vmatpush.msra.mxu0 %v694
  %7213 = vmatpush.msra.mxu0 %v693
  %7214 = vmatpush.msra.mxu0 %v692
  %7215 = vmatpush.msra.mxu0 %v691
  %7216 = vmatpush.msra.mxu0 %v690
  %7217 = vmatpush.msra.mxu0 %v689
  %7218 = vmatpush.msra.mxu0 %v688
  %7219 = vmatpush.msra.mxu0 %v687
  %7220 = vmatpush.msra.mxu0 %v686
  %7221 = vmatpush.msra.mxu0 %v685
  %7222 = vmatpush.msra.mxu0 %v684
  %7223 = vmatpush.msra.mxu0 %v683
  %7224 = vmatpush.msra.mxu0 %v682
  %7225 = vmatpush.msra.mxu0 %v681
  %7226 = vmatmul.f32.gmra.mxu0 %v7082
  %v7227 = vpop.f32.mrf.mxu0
  %v7228 = vadd.f32 %v7163, %v7227
  %7229 = vmatmul.f32.gmra.mxu0 %v7086
  %v7230 = vpop.f32.mrf.mxu0
  %v7231 = vadd.f32 %v7166, %v7230
  %7232 = vmatmul.f32.gmra.mxu0 %v7090
  %v7233 = vpop.f32.mrf.mxu0
  %v7234 = vadd.f32 %v7169, %v7233
  %7235 = vmatmul.f32.gmra.mxu0 %v7094
  %v7236 = vpop.f32.mrf.mxu0
  %v7237 = vadd.f32 %v7172, %v7236
  %7238 = vmatmul.f32.gmra.mxu0 %v7098
  %v7239 = vpop.f32.mrf.mxu0
  %v7240 = vadd.f32 %v7175, %v7239
  %7241 = vmatmul.f32.gmra.mxu0 %v7102
  %v7242 = vpop.f32.mrf.mxu0
  %v7243 = vadd.f32 %v7178, %v7242
  %7244 = vmatmul.f32.gmra.mxu0 %v7106
  %v7245 = vpop.f32.mrf.mxu0
  %v7246 = vadd.f32 %v7181, %v7245
  %7247 = vmatmul.f32.gmra.mxu0 %v7110
  %v7248 = vpop.f32.mrf.mxu0
  %v7249 = vadd.f32 %v7184, %v7248
  %7250 = vmatmul.f32.gmra.mxu0 %v7114
  %v7251 = vpop.f32.mrf.mxu0
  %v7252 = vadd.f32 %v7187, %v7251
  %7253 = vmatmul.f32.gmra.mxu0 %v7118
  %v7254 = vpop.f32.mrf.mxu0
  %v7255 = vadd.f32 %v7190, %v7254
  %7256 = vmatmul.f32.gmra.mxu0 %v7122
  %v7257 = vpop.f32.mrf.mxu0
  %v7258 = vadd.f32 %v7193, %v7257
  %7259 = vmatmul.f32.gmra.mxu0 %v7126
  %v7260 = vpop.f32.mrf.mxu0
  %v7261 = vadd.f32 %v7196, %v7260
  %7262 = vmatmul.f32.gmra.mxu0 %v7130
  %v7263 = vpop.f32.mrf.mxu0
  %v7264 = vadd.f32 %v7199, %v7263
  %7265 = vmatmul.f32.gmra.mxu0 %v7134
  %v7266 = vpop.f32.mrf.mxu0
  %v7267 = vadd.f32 %v7202, %v7266
  %7268 = vmatmul.f32.gmra.mxu0 %v7138
  %v7269 = vpop.f32.mrf.mxu0
  %v7270 = vadd.f32 %v7205, %v7269
  %7271 = vmatmul.f32.gmra.mxu0 %v7142
  %v7272 = vpop.f32.mrf.mxu0
  %v7273 = vadd.f32 %v7208, %v7272
  %7274 = vdwg.mxu0
  %7275 = vmatpush.msra.mxu0 %v712
  %7276 = vmatpush.msra.mxu0 %v711
  %7277 = vmatpush.msra.mxu0 %v710
  %7278 = vmatpush.msra.mxu0 %v709
  %7279 = vmatpush.msra.mxu0 %v708
  %7280 = vmatpush.msra.mxu0 %v707
  %7281 = vmatpush.msra.mxu0 %v706
  %7282 = vmatpush.msra.mxu0 %v705
  %7283 = vmatpush.msra.mxu0 %v704
  %7284 = vmatpush.msra.mxu0 %v703
  %7285 = vmatpush.msra.mxu0 %v702
  %7286 = vmatpush.msra.mxu0 %v701
  %7287 = vmatpush.msra.mxu0 %v700
  %7288 = vmatpush.msra.mxu0 %v699
  %7289 = vmatpush.msra.mxu0 %v698
  %7290 = vmatpush.msra.mxu0 %v697
  %7291 = vmatmul.f32.gmra.mxu0 %v7083
  %v7292 = vpop.f32.mrf.mxu0
  %v7293 = vadd.f32 %v7228, %v7292
  %7294 = vmatmul.f32.gmra.mxu0 %v7087
  %v7295 = vpop.f32.mrf.mxu0
  %v7296 = vadd.f32 %v7231, %v7295
  %7297 = vmatmul.f32.gmra.mxu0 %v7091
  %v7298 = vpop.f32.mrf.mxu0
  %v7299 = vadd.f32 %v7234, %v7298
  %7300 = vmatmul.f32.gmra.mxu0 %v7095
  %v7301 = vpop.f32.mrf.mxu0
  %v7302 = vadd.f32 %v7237, %v7301
  %7303 = vmatmul.f32.gmra.mxu0 %v7099
  %v7304 = vpop.f32.mrf.mxu0
  %v7305 = vadd.f32 %v7240, %v7304
  %7306 = vmatmul.f32.gmra.mxu0 %v7103
  %v7307 = vpop.f32.mrf.mxu0
  %v7308 = vadd.f32 %v7243, %v7307
  %7309 = vmatmul.f32.gmra.mxu0 %v7107
  %v7310 = vpop.f32.mrf.mxu0
  %v7311 = vadd.f32 %v7246, %v7310
  %7312 = vmatmul.f32.gmra.mxu0 %v7111
  %v7313 = vpop.f32.mrf.mxu0
  %v7314 = vadd.f32 %v7249, %v7313
  %7315 = vmatmul.f32.gmra.mxu0 %v7115
  %v7316 = vpop.f32.mrf.mxu0
  %v7317 = vadd.f32 %v7252, %v7316
  %7318 = vmatmul.f32.gmra.mxu0 %v7119
  %v7319 = vpop.f32.mrf.mxu0
  %v7320 = vadd.f32 %v7255, %v7319
  %7321 = vmatmul.f32.gmra.mxu0 %v7123
  %v7322 = vpop.f32.mrf.mxu0
  %v7323 = vadd.f32 %v7258, %v7322
  %7324 = vmatmul.f32.gmra.mxu0 %v7127
  %v7325 = vpop.f32.mrf.mxu0
  %v7326 = vadd.f32 %v7261, %v7325
  %7327 = vmatmul.f32.gmra.mxu0 %v7131
  %v7328 = vpop.f32.mrf.mxu0
  %v7329 = vadd.f32 %v7264, %v7328
  %7330 = vmatmul.f32.gmra.mxu0 %v7135
  %v7331 = vpop.f32.mrf.mxu0
  %v7332 = vadd.f32 %v7267, %v7331
  %7333 = vmatmul.f32.gmra.mxu0 %v7139
  %v7334 = vpop.f32.mrf.mxu0
  %v7335 = vadd.f32 %v7270, %v7334
  %7336 = vmatmul.f32.gmra.mxu0 %v7143
  %v7337 = vpop.f32.mrf.mxu0
  %v7338 = vadd.f32 %v7273, %v7337
  %7339 = vdwg.mxu0
  %7340 = vmatpush.msra.mxu0 %v728
  %7341 = vmatpush.msra.mxu0 %v727
  %7342 = vmatpush.msra.mxu0 %v726
  %7343 = vmatpush.msra.mxu0 %v725
  %7344 = vmatpush.msra.mxu0 %v724
  %7345 = vmatpush.msra.mxu0 %v723
  %7346 = vmatpush.msra.mxu0 %v722
  %7347 = vmatpush.msra.mxu0 %v721
  %7348 = vmatpush.msra.mxu0 %v720
  %7349 = vmatpush.msra.mxu0 %v719
  %7350 = vmatpush.msra.mxu0 %v718
  %7351 = vmatpush.msra.mxu0 %v717
  %7352 = vmatpush.msra.mxu0 %v716
  %7353 = vmatpush.msra.mxu0 %v715
  %7354 = vmatpush.msra.mxu0 %v714
  %7355 = vmatpush.msra.mxu0 %v713
  %7356 = vmatmul.f32.gmra.mxu0 %v7084
  %v7357 = vpop.f32.mrf.mxu0
  %v7358 = vadd.f32 %v7293, %v7357
  %7359 = vmatmul.f32.gmra.mxu0 %v7088
  %v7360 = vpop.f32.mrf.mxu0
  %v7361 = vadd.f32 %v7296, %v7360
  %7362 = vmatmul.f32.gmra.mxu0 %v7092
  %v7363 = vpop.f32.mrf.mxu0
  %v7364 = vadd.f32 %v7299, %v7363
  %7365 = vmatmul.f32.gmra.mxu0 %v7096
  %v7366 = vpop.f32.mrf.mxu0
  %v7367 = vadd.f32 %v7302, %v7366
  %7368 = vmatmul.f32.gmra.mxu0 %v7100
  %v7369 = vpop.f32.mrf.mxu0
  %v7370 = vadd.f32 %v7305, %v7369
  %7371 = vmatmul.f32.gmra.mxu0 %v7104
  %v7372 = vpop.f32.mrf.mxu0
  %v7373 = vadd.f32 %v7308, %v7372
  %7374 = vmatmul.f32.gmra.mxu0 %v7108
  %v7375 = vpop.f32.mrf.mxu0
  %v7376 = vadd.f32 %v7311, %v7375
  %7377 = vmatmul.f32.gmra.mxu0 %v7112
  %v7378 = vpop.f32.mrf.mxu0
  %v7379 = vadd.f32 %v7314, %v7378
  %7380 = vmatmul.f32.gmra.mxu0 %v7116
  %v7381 = vpop.f32.mrf.mxu0
  %v7382 = vadd.f32 %v7317, %v7381
  %7383 = vmatmul.f32.gmra.mxu0 %v7120
  %v7384 = vpop.f32.mrf.mxu0
  %v7385 = vadd.f32 %v7320, %v7384
  %7386 = vmatmul.f32.gmra.mxu0 %v7124
  %v7387 = vpop.f32.mrf.mxu0
  %v7388 = vadd.f32 %v7323, %v7387
  %7389 = vmatmul.f32.gmra.mxu0 %v7128
  %v7390 = vpop.f32.mrf.mxu0
  %v7391 = vadd.f32 %v7326, %v7390
  %7392 = vmatmul.f32.gmra.mxu0 %v7132
  %v7393 = vpop.f32.mrf.mxu0
  %v7394 = vadd.f32 %v7329, %v7393
  %7395 = vmatmul.f32.gmra.mxu0 %v7136
  %v7396 = vpop.f32.mrf.mxu0
  %v7397 = vadd.f32 %v7332, %v7396
  %7398 = vmatmul.f32.gmra.mxu0 %v7140
  %v7399 = vpop.f32.mrf.mxu0
  %v7400 = vadd.f32 %v7335, %v7399
  %7401 = vmatmul.f32.gmra.mxu0 %v7144
  %v7402 = vpop.f32.mrf.mxu0
  %v7403 = vadd.f32 %v7338, %v7402
  %7404 = vdwg.mxu0
  %s7405 = scalar_lea.vmem %s4, 112
  %v7406 = vld [vmem:[%s7405] sm:$0xff]
  %v7408 = vsel %vm1381, %v7358, 0
  %v7411 = vsel %vm1381, %v7361, 0
  %v7414 = vsel %vm1381, %v7364, 0
  %v7417 = vsel %vm1381, %v7367, 0
  %v7420 = vsel %vm1381, %v7370, 0
  %v7423 = vsel %vm1381, %v7373, 0
  %v7426 = vsel %vm1381, %v7376, 0
  %v7429 = vsel %vm1381, %v7379, 0
  %v7432 = vsel %vm1381, %v7382, 0
  %v7435 = vsel %vm1381, %v7385, 0
  %v7438 = vsel %vm1381, %v7388, 0
  %v7441 = vsel %vm1381, %v7391, 0
  %v7444 = vsel %vm1381, %v7394, 0
  %v7447 = vsel %vm1381, %v7397, 0
  %v7450 = vsel %vm1381, %v7400, 0
  %v7453 = vsel %vm1381, %v7403, 0
  %7455 = vmatpush.msra.mxu0 0.0
  %7456 = vmatpush.msra.mxu0 0.0
  %7457 = vmatpush.msra.mxu0 0.0
  %7458 = vmatpush.msra.mxu0 0.0
  %7459 = vmatpush.msra.mxu0 0.0
  %7460 = vmatpush.msra.mxu0 0.0
  %7461 = vmatpush.msra.mxu0 0.0
  %7462 = vmatpush.msra.mxu0 0.0
  %7463 = vmatpush.msra.mxu0 0.0
  %7464 = vmatpush.msra.mxu0 0.0
  %7465 = vmatpush.msra.mxu0 0.0
  %7466 = vmatpush.msra.mxu0 0.0
  %7467 = vmatpush.msra.mxu0 0.0
  %7468 = vmatpush.msra.mxu0 0.0
  %7469 = vmatpush.msra.mxu0 0.0
  %7470 = vmatpush.msra.mxu0 %v7406
  %7471 = vmatmul.f32.gmra.mxu0 %v7408
  %v7472 = vpop.f32.mrf.mxu0
  %v7473 = vadd.f32 0.0, %v7472
  %7474 = vmatmul.f32.gmra.mxu0 %v7411
  %v7475 = vpop.f32.mrf.mxu0
  %v7476 = vadd.f32 0.0, %v7475
  %7477 = vmatmul.f32.gmra.mxu0 %v7414
  %v7478 = vpop.f32.mrf.mxu0
  %v7479 = vadd.f32 0.0, %v7478
  %7480 = vmatmul.f32.gmra.mxu0 %v7417
  %v7481 = vpop.f32.mrf.mxu0
  %v7482 = vadd.f32 0.0, %v7481
  %7483 = vmatmul.f32.gmra.mxu0 %v7420
  %v7484 = vpop.f32.mrf.mxu0
  %v7485 = vadd.f32 0.0, %v7484
  %7486 = vmatmul.f32.gmra.mxu0 %v7423
  %v7487 = vpop.f32.mrf.mxu0
  %v7488 = vadd.f32 0.0, %v7487
  %7489 = vmatmul.f32.gmra.mxu0 %v7426
  %v7490 = vpop.f32.mrf.mxu0
  %v7491 = vadd.f32 0.0, %v7490
  %7492 = vmatmul.f32.gmra.mxu0 %v7429
  %v7493 = vpop.f32.mrf.mxu0
  %v7494 = vadd.f32 0.0, %v7493
  %7495 = vmatmul.f32.gmra.mxu0 %v7432
  %v7496 = vpop.f32.mrf.mxu0
  %v7497 = vadd.f32 0.0, %v7496
  %7498 = vmatmul.f32.gmra.mxu0 %v7435
  %v7499 = vpop.f32.mrf.mxu0
  %v7500 = vadd.f32 0.0, %v7499
  %7501 = vmatmul.f32.gmra.mxu0 %v7438
  %v7502 = vpop.f32.mrf.mxu0
  %v7503 = vadd.f32 0.0, %v7502
  %7504 = vmatmul.f32.gmra.mxu0 %v7441
  %v7505 = vpop.f32.mrf.mxu0
  %v7506 = vadd.f32 0.0, %v7505
  %7507 = vmatmul.f32.gmra.mxu0 %v7444
  %v7508 = vpop.f32.mrf.mxu0
  %v7509 = vadd.f32 0.0, %v7508
  %7510 = vmatmul.f32.gmra.mxu0 %v7447
  %v7511 = vpop.f32.mrf.mxu0
  %v7512 = vadd.f32 0.0, %v7511
  %7513 = vmatmul.f32.gmra.mxu0 %v7450
  %v7514 = vpop.f32.mrf.mxu0
  %v7515 = vadd.f32 0.0, %v7514
  %7516 = vmatmul.f32.gmra.mxu0 %v7453
  %v7517 = vpop.f32.mrf.mxu0
  %v7518 = vadd.f32 0.0, %v7517
  %7519 = vdwg.mxu0
  %v7520 = vadd.f32 %v7064, %v7473
  %v7521 = vadd.f32 %v7065, %v7476
  %v7522 = vadd.f32 %v7066, %v7479
  %v7523 = vadd.f32 %v7067, %v7482
  %v7524 = vadd.f32 %v7068, %v7485
  %v7525 = vadd.f32 %v7069, %v7488
  %v7526 = vadd.f32 %v7070, %v7491
  %v7527 = vadd.f32 %v7071, %v7494
  %v7528 = vadd.f32 %v7072, %v7497
  %v7529 = vadd.f32 %v7073, %v7500
  %v7530 = vadd.f32 %v7074, %v7503
  %v7531 = vadd.f32 %v7075, %v7506
  %v7532 = vadd.f32 %v7076, %v7509
  %v7533 = vadd.f32 %v7077, %v7512
  %v7534 = vadd.f32 %v7078, %v7515
  %v7535 = vadd.f32 %v7079, %v7518
  %s7536 = scalar_lea.vmem %s3, 7680
  %v7537 = vld [vmem:[%s7536] sm:$0xff]
  %v7538 = vld [vmem:[%s7536 + $0x8] sm:$0xff]
  %v7539 = vld [vmem:[%s7536 + $0x10] sm:$0xff]
  %v7540 = vld [vmem:[%s7536 + $0x18] sm:$0xff]
  %v7541 = vld [vmem:[%s7536 + $0x20] sm:$0xff]
  %v7542 = vld [vmem:[%s7536 + $0x28] sm:$0xff]
  %v7543 = vld [vmem:[%s7536 + $0x30] sm:$0xff]
  %v7544 = vld [vmem:[%s7536 + $0x38] sm:$0xff]
  %v7545 = vld [vmem:[%s7536 + $0x40] sm:$0xff]
  %v7546 = vld [vmem:[%s7536 + $0x48] sm:$0xff]
  %v7547 = vld [vmem:[%s7536 + $0x50] sm:$0xff]
  %v7548 = vld [vmem:[%s7536 + $0x58] sm:$0xff]
  %v7549 = vld [vmem:[%s7536 + $0x60] sm:$0xff]
  %v7550 = vld [vmem:[%s7536 + $0x68] sm:$0xff]
  %v7551 = vld [vmem:[%s7536 + $0x70] sm:$0xff]
  %v7552 = vld [vmem:[%s7536 + $0x78] sm:$0xff]
  %v7553 = vld [vmem:[%s7536 + $0x80] sm:$0xff]
  %v7554 = vld [vmem:[%s7536 + $0x88] sm:$0xff]
  %v7555 = vld [vmem:[%s7536 + $0x90] sm:$0xff]
  %v7556 = vld [vmem:[%s7536 + $0x98] sm:$0xff]
  %v7557 = vld [vmem:[%s7536 + $0xa0] sm:$0xff]
  %v7558 = vld [vmem:[%s7536 + $0xa8] sm:$0xff]
  %v7559 = vld [vmem:[%s7536 + $0xb0] sm:$0xff]
  %v7560 = vld [vmem:[%s7536 + $0xb8] sm:$0xff]
  %v7561 = vld [vmem:[%s7536 + $0xc0] sm:$0xff]
  %v7562 = vld [vmem:[%s7536 + $0xc8] sm:$0xff]
  %v7563 = vld [vmem:[%s7536 + $0xd0] sm:$0xff]
  %v7564 = vld [vmem:[%s7536 + $0xd8] sm:$0xff]
  %v7565 = vld [vmem:[%s7536 + $0xe0] sm:$0xff]
  %v7566 = vld [vmem:[%s7536 + $0xe8] sm:$0xff]
  %v7567 = vld [vmem:[%s7536 + $0xf0] sm:$0xff]
  %v7568 = vld [vmem:[%s7536 + $0xf8] sm:$0xff]
  %v7569 = vld [vmem:[%s7536 + $0x100] sm:$0xff]
  %v7570 = vld [vmem:[%s7536 + $0x108] sm:$0xff]
  %v7571 = vld [vmem:[%s7536 + $0x110] sm:$0xff]
  %v7572 = vld [vmem:[%s7536 + $0x118] sm:$0xff]
  %v7573 = vld [vmem:[%s7536 + $0x120] sm:$0xff]
  %v7574 = vld [vmem:[%s7536 + $0x128] sm:$0xff]
  %v7575 = vld [vmem:[%s7536 + $0x130] sm:$0xff]
  %v7576 = vld [vmem:[%s7536 + $0x138] sm:$0xff]
  %v7577 = vld [vmem:[%s7536 + $0x140] sm:$0xff]
  %v7578 = vld [vmem:[%s7536 + $0x148] sm:$0xff]
  %v7579 = vld [vmem:[%s7536 + $0x150] sm:$0xff]
  %v7580 = vld [vmem:[%s7536 + $0x158] sm:$0xff]
  %v7581 = vld [vmem:[%s7536 + $0x160] sm:$0xff]
  %v7582 = vld [vmem:[%s7536 + $0x168] sm:$0xff]
  %v7583 = vld [vmem:[%s7536 + $0x170] sm:$0xff]
  %v7584 = vld [vmem:[%s7536 + $0x178] sm:$0xff]
  %v7585 = vld [vmem:[%s7536 + $0x180] sm:$0xff]
  %v7586 = vld [vmem:[%s7536 + $0x188] sm:$0xff]
  %v7587 = vld [vmem:[%s7536 + $0x190] sm:$0xff]
  %v7588 = vld [vmem:[%s7536 + $0x198] sm:$0xff]
  %v7589 = vld [vmem:[%s7536 + $0x1a0] sm:$0xff]
  %v7590 = vld [vmem:[%s7536 + $0x1a8] sm:$0xff]
  %v7591 = vld [vmem:[%s7536 + $0x1b0] sm:$0xff]
  %v7592 = vld [vmem:[%s7536 + $0x1b8] sm:$0xff]
  %v7593 = vld [vmem:[%s7536 + $0x1c0] sm:$0xff]
  %v7594 = vld [vmem:[%s7536 + $0x1c8] sm:$0xff]
  %v7595 = vld [vmem:[%s7536 + $0x1d0] sm:$0xff]
  %v7596 = vld [vmem:[%s7536 + $0x1d8] sm:$0xff]
  %v7597 = vld [vmem:[%s7536 + $0x1e0] sm:$0xff]
  %v7598 = vld [vmem:[%s7536 + $0x1e8] sm:$0xff]
  %v7599 = vld [vmem:[%s7536 + $0x1f0] sm:$0xff]
  %v7600 = vld [vmem:[%s7536 + $0x1f8] sm:$0xff]
  %7601 = vmatpush.msra.mxu0 %v680
  %7602 = vmatpush.msra.mxu0 %v679
  %7603 = vmatpush.msra.mxu0 %v678
  %7604 = vmatpush.msra.mxu0 %v677
  %7605 = vmatpush.msra.mxu0 %v676
  %7606 = vmatpush.msra.mxu0 %v675
  %7607 = vmatpush.msra.mxu0 %v674
  %7608 = vmatpush.msra.mxu0 %v673
  %7609 = vmatpush.msra.mxu0 %v672
  %7610 = vmatpush.msra.mxu0 %v671
  %7611 = vmatpush.msra.mxu0 %v670
  %7612 = vmatpush.msra.mxu0 %v669
  %7613 = vmatpush.msra.mxu0 %v668
  %7614 = vmatpush.msra.mxu0 %v667
  %7615 = vmatpush.msra.mxu0 %v666
  %7616 = vmatpush.msra.mxu0 %v665
  %7617 = vmatmul.f32.gmra.mxu0 %v7537
  %v7618 = vpop.f32.mrf.mxu0
  %v7619 = vadd.f32 0.0, %v7618
  %7620 = vmatmul.f32.gmra.mxu0 %v7541
  %v7621 = vpop.f32.mrf.mxu0
  %v7622 = vadd.f32 0.0, %v7621
  %7623 = vmatmul.f32.gmra.mxu0 %v7545
  %v7624 = vpop.f32.mrf.mxu0
  %v7625 = vadd.f32 0.0, %v7624
  %7626 = vmatmul.f32.gmra.mxu0 %v7549
  %v7627 = vpop.f32.mrf.mxu0
  %v7628 = vadd.f32 0.0, %v7627
  %7629 = vmatmul.f32.gmra.mxu0 %v7553
  %v7630 = vpop.f32.mrf.mxu0
  %v7631 = vadd.f32 0.0, %v7630
  %7632 = vmatmul.f32.gmra.mxu0 %v7557
  %v7633 = vpop.f32.mrf.mxu0
  %v7634 = vadd.f32 0.0, %v7633
  %7635 = vmatmul.f32.gmra.mxu0 %v7561
  %v7636 = vpop.f32.mrf.mxu0
  %v7637 = vadd.f32 0.0, %v7636
  %7638 = vmatmul.f32.gmra.mxu0 %v7565
  %v7639 = vpop.f32.mrf.mxu0
  %v7640 = vadd.f32 0.0, %v7639
  %7641 = vmatmul.f32.gmra.mxu0 %v7569
  %v7642 = vpop.f32.mrf.mxu0
  %v7643 = vadd.f32 0.0, %v7642
  %7644 = vmatmul.f32.gmra.mxu0 %v7573
  %v7645 = vpop.f32.mrf.mxu0
  %v7646 = vadd.f32 0.0, %v7645
  %7647 = vmatmul.f32.gmra.mxu0 %v7577
  %v7648 = vpop.f32.mrf.mxu0
  %v7649 = vadd.f32 0.0, %v7648
  %7650 = vmatmul.f32.gmra.mxu0 %v7581
  %v7651 = vpop.f32.mrf.mxu0
  %v7652 = vadd.f32 0.0, %v7651
  %7653 = vmatmul.f32.gmra.mxu0 %v7585
  %v7654 = vpop.f32.mrf.mxu0
  %v7655 = vadd.f32 0.0, %v7654
  %7656 = vmatmul.f32.gmra.mxu0 %v7589
  %v7657 = vpop.f32.mrf.mxu0
  %v7658 = vadd.f32 0.0, %v7657
  %7659 = vmatmul.f32.gmra.mxu0 %v7593
  %v7660 = vpop.f32.mrf.mxu0
  %v7661 = vadd.f32 0.0, %v7660
  %7662 = vmatmul.f32.gmra.mxu0 %v7597
  %v7663 = vpop.f32.mrf.mxu0
  %v7664 = vadd.f32 0.0, %v7663
  %7665 = vdwg.mxu0
  %7666 = vmatpush.msra.mxu0 %v696
  %7667 = vmatpush.msra.mxu0 %v695
  %7668 = vmatpush.msra.mxu0 %v694
  %7669 = vmatpush.msra.mxu0 %v693
  %7670 = vmatpush.msra.mxu0 %v692
  %7671 = vmatpush.msra.mxu0 %v691
  %7672 = vmatpush.msra.mxu0 %v690
  %7673 = vmatpush.msra.mxu0 %v689
  %7674 = vmatpush.msra.mxu0 %v688
  %7675 = vmatpush.msra.mxu0 %v687
  %7676 = vmatpush.msra.mxu0 %v686
  %7677 = vmatpush.msra.mxu0 %v685
  %7678 = vmatpush.msra.mxu0 %v684
  %7679 = vmatpush.msra.mxu0 %v683
  %7680 = vmatpush.msra.mxu0 %v682
  %7681 = vmatpush.msra.mxu0 %v681
  %7682 = vmatmul.f32.gmra.mxu0 %v7538
  %v7683 = vpop.f32.mrf.mxu0
  %v7684 = vadd.f32 %v7619, %v7683
  %7685 = vmatmul.f32.gmra.mxu0 %v7542
  %v7686 = vpop.f32.mrf.mxu0
  %v7687 = vadd.f32 %v7622, %v7686
  %7688 = vmatmul.f32.gmra.mxu0 %v7546
  %v7689 = vpop.f32.mrf.mxu0
  %v7690 = vadd.f32 %v7625, %v7689
  %7691 = vmatmul.f32.gmra.mxu0 %v7550
  %v7692 = vpop.f32.mrf.mxu0
  %v7693 = vadd.f32 %v7628, %v7692
  %7694 = vmatmul.f32.gmra.mxu0 %v7554
  %v7695 = vpop.f32.mrf.mxu0
  %v7696 = vadd.f32 %v7631, %v7695
  %7697 = vmatmul.f32.gmra.mxu0 %v7558
  %v7698 = vpop.f32.mrf.mxu0
  %v7699 = vadd.f32 %v7634, %v7698
  %7700 = vmatmul.f32.gmra.mxu0 %v7562
  %v7701 = vpop.f32.mrf.mxu0
  %v7702 = vadd.f32 %v7637, %v7701
  %7703 = vmatmul.f32.gmra.mxu0 %v7566
  %v7704 = vpop.f32.mrf.mxu0
  %v7705 = vadd.f32 %v7640, %v7704
  %7706 = vmatmul.f32.gmra.mxu0 %v7570
  %v7707 = vpop.f32.mrf.mxu0
  %v7708 = vadd.f32 %v7643, %v7707
  %7709 = vmatmul.f32.gmra.mxu0 %v7574
  %v7710 = vpop.f32.mrf.mxu0
  %v7711 = vadd.f32 %v7646, %v7710
  %7712 = vmatmul.f32.gmra.mxu0 %v7578
  %v7713 = vpop.f32.mrf.mxu0
  %v7714 = vadd.f32 %v7649, %v7713
  %7715 = vmatmul.f32.gmra.mxu0 %v7582
  %v7716 = vpop.f32.mrf.mxu0
  %v7717 = vadd.f32 %v7652, %v7716
  %7718 = vmatmul.f32.gmra.mxu0 %v7586
  %v7719 = vpop.f32.mrf.mxu0
  %v7720 = vadd.f32 %v7655, %v7719
  %7721 = vmatmul.f32.gmra.mxu0 %v7590
  %v7722 = vpop.f32.mrf.mxu0
  %v7723 = vadd.f32 %v7658, %v7722
  %7724 = vmatmul.f32.gmra.mxu0 %v7594
  %v7725 = vpop.f32.mrf.mxu0
  %v7726 = vadd.f32 %v7661, %v7725
  %7727 = vmatmul.f32.gmra.mxu0 %v7598
  %v7728 = vpop.f32.mrf.mxu0
  %v7729 = vadd.f32 %v7664, %v7728
  %7730 = vdwg.mxu0
  %7731 = vmatpush.msra.mxu0 %v712
  %7732 = vmatpush.msra.mxu0 %v711
  %7733 = vmatpush.msra.mxu0 %v710
  %7734 = vmatpush.msra.mxu0 %v709
  %7735 = vmatpush.msra.mxu0 %v708
  %7736 = vmatpush.msra.mxu0 %v707
  %7737 = vmatpush.msra.mxu0 %v706
  %7738 = vmatpush.msra.mxu0 %v705
  %7739 = vmatpush.msra.mxu0 %v704
  %7740 = vmatpush.msra.mxu0 %v703
  %7741 = vmatpush.msra.mxu0 %v702
  %7742 = vmatpush.msra.mxu0 %v701
  %7743 = vmatpush.msra.mxu0 %v700
  %7744 = vmatpush.msra.mxu0 %v699
  %7745 = vmatpush.msra.mxu0 %v698
  %7746 = vmatpush.msra.mxu0 %v697
  %7747 = vmatmul.f32.gmra.mxu0 %v7539
  %v7748 = vpop.f32.mrf.mxu0
  %v7749 = vadd.f32 %v7684, %v7748
  %7750 = vmatmul.f32.gmra.mxu0 %v7543
  %v7751 = vpop.f32.mrf.mxu0
  %v7752 = vadd.f32 %v7687, %v7751
  %7753 = vmatmul.f32.gmra.mxu0 %v7547
  %v7754 = vpop.f32.mrf.mxu0
  %v7755 = vadd.f32 %v7690, %v7754
  %7756 = vmatmul.f32.gmra.mxu0 %v7551
  %v7757 = vpop.f32.mrf.mxu0
  %v7758 = vadd.f32 %v7693, %v7757
  %7759 = vmatmul.f32.gmra.mxu0 %v7555
  %v7760 = vpop.f32.mrf.mxu0
  %v7761 = vadd.f32 %v7696, %v7760
  %7762 = vmatmul.f32.gmra.mxu0 %v7559
  %v7763 = vpop.f32.mrf.mxu0
  %v7764 = vadd.f32 %v7699, %v7763
  %7765 = vmatmul.f32.gmra.mxu0 %v7563
  %v7766 = vpop.f32.mrf.mxu0
  %v7767 = vadd.f32 %v7702, %v7766
  %7768 = vmatmul.f32.gmra.mxu0 %v7567
  %v7769 = vpop.f32.mrf.mxu0
  %v7770 = vadd.f32 %v7705, %v7769
  %7771 = vmatmul.f32.gmra.mxu0 %v7571
  %v7772 = vpop.f32.mrf.mxu0
  %v7773 = vadd.f32 %v7708, %v7772
  %7774 = vmatmul.f32.gmra.mxu0 %v7575
  %v7775 = vpop.f32.mrf.mxu0
  %v7776 = vadd.f32 %v7711, %v7775
  %7777 = vmatmul.f32.gmra.mxu0 %v7579
  %v7778 = vpop.f32.mrf.mxu0
  %v7779 = vadd.f32 %v7714, %v7778
  %7780 = vmatmul.f32.gmra.mxu0 %v7583
  %v7781 = vpop.f32.mrf.mxu0
  %v7782 = vadd.f32 %v7717, %v7781
  %7783 = vmatmul.f32.gmra.mxu0 %v7587
  %v7784 = vpop.f32.mrf.mxu0
  %v7785 = vadd.f32 %v7720, %v7784
  %7786 = vmatmul.f32.gmra.mxu0 %v7591
  %v7787 = vpop.f32.mrf.mxu0
  %v7788 = vadd.f32 %v7723, %v7787
  %7789 = vmatmul.f32.gmra.mxu0 %v7595
  %v7790 = vpop.f32.mrf.mxu0
  %v7791 = vadd.f32 %v7726, %v7790
  %7792 = vmatmul.f32.gmra.mxu0 %v7599
  %v7793 = vpop.f32.mrf.mxu0
  %v7794 = vadd.f32 %v7729, %v7793
  %7795 = vdwg.mxu0
  %7796 = vmatpush.msra.mxu0 %v728
  %7797 = vmatpush.msra.mxu0 %v727
  %7798 = vmatpush.msra.mxu0 %v726
  %7799 = vmatpush.msra.mxu0 %v725
  %7800 = vmatpush.msra.mxu0 %v724
  %7801 = vmatpush.msra.mxu0 %v723
  %7802 = vmatpush.msra.mxu0 %v722
  %7803 = vmatpush.msra.mxu0 %v721
  %7804 = vmatpush.msra.mxu0 %v720
  %7805 = vmatpush.msra.mxu0 %v719
  %7806 = vmatpush.msra.mxu0 %v718
  %7807 = vmatpush.msra.mxu0 %v717
  %7808 = vmatpush.msra.mxu0 %v716
  %7809 = vmatpush.msra.mxu0 %v715
  %7810 = vmatpush.msra.mxu0 %v714
  %7811 = vmatpush.msra.mxu0 %v713
  %7812 = vmatmul.f32.gmra.mxu0 %v7540
  %v7813 = vpop.f32.mrf.mxu0
  %v7814 = vadd.f32 %v7749, %v7813
  %7815 = vmatmul.f32.gmra.mxu0 %v7544
  %v7816 = vpop.f32.mrf.mxu0
  %v7817 = vadd.f32 %v7752, %v7816
  %7818 = vmatmul.f32.gmra.mxu0 %v7548
  %v7819 = vpop.f32.mrf.mxu0
  %v7820 = vadd.f32 %v7755, %v7819
  %7821 = vmatmul.f32.gmra.mxu0 %v7552
  %v7822 = vpop.f32.mrf.mxu0
  %v7823 = vadd.f32 %v7758, %v7822
  %7824 = vmatmul.f32.gmra.mxu0 %v7556
  %v7825 = vpop.f32.mrf.mxu0
  %v7826 = vadd.f32 %v7761, %v7825
  %7827 = vmatmul.f32.gmra.mxu0 %v7560
  %v7828 = vpop.f32.mrf.mxu0
  %v7829 = vadd.f32 %v7764, %v7828
  %7830 = vmatmul.f32.gmra.mxu0 %v7564
  %v7831 = vpop.f32.mrf.mxu0
  %v7832 = vadd.f32 %v7767, %v7831
  %7833 = vmatmul.f32.gmra.mxu0 %v7568
  %v7834 = vpop.f32.mrf.mxu0
  %v7835 = vadd.f32 %v7770, %v7834
  %7836 = vmatmul.f32.gmra.mxu0 %v7572
  %v7837 = vpop.f32.mrf.mxu0
  %v7838 = vadd.f32 %v7773, %v7837
  %7839 = vmatmul.f32.gmra.mxu0 %v7576
  %v7840 = vpop.f32.mrf.mxu0
  %v7841 = vadd.f32 %v7776, %v7840
  %7842 = vmatmul.f32.gmra.mxu0 %v7580
  %v7843 = vpop.f32.mrf.mxu0
  %v7844 = vadd.f32 %v7779, %v7843
  %7845 = vmatmul.f32.gmra.mxu0 %v7584
  %v7846 = vpop.f32.mrf.mxu0
  %v7847 = vadd.f32 %v7782, %v7846
  %7848 = vmatmul.f32.gmra.mxu0 %v7588
  %v7849 = vpop.f32.mrf.mxu0
  %v7850 = vadd.f32 %v7785, %v7849
  %7851 = vmatmul.f32.gmra.mxu0 %v7592
  %v7852 = vpop.f32.mrf.mxu0
  %v7853 = vadd.f32 %v7788, %v7852
  %7854 = vmatmul.f32.gmra.mxu0 %v7596
  %v7855 = vpop.f32.mrf.mxu0
  %v7856 = vadd.f32 %v7791, %v7855
  %7857 = vmatmul.f32.gmra.mxu0 %v7600
  %v7858 = vpop.f32.mrf.mxu0
  %v7859 = vadd.f32 %v7794, %v7858
  %7860 = vdwg.mxu0
  %s7861 = scalar_lea.vmem %s4, 120
  %v7862 = vld [vmem:[%s7861] sm:$0xff]
  %v7864 = vsel %vm1381, %v7814, 0
  %v7867 = vsel %vm1381, %v7817, 0
  %v7870 = vsel %vm1381, %v7820, 0
  %v7873 = vsel %vm1381, %v7823, 0
  %v7876 = vsel %vm1381, %v7826, 0
  %v7879 = vsel %vm1381, %v7829, 0
  %v7882 = vsel %vm1381, %v7832, 0
  %v7885 = vsel %vm1381, %v7835, 0
  %v7888 = vsel %vm1381, %v7838, 0
  %v7891 = vsel %vm1381, %v7841, 0
  %v7894 = vsel %vm1381, %v7844, 0
  %v7897 = vsel %vm1381, %v7847, 0
  %v7900 = vsel %vm1381, %v7850, 0
  %v7903 = vsel %vm1381, %v7853, 0
  %v7906 = vsel %vm1381, %v7856, 0
  %v7909 = vsel %vm1381, %v7859, 0
  %7911 = vmatpush.msra.mxu0 0.0
  %7912 = vmatpush.msra.mxu0 0.0
  %7913 = vmatpush.msra.mxu0 0.0
  %7914 = vmatpush.msra.mxu0 0.0
  %7915 = vmatpush.msra.mxu0 0.0
  %7916 = vmatpush.msra.mxu0 0.0
  %7917 = vmatpush.msra.mxu0 0.0
  %7918 = vmatpush.msra.mxu0 0.0
  %7919 = vmatpush.msra.mxu0 0.0
  %7920 = vmatpush.msra.mxu0 0.0
  %7921 = vmatpush.msra.mxu0 0.0
  %7922 = vmatpush.msra.mxu0 0.0
  %7923 = vmatpush.msra.mxu0 0.0
  %7924 = vmatpush.msra.mxu0 0.0
  %7925 = vmatpush.msra.mxu0 0.0
  %7926 = vmatpush.msra.mxu0 %v7862
  %7927 = vmatmul.f32.gmra.mxu0 %v7864
  %v7928 = vpop.f32.mrf.mxu0
  %v7929 = vadd.f32 0.0, %v7928
  %7930 = vmatmul.f32.gmra.mxu0 %v7867
  %v7931 = vpop.f32.mrf.mxu0
  %v7932 = vadd.f32 0.0, %v7931
  %7933 = vmatmul.f32.gmra.mxu0 %v7870
  %v7934 = vpop.f32.mrf.mxu0
  %v7935 = vadd.f32 0.0, %v7934
  %7936 = vmatmul.f32.gmra.mxu0 %v7873
  %v7937 = vpop.f32.mrf.mxu0
  %v7938 = vadd.f32 0.0, %v7937
  %7939 = vmatmul.f32.gmra.mxu0 %v7876
  %v7940 = vpop.f32.mrf.mxu0
  %v7941 = vadd.f32 0.0, %v7940
  %7942 = vmatmul.f32.gmra.mxu0 %v7879
  %v7943 = vpop.f32.mrf.mxu0
  %v7944 = vadd.f32 0.0, %v7943
  %7945 = vmatmul.f32.gmra.mxu0 %v7882
  %v7946 = vpop.f32.mrf.mxu0
  %v7947 = vadd.f32 0.0, %v7946
  %7948 = vmatmul.f32.gmra.mxu0 %v7885
  %v7949 = vpop.f32.mrf.mxu0
  %v7950 = vadd.f32 0.0, %v7949
  %7951 = vmatmul.f32.gmra.mxu0 %v7888
  %v7952 = vpop.f32.mrf.mxu0
  %v7953 = vadd.f32 0.0, %v7952
  %7954 = vmatmul.f32.gmra.mxu0 %v7891
  %v7955 = vpop.f32.mrf.mxu0
  %v7956 = vadd.f32 0.0, %v7955
  %7957 = vmatmul.f32.gmra.mxu0 %v7894
  %v7958 = vpop.f32.mrf.mxu0
  %v7959 = vadd.f32 0.0, %v7958
  %7960 = vmatmul.f32.gmra.mxu0 %v7897
  %v7961 = vpop.f32.mrf.mxu0
  %v7962 = vadd.f32 0.0, %v7961
  %7963 = vmatmul.f32.gmra.mxu0 %v7900
  %v7964 = vpop.f32.mrf.mxu0
  %v7965 = vadd.f32 0.0, %v7964
  %7966 = vmatmul.f32.gmra.mxu0 %v7903
  %v7967 = vpop.f32.mrf.mxu0
  %v7968 = vadd.f32 0.0, %v7967
  %7969 = vmatmul.f32.gmra.mxu0 %v7906
  %v7970 = vpop.f32.mrf.mxu0
  %v7971 = vadd.f32 0.0, %v7970
  %7972 = vmatmul.f32.gmra.mxu0 %v7909
  %v7973 = vpop.f32.mrf.mxu0
  %v7974 = vadd.f32 0.0, %v7973
  %7975 = vdwg.mxu0
  %v7976 = vadd.f32 %v7520, %v7929
  %v7977 = vadd.f32 %v7521, %v7932
  %v7978 = vadd.f32 %v7522, %v7935
  %v7979 = vadd.f32 %v7523, %v7938
  %v7980 = vadd.f32 %v7524, %v7941
  %v7981 = vadd.f32 %v7525, %v7944
  %v7982 = vadd.f32 %v7526, %v7947
  %v7983 = vadd.f32 %v7527, %v7950
  %v7984 = vadd.f32 %v7528, %v7953
  %v7985 = vadd.f32 %v7529, %v7956
  %v7986 = vadd.f32 %v7530, %v7959
  %v7987 = vadd.f32 %v7531, %v7962
  %v7988 = vadd.f32 %v7532, %v7965
  %v7989 = vadd.f32 %v7533, %v7968
  %v7990 = vadd.f32 %v7534, %v7971
  %v7991 = vadd.f32 %v7535, %v7974
  %vm7992 = vcmask 130048
  %v7993 = vsel %vm7992, %v7976, 0.0
  %v7994 = vsel %vm7992, %v7977, 0.0
  %v7995 = vadd.f32 %v7993, %v7994
  %v7996 = vsel %vm7992, %v7978, 0.0
  %v7997 = vadd.f32 %v7995, %v7996
  %v7998 = vsel %vm7992, %v7979, 0.0
  %v7999 = vadd.f32 %v7997, %v7998
  %v8000 = vsel %vm7992, %v7980, 0.0
  %v8001 = vadd.f32 %v7999, %v8000
  %v8002 = vsel %vm7992, %v7981, 0.0
  %v8003 = vadd.f32 %v8001, %v8002
  %v8004 = vsel %vm7992, %v7982, 0.0
  %v8005 = vadd.f32 %v8003, %v8004
  %v8006 = vsel %vm7992, %v7983, 0.0
  %v8007 = vadd.f32 %v8005, %v8006
  %v8008 = vsel %vm7992, %v7984, 0.0
  %v8009 = vadd.f32 %v8007, %v8008
  %v8010 = vsel %vm7992, %v7985, 0.0
  %v8011 = vadd.f32 %v8009, %v8010
  %v8012 = vsel %vm7992, %v7986, 0.0
  %v8013 = vadd.f32 %v8011, %v8012
  %v8014 = vsel %vm7992, %v7987, 0.0
  %v8015 = vadd.f32 %v8013, %v8014
  %v8016 = vsel %vm7992, %v7988, 0.0
  %v8017 = vadd.f32 %v8015, %v8016
  %v8018 = vsel %vm7992, %v7989, 0.0
  %v8019 = vadd.f32 %v8017, %v8018
  %v8020 = vsel %vm7992, %v7990, 0.0
  %v8021 = vadd.f32 %v8019, %v8020
  %v8022 = vsel %vm7992, %v7991, 0.0
  %v8023 = vadd.f32 %v8021, %v8022
  %v8024 = vrot.slane %v8023, 4
  %v8025 = vadd.f32 %v8023, %v8024
  %v8026 = vrot.slane %v8025, 2
  %v8027 = vadd.f32 %v8025, %v8026
  %v8028 = vrot.slane %v8027, 1
  %v8029 = vadd.f32 %v8027, %v8028
  %v8030 = vrcp.pop 128.0
  %v8031 = vmul.f32 128.0, %v8030
  %v8032 = vsub.f32 1.0, %v8031
  %v8033 = vmul.f32 %v8030, %v8032
  %v8034 = vadd.f32 %v8030, %v8033
  %vm8035 = vweird.f32 %v8030
  %v8036 = vsel %vm8035, %v8030, %v8034
  %v8037 = vmul.f32 %v8029, %v8036
  %v8038 = vsub.f32 %v7976, %v8037
  %v8039 = vsub.f32 %v7977, %v8037
  %v8040 = vsub.f32 %v7978, %v8037
  %v8041 = vsub.f32 %v7979, %v8037
  %v8042 = vsub.f32 %v7980, %v8037
  %v8043 = vsub.f32 %v7981, %v8037
  %v8044 = vsub.f32 %v7982, %v8037
  %v8045 = vsub.f32 %v7983, %v8037
  %v8046 = vsub.f32 %v7984, %v8037
  %v8047 = vsub.f32 %v7985, %v8037
  %v8048 = vsub.f32 %v7986, %v8037
  %v8049 = vsub.f32 %v7987, %v8037
  %v8050 = vsub.f32 %v7988, %v8037
  %v8051 = vsub.f32 %v7989, %v8037
  %v8052 = vsub.f32 %v7990, %v8037
  %v8053 = vsub.f32 %v7991, %v8037
  %v8054 = vmul.f32 %v8038, %v8038
  %v8055 = vmul.f32 %v8039, %v8039
  %v8056 = vmul.f32 %v8040, %v8040
  %v8057 = vmul.f32 %v8041, %v8041
  %v8058 = vmul.f32 %v8042, %v8042
  %v8059 = vmul.f32 %v8043, %v8043
  %v8060 = vmul.f32 %v8044, %v8044
  %v8061 = vmul.f32 %v8045, %v8045
  %v8062 = vmul.f32 %v8046, %v8046
  %v8063 = vmul.f32 %v8047, %v8047
  %v8064 = vmul.f32 %v8048, %v8048
  %v8065 = vmul.f32 %v8049, %v8049
  %v8066 = vmul.f32 %v8050, %v8050
  %v8067 = vmul.f32 %v8051, %v8051
  %v8068 = vmul.f32 %v8052, %v8052
  %v8069 = vmul.f32 %v8053, %v8053
  %v8070 = vsel %vm7992, %v8054, 0.0
  %v8071 = vsel %vm7992, %v8055, 0.0
  %v8072 = vadd.f32 %v8070, %v8071
  %v8073 = vsel %vm7992, %v8056, 0.0
  %v8074 = vadd.f32 %v8072, %v8073
  %v8075 = vsel %vm7992, %v8057, 0.0
  %v8076 = vadd.f32 %v8074, %v8075
  %v8077 = vsel %vm7992, %v8058, 0.0
  %v8078 = vadd.f32 %v8076, %v8077
  %v8079 = vsel %vm7992, %v8059, 0.0
  %v8080 = vadd.f32 %v8078, %v8079
  %v8081 = vsel %vm7992, %v8060, 0.0
  %v8082 = vadd.f32 %v8080, %v8081
  %v8083 = vsel %vm7992, %v8061, 0.0
  %v8084 = vadd.f32 %v8082, %v8083
  %v8085 = vsel %vm7992, %v8062, 0.0
  %v8086 = vadd.f32 %v8084, %v8085
  %v8087 = vsel %vm7992, %v8063, 0.0
  %v8088 = vadd.f32 %v8086, %v8087
  %v8089 = vsel %vm7992, %v8064, 0.0
  %v8090 = vadd.f32 %v8088, %v8089
  %v8091 = vsel %vm7992, %v8065, 0.0
  %v8092 = vadd.f32 %v8090, %v8091
  %v8093 = vsel %vm7992, %v8066, 0.0
  %v8094 = vadd.f32 %v8092, %v8093
  %v8095 = vsel %vm7992, %v8067, 0.0
  %v8096 = vadd.f32 %v8094, %v8095
  %v8097 = vsel %vm7992, %v8068, 0.0
  %v8098 = vadd.f32 %v8096, %v8097
  %v8099 = vsel %vm7992, %v8069, 0.0
  %v8100 = vadd.f32 %v8098, %v8099
  %v8101 = vrot.slane %v8100, 4
  %v8102 = vadd.f32 %v8100, %v8101
  %v8103 = vrot.slane %v8102, 2
  %v8104 = vadd.f32 %v8102, %v8103
  %v8105 = vrot.slane %v8104, 1
  %v8106 = vadd.f32 %v8104, %v8105
  %v8107 = vmul.f32 %v8106, %v8036
  %v8108 = vld [vmem:[%s5] sm:$0x1]
  %v8109 = vadd.f32 %v8107, 1e-05
  %v8110 = vrsqrt.pop %v8109
  %v8111 = vmul.f32 %v8110, %v8109
  %v8112 = vmul.f32 %v8111, %v8110
  %v8113 = vmul.f32 0.5, %v8112
  %v8114 = vsub.f32 1.5, %v8113
  %v8115 = vmul.f32 %v8110, %v8114
  %vm8116 = vweird.f32 %v8109
  %vm8117 = vweird.f32 %v8110
  %vm8118 = vmor %vm8116, %vm8117
  %v8119 = vsel %vm8118, %v8110, %v8115
  %v8120 = vmul.f32 %v8108, %v8119
  %v8122 = vperm.slane %v8120, 0
  %v8124 = vmul.f32 %v7976, %v8122
  %v8125 = vmul.f32 %v7977, %v8122
  %v8126 = vmul.f32 %v7978, %v8122
  %v8127 = vmul.f32 %v7979, %v8122
  %v8128 = vmul.f32 %v7980, %v8122
  %v8129 = vmul.f32 %v7981, %v8122
  %v8130 = vmul.f32 %v7982, %v8122
  %v8131 = vmul.f32 %v7983, %v8122
  %v8132 = vmul.f32 %v7984, %v8122
  %v8133 = vmul.f32 %v7985, %v8122
  %v8134 = vmul.f32 %v7986, %v8122
  %v8135 = vmul.f32 %v7987, %v8122
  %v8136 = vmul.f32 %v7988, %v8122
  %v8137 = vmul.f32 %v7989, %v8122
  %v8138 = vmul.f32 %v7990, %v8122
  %v8139 = vmul.f32 %v7991, %v8122
  %v8140 = vld [vmem:[%s6] sm:$0x1]
  %v8141 = vmul.f32 %v8037, %v8120
  %v8142 = vsub.f32 %v8140, %v8141
  %v8144 = vperm.slane %v8142, 0
  %v8146 = vadd.f32 %v8124, %v8144
  %v8147 = vadd.f32 %v8125, %v8144
  %v8148 = vadd.f32 %v8126, %v8144
  %v8149 = vadd.f32 %v8127, %v8144
  %v8150 = vadd.f32 %v8128, %v8144
  %v8151 = vadd.f32 %v8129, %v8144
  %v8152 = vadd.f32 %v8130, %v8144
  %v8153 = vadd.f32 %v8131, %v8144
  %v8154 = vadd.f32 %v8132, %v8144
  %v8155 = vadd.f32 %v8133, %v8144
  %v8156 = vadd.f32 %v8134, %v8144
  %v8157 = vadd.f32 %v8135, %v8144
  %v8158 = vadd.f32 %v8136, %v8144
  %v8159 = vadd.f32 %v8137, %v8144
  %v8160 = vadd.f32 %v8138, %v8144
  %v8161 = vadd.f32 %v8139, %v8144
  %vm8162 = vcmp.ge.f32.partialorder %v8146, 0.0
  %vm8163 = vcmp.ge.f32.partialorder %v8147, 0.0
  %vm8164 = vcmp.ge.f32.partialorder %v8148, 0.0
  %vm8165 = vcmp.ge.f32.partialorder %v8149, 0.0
  %vm8166 = vcmp.ge.f32.partialorder %v8150, 0.0
  %vm8167 = vcmp.ge.f32.partialorder %v8151, 0.0
  %vm8168 = vcmp.ge.f32.partialorder %v8152, 0.0
  %vm8169 = vcmp.ge.f32.partialorder %v8153, 0.0
  %vm8170 = vcmp.ge.f32.partialorder %v8154, 0.0
  %vm8171 = vcmp.ge.f32.partialorder %v8155, 0.0
  %vm8172 = vcmp.ge.f32.partialorder %v8156, 0.0
  %vm8173 = vcmp.ge.f32.partialorder %v8157, 0.0
  %vm8174 = vcmp.ge.f32.partialorder %v8158, 0.0
  %vm8175 = vcmp.ge.f32.partialorder %v8159, 0.0
  %vm8176 = vcmp.ge.f32.partialorder %v8160, 0.0
  %vm8177 = vcmp.ge.f32.partialorder %v8161, 0.0
  %v8178 = vmul.f32 %v8146, 0.05
  %v8179 = vmul.f32 %v8147, 0.05
  %v8180 = vmul.f32 %v8148, 0.05
  %v8181 = vmul.f32 %v8149, 0.05
  %v8182 = vmul.f32 %v8150, 0.05
  %v8183 = vmul.f32 %v8151, 0.05
  %v8184 = vmul.f32 %v8152, 0.05
  %v8185 = vmul.f32 %v8153, 0.05
  %v8186 = vmul.f32 %v8154, 0.05
  %v8187 = vmul.f32 %v8155, 0.05
  %v8188 = vmul.f32 %v8156, 0.05
  %v8189 = vmul.f32 %v8157, 0.05
  %v8190 = vmul.f32 %v8158, 0.05
  %v8191 = vmul.f32 %v8159, 0.05
  %v8192 = vmul.f32 %v8160, 0.05
  %v8193 = vmul.f32 %v8161, 0.05
  %v8194 = vsel %vm8162, %v8146, %v8178
  %v8195 = vsel %vm8163, %v8147, %v8179
  %v8196 = vsel %vm8164, %v8148, %v8180
  %v8197 = vsel %vm8165, %v8149, %v8181
  %v8198 = vsel %vm8166, %v8150, %v8182
  %v8199 = vsel %vm8167, %v8151, %v8183
  %v8200 = vsel %vm8168, %v8152, %v8184
  %v8201 = vsel %vm8169, %v8153, %v8185
  %v8202 = vsel %vm8170, %v8154, %v8186
  %v8203 = vsel %vm8171, %v8155, %v8187
  %v8204 = vsel %vm8172, %v8156, %v8188
  %v8205 = vsel %vm8173, %v8157, %v8189
  %v8206 = vsel %vm8174, %v8158, %v8190
  %v8207 = vsel %vm8175, %v8159, %v8191
  %v8208 = vsel %vm8176, %v8160, %v8192
  %v8209 = vsel %vm8177, %v8161, %v8193
  %v8210 = vld [vmem:[%s7] sm:$0xff]
  %v8211 = vld [vmem:[%s7 + $0x8] sm:$0xff]
  %v8212 = vld [vmem:[%s7 + $0x10] sm:$0xff]
  %v8213 = vld [vmem:[%s7 + $0x18] sm:$0xff]
  %8214 = vmatpush.msra.mxu0 %v8209
  %8215 = vmatpush.msra.mxu0 %v8208
  %8216 = vmatpush.msra.mxu0 %v8207
  %8217 = vmatpush.msra.mxu0 %v8206
  %8218 = vmatpush.msra.mxu0 %v8205
  %8219 = vmatpush.msra.mxu0 %v8204
  %8220 = vmatpush.msra.mxu0 %v8203
  %8221 = vmatpush.msra.mxu0 %v8202
  %8222 = vmatpush.msra.mxu0 %v8201
  %8223 = vmatpush.msra.mxu0 %v8200
  %8224 = vmatpush.msra.mxu0 %v8199
  %8225 = vmatpush.msra.mxu0 %v8198
  %8226 = vmatpush.msra.mxu0 %v8197
  %8227 = vmatpush.msra.mxu0 %v8196
  %8228 = vmatpush.msra.mxu0 %v8195
  %8229 = vmatpush.msra.mxu0 %v8194
  %8230 = vmatmul.f32.gmra.mxu0 %v8210
  %v8231 = vpop.f32.mrf.mxu0
  %v8232 = vadd.f32 0.0, %v8231
  %8233 = vmatmul.f32.gmra.mxu0 %v8211
  %v8234 = vpop.f32.mrf.mxu0
  %v8235 = vadd.f32 0.0, %v8234
  %8236 = vmatmul.f32.gmra.mxu0 %v8212
  %v8237 = vpop.f32.mrf.mxu0
  %v8238 = vadd.f32 0.0, %v8237
  %8239 = vmatmul.f32.gmra.mxu0 %v8213
  %v8240 = vpop.f32.mrf.mxu0
  %v8241 = vadd.f32 0.0, %v8240
  %8242 = vdwg.mxu0
  %v8243 = vld [vmem:[%s8] sm:$0xff]
  %v8244 = vld [vmem:[%s8 + $0x8] sm:$0xff]
  %s8245 = scalar_lea.vmem %s7, 32
  %v8246 = vld [vmem:[%s8245] sm:$0xff]
  %v8247 = vld [vmem:[%s8245 + $0x8] sm:$0xff]
  %v8248 = vld [vmem:[%s8245 + $0x10] sm:$0xff]
  %v8249 = vld [vmem:[%s8245 + $0x18] sm:$0xff]
  %8250 = vmatpush.msra.mxu0 %v8209
  %8251 = vmatpush.msra.mxu0 %v8208
  %8252 = vmatpush.msra.mxu0 %v8207
  %8253 = vmatpush.msra.mxu0 %v8206
  %8254 = vmatpush.msra.mxu0 %v8205
  %8255 = vmatpush.msra.mxu0 %v8204
  %8256 = vmatpush.msra.mxu0 %v8203
  %8257 = vmatpush.msra.mxu0 %v8202
  %8258 = vmatpush.msra.mxu0 %v8201
  %8259 = vmatpush.msra.mxu0 %v8200
  %8260 = vmatpush.msra.mxu0 %v8199
  %8261 = vmatpush.msra.mxu0 %v8198
  %8262 = vmatpush.msra.mxu0 %v8197
  %8263 = vmatpush.msra.mxu0 %v8196
  %8264 = vmatpush.msra.mxu0 %v8195
  %8265 = vmatpush.msra.mxu0 %v8194
  %8266 = vmatmul.f32.gmra.mxu0 %v8246
  %v8267 = vpop.f32.mrf.mxu0
  %v8268 = vadd.f32 0.0, %v8267
  %8269 = vmatmul.f32.gmra.mxu0 %v8247
  %v8270 = vpop.f32.mrf.mxu0
  %v8271 = vadd.f32 0.0, %v8270
  %8272 = vmatmul.f32.gmra.mxu0 %v8248
  %v8273 = vpop.f32.mrf.mxu0
  %v8274 = vadd.f32 0.0, %v8273
  %8275 = vmatmul.f32.gmra.mxu0 %v8249
  %v8276 = vpop.f32.mrf.mxu0
  %v8277 = vadd.f32 0.0, %v8276
  %8278 = vdwg.mxu0
  %s8279 = scalar_lea.vmem %s8, 16
  %v8280 = vld [vmem:[%s8279] sm:$0xff]
  %v8281 = vld [vmem:[%s8279 + $0x8] sm:$0xff]
  %v8283 = vsel %vm7992, %v8268, 0
  %v8286 = vsel %vm7992, %v8271, 0
  %v8289 = vsel %vm7992, %v8274, 0
  %v8292 = vsel %vm7992, %v8277, 0
  %8294 = vmatpush.msra.mxu0 0.0
  %8295 = vmatpush.msra.mxu0 0.0
  %8296 = vmatpush.msra.mxu0 0.0
  %8297 = vmatpush.msra.mxu0 0.0
  %8298 = vmatpush.msra.mxu0 0.0
  %8299 = vmatpush.msra.mxu0 0.0
  %8300 = vmatpush.msra.mxu0 0.0
  %8301 = vmatpush.msra.mxu0 0.0
  %8302 = vmatpush.msra.mxu0 0.0
  %8303 = vmatpush.msra.mxu0 0.0
  %8304 = vmatpush.msra.mxu0 0.0
  %8305 = vmatpush.msra.mxu0 0.0
  %8306 = vmatpush.msra.mxu0 0.0
  %8307 = vmatpush.msra.mxu0 0.0
  %8308 = vmatpush.msra.mxu0 %v8281
  %8309 = vmatpush.msra.mxu0 %v8280
  %8310 = vmatmul.f32.gmra.mxu0 %v8283
  %v8311 = vpop.f32.mrf.mxu0
  %v8312 = vadd.f32 0.0, %v8311
  %8313 = vmatmul.f32.gmra.mxu0 %v8286
  %v8314 = vpop.f32.mrf.mxu0
  %v8315 = vadd.f32 0.0, %v8314
  %8316 = vmatmul.f32.gmra.mxu0 %v8289
  %v8317 = vpop.f32.mrf.mxu0
  %v8318 = vadd.f32 0.0, %v8317
  %8319 = vmatmul.f32.gmra.mxu0 %v8292
  %v8320 = vpop.f32.mrf.mxu0
  %v8321 = vadd.f32 0.0, %v8320
  %8322 = vdwg.mxu0
  %v8324 = vsel %vm7992, %v8232, 0
  %v8327 = vsel %vm7992, %v8235, 0
  %v8330 = vsel %vm7992, %v8238, 0
  %v8333 = vsel %vm7992, %v8241, 0
  %8335 = vmatpush.msra.mxu0 0.0
  %8336 = vmatpush.msra.mxu0 0.0
  %8337 = vmatpush.msra.mxu0 0.0
  %8338 = vmatpush.msra.mxu0 0.0
  %8339 = vmatpush.msra.mxu0 0.0
  %8340 = vmatpush.msra.mxu0 0.0
  %8341 = vmatpush.msra.mxu0 0.0
  %8342 = vmatpush.msra.mxu0 0.0
  %8343 = vmatpush.msra.mxu0 0.0
  %8344 = vmatpush.msra.mxu0 0.0
  %8345 = vmatpush.msra.mxu0 0.0
  %8346 = vmatpush.msra.mxu0 0.0
  %8347 = vmatpush.msra.mxu0 0.0
  %8348 = vmatpush.msra.mxu0 0.0
  %8349 = vmatpush.msra.mxu0 %v8244
  %8350 = vmatpush.msra.mxu0 %v8243
  %8351 = vmatmul.f32.gmra.mxu0 %v8324
  %v8352 = vpop.f32.mrf.mxu0
  %v8353 = vadd.f32 %v8312, %v8352
  %8354 = vmatmul.f32.gmra.mxu0 %v8327
  %v8355 = vpop.f32.mrf.mxu0
  %v8356 = vadd.f32 %v8315, %v8355
  %8357 = vmatmul.f32.gmra.mxu0 %v8330
  %v8358 = vpop.f32.mrf.mxu0
  %v8359 = vadd.f32 %v8318, %v8358
  %8360 = vmatmul.f32.gmra.mxu0 %v8333
  %v8361 = vpop.f32.mrf.mxu0
  %v8362 = vadd.f32 %v8321, %v8361
  %8363 = vdwg.mxu0
  %s8364 = scalar_lea.vmem %s7, 64
  %v8365 = vld [vmem:[%s8364] sm:$0xff]
  %v8366 = vld [vmem:[%s8364 + $0x8] sm:$0xff]
  %v8367 = vld [vmem:[%s8364 + $0x10] sm:$0xff]
  %v8368 = vld [vmem:[%s8364 + $0x18] sm:$0xff]
  %8369 = vmatpush.msra.mxu0 %v8209
  %8370 = vmatpush.msra.mxu0 %v8208
  %8371 = vmatpush.msra.mxu0 %v8207
  %8372 = vmatpush.msra.mxu0 %v8206
  %8373 = vmatpush.msra.mxu0 %v8205
  %8374 = vmatpush.msra.mxu0 %v8204
  %8375 = vmatpush.msra.mxu0 %v8203
  %8376 = vmatpush.msra.mxu0 %v8202
  %8377 = vmatpush.msra.mxu0 %v8201
  %8378 = vmatpush.msra.mxu0 %v8200
  %8379 = vmatpush.msra.mxu0 %v8199
  %8380 = vmatpush.msra.mxu0 %v8198
  %8381 = vmatpush.msra.mxu0 %v8197
  %8382 = vmatpush.msra.mxu0 %v8196
  %8383 = vmatpush.msra.mxu0 %v8195
  %8384 = vmatpush.msra.mxu0 %v8194
  %8385 = vmatmul.f32.gmra.mxu0 %v8365
  %v8386 = vpop.f32.mrf.mxu0
  %v8387 = vadd.f32 0.0, %v8386
  %8388 = vmatmul.f32.gmra.mxu0 %v8366
  %v8389 = vpop.f32.mrf.mxu0
  %v8390 = vadd.f32 0.0, %v8389
  %8391 = vmatmul.f32.gmra.mxu0 %v8367
  %v8392 = vpop.f32.mrf.mxu0
  %v8393 = vadd.f32 0.0, %v8392
  %8394 = vmatmul.f32.gmra.mxu0 %v8368
  %v8395 = vpop.f32.mrf.mxu0
  %v8396 = vadd.f32 0.0, %v8395
  %8397 = vdwg.mxu0
  %s8398 = scalar_lea.vmem %s8, 32
  %v8399 = vld [vmem:[%s8398] sm:$0xff]
  %v8400 = vld [vmem:[%s8398 + $0x8] sm:$0xff]
  %v8402 = vsel %vm7992, %v8387, 0
  %v8405 = vsel %vm7992, %v8390, 0
  %v8408 = vsel %vm7992, %v8393, 0
  %v8411 = vsel %vm7992, %v8396, 0
  %8413 = vmatpush.msra.mxu0 0.0
  %8414 = vmatpush.msra.mxu0 0.0
  %8415 = vmatpush.msra.mxu0 0.0
  %8416 = vmatpush.msra.mxu0 0.0
  %8417 = vmatpush.msra.mxu0 0.0
  %8418 = vmatpush.msra.mxu0 0.0
  %8419 = vmatpush.msra.mxu0 0.0
  %8420 = vmatpush.msra.mxu0 0.0
  %8421 = vmatpush.msra.mxu0 0.0
  %8422 = vmatpush.msra.mxu0 0.0
  %8423 = vmatpush.msra.mxu0 0.0
  %8424 = vmatpush.msra.mxu0 0.0
  %8425 = vmatpush.msra.mxu0 0.0
  %8426 = vmatpush.msra.mxu0 0.0
  %8427 = vmatpush.msra.mxu0 %v8400
  %8428 = vmatpush.msra.mxu0 %v8399
  %8429 = vmatmul.f32.gmra.mxu0 %v8402
  %v8430 = vpop.f32.mrf.mxu0
  %v8431 = vadd.f32 0.0, %v8430
  %8432 = vmatmul.f32.gmra.mxu0 %v8405
  %v8433 = vpop.f32.mrf.mxu0
  %v8434 = vadd.f32 0.0, %v8433
  %8435 = vmatmul.f32.gmra.mxu0 %v8408
  %v8436 = vpop.f32.mrf.mxu0
  %v8437 = vadd.f32 0.0, %v8436
  %8438 = vmatmul.f32.gmra.mxu0 %v8411
  %v8439 = vpop.f32.mrf.mxu0
  %v8440 = vadd.f32 0.0, %v8439
  %8441 = vdwg.mxu0
  %v8442 = vadd.f32 %v8353, %v8431
  %v8443 = vadd.f32 %v8356, %v8434
  %v8444 = vadd.f32 %v8359, %v8437
  %v8445 = vadd.f32 %v8362, %v8440
  %s8446 = scalar_lea.vmem %s7, 96
  %v8447 = vld [vmem:[%s8446] sm:$0xff]
  %v8448 = vld [vmem:[%s8446 + $0x8] sm:$0xff]
  %v8449 = vld [vmem:[%s8446 + $0x10] sm:$0xff]
  %v8450 = vld [vmem:[%s8446 + $0x18] sm:$0xff]
  %8451 = vmatpush.msra.mxu0 %v8209
  %8452 = vmatpush.msra.mxu0 %v8208
  %8453 = vmatpush.msra.mxu0 %v8207
  %8454 = vmatpush.msra.mxu0 %v8206
  %8455 = vmatpush.msra.mxu0 %v8205
  %8456 = vmatpush.msra.mxu0 %v8204
  %8457 = vmatpush.msra.mxu0 %v8203
  %8458 = vmatpush.msra.mxu0 %v8202
  %8459 = vmatpush.msra.mxu0 %v8201
  %8460 = vmatpush.msra.mxu0 %v8200
  %8461 = vmatpush.msra.mxu0 %v8199
  %8462 = vmatpush.msra.mxu0 %v8198
  %8463 = vmatpush.msra.mxu0 %v8197
  %8464 = vmatpush.msra.mxu0 %v8196
  %8465 = vmatpush.msra.mxu0 %v8195
  %8466 = vmatpush.msra.mxu0 %v8194
  %8467 = vmatmul.f32.gmra.mxu0 %v8447
  %v8468 = vpop.f32.mrf.mxu0
  %v8469 = vadd.f32 0.0, %v8468
  %8470 = vmatmul.f32.gmra.mxu0 %v8448
  %v8471 = vpop.f32.mrf.mxu0
  %v8472 = vadd.f32 0.0, %v8471
  %8473 = vmatmul.f32.gmra.mxu0 %v8449
  %v8474 = vpop.f32.mrf.mxu0
  %v8475 = vadd.f32 0.0, %v8474
  %8476 = vmatmul.f32.gmra.mxu0 %v8450
  %v8477 = vpop.f32.mrf.mxu0
  %v8478 = vadd.f32 0.0, %v8477
  %8479 = vdwg.mxu0
  %s8480 = scalar_lea.vmem %s8, 48
  %v8481 = vld [vmem:[%s8480] sm:$0xff]
  %v8482 = vld [vmem:[%s8480 + $0x8] sm:$0xff]
  %v8484 = vsel %vm7992, %v8469, 0
  %v8487 = vsel %vm7992, %v8472, 0
  %v8490 = vsel %vm7992, %v8475, 0
  %v8493 = vsel %vm7992, %v8478, 0
  %8495 = vmatpush.msra.mxu0 0.0
  %8496 = vmatpush.msra.mxu0 0.0
  %8497 = vmatpush.msra.mxu0 0.0
  %8498 = vmatpush.msra.mxu0 0.0
  %8499 = vmatpush.msra.mxu0 0.0
  %8500 = vmatpush.msra.mxu0 0.0
  %8501 = vmatpush.msra.mxu0 0.0
  %8502 = vmatpush.msra.mxu0 0.0
  %8503 = vmatpush.msra.mxu0 0.0
  %8504 = vmatpush.msra.mxu0 0.0
  %8505 = vmatpush.msra.mxu0 0.0
  %8506 = vmatpush.msra.mxu0 0.0
  %8507 = vmatpush.msra.mxu0 0.0
  %8508 = vmatpush.msra.mxu0 0.0
  %8509 = vmatpush.msra.mxu0 %v8482
  %8510 = vmatpush.msra.mxu0 %v8481
  %8511 = vmatmul.f32.gmra.mxu0 %v8484
  %v8512 = vpop.f32.mrf.mxu0
  %v8513 = vadd.f32 0.0, %v8512
  %8514 = vmatmul.f32.gmra.mxu0 %v8487
  %v8515 = vpop.f32.mrf.mxu0
  %v8516 = vadd.f32 0.0, %v8515
  %8517 = vmatmul.f32.gmra.mxu0 %v8490
  %v8518 = vpop.f32.mrf.mxu0
  %v8519 = vadd.f32 0.0, %v8518
  %8520 = vmatmul.f32.gmra.mxu0 %v8493
  %v8521 = vpop.f32.mrf.mxu0
  %v8522 = vadd.f32 0.0, %v8521
  %8523 = vdwg.mxu0
  %v8524 = vadd.f32 %v8442, %v8513
  %v8525 = vadd.f32 %v8443, %v8516
  %v8526 = vadd.f32 %v8444, %v8519
  %v8527 = vadd.f32 %v8445, %v8522
  %s8528 = scalar_lea.vmem %s7, 128
  %v8529 = vld [vmem:[%s8528] sm:$0xff]
  %v8530 = vld [vmem:[%s8528 + $0x8] sm:$0xff]
  %v8531 = vld [vmem:[%s8528 + $0x10] sm:$0xff]
  %v8532 = vld [vmem:[%s8528 + $0x18] sm:$0xff]
  %8533 = vmatpush.msra.mxu0 %v8209
  %8534 = vmatpush.msra.mxu0 %v8208
  %8535 = vmatpush.msra.mxu0 %v8207
  %8536 = vmatpush.msra.mxu0 %v8206
  %8537 = vmatpush.msra.mxu0 %v8205
  %8538 = vmatpush.msra.mxu0 %v8204
  %8539 = vmatpush.msra.mxu0 %v8203
  %8540 = vmatpush.msra.mxu0 %v8202
  %8541 = vmatpush.msra.mxu0 %v8201
  %8542 = vmatpush.msra.mxu0 %v8200
  %8543 = vmatpush.msra.mxu0 %v8199
  %8544 = vmatpush.msra.mxu0 %v8198
  %8545 = vmatpush.msra.mxu0 %v8197
  %8546 = vmatpush.msra.mxu0 %v8196
  %8547 = vmatpush.msra.mxu0 %v8195
  %8548 = vmatpush.msra.mxu0 %v8194
  %8549 = vmatmul.f32.gmra.mxu0 %v8529
  %v8550 = vpop.f32.mrf.mxu0
  %v8551 = vadd.f32 0.0, %v8550
  %8552 = vmatmul.f32.gmra.mxu0 %v8530
  %v8553 = vpop.f32.mrf.mxu0
  %v8554 = vadd.f32 0.0, %v8553
  %8555 = vmatmul.f32.gmra.mxu0 %v8531
  %v8556 = vpop.f32.mrf.mxu0
  %v8557 = vadd.f32 0.0, %v8556
  %8558 = vmatmul.f32.gmra.mxu0 %v8532
  %v8559 = vpop.f32.mrf.mxu0
  %v8560 = vadd.f32 0.0, %v8559
  %8561 = vdwg.mxu0
  %s8562 = scalar_lea.vmem %s8, 64
  %v8563 = vld [vmem:[%s8562] sm:$0xff]
  %v8564 = vld [vmem:[%s8562 + $0x8] sm:$0xff]
  %v8566 = vsel %vm7992, %v8551, 0
  %v8569 = vsel %vm7992, %v8554, 0
  %v8572 = vsel %vm7992, %v8557, 0
  %v8575 = vsel %vm7992, %v8560, 0
  %8577 = vmatpush.msra.mxu0 0.0
  %8578 = vmatpush.msra.mxu0 0.0
  %8579 = vmatpush.msra.mxu0 0.0
  %8580 = vmatpush.msra.mxu0 0.0
  %8581 = vmatpush.msra.mxu0 0.0
  %8582 = vmatpush.msra.mxu0 0.0
  %8583 = vmatpush.msra.mxu0 0.0
  %8584 = vmatpush.msra.mxu0 0.0
  %8585 = vmatpush.msra.mxu0 0.0
  %8586 = vmatpush.msra.mxu0 0.0
  %8587 = vmatpush.msra.mxu0 0.0
  %8588 = vmatpush.msra.mxu0 0.0
  %8589 = vmatpush.msra.mxu0 0.0
  %8590 = vmatpush.msra.mxu0 0.0
  %8591 = vmatpush.msra.mxu0 %v8564
  %8592 = vmatpush.msra.mxu0 %v8563
  %8593 = vmatmul.f32.gmra.mxu0 %v8566
  %v8594 = vpop.f32.mrf.mxu0
  %v8595 = vadd.f32 0.0, %v8594
  %8596 = vmatmul.f32.gmra.mxu0 %v8569
  %v8597 = vpop.f32.mrf.mxu0
  %v8598 = vadd.f32 0.0, %v8597
  %8599 = vmatmul.f32.gmra.mxu0 %v8572
  %v8600 = vpop.f32.mrf.mxu0
  %v8601 = vadd.f32 0.0, %v8600
  %8602 = vmatmul.f32.gmra.mxu0 %v8575
  %v8603 = vpop.f32.mrf.mxu0
  %v8604 = vadd.f32 0.0, %v8603
  %8605 = vdwg.mxu0
  %v8606 = vadd.f32 %v8524, %v8595
  %v8607 = vadd.f32 %v8525, %v8598
  %v8608 = vadd.f32 %v8526, %v8601
  %v8609 = vadd.f32 %v8527, %v8604
  %s8610 = scalar_lea.vmem %s7, 160
  %v8611 = vld [vmem:[%s8610] sm:$0xff]
  %v8612 = vld [vmem:[%s8610 + $0x8] sm:$0xff]
  %v8613 = vld [vmem:[%s8610 + $0x10] sm:$0xff]
  %v8614 = vld [vmem:[%s8610 + $0x18] sm:$0xff]
  %8615 = vmatpush.msra.mxu0 %v8209
  %8616 = vmatpush.msra.mxu0 %v8208
  %8617 = vmatpush.msra.mxu0 %v8207
  %8618 = vmatpush.msra.mxu0 %v8206
  %8619 = vmatpush.msra.mxu0 %v8205
  %8620 = vmatpush.msra.mxu0 %v8204
  %8621 = vmatpush.msra.mxu0 %v8203
  %8622 = vmatpush.msra.mxu0 %v8202
  %8623 = vmatpush.msra.mxu0 %v8201
  %8624 = vmatpush.msra.mxu0 %v8200
  %8625 = vmatpush.msra.mxu0 %v8199
  %8626 = vmatpush.msra.mxu0 %v8198
  %8627 = vmatpush.msra.mxu0 %v8197
  %8628 = vmatpush.msra.mxu0 %v8196
  %8629 = vmatpush.msra.mxu0 %v8195
  %8630 = vmatpush.msra.mxu0 %v8194
  %8631 = vmatmul.f32.gmra.mxu0 %v8611
  %v8632 = vpop.f32.mrf.mxu0
  %v8633 = vadd.f32 0.0, %v8632
  %8634 = vmatmul.f32.gmra.mxu0 %v8612
  %v8635 = vpop.f32.mrf.mxu0
  %v8636 = vadd.f32 0.0, %v8635
  %8637 = vmatmul.f32.gmra.mxu0 %v8613
  %v8638 = vpop.f32.mrf.mxu0
  %v8639 = vadd.f32 0.0, %v8638
  %8640 = vmatmul.f32.gmra.mxu0 %v8614
  %v8641 = vpop.f32.mrf.mxu0
  %v8642 = vadd.f32 0.0, %v8641
  %8643 = vdwg.mxu0
  %s8644 = scalar_lea.vmem %s8, 80
  %v8645 = vld [vmem:[%s8644] sm:$0xff]
  %v8646 = vld [vmem:[%s8644 + $0x8] sm:$0xff]
  %v8648 = vsel %vm7992, %v8633, 0
  %v8651 = vsel %vm7992, %v8636, 0
  %v8654 = vsel %vm7992, %v8639, 0
  %v8657 = vsel %vm7992, %v8642, 0
  %8659 = vmatpush.msra.mxu0 0.0
  %8660 = vmatpush.msra.mxu0 0.0
  %8661 = vmatpush.msra.mxu0 0.0
  %8662 = vmatpush.msra.mxu0 0.0
  %8663 = vmatpush.msra.mxu0 0.0
  %8664 = vmatpush.msra.mxu0 0.0
  %8665 = vmatpush.msra.mxu0 0.0
  %8666 = vmatpush.msra.mxu0 0.0
  %8667 = vmatpush.msra.mxu0 0.0
  %8668 = vmatpush.msra.mxu0 0.0
  %8669 = vmatpush.msra.mxu0 0.0
  %8670 = vmatpush.msra.mxu0 0.0
  %8671 = vmatpush.msra.mxu0 0.0
  %8672 = vmatpush.msra.mxu0 0.0
  %8673 = vmatpush.msra.mxu0 %v8646
  %8674 = vmatpush.msra.mxu0 %v8645
  %8675 = vmatmul.f32.gmra.mxu0 %v8648
  %v8676 = vpop.f32.mrf.mxu0
  %v8677 = vadd.f32 0.0, %v8676
  %8678 = vmatmul.f32.gmra.mxu0 %v8651
  %v8679 = vpop.f32.mrf.mxu0
  %v8680 = vadd.f32 0.0, %v8679
  %8681 = vmatmul.f32.gmra.mxu0 %v8654
  %v8682 = vpop.f32.mrf.mxu0
  %v8683 = vadd.f32 0.0, %v8682
  %8684 = vmatmul.f32.gmra.mxu0 %v8657
  %v8685 = vpop.f32.mrf.mxu0
  %v8686 = vadd.f32 0.0, %v8685
  %8687 = vdwg.mxu0
  %v8688 = vadd.f32 %v8606, %v8677
  %v8689 = vadd.f32 %v8607, %v8680
  %v8690 = vadd.f32 %v8608, %v8683
  %v8691 = vadd.f32 %v8609, %v8686
  %s8692 = scalar_lea.vmem %s7, 192
  %v8693 = vld [vmem:[%s8692] sm:$0xff]
  %v8694 = vld [vmem:[%s8692 + $0x8] sm:$0xff]
  %v8695 = vld [vmem:[%s8692 + $0x10] sm:$0xff]
  %v8696 = vld [vmem:[%s8692 + $0x18] sm:$0xff]
  %8697 = vmatpush.msra.mxu0 %v8209
  %8698 = vmatpush.msra.mxu0 %v8208
  %8699 = vmatpush.msra.mxu0 %v8207
  %8700 = vmatpush.msra.mxu0 %v8206
  %8701 = vmatpush.msra.mxu0 %v8205
  %8702 = vmatpush.msra.mxu0 %v8204
  %8703 = vmatpush.msra.mxu0 %v8203
  %8704 = vmatpush.msra.mxu0 %v8202
  %8705 = vmatpush.msra.mxu0 %v8201
  %8706 = vmatpush.msra.mxu0 %v8200
  %8707 = vmatpush.msra.mxu0 %v8199
  %8708 = vmatpush.msra.mxu0 %v8198
  %8709 = vmatpush.msra.mxu0 %v8197
  %8710 = vmatpush.msra.mxu0 %v8196
  %8711 = vmatpush.msra.mxu0 %v8195
  %8712 = vmatpush.msra.mxu0 %v8194
  %8713 = vmatmul.f32.gmra.mxu0 %v8693
  %v8714 = vpop.f32.mrf.mxu0
  %v8715 = vadd.f32 0.0, %v8714
  %8716 = vmatmul.f32.gmra.mxu0 %v8694
  %v8717 = vpop.f32.mrf.mxu0
  %v8718 = vadd.f32 0.0, %v8717
  %8719 = vmatmul.f32.gmra.mxu0 %v8695
  %v8720 = vpop.f32.mrf.mxu0
  %v8721 = vadd.f32 0.0, %v8720
  %8722 = vmatmul.f32.gmra.mxu0 %v8696
  %v8723 = vpop.f32.mrf.mxu0
  %v8724 = vadd.f32 0.0, %v8723
  %8725 = vdwg.mxu0
  %s8726 = scalar_lea.vmem %s8, 96
  %v8727 = vld [vmem:[%s8726] sm:$0xff]
  %v8728 = vld [vmem:[%s8726 + $0x8] sm:$0xff]
  %v8730 = vsel %vm7992, %v8715, 0
  %v8733 = vsel %vm7992, %v8718, 0
  %v8736 = vsel %vm7992, %v8721, 0
  %v8739 = vsel %vm7992, %v8724, 0
  %8741 = vmatpush.msra.mxu0 0.0
  %8742 = vmatpush.msra.mxu0 0.0
  %8743 = vmatpush.msra.mxu0 0.0
  %8744 = vmatpush.msra.mxu0 0.0
  %8745 = vmatpush.msra.mxu0 0.0
  %8746 = vmatpush.msra.mxu0 0.0
  %8747 = vmatpush.msra.mxu0 0.0
  %8748 = vmatpush.msra.mxu0 0.0
  %8749 = vmatpush.msra.mxu0 0.0
  %8750 = vmatpush.msra.mxu0 0.0
  %8751 = vmatpush.msra.mxu0 0.0
  %8752 = vmatpush.msra.mxu0 0.0
  %8753 = vmatpush.msra.mxu0 0.0
  %8754 = vmatpush.msra.mxu0 0.0
  %8755 = vmatpush.msra.mxu0 %v8728
  %8756 = vmatpush.msra.mxu0 %v8727
  %8757 = vmatmul.f32.gmra.mxu0 %v8730
  %v8758 = vpop.f32.mrf.mxu0
  %v8759 = vadd.f32 0.0, %v8758
  %8760 = vmatmul.f32.gmra.mxu0 %v8733
  %v8761 = vpop.f32.mrf.mxu0
  %v8762 = vadd.f32 0.0, %v8761
  %8763 = vmatmul.f32.gmra.mxu0 %v8736
  %v8764 = vpop.f32.mrf.mxu0
  %v8765 = vadd.f32 0.0, %v8764
  %8766 = vmatmul.f32.gmra.mxu0 %v8739
  %v8767 = vpop.f32.mrf.mxu0
  %v8768 = vadd.f32 0.0, %v8767
  %8769 = vdwg.mxu0
  %v8770 = vadd.f32 %v8688, %v8759
  %v8771 = vadd.f32 %v8689, %v8762
  %v8772 = vadd.f32 %v8690, %v8765
  %v8773 = vadd.f32 %v8691, %v8768
  %s8774 = scalar_lea.vmem %s7, 224
  %v8775 = vld [vmem:[%s8774] sm:$0xff]
  %v8776 = vld [vmem:[%s8774 + $0x8] sm:$0xff]
  %v8777 = vld [vmem:[%s8774 + $0x10] sm:$0xff]
  %v8778 = vld [vmem:[%s8774 + $0x18] sm:$0xff]
  %8779 = vmatpush.msra.mxu0 %v8209
  %8780 = vmatpush.msra.mxu0 %v8208
  %8781 = vmatpush.msra.mxu0 %v8207
  %8782 = vmatpush.msra.mxu0 %v8206
  %8783 = vmatpush.msra.mxu0 %v8205
  %8784 = vmatpush.msra.mxu0 %v8204
  %8785 = vmatpush.msra.mxu0 %v8203
  %8786 = vmatpush.msra.mxu0 %v8202
  %8787 = vmatpush.msra.mxu0 %v8201
  %8788 = vmatpush.msra.mxu0 %v8200
  %8789 = vmatpush.msra.mxu0 %v8199
  %8790 = vmatpush.msra.mxu0 %v8198
  %8791 = vmatpush.msra.mxu0 %v8197
  %8792 = vmatpush.msra.mxu0 %v8196
  %8793 = vmatpush.msra.mxu0 %v8195
  %8794 = vmatpush.msra.mxu0 %v8194
  %8795 = vmatmul.f32.gmra.mxu0 %v8775
  %v8796 = vpop.f32.mrf.mxu0
  %v8797 = vadd.f32 0.0, %v8796
  %8798 = vmatmul.f32.gmra.mxu0 %v8776
  %v8799 = vpop.f32.mrf.mxu0
  %v8800 = vadd.f32 0.0, %v8799
  %8801 = vmatmul.f32.gmra.mxu0 %v8777
  %v8802 = vpop.f32.mrf.mxu0
  %v8803 = vadd.f32 0.0, %v8802
  %8804 = vmatmul.f32.gmra.mxu0 %v8778
  %v8805 = vpop.f32.mrf.mxu0
  %v8806 = vadd.f32 0.0, %v8805
  %8807 = vdwg.mxu0
  %s8808 = scalar_lea.vmem %s8, 112
  %v8809 = vld [vmem:[%s8808] sm:$0xff]
  %v8810 = vld [vmem:[%s8808 + $0x8] sm:$0xff]
  %v8812 = vsel %vm7992, %v8797, 0
  %v8815 = vsel %vm7992, %v8800, 0
  %v8818 = vsel %vm7992, %v8803, 0
  %v8821 = vsel %vm7992, %v8806, 0
  %8823 = vmatpush.msra.mxu0 0.0
  %8824 = vmatpush.msra.mxu0 0.0
  %8825 = vmatpush.msra.mxu0 0.0
  %8826 = vmatpush.msra.mxu0 0.0
  %8827 = vmatpush.msra.mxu0 0.0
  %8828 = vmatpush.msra.mxu0 0.0
  %8829 = vmatpush.msra.mxu0 0.0
  %8830 = vmatpush.msra.mxu0 0.0
  %8831 = vmatpush.msra.mxu0 0.0
  %8832 = vmatpush.msra.mxu0 0.0
  %8833 = vmatpush.msra.mxu0 0.0
  %8834 = vmatpush.msra.mxu0 0.0
  %8835 = vmatpush.msra.mxu0 0.0
  %8836 = vmatpush.msra.mxu0 0.0
  %8837 = vmatpush.msra.mxu0 %v8810
  %8838 = vmatpush.msra.mxu0 %v8809
  %8839 = vmatmul.f32.gmra.mxu0 %v8812
  %v8840 = vpop.f32.mrf.mxu0
  %v8841 = vadd.f32 0.0, %v8840
  %8842 = vmatmul.f32.gmra.mxu0 %v8815
  %v8843 = vpop.f32.mrf.mxu0
  %v8844 = vadd.f32 0.0, %v8843
  %8845 = vmatmul.f32.gmra.mxu0 %v8818
  %v8846 = vpop.f32.mrf.mxu0
  %v8847 = vadd.f32 0.0, %v8846
  %8848 = vmatmul.f32.gmra.mxu0 %v8821
  %v8849 = vpop.f32.mrf.mxu0
  %v8850 = vadd.f32 0.0, %v8849
  %8851 = vdwg.mxu0
  %v8852 = vadd.f32 %v8770, %v8841
  %v8853 = vadd.f32 %v8771, %v8844
  %v8854 = vadd.f32 %v8772, %v8847
  %v8855 = vadd.f32 %v8773, %v8850
  %s8856 = scalar_lea.vmem %s7, 256
  %v8857 = vld [vmem:[%s8856] sm:$0xff]
  %v8858 = vld [vmem:[%s8856 + $0x8] sm:$0xff]
  %v8859 = vld [vmem:[%s8856 + $0x10] sm:$0xff]
  %v8860 = vld [vmem:[%s8856 + $0x18] sm:$0xff]
  %8861 = vmatpush.msra.mxu0 %v8209
  %8862 = vmatpush.msra.mxu0 %v8208
  %8863 = vmatpush.msra.mxu0 %v8207
  %8864 = vmatpush.msra.mxu0 %v8206
  %8865 = vmatpush.msra.mxu0 %v8205
  %8866 = vmatpush.msra.mxu0 %v8204
  %8867 = vmatpush.msra.mxu0 %v8203
  %8868 = vmatpush.msra.mxu0 %v8202
  %8869 = vmatpush.msra.mxu0 %v8201
  %8870 = vmatpush.msra.mxu0 %v8200
  %8871 = vmatpush.msra.mxu0 %v8199
  %8872 = vmatpush.msra.mxu0 %v8198
  %8873 = vmatpush.msra.mxu0 %v8197
  %8874 = vmatpush.msra.mxu0 %v8196
  %8875 = vmatpush.msra.mxu0 %v8195
  %8876 = vmatpush.msra.mxu0 %v8194
  %8877 = vmatmul.f32.gmra.mxu0 %v8857
  %v8878 = vpop.f32.mrf.mxu0
  %v8879 = vadd.f32 0.0, %v8878
  %8880 = vmatmul.f32.gmra.mxu0 %v8858
  %v8881 = vpop.f32.mrf.mxu0
  %v8882 = vadd.f32 0.0, %v8881
  %8883 = vmatmul.f32.gmra.mxu0 %v8859
  %v8884 = vpop.f32.mrf.mxu0
  %v8885 = vadd.f32 0.0, %v8884
  %8886 = vmatmul.f32.gmra.mxu0 %v8860
  %v8887 = vpop.f32.mrf.mxu0
  %v8888 = vadd.f32 0.0, %v8887
  %8889 = vdwg.mxu0
  %s8890 = scalar_lea.vmem %s8, 128
  %v8891 = vld [vmem:[%s8890] sm:$0xff]
  %v8892 = vld [vmem:[%s8890 + $0x8] sm:$0xff]
  %v8894 = vsel %vm7992, %v8879, 0
  %v8897 = vsel %vm7992, %v8882, 0
  %v8900 = vsel %vm7992, %v8885, 0
  %v8903 = vsel %vm7992, %v8888, 0
  %8905 = vmatpush.msra.mxu0 0.0
  %8906 = vmatpush.msra.mxu0 0.0
  %8907 = vmatpush.msra.mxu0 0.0
  %8908 = vmatpush.msra.mxu0 0.0
  %8909 = vmatpush.msra.mxu0 0.0
  %8910 = vmatpush.msra.mxu0 0.0
  %8911 = vmatpush.msra.mxu0 0.0
  %8912 = vmatpush.msra.mxu0 0.0
  %8913 = vmatpush.msra.mxu0 0.0
  %8914 = vmatpush.msra.mxu0 0.0
  %8915 = vmatpush.msra.mxu0 0.0
  %8916 = vmatpush.msra.mxu0 0.0
  %8917 = vmatpush.msra.mxu0 0.0
  %8918 = vmatpush.msra.mxu0 0.0
  %8919 = vmatpush.msra.mxu0 %v8892
  %8920 = vmatpush.msra.mxu0 %v8891
  %8921 = vmatmul.f32.gmra.mxu0 %v8894
  %v8922 = vpop.f32.mrf.mxu0
  %v8923 = vadd.f32 0.0, %v8922
  %8924 = vmatmul.f32.gmra.mxu0 %v8897
  %v8925 = vpop.f32.mrf.mxu0
  %v8926 = vadd.f32 0.0, %v8925
  %8927 = vmatmul.f32.gmra.mxu0 %v8900
  %v8928 = vpop.f32.mrf.mxu0
  %v8929 = vadd.f32 0.0, %v8928
  %8930 = vmatmul.f32.gmra.mxu0 %v8903
  %v8931 = vpop.f32.mrf.mxu0
  %v8932 = vadd.f32 0.0, %v8931
  %8933 = vdwg.mxu0
  %v8934 = vadd.f32 %v8852, %v8923
  %v8935 = vadd.f32 %v8853, %v8926
  %v8936 = vadd.f32 %v8854, %v8929
  %v8937 = vadd.f32 %v8855, %v8932
  %s8938 = scalar_lea.vmem %s7, 288
  %v8939 = vld [vmem:[%s8938] sm:$0xff]
  %v8940 = vld [vmem:[%s8938 + $0x8] sm:$0xff]
  %v8941 = vld [vmem:[%s8938 + $0x10] sm:$0xff]
  %v8942 = vld [vmem:[%s8938 + $0x18] sm:$0xff]
  %8943 = vmatpush.msra.mxu0 %v8209
  %8944 = vmatpush.msra.mxu0 %v8208
  %8945 = vmatpush.msra.mxu0 %v8207
  %8946 = vmatpush.msra.mxu0 %v8206
  %8947 = vmatpush.msra.mxu0 %v8205
  %8948 = vmatpush.msra.mxu0 %v8204
  %8949 = vmatpush.msra.mxu0 %v8203
  %8950 = vmatpush.msra.mxu0 %v8202
  %8951 = vmatpush.msra.mxu0 %v8201
  %8952 = vmatpush.msra.mxu0 %v8200
  %8953 = vmatpush.msra.mxu0 %v8199
  %8954 = vmatpush.msra.mxu0 %v8198
  %8955 = vmatpush.msra.mxu0 %v8197
  %8956 = vmatpush.msra.mxu0 %v8196
  %8957 = vmatpush.msra.mxu0 %v8195
  %8958 = vmatpush.msra.mxu0 %v8194
  %8959 = vmatmul.f32.gmra.mxu0 %v8939
  %v8960 = vpop.f32.mrf.mxu0
  %v8961 = vadd.f32 0.0, %v8960
  %8962 = vmatmul.f32.gmra.mxu0 %v8940
  %v8963 = vpop.f32.mrf.mxu0
  %v8964 = vadd.f32 0.0, %v8963
  %8965 = vmatmul.f32.gmra.mxu0 %v8941
  %v8966 = vpop.f32.mrf.mxu0
  %v8967 = vadd.f32 0.0, %v8966
  %8968 = vmatmul.f32.gmra.mxu0 %v8942
  %v8969 = vpop.f32.mrf.mxu0
  %v8970 = vadd.f32 0.0, %v8969
  %8971 = vdwg.mxu0
  %s8972 = scalar_lea.vmem %s8, 144
  %v8973 = vld [vmem:[%s8972] sm:$0xff]
  %v8974 = vld [vmem:[%s8972 + $0x8] sm:$0xff]
  %v8976 = vsel %vm7992, %v8961, 0
  %v8979 = vsel %vm7992, %v8964, 0
  %v8982 = vsel %vm7992, %v8967, 0
  %v8985 = vsel %vm7992, %v8970, 0
  %8987 = vmatpush.msra.mxu0 0.0
  %8988 = vmatpush.msra.mxu0 0.0
  %8989 = vmatpush.msra.mxu0 0.0
  %8990 = vmatpush.msra.mxu0 0.0
  %8991 = vmatpush.msra.mxu0 0.0
  %8992 = vmatpush.msra.mxu0 0.0
  %8993 = vmatpush.msra.mxu0 0.0
  %8994 = vmatpush.msra.mxu0 0.0
  %8995 = vmatpush.msra.mxu0 0.0
  %8996 = vmatpush.msra.mxu0 0.0
  %8997 = vmatpush.msra.mxu0 0.0
  %8998 = vmatpush.msra.mxu0 0.0
  %8999 = vmatpush.msra.mxu0 0.0
  %9000 = vmatpush.msra.mxu0 0.0
  %9001 = vmatpush.msra.mxu0 %v8974
  %9002 = vmatpush.msra.mxu0 %v8973
  %9003 = vmatmul.f32.gmra.mxu0 %v8976
  %v9004 = vpop.f32.mrf.mxu0
  %v9005 = vadd.f32 0.0, %v9004
  %9006 = vmatmul.f32.gmra.mxu0 %v8979
  %v9007 = vpop.f32.mrf.mxu0
  %v9008 = vadd.f32 0.0, %v9007
  %9009 = vmatmul.f32.gmra.mxu0 %v8982
  %v9010 = vpop.f32.mrf.mxu0
  %v9011 = vadd.f32 0.0, %v9010
  %9012 = vmatmul.f32.gmra.mxu0 %v8985
  %v9013 = vpop.f32.mrf.mxu0
  %v9014 = vadd.f32 0.0, %v9013
  %9015 = vdwg.mxu0
  %v9016 = vadd.f32 %v8934, %v9005
  %v9017 = vadd.f32 %v8935, %v9008
  %v9018 = vadd.f32 %v8936, %v9011
  %v9019 = vadd.f32 %v8937, %v9014
  %s9020 = scalar_lea.vmem %s7, 320
  %v9021 = vld [vmem:[%s9020] sm:$0xff]
  %v9022 = vld [vmem:[%s9020 + $0x8] sm:$0xff]
  %v9023 = vld [vmem:[%s9020 + $0x10] sm:$0xff]
  %v9024 = vld [vmem:[%s9020 + $0x18] sm:$0xff]
  %9025 = vmatpush.msra.mxu0 %v8209
  %9026 = vmatpush.msra.mxu0 %v8208
  %9027 = vmatpush.msra.mxu0 %v8207
  %9028 = vmatpush.msra.mxu0 %v8206
  %9029 = vmatpush.msra.mxu0 %v8205
  %9030 = vmatpush.msra.mxu0 %v8204
  %9031 = vmatpush.msra.mxu0 %v8203
  %9032 = vmatpush.msra.mxu0 %v8202
  %9033 = vmatpush.msra.mxu0 %v8201
  %9034 = vmatpush.msra.mxu0 %v8200
  %9035 = vmatpush.msra.mxu0 %v8199
  %9036 = vmatpush.msra.mxu0 %v8198
  %9037 = vmatpush.msra.mxu0 %v8197
  %9038 = vmatpush.msra.mxu0 %v8196
  %9039 = vmatpush.msra.mxu0 %v8195
  %9040 = vmatpush.msra.mxu0 %v8194
  %9041 = vmatmul.f32.gmra.mxu0 %v9021
  %v9042 = vpop.f32.mrf.mxu0
  %v9043 = vadd.f32 0.0, %v9042
  %9044 = vmatmul.f32.gmra.mxu0 %v9022
  %v9045 = vpop.f32.mrf.mxu0
  %v9046 = vadd.f32 0.0, %v9045
  %9047 = vmatmul.f32.gmra.mxu0 %v9023
  %v9048 = vpop.f32.mrf.mxu0
  %v9049 = vadd.f32 0.0, %v9048
  %9050 = vmatmul.f32.gmra.mxu0 %v9024
  %v9051 = vpop.f32.mrf.mxu0
  %v9052 = vadd.f32 0.0, %v9051
  %9053 = vdwg.mxu0
  %s9054 = scalar_lea.vmem %s8, 160
  %v9055 = vld [vmem:[%s9054] sm:$0xff]
  %v9056 = vld [vmem:[%s9054 + $0x8] sm:$0xff]
  %v9058 = vsel %vm7992, %v9043, 0
  %v9061 = vsel %vm7992, %v9046, 0
  %v9064 = vsel %vm7992, %v9049, 0
  %v9067 = vsel %vm7992, %v9052, 0
  %9069 = vmatpush.msra.mxu0 0.0
  %9070 = vmatpush.msra.mxu0 0.0
  %9071 = vmatpush.msra.mxu0 0.0
  %9072 = vmatpush.msra.mxu0 0.0
  %9073 = vmatpush.msra.mxu0 0.0
  %9074 = vmatpush.msra.mxu0 0.0
  %9075 = vmatpush.msra.mxu0 0.0
  %9076 = vmatpush.msra.mxu0 0.0
  %9077 = vmatpush.msra.mxu0 0.0
  %9078 = vmatpush.msra.mxu0 0.0
  %9079 = vmatpush.msra.mxu0 0.0
  %9080 = vmatpush.msra.mxu0 0.0
  %9081 = vmatpush.msra.mxu0 0.0
  %9082 = vmatpush.msra.mxu0 0.0
  %9083 = vmatpush.msra.mxu0 %v9056
  %9084 = vmatpush.msra.mxu0 %v9055
  %9085 = vmatmul.f32.gmra.mxu0 %v9058
  %v9086 = vpop.f32.mrf.mxu0
  %v9087 = vadd.f32 0.0, %v9086
  %9088 = vmatmul.f32.gmra.mxu0 %v9061
  %v9089 = vpop.f32.mrf.mxu0
  %v9090 = vadd.f32 0.0, %v9089
  %9091 = vmatmul.f32.gmra.mxu0 %v9064
  %v9092 = vpop.f32.mrf.mxu0
  %v9093 = vadd.f32 0.0, %v9092
  %9094 = vmatmul.f32.gmra.mxu0 %v9067
  %v9095 = vpop.f32.mrf.mxu0
  %v9096 = vadd.f32 0.0, %v9095
  %9097 = vdwg.mxu0
  %v9098 = vadd.f32 %v9016, %v9087
  %v9099 = vadd.f32 %v9017, %v9090
  %v9100 = vadd.f32 %v9018, %v9093
  %v9101 = vadd.f32 %v9019, %v9096
  %s9102 = scalar_lea.vmem %s7, 352
  %v9103 = vld [vmem:[%s9102] sm:$0xff]
  %v9104 = vld [vmem:[%s9102 + $0x8] sm:$0xff]
  %v9105 = vld [vmem:[%s9102 + $0x10] sm:$0xff]
  %v9106 = vld [vmem:[%s9102 + $0x18] sm:$0xff]
  %9107 = vmatpush.msra.mxu0 %v8209
  %9108 = vmatpush.msra.mxu0 %v8208
  %9109 = vmatpush.msra.mxu0 %v8207
  %9110 = vmatpush.msra.mxu0 %v8206
  %9111 = vmatpush.msra.mxu0 %v8205
  %9112 = vmatpush.msra.mxu0 %v8204
  %9113 = vmatpush.msra.mxu0 %v8203
  %9114 = vmatpush.msra.mxu0 %v8202
  %9115 = vmatpush.msra.mxu0 %v8201
  %9116 = vmatpush.msra.mxu0 %v8200
  %9117 = vmatpush.msra.mxu0 %v8199
  %9118 = vmatpush.msra.mxu0 %v8198
  %9119 = vmatpush.msra.mxu0 %v8197
  %9120 = vmatpush.msra.mxu0 %v8196
  %9121 = vmatpush.msra.mxu0 %v8195
  %9122 = vmatpush.msra.mxu0 %v8194
  %9123 = vmatmul.f32.gmra.mxu0 %v9103
  %v9124 = vpop.f32.mrf.mxu0
  %v9125 = vadd.f32 0.0, %v9124
  %9126 = vmatmul.f32.gmra.mxu0 %v9104
  %v9127 = vpop.f32.mrf.mxu0
  %v9128 = vadd.f32 0.0, %v9127
  %9129 = vmatmul.f32.gmra.mxu0 %v9105
  %v9130 = vpop.f32.mrf.mxu0
  %v9131 = vadd.f32 0.0, %v9130
  %9132 = vmatmul.f32.gmra.mxu0 %v9106
  %v9133 = vpop.f32.mrf.mxu0
  %v9134 = vadd.f32 0.0, %v9133
  %9135 = vdwg.mxu0
  %s9136 = scalar_lea.vmem %s8, 176
  %v9137 = vld [vmem:[%s9136] sm:$0xff]
  %v9138 = vld [vmem:[%s9136 + $0x8] sm:$0xff]
  %v9140 = vsel %vm7992, %v9125, 0
  %v9143 = vsel %vm7992, %v9128, 0
  %v9146 = vsel %vm7992, %v9131, 0
  %v9149 = vsel %vm7992, %v9134, 0
  %9151 = vmatpush.msra.mxu0 0.0
  %9152 = vmatpush.msra.mxu0 0.0
  %9153 = vmatpush.msra.mxu0 0.0
  %9154 = vmatpush.msra.mxu0 0.0
  %9155 = vmatpush.msra.mxu0 0.0
  %9156 = vmatpush.msra.mxu0 0.0
  %9157 = vmatpush.msra.mxu0 0.0
  %9158 = vmatpush.msra.mxu0 0.0
  %9159 = vmatpush.msra.mxu0 0.0
  %9160 = vmatpush.msra.mxu0 0.0
  %9161 = vmatpush.msra.mxu0 0.0
  %9162 = vmatpush.msra.mxu0 0.0
  %9163 = vmatpush.msra.mxu0 0.0
  %9164 = vmatpush.msra.mxu0 0.0
  %9165 = vmatpush.msra.mxu0 %v9138
  %9166 = vmatpush.msra.mxu0 %v9137
  %9167 = vmatmul.f32.gmra.mxu0 %v9140
  %v9168 = vpop.f32.mrf.mxu0
  %v9169 = vadd.f32 0.0, %v9168
  %9170 = vmatmul.f32.gmra.mxu0 %v9143
  %v9171 = vpop.f32.mrf.mxu0
  %v9172 = vadd.f32 0.0, %v9171
  %9173 = vmatmul.f32.gmra.mxu0 %v9146
  %v9174 = vpop.f32.mrf.mxu0
  %v9175 = vadd.f32 0.0, %v9174
  %9176 = vmatmul.f32.gmra.mxu0 %v9149
  %v9177 = vpop.f32.mrf.mxu0
  %v9178 = vadd.f32 0.0, %v9177
  %9179 = vdwg.mxu0
  %v9180 = vadd.f32 %v9098, %v9169
  %v9181 = vadd.f32 %v9099, %v9172
  %v9182 = vadd.f32 %v9100, %v9175
  %v9183 = vadd.f32 %v9101, %v9178
  %s9184 = scalar_lea.vmem %s7, 384
  %v9185 = vld [vmem:[%s9184] sm:$0xff]
  %v9186 = vld [vmem:[%s9184 + $0x8] sm:$0xff]
  %v9187 = vld [vmem:[%s9184 + $0x10] sm:$0xff]
  %v9188 = vld [vmem:[%s9184 + $0x18] sm:$0xff]
  %9189 = vmatpush.msra.mxu0 %v8209
  %9190 = vmatpush.msra.mxu0 %v8208
  %9191 = vmatpush.msra.mxu0 %v8207
  %9192 = vmatpush.msra.mxu0 %v8206
  %9193 = vmatpush.msra.mxu0 %v8205
  %9194 = vmatpush.msra.mxu0 %v8204
  %9195 = vmatpush.msra.mxu0 %v8203
  %9196 = vmatpush.msra.mxu0 %v8202
  %9197 = vmatpush.msra.mxu0 %v8201
  %9198 = vmatpush.msra.mxu0 %v8200
  %9199 = vmatpush.msra.mxu0 %v8199
  %9200 = vmatpush.msra.mxu0 %v8198
  %9201 = vmatpush.msra.mxu0 %v8197
  %9202 = vmatpush.msra.mxu0 %v8196
  %9203 = vmatpush.msra.mxu0 %v8195
  %9204 = vmatpush.msra.mxu0 %v8194
  %9205 = vmatmul.f32.gmra.mxu0 %v9185
  %v9206 = vpop.f32.mrf.mxu0
  %v9207 = vadd.f32 0.0, %v9206
  %9208 = vmatmul.f32.gmra.mxu0 %v9186
  %v9209 = vpop.f32.mrf.mxu0
  %v9210 = vadd.f32 0.0, %v9209
  %9211 = vmatmul.f32.gmra.mxu0 %v9187
  %v9212 = vpop.f32.mrf.mxu0
  %v9213 = vadd.f32 0.0, %v9212
  %9214 = vmatmul.f32.gmra.mxu0 %v9188
  %v9215 = vpop.f32.mrf.mxu0
  %v9216 = vadd.f32 0.0, %v9215
  %9217 = vdwg.mxu0
  %s9218 = scalar_lea.vmem %s8, 192
  %v9219 = vld [vmem:[%s9218] sm:$0xff]
  %v9220 = vld [vmem:[%s9218 + $0x8] sm:$0xff]
  %v9222 = vsel %vm7992, %v9207, 0
  %v9225 = vsel %vm7992, %v9210, 0
  %v9228 = vsel %vm7992, %v9213, 0
  %v9231 = vsel %vm7992, %v9216, 0
  %9233 = vmatpush.msra.mxu0 0.0
  %9234 = vmatpush.msra.mxu0 0.0
  %9235 = vmatpush.msra.mxu0 0.0
  %9236 = vmatpush.msra.mxu0 0.0
  %9237 = vmatpush.msra.mxu0 0.0
  %9238 = vmatpush.msra.mxu0 0.0
  %9239 = vmatpush.msra.mxu0 0.0
  %9240 = vmatpush.msra.mxu0 0.0
  %9241 = vmatpush.msra.mxu0 0.0
  %9242 = vmatpush.msra.mxu0 0.0
  %9243 = vmatpush.msra.mxu0 0.0
  %9244 = vmatpush.msra.mxu0 0.0
  %9245 = vmatpush.msra.mxu0 0.0
  %9246 = vmatpush.msra.mxu0 0.0
  %9247 = vmatpush.msra.mxu0 %v9220
  %9248 = vmatpush.msra.mxu0 %v9219
  %9249 = vmatmul.f32.gmra.mxu0 %v9222
  %v9250 = vpop.f32.mrf.mxu0
  %v9251 = vadd.f32 0.0, %v9250
  %9252 = vmatmul.f32.gmra.mxu0 %v9225
  %v9253 = vpop.f32.mrf.mxu0
  %v9254 = vadd.f32 0.0, %v9253
  %9255 = vmatmul.f32.gmra.mxu0 %v9228
  %v9256 = vpop.f32.mrf.mxu0
  %v9257 = vadd.f32 0.0, %v9256
  %9258 = vmatmul.f32.gmra.mxu0 %v9231
  %v9259 = vpop.f32.mrf.mxu0
  %v9260 = vadd.f32 0.0, %v9259
  %9261 = vdwg.mxu0
  %v9262 = vadd.f32 %v9180, %v9251
  %v9263 = vadd.f32 %v9181, %v9254
  %v9264 = vadd.f32 %v9182, %v9257
  %v9265 = vadd.f32 %v9183, %v9260
  %s9266 = scalar_lea.vmem %s7, 416
  %v9267 = vld [vmem:[%s9266] sm:$0xff]
  %v9268 = vld [vmem:[%s9266 + $0x8] sm:$0xff]
  %v9269 = vld [vmem:[%s9266 + $0x10] sm:$0xff]
  %v9270 = vld [vmem:[%s9266 + $0x18] sm:$0xff]
  %9271 = vmatpush.msra.mxu0 %v8209
  %9272 = vmatpush.msra.mxu0 %v8208
  %9273 = vmatpush.msra.mxu0 %v8207
  %9274 = vmatpush.msra.mxu0 %v8206
  %9275 = vmatpush.msra.mxu0 %v8205
  %9276 = vmatpush.msra.mxu0 %v8204
  %9277 = vmatpush.msra.mxu0 %v8203
  %9278 = vmatpush.msra.mxu0 %v8202
  %9279 = vmatpush.msra.mxu0 %v8201
  %9280 = vmatpush.msra.mxu0 %v8200
  %9281 = vmatpush.msra.mxu0 %v8199
  %9282 = vmatpush.msra.mxu0 %v8198
  %9283 = vmatpush.msra.mxu0 %v8197
  %9284 = vmatpush.msra.mxu0 %v8196
  %9285 = vmatpush.msra.mxu0 %v8195
  %9286 = vmatpush.msra.mxu0 %v8194
  %9287 = vmatmul.f32.gmra.mxu0 %v9267
  %v9288 = vpop.f32.mrf.mxu0
  %v9289 = vadd.f32 0.0, %v9288
  %9290 = vmatmul.f32.gmra.mxu0 %v9268
  %v9291 = vpop.f32.mrf.mxu0
  %v9292 = vadd.f32 0.0, %v9291
  %9293 = vmatmul.f32.gmra.mxu0 %v9269
  %v9294 = vpop.f32.mrf.mxu0
  %v9295 = vadd.f32 0.0, %v9294
  %9296 = vmatmul.f32.gmra.mxu0 %v9270
  %v9297 = vpop.f32.mrf.mxu0
  %v9298 = vadd.f32 0.0, %v9297
  %9299 = vdwg.mxu0
  %s9300 = scalar_lea.vmem %s8, 208
  %v9301 = vld [vmem:[%s9300] sm:$0xff]
  %v9302 = vld [vmem:[%s9300 + $0x8] sm:$0xff]
  %v9304 = vsel %vm7992, %v9289, 0
  %v9307 = vsel %vm7992, %v9292, 0
  %v9310 = vsel %vm7992, %v9295, 0
  %v9313 = vsel %vm7992, %v9298, 0
  %9315 = vmatpush.msra.mxu0 0.0
  %9316 = vmatpush.msra.mxu0 0.0
  %9317 = vmatpush.msra.mxu0 0.0
  %9318 = vmatpush.msra.mxu0 0.0
  %9319 = vmatpush.msra.mxu0 0.0
  %9320 = vmatpush.msra.mxu0 0.0
  %9321 = vmatpush.msra.mxu0 0.0
  %9322 = vmatpush.msra.mxu0 0.0
  %9323 = vmatpush.msra.mxu0 0.0
  %9324 = vmatpush.msra.mxu0 0.0
  %9325 = vmatpush.msra.mxu0 0.0
  %9326 = vmatpush.msra.mxu0 0.0
  %9327 = vmatpush.msra.mxu0 0.0
  %9328 = vmatpush.msra.mxu0 0.0
  %9329 = vmatpush.msra.mxu0 %v9302
  %9330 = vmatpush.msra.mxu0 %v9301
  %9331 = vmatmul.f32.gmra.mxu0 %v9304
  %v9332 = vpop.f32.mrf.mxu0
  %v9333 = vadd.f32 0.0, %v9332
  %9334 = vmatmul.f32.gmra.mxu0 %v9307
  %v9335 = vpop.f32.mrf.mxu0
  %v9336 = vadd.f32 0.0, %v9335
  %9337 = vmatmul.f32.gmra.mxu0 %v9310
  %v9338 = vpop.f32.mrf.mxu0
  %v9339 = vadd.f32 0.0, %v9338
  %9340 = vmatmul.f32.gmra.mxu0 %v9313
  %v9341 = vpop.f32.mrf.mxu0
  %v9342 = vadd.f32 0.0, %v9341
  %9343 = vdwg.mxu0
  %v9344 = vadd.f32 %v9262, %v9333
  %v9345 = vadd.f32 %v9263, %v9336
  %v9346 = vadd.f32 %v9264, %v9339
  %v9347 = vadd.f32 %v9265, %v9342
  %s9348 = scalar_lea.vmem %s7, 448
  %v9349 = vld [vmem:[%s9348] sm:$0xff]
  %v9350 = vld [vmem:[%s9348 + $0x8] sm:$0xff]
  %v9351 = vld [vmem:[%s9348 + $0x10] sm:$0xff]
  %v9352 = vld [vmem:[%s9348 + $0x18] sm:$0xff]
  %9353 = vmatpush.msra.mxu0 %v8209
  %9354 = vmatpush.msra.mxu0 %v8208
  %9355 = vmatpush.msra.mxu0 %v8207
  %9356 = vmatpush.msra.mxu0 %v8206
  %9357 = vmatpush.msra.mxu0 %v8205
  %9358 = vmatpush.msra.mxu0 %v8204
  %9359 = vmatpush.msra.mxu0 %v8203
  %9360 = vmatpush.msra.mxu0 %v8202
  %9361 = vmatpush.msra.mxu0 %v8201
  %9362 = vmatpush.msra.mxu0 %v8200
  %9363 = vmatpush.msra.mxu0 %v8199
  %9364 = vmatpush.msra.mxu0 %v8198
  %9365 = vmatpush.msra.mxu0 %v8197
  %9366 = vmatpush.msra.mxu0 %v8196
  %9367 = vmatpush.msra.mxu0 %v8195
  %9368 = vmatpush.msra.mxu0 %v8194
  %9369 = vmatmul.f32.gmra.mxu0 %v9349
  %v9370 = vpop.f32.mrf.mxu0
  %v9371 = vadd.f32 0.0, %v9370
  %9372 = vmatmul.f32.gmra.mxu0 %v9350
  %v9373 = vpop.f32.mrf.mxu0
  %v9374 = vadd.f32 0.0, %v9373
  %9375 = vmatmul.f32.gmra.mxu0 %v9351
  %v9376 = vpop.f32.mrf.mxu0
  %v9377 = vadd.f32 0.0, %v9376
  %9378 = vmatmul.f32.gmra.mxu0 %v9352
  %v9379 = vpop.f32.mrf.mxu0
  %v9380 = vadd.f32 0.0, %v9379
  %9381 = vdwg.mxu0
  %s9382 = scalar_lea.vmem %s8, 224
  %v9383 = vld [vmem:[%s9382] sm:$0xff]
  %v9384 = vld [vmem:[%s9382 + $0x8] sm:$0xff]
  %v9386 = vsel %vm7992, %v9371, 0
  %v9389 = vsel %vm7992, %v9374, 0
  %v9392 = vsel %vm7992, %v9377, 0
  %v9395 = vsel %vm7992, %v9380, 0
  %9397 = vmatpush.msra.mxu0 0.0
  %9398 = vmatpush.msra.mxu0 0.0
  %9399 = vmatpush.msra.mxu0 0.0
  %9400 = vmatpush.msra.mxu0 0.0
  %9401 = vmatpush.msra.mxu0 0.0
  %9402 = vmatpush.msra.mxu0 0.0
  %9403 = vmatpush.msra.mxu0 0.0
  %9404 = vmatpush.msra.mxu0 0.0
  %9405 = vmatpush.msra.mxu0 0.0
  %9406 = vmatpush.msra.mxu0 0.0
  %9407 = vmatpush.msra.mxu0 0.0
  %9408 = vmatpush.msra.mxu0 0.0
  %9409 = vmatpush.msra.mxu0 0.0
  %9410 = vmatpush.msra.mxu0 0.0
  %9411 = vmatpush.msra.mxu0 %v9384
  %9412 = vmatpush.msra.mxu0 %v9383
  %9413 = vmatmul.f32.gmra.mxu0 %v9386
  %v9414 = vpop.f32.mrf.mxu0
  %v9415 = vadd.f32 0.0, %v9414
  %9416 = vmatmul.f32.gmra.mxu0 %v9389
  %v9417 = vpop.f32.mrf.mxu0
  %v9418 = vadd.f32 0.0, %v9417
  %9419 = vmatmul.f32.gmra.mxu0 %v9392
  %v9420 = vpop.f32.mrf.mxu0
  %v9421 = vadd.f32 0.0, %v9420
  %9422 = vmatmul.f32.gmra.mxu0 %v9395
  %v9423 = vpop.f32.mrf.mxu0
  %v9424 = vadd.f32 0.0, %v9423
  %9425 = vdwg.mxu0
  %v9426 = vadd.f32 %v9344, %v9415
  %v9427 = vadd.f32 %v9345, %v9418
  %v9428 = vadd.f32 %v9346, %v9421
  %v9429 = vadd.f32 %v9347, %v9424
  %s9430 = scalar_lea.vmem %s7, 480
  %v9431 = vld [vmem:[%s9430] sm:$0xff]
  %v9432 = vld [vmem:[%s9430 + $0x8] sm:$0xff]
  %v9433 = vld [vmem:[%s9430 + $0x10] sm:$0xff]
  %v9434 = vld [vmem:[%s9430 + $0x18] sm:$0xff]
  %9435 = vmatpush.msra.mxu0 %v8209
  %9436 = vmatpush.msra.mxu0 %v8208
  %9437 = vmatpush.msra.mxu0 %v8207
  %9438 = vmatpush.msra.mxu0 %v8206
  %9439 = vmatpush.msra.mxu0 %v8205
  %9440 = vmatpush.msra.mxu0 %v8204
  %9441 = vmatpush.msra.mxu0 %v8203
  %9442 = vmatpush.msra.mxu0 %v8202
  %9443 = vmatpush.msra.mxu0 %v8201
  %9444 = vmatpush.msra.mxu0 %v8200
  %9445 = vmatpush.msra.mxu0 %v8199
  %9446 = vmatpush.msra.mxu0 %v8198
  %9447 = vmatpush.msra.mxu0 %v8197
  %9448 = vmatpush.msra.mxu0 %v8196
  %9449 = vmatpush.msra.mxu0 %v8195
  %9450 = vmatpush.msra.mxu0 %v8194
  %9451 = vmatmul.f32.gmra.mxu0 %v9431
  %v9452 = vpop.f32.mrf.mxu0
  %v9453 = vadd.f32 0.0, %v9452
  %9454 = vmatmul.f32.gmra.mxu0 %v9432
  %v9455 = vpop.f32.mrf.mxu0
  %v9456 = vadd.f32 0.0, %v9455
  %9457 = vmatmul.f32.gmra.mxu0 %v9433
  %v9458 = vpop.f32.mrf.mxu0
  %v9459 = vadd.f32 0.0, %v9458
  %9460 = vmatmul.f32.gmra.mxu0 %v9434
  %v9461 = vpop.f32.mrf.mxu0
  %v9462 = vadd.f32 0.0, %v9461
  %9463 = vdwg.mxu0
  %s9464 = scalar_lea.vmem %s8, 240
  %v9465 = vld [vmem:[%s9464] sm:$0xff]
  %v9466 = vld [vmem:[%s9464 + $0x8] sm:$0xff]
  %v9468 = vsel %vm7992, %v9453, 0
  %v9471 = vsel %vm7992, %v9456, 0
  %v9474 = vsel %vm7992, %v9459, 0
  %v9477 = vsel %vm7992, %v9462, 0
  %9479 = vmatpush.msra.mxu0 0.0
  %9480 = vmatpush.msra.mxu0 0.0
  %9481 = vmatpush.msra.mxu0 0.0
  %9482 = vmatpush.msra.mxu0 0.0
  %9483 = vmatpush.msra.mxu0 0.0
  %9484 = vmatpush.msra.mxu0 0.0
  %9485 = vmatpush.msra.mxu0 0.0
  %9486 = vmatpush.msra.mxu0 0.0
  %9487 = vmatpush.msra.mxu0 0.0
  %9488 = vmatpush.msra.mxu0 0.0
  %9489 = vmatpush.msra.mxu0 0.0
  %9490 = vmatpush.msra.mxu0 0.0
  %9491 = vmatpush.msra.mxu0 0.0
  %9492 = vmatpush.msra.mxu0 0.0
  %9493 = vmatpush.msra.mxu0 %v9466
  %9494 = vmatpush.msra.mxu0 %v9465
  %9495 = vmatmul.f32.gmra.mxu0 %v9468
  %v9496 = vpop.f32.mrf.mxu0
  %v9497 = vadd.f32 0.0, %v9496
  %9498 = vmatmul.f32.gmra.mxu0 %v9471
  %v9499 = vpop.f32.mrf.mxu0
  %v9500 = vadd.f32 0.0, %v9499
  %9501 = vmatmul.f32.gmra.mxu0 %v9474
  %v9502 = vpop.f32.mrf.mxu0
  %v9503 = vadd.f32 0.0, %v9502
  %9504 = vmatmul.f32.gmra.mxu0 %v9477
  %v9505 = vpop.f32.mrf.mxu0
  %v9506 = vadd.f32 0.0, %v9505
  %9507 = vdwg.mxu0
  %v9508 = vadd.f32 %v9426, %v9497
  %v9509 = vadd.f32 %v9427, %v9500
  %v9510 = vadd.f32 %v9428, %v9503
  %v9511 = vadd.f32 %v9429, %v9506
  %vm9512 = vcmask 261120
  %v9513 = vsel %vm9512, %v9508, 0.0
  %v9514 = vsel %vm9512, %v9509, 0.0
  %v9515 = vadd.f32 %v9513, %v9514
  %v9516 = vsel %vm9512, %v9510, 0.0
  %v9517 = vadd.f32 %v9515, %v9516
  %v9518 = vsel %vm9512, %v9511, 0.0
  %v9519 = vadd.f32 %v9517, %v9518
  %v9520 = vrot.slane %v9519, 4
  %v9521 = vadd.f32 %v9519, %v9520
  %v9522 = vrot.slane %v9521, 2
  %v9523 = vadd.f32 %v9521, %v9522
  %v9524 = vrot.slane %v9523, 1
  %v9525 = vadd.f32 %v9523, %v9524
  %v9526 = vrcp.pop 32.0
  %v9527 = vmul.f32 32.0, %v9526
  %v9528 = vsub.f32 1.0, %v9527
  %v9529 = vmul.f32 %v9526, %v9528
  %v9530 = vadd.f32 %v9526, %v9529
  %vm9531 = vweird.f32 %v9526
  %v9532 = vsel %vm9531, %v9526, %v9530
  %v9533 = vmul.f32 %v9525, %v9532
  %v9534 = vsub.f32 %v9508, %v9533
  %v9535 = vsub.f32 %v9509, %v9533
  %v9536 = vsub.f32 %v9510, %v9533
  %v9537 = vsub.f32 %v9511, %v9533
  %v9538 = vmul.f32 %v9534, %v9534
  %v9539 = vmul.f32 %v9535, %v9535
  %v9540 = vmul.f32 %v9536, %v9536
  %v9541 = vmul.f32 %v9537, %v9537
  %v9542 = vsel %vm9512, %v9538, 0.0
  %v9543 = vsel %vm9512, %v9539, 0.0
  %v9544 = vadd.f32 %v9542, %v9543
  %v9545 = vsel %vm9512, %v9540, 0.0
  %v9546 = vadd.f32 %v9544, %v9545
  %v9547 = vsel %vm9512, %v9541, 0.0
  %v9548 = vadd.f32 %v9546, %v9547
  %v9549 = vrot.slane %v9548, 4
  %v9550 = vadd.f32 %v9548, %v9549
  %v9551 = vrot.slane %v9550, 2
  %v9552 = vadd.f32 %v9550, %v9551
  %v9553 = vrot.slane %v9552, 1
  %v9554 = vadd.f32 %v9552, %v9553
  %v9555 = vmul.f32 %v9554, %v9532
  %v9556 = vld [vmem:[%s9] sm:$0x1]
  %v9557 = vadd.f32 %v9555, 1e-05
  %v9558 = vrsqrt.pop %v9557
  %v9559 = vmul.f32 %v9558, %v9557
  %v9560 = vmul.f32 %v9559, %v9558
  %v9561 = vmul.f32 0.5, %v9560
  %v9562 = vsub.f32 1.5, %v9561
  %v9563 = vmul.f32 %v9558, %v9562
  %vm9564 = vweird.f32 %v9557
  %vm9565 = vweird.f32 %v9558
  %vm9566 = vmor %vm9564, %vm9565
  %v9567 = vsel %vm9566, %v9558, %v9563
  %v9568 = vmul.f32 %v9556, %v9567
  %v9570 = vperm.slane %v9568, 0
  %v9572 = vmul.f32 %v9508, %v9570
  %v9573 = vmul.f32 %v9509, %v9570
  %v9574 = vmul.f32 %v9510, %v9570
  %v9575 = vmul.f32 %v9511, %v9570
  %v9576 = vld [vmem:[%s10] sm:$0x1]
  %v9577 = vmul.f32 %v9533, %v9568
  %v9578 = vsub.f32 %v9576, %v9577
  %v9580 = vperm.slane %v9578, 0
  %v9582 = vadd.f32 %v9572, %v9580
  %v9583 = vadd.f32 %v9573, %v9580
  %v9584 = vadd.f32 %v9574, %v9580
  %v9585 = vadd.f32 %v9575, %v9580
  %vm9586 = vcmp.ge.f32.partialorder %v9582, 0.0
  %vm9587 = vcmp.ge.f32.partialorder %v9583, 0.0
  %vm9588 = vcmp.ge.f32.partialorder %v9584, 0.0
  %vm9589 = vcmp.ge.f32.partialorder %v9585, 0.0
  %v9590 = vmul.f32 %v9582, 0.05
  %v9591 = vmul.f32 %v9583, 0.05
  %v9592 = vmul.f32 %v9584, 0.05
  %v9593 = vmul.f32 %v9585, 0.05
  %v9594 = vsel %vm9586, %v9582, %v9590
  %v9595 = vsel %vm9587, %v9583, %v9591
  %v9596 = vsel %vm9588, %v9584, %v9592
  %v9597 = vsel %vm9589, %v9585, %v9593
  %v9598 = vld [vmem:[%s11] sm:$0xff]
  %v9600 = vsel %vm9512, %v9598, 0
  %9602 = vmatpush.msra.mxu0 0.0
  %9603 = vmatpush.msra.mxu0 0.0
  %9604 = vmatpush.msra.mxu0 0.0
  %9605 = vmatpush.msra.mxu0 0.0
  %9606 = vmatpush.msra.mxu0 0.0
  %9607 = vmatpush.msra.mxu0 0.0
  %9608 = vmatpush.msra.mxu0 0.0
  %9609 = vmatpush.msra.mxu0 0.0
  %9610 = vmatpush.msra.mxu0 0.0
  %9611 = vmatpush.msra.mxu0 0.0
  %9612 = vmatpush.msra.mxu0 0.0
  %9613 = vmatpush.msra.mxu0 0.0
  %9614 = vmatpush.msra.mxu0 %v9597
  %9615 = vmatpush.msra.mxu0 %v9596
  %9616 = vmatpush.msra.mxu0 %v9595
  %9617 = vmatpush.msra.mxu0 %v9594
  %9618 = vmatmul.f32.gmra.mxu0 %v9600
  %v9619 = vpop.f32.mrf.mxu0
  %v9620 = vadd.f32 0.0, %v9619
  %9621 = vdwg.mxu0
  %v9622 = vld [vmem:[%s12] sm:$0xff]
  %v9623 = vld [vmem:[%s12 + $0x8] sm:$0xff]
  %v9624 = vld [vmem:[%s12 + $0x10] sm:$0xff]
  %v9625 = vld [vmem:[%s12 + $0x18] sm:$0xff]
  %s9626 = scalar_lea.vmem %s11, 8
  %v9627 = vld [vmem:[%s9626] sm:$0xff]
  %v9629 = vsel %vm9512, %v9627, 0
  %9631 = vmatpush.msra.mxu0 0.0
  %9632 = vmatpush.msra.mxu0 0.0
  %9633 = vmatpush.msra.mxu0 0.0
  %9634 = vmatpush.msra.mxu0 0.0
  %9635 = vmatpush.msra.mxu0 0.0
  %9636 = vmatpush.msra.mxu0 0.0
  %9637 = vmatpush.msra.mxu0 0.0
  %9638 = vmatpush.msra.mxu0 0.0
  %9639 = vmatpush.msra.mxu0 0.0
  %9640 = vmatpush.msra.mxu0 0.0
  %9641 = vmatpush.msra.mxu0 0.0
  %9642 = vmatpush.msra.mxu0 0.0
  %9643 = vmatpush.msra.mxu0 %v9597
  %9644 = vmatpush.msra.mxu0 %v9596
  %9645 = vmatpush.msra.mxu0 %v9595
  %9646 = vmatpush.msra.mxu0 %v9594
  %9647 = vmatmul.f32.gmra.mxu0 %v9629
  %v9648 = vpop.f32.mrf.mxu0
  %v9649 = vadd.f32 0.0, %v9648
  %9650 = vdwg.mxu0
  %s9651 = scalar_lea.vmem %s12, 32
  %v9652 = vld [vmem:[%s9651] sm:$0xff]
  %v9653 = vld [vmem:[%s9651 + $0x8] sm:$0xff]
  %v9654 = vld [vmem:[%s9651 + $0x10] sm:$0xff]
  %v9655 = vld [vmem:[%s9651 + $0x18] sm:$0xff]
  %v9657 = vsel %vm9512, %v9649, 0
  %9659 = vmatpush.msra.mxu0 0.0
  %9660 = vmatpush.msra.mxu0 0.0
  %9661 = vmatpush.msra.mxu0 0.0
  %9662 = vmatpush.msra.mxu0 0.0
  %9663 = vmatpush.msra.mxu0 0.0
  %9664 = vmatpush.msra.mxu0 0.0
  %9665 = vmatpush.msra.mxu0 0.0
  %9666 = vmatpush.msra.mxu0 0.0
  %9667 = vmatpush.msra.mxu0 0.0
  %9668 = vmatpush.msra.mxu0 0.0
  %9669 = vmatpush.msra.mxu0 0.0
  %9670 = vmatpush.msra.mxu0 0.0
  %9671 = vmatpush.msra.mxu0 %v9655
  %9672 = vmatpush.msra.mxu0 %v9654
  %9673 = vmatpush.msra.mxu0 %v9653
  %9674 = vmatpush.msra.mxu0 %v9652
  %9675 = vmatmul.f32.gmra.mxu0 %v9657
  %v9676 = vpop.f32.mrf.mxu0
  %v9677 = vadd.f32 0.0, %v9676
  %9678 = vdwg.mxu0
  %v9680 = vsel %vm9512, %v9620, 0
  %9682 = vmatpush.msra.mxu0 0.0
  %9683 = vmatpush.msra.mxu0 0.0
  %9684 = vmatpush.msra.mxu0 0.0
  %9685 = vmatpush.msra.mxu0 0.0
  %9686 = vmatpush.msra.mxu0 0.0
  %9687 = vmatpush.msra.mxu0 0.0
  %9688 = vmatpush.msra.mxu0 0.0
  %9689 = vmatpush.msra.mxu0 0.0
  %9690 = vmatpush.msra.mxu0 0.0
  %9691 = vmatpush.msra.mxu0 0.0
  %9692 = vmatpush.msra.mxu0 0.0
  %9693 = vmatpush.msra.mxu0 0.0
  %9694 = vmatpush.msra.mxu0 %v9625
  %9695 = vmatpush.msra.mxu0 %v9624
  %9696 = vmatpush.msra.mxu0 %v9623
  %9697 = vmatpush.msra.mxu0 %v9622
  %9698 = vmatmul.f32.gmra.mxu0 %v9680
  %v9699 = vpop.f32.mrf.mxu0
  %v9700 = vadd.f32 %v9677, %v9699
  %9701 = vdwg.mxu0
  %s9702 = scalar_lea.vmem %s11, 16
  %v9703 = vld [vmem:[%s9702] sm:$0xff]
  %v9705 = vsel %vm9512, %v9703, 0
  %9707 = vmatpush.msra.mxu0 0.0
  %9708 = vmatpush.msra.mxu0 0.0
  %9709 = vmatpush.msra.mxu0 0.0
  %9710 = vmatpush.msra.mxu0 0.0
  %9711 = vmatpush.msra.mxu0 0.0
  %9712 = vmatpush.msra.mxu0 0.0
  %9713 = vmatpush.msra.mxu0 0.0
  %9714 = vmatpush.msra.mxu0 0.0
  %9715 = vmatpush.msra.mxu0 0.0
  %9716 = vmatpush.msra.mxu0 0.0
  %9717 = vmatpush.msra.mxu0 0.0
  %9718 = vmatpush.msra.mxu0 0.0
  %9719 = vmatpush.msra.mxu0 %v9597
  %9720 = vmatpush.msra.mxu0 %v9596
  %9721 = vmatpush.msra.mxu0 %v9595
  %9722 = vmatpush.msra.mxu0 %v9594
  %9723 = vmatmul.f32.gmra.mxu0 %v9705
  %v9724 = vpop.f32.mrf.mxu0
  %v9725 = vadd.f32 0.0, %v9724
  %9726 = vdwg.mxu0
  %s9727 = scalar_lea.vmem %s12, 64
  %v9728 = vld [vmem:[%s9727] sm:$0xff]
  %v9729 = vld [vmem:[%s9727 + $0x8] sm:$0xff]
  %v9730 = vld [vmem:[%s9727 + $0x10] sm:$0xff]
  %v9731 = vld [vmem:[%s9727 + $0x18] sm:$0xff]
  %v9733 = vsel %vm9512, %v9725, 0
  %9735 = vmatpush.msra.mxu0 0.0
  %9736 = vmatpush.msra.mxu0 0.0
  %9737 = vmatpush.msra.mxu0 0.0
  %9738 = vmatpush.msra.mxu0 0.0
  %9739 = vmatpush.msra.mxu0 0.0
  %9740 = vmatpush.msra.mxu0 0.0
  %9741 = vmatpush.msra.mxu0 0.0
  %9742 = vmatpush.msra.mxu0 0.0
  %9743 = vmatpush.msra.mxu0 0.0
  %9744 = vmatpush.msra.mxu0 0.0
  %9745 = vmatpush.msra.mxu0 0.0
  %9746 = vmatpush.msra.mxu0 0.0
  %9747 = vmatpush.msra.mxu0 %v9731
  %9748 = vmatpush.msra.mxu0 %v9730
  %9749 = vmatpush.msra.mxu0 %v9729
  %9750 = vmatpush.msra.mxu0 %v9728
  %9751 = vmatmul.f32.gmra.mxu0 %v9733
  %v9752 = vpop.f32.mrf.mxu0
  %v9753 = vadd.f32 0.0, %v9752
  %9754 = vdwg.mxu0
  %v9755 = vadd.f32 %v9700, %v9753
  %s9756 = scalar_lea.vmem %s11, 24
  %v9757 = vld [vmem:[%s9756] sm:$0xff]
  %v9759 = vsel %vm9512, %v9757, 0
  %9761 = vmatpush.msra.mxu0 0.0
  %9762 = vmatpush.msra.mxu0 0.0
  %9763 = vmatpush.msra.mxu0 0.0
  %9764 = vmatpush.msra.mxu0 0.0
  %9765 = vmatpush.msra.mxu0 0.0
  %9766 = vmatpush.msra.mxu0 0.0
  %9767 = vmatpush.msra.mxu0 0.0
  %9768 = vmatpush.msra.mxu0 0.0
  %9769 = vmatpush.msra.mxu0 0.0
  %9770 = vmatpush.msra.mxu0 0.0
  %9771 = vmatpush.msra.mxu0 0.0
  %9772 = vmatpush.msra.mxu0 0.0
  %9773 = vmatpush.msra.mxu0 %v9597
  %9774 = vmatpush.msra.mxu0 %v9596
  %9775 = vmatpush.msra.mxu0 %v9595
  %9776 = vmatpush.msra.mxu0 %v9594
  %9777 = vmatmul.f32.gmra.mxu0 %v9759
  %v9778 = vpop.f32.mrf.mxu0
  %v9779 = vadd.f32 0.0, %v9778
  %9780 = vdwg.mxu0
  %s9781 = scalar_lea.vmem %s12, 96
  %v9782 = vld [vmem:[%s9781] sm:$0xff]
  %v9783 = vld [vmem:[%s9781 + $0x8] sm:$0xff]
  %v9784 = vld [vmem:[%s9781 + $0x10] sm:$0xff]
  %v9785 = vld [vmem:[%s9781 + $0x18] sm:$0xff]
  %v9787 = vsel %vm9512, %v9779, 0
  %9789 = vmatpush.msra.mxu0 0.0
  %9790 = vmatpush.msra.mxu0 0.0
  %9791 = vmatpush.msra.mxu0 0.0
  %9792 = vmatpush.msra.mxu0 0.0
  %9793 = vmatpush.msra.mxu0 0.0
  %9794 = vmatpush.msra.mxu0 0.0
  %9795 = vmatpush.msra.mxu0 0.0
  %9796 = vmatpush.msra.mxu0 0.0
  %9797 = vmatpush.msra.mxu0 0.0
  %9798 = vmatpush.msra.mxu0 0.0
  %9799 = vmatpush.msra.mxu0 0.0
  %9800 = vmatpush.msra.mxu0 0.0
  %9801 = vmatpush.msra.mxu0 %v9785
  %9802 = vmatpush.msra.mxu0 %v9784
  %9803 = vmatpush.msra.mxu0 %v9783
  %9804 = vmatpush.msra.mxu0 %v9782
  %9805 = vmatmul.f32.gmra.mxu0 %v9787
  %v9806 = vpop.f32.mrf.mxu0
  %v9807 = vadd.f32 0.0, %v9806
  %9808 = vdwg.mxu0
  %v9809 = vadd.f32 %v9755, %v9807
  %s9810 = scalar_lea.vmem %s11, 32
  %v9811 = vld [vmem:[%s9810] sm:$0xff]
  %v9813 = vsel %vm9512, %v9811, 0
  %9815 = vmatpush.msra.mxu0 0.0
  %9816 = vmatpush.msra.mxu0 0.0
  %9817 = vmatpush.msra.mxu0 0.0
  %9818 = vmatpush.msra.mxu0 0.0
  %9819 = vmatpush.msra.mxu0 0.0
  %9820 = vmatpush.msra.mxu0 0.0
  %9821 = vmatpush.msra.mxu0 0.0
  %9822 = vmatpush.msra.mxu0 0.0
  %9823 = vmatpush.msra.mxu0 0.0
  %9824 = vmatpush.msra.mxu0 0.0
  %9825 = vmatpush.msra.mxu0 0.0
  %9826 = vmatpush.msra.mxu0 0.0
  %9827 = vmatpush.msra.mxu0 %v9597
  %9828 = vmatpush.msra.mxu0 %v9596
  %9829 = vmatpush.msra.mxu0 %v9595
  %9830 = vmatpush.msra.mxu0 %v9594
  %9831 = vmatmul.f32.gmra.mxu0 %v9813
  %v9832 = vpop.f32.mrf.mxu0
  %v9833 = vadd.f32 0.0, %v9832
  %9834 = vdwg.mxu0
  %s9835 = scalar_lea.vmem %s12, 128
  %v9836 = vld [vmem:[%s9835] sm:$0xff]
  %v9837 = vld [vmem:[%s9835 + $0x8] sm:$0xff]
  %v9838 = vld [vmem:[%s9835 + $0x10] sm:$0xff]
  %v9839 = vld [vmem:[%s9835 + $0x18] sm:$0xff]
  %v9841 = vsel %vm9512, %v9833, 0
  %9843 = vmatpush.msra.mxu0 0.0
  %9844 = vmatpush.msra.mxu0 0.0
  %9845 = vmatpush.msra.mxu0 0.0
  %9846 = vmatpush.msra.mxu0 0.0
  %9847 = vmatpush.msra.mxu0 0.0
  %9848 = vmatpush.msra.mxu0 0.0
  %9849 = vmatpush.msra.mxu0 0.0
  %9850 = vmatpush.msra.mxu0 0.0
  %9851 = vmatpush.msra.mxu0 0.0
  %9852 = vmatpush.msra.mxu0 0.0
  %9853 = vmatpush.msra.mxu0 0.0
  %9854 = vmatpush.msra.mxu0 0.0
  %9855 = vmatpush.msra.mxu0 %v9839
  %9856 = vmatpush.msra.mxu0 %v9838
  %9857 = vmatpush.msra.mxu0 %v9837
  %9858 = vmatpush.msra.mxu0 %v9836
  %9859 = vmatmul.f32.gmra.mxu0 %v9841
  %v9860 = vpop.f32.mrf.mxu0
  %v9861 = vadd.f32 0.0, %v9860
  %9862 = vdwg.mxu0
  %v9863 = vadd.f32 %v9809, %v9861
  %s9864 = scalar_lea.vmem %s11, 40
  %v9865 = vld [vmem:[%s9864] sm:$0xff]
  %v9867 = vsel %vm9512, %v9865, 0
  %9869 = vmatpush.msra.mxu0 0.0
  %9870 = vmatpush.msra.mxu0 0.0
  %9871 = vmatpush.msra.mxu0 0.0
  %9872 = vmatpush.msra.mxu0 0.0
  %9873 = vmatpush.msra.mxu0 0.0
  %9874 = vmatpush.msra.mxu0 0.0
  %9875 = vmatpush.msra.mxu0 0.0
  %9876 = vmatpush.msra.mxu0 0.0
  %9877 = vmatpush.msra.mxu0 0.0
  %9878 = vmatpush.msra.mxu0 0.0
  %9879 = vmatpush.msra.mxu0 0.0
  %9880 = vmatpush.msra.mxu0 0.0
  %9881 = vmatpush.msra.mxu0 %v9597
  %9882 = vmatpush.msra.mxu0 %v9596
  %9883 = vmatpush.msra.mxu0 %v9595
  %9884 = vmatpush.msra.mxu0 %v9594
  %9885 = vmatmul.f32.gmra.mxu0 %v9867
  %v9886 = vpop.f32.mrf.mxu0
  %v9887 = vadd.f32 0.0, %v9886
  %9888 = vdwg.mxu0
  %s9889 = scalar_lea.vmem %s12, 160
  %v9890 = vld [vmem:[%s9889] sm:$0xff]
  %v9891 = vld [vmem:[%s9889 + $0x8] sm:$0xff]
  %v9892 = vld [vmem:[%s9889 + $0x10] sm:$0xff]
  %v9893 = vld [vmem:[%s9889 + $0x18] sm:$0xff]
  %v9895 = vsel %vm9512, %v9887, 0
  %9897 = vmatpush.msra.mxu0 0.0
  %9898 = vmatpush.msra.mxu0 0.0
  %9899 = vmatpush.msra.mxu0 0.0
  %9900 = vmatpush.msra.mxu0 0.0
  %9901 = vmatpush.msra.mxu0 0.0
  %9902 = vmatpush.msra.mxu0 0.0
  %9903 = vmatpush.msra.mxu0 0.0
  %9904 = vmatpush.msra.mxu0 0.0
  %9905 = vmatpush.msra.mxu0 0.0
  %9906 = vmatpush.msra.mxu0 0.0
  %9907 = vmatpush.msra.mxu0 0.0
  %9908 = vmatpush.msra.mxu0 0.0
  %9909 = vmatpush.msra.mxu0 %v9893
  %9910 = vmatpush.msra.mxu0 %v9892
  %9911 = vmatpush.msra.mxu0 %v9891
  %9912 = vmatpush.msra.mxu0 %v9890
  %9913 = vmatmul.f32.gmra.mxu0 %v9895
  %v9914 = vpop.f32.mrf.mxu0
  %v9915 = vadd.f32 0.0, %v9914
  %9916 = vdwg.mxu0
  %v9917 = vadd.f32 %v9863, %v9915
  %s9918 = scalar_lea.vmem %s11, 48
  %v9919 = vld [vmem:[%s9918] sm:$0xff]
  %v9921 = vsel %vm9512, %v9919, 0
  %9923 = vmatpush.msra.mxu0 0.0
  %9924 = vmatpush.msra.mxu0 0.0
  %9925 = vmatpush.msra.mxu0 0.0
  %9926 = vmatpush.msra.mxu0 0.0
  %9927 = vmatpush.msra.mxu0 0.0
  %9928 = vmatpush.msra.mxu0 0.0
  %9929 = vmatpush.msra.mxu0 0.0
  %9930 = vmatpush.msra.mxu0 0.0
  %9931 = vmatpush.msra.mxu0 0.0
  %9932 = vmatpush.msra.mxu0 0.0
  %9933 = vmatpush.msra.mxu0 0.0
  %9934 = vmatpush.msra.mxu0 0.0
  %9935 = vmatpush.msra.mxu0 %v9597
  %9936 = vmatpush.msra.mxu0 %v9596
  %9937 = vmatpush.msra.mxu0 %v9595
  %9938 = vmatpush.msra.mxu0 %v9594
  %9939 = vmatmul.f32.gmra.mxu0 %v9921
  %v9940 = vpop.f32.mrf.mxu0
  %v9941 = vadd.f32 0.0, %v9940
  %9942 = vdwg.mxu0
  %s9943 = scalar_lea.vmem %s12, 192
  %v9944 = vld [vmem:[%s9943] sm:$0xff]
  %v9945 = vld [vmem:[%s9943 + $0x8] sm:$0xff]
  %v9946 = vld [vmem:[%s9943 + $0x10] sm:$0xff]
  %v9947 = vld [vmem:[%s9943 + $0x18] sm:$0xff]
  %v9949 = vsel %vm9512, %v9941, 0
  %9951 = vmatpush.msra.mxu0 0.0
  %9952 = vmatpush.msra.mxu0 0.0
  %9953 = vmatpush.msra.mxu0 0.0
  %9954 = vmatpush.msra.mxu0 0.0
  %9955 = vmatpush.msra.mxu0 0.0
  %9956 = vmatpush.msra.mxu0 0.0
  %9957 = vmatpush.msra.mxu0 0.0
  %9958 = vmatpush.msra.mxu0 0.0
  %9959 = vmatpush.msra.mxu0 0.0
  %9960 = vmatpush.msra.mxu0 0.0
  %9961 = vmatpush.msra.mxu0 0.0
  %9962 = vmatpush.msra.mxu0 0.0
  %9963 = vmatpush.msra.mxu0 %v9947
  %9964 = vmatpush.msra.mxu0 %v9946
  %9965 = vmatpush.msra.mxu0 %v9945
  %9966 = vmatpush.msra.mxu0 %v9944
  %9967 = vmatmul.f32.gmra.mxu0 %v9949
  %v9968 = vpop.f32.mrf.mxu0
  %v9969 = vadd.f32 0.0, %v9968
  %9970 = vdwg.mxu0
  %v9971 = vadd.f32 %v9917, %v9969
  %s9972 = scalar_lea.vmem %s11, 56
  %v9973 = vld [vmem:[%s9972] sm:$0xff]
  %v9975 = vsel %vm9512, %v9973, 0
  %9977 = vmatpush.msra.mxu0 0.0
  %9978 = vmatpush.msra.mxu0 0.0
  %9979 = vmatpush.msra.mxu0 0.0
  %9980 = vmatpush.msra.mxu0 0.0
  %9981 = vmatpush.msra.mxu0 0.0
  %9982 = vmatpush.msra.mxu0 0.0
  %9983 = vmatpush.msra.mxu0 0.0
  %9984 = vmatpush.msra.mxu0 0.0
  %9985 = vmatpush.msra.mxu0 0.0
  %9986 = vmatpush.msra.mxu0 0.0
  %9987 = vmatpush.msra.mxu0 0.0
  %9988 = vmatpush.msra.mxu0 0.0
  %9989 = vmatpush.msra.mxu0 %v9597
  %9990 = vmatpush.msra.mxu0 %v9596
  %9991 = vmatpush.msra.mxu0 %v9595
  %9992 = vmatpush.msra.mxu0 %v9594
  %9993 = vmatmul.f32.gmra.mxu0 %v9975
  %v9994 = vpop.f32.mrf.mxu0
  %v9995 = vadd.f32 0.0, %v9994
  %9996 = vdwg.mxu0
  %s9997 = scalar_lea.vmem %s12, 224
  %v9998 = vld [vmem:[%s9997] sm:$0xff]
  %v9999 = vld [vmem:[%s9997 + $0x8] sm:$0xff]
  %v10000 = vld [vmem:[%s9997 + $0x10] sm:$0xff]
  %v10001 = vld [vmem:[%s9997 + $0x18] sm:$0xff]
  %v10003 = vsel %vm9512, %v9995, 0
  %10005 = vmatpush.msra.mxu0 0.0
  %10006 = vmatpush.msra.mxu0 0.0
  %10007 = vmatpush.msra.mxu0 0.0
  %10008 = vmatpush.msra.mxu0 0.0
  %10009 = vmatpush.msra.mxu0 0.0
  %10010 = vmatpush.msra.mxu0 0.0
  %10011 = vmatpush.msra.mxu0 0.0
  %10012 = vmatpush.msra.mxu0 0.0
  %10013 = vmatpush.msra.mxu0 0.0
  %10014 = vmatpush.msra.mxu0 0.0
  %10015 = vmatpush.msra.mxu0 0.0
  %10016 = vmatpush.msra.mxu0 0.0
  %10017 = vmatpush.msra.mxu0 %v10001
  %10018 = vmatpush.msra.mxu0 %v10000
  %10019 = vmatpush.msra.mxu0 %v9999
  %10020 = vmatpush.msra.mxu0 %v9998
  %10021 = vmatmul.f32.gmra.mxu0 %v10003
  %v10022 = vpop.f32.mrf.mxu0
  %v10023 = vadd.f32 0.0, %v10022
  %10024 = vdwg.mxu0
  %v10025 = vadd.f32 %v9971, %v10023
  %s10026 = scalar_lea.vmem %s11, 64
  %v10027 = vld [vmem:[%s10026] sm:$0xff]
  %v10029 = vsel %vm9512, %v10027, 0
  %10031 = vmatpush.msra.mxu0 0.0
  %10032 = vmatpush.msra.mxu0 0.0
  %10033 = vmatpush.msra.mxu0 0.0
  %10034 = vmatpush.msra.mxu0 0.0
  %10035 = vmatpush.msra.mxu0 0.0
  %10036 = vmatpush.msra.mxu0 0.0
  %10037 = vmatpush.msra.mxu0 0.0
  %10038 = vmatpush.msra.mxu0 0.0
  %10039 = vmatpush.msra.mxu0 0.0
  %10040 = vmatpush.msra.mxu0 0.0
  %10041 = vmatpush.msra.mxu0 0.0
  %10042 = vmatpush.msra.mxu0 0.0
  %10043 = vmatpush.msra.mxu0 %v9597
  %10044 = vmatpush.msra.mxu0 %v9596
  %10045 = vmatpush.msra.mxu0 %v9595
  %10046 = vmatpush.msra.mxu0 %v9594
  %10047 = vmatmul.f32.gmra.mxu0 %v10029
  %v10048 = vpop.f32.mrf.mxu0
  %v10049 = vadd.f32 0.0, %v10048
  %10050 = vdwg.mxu0
  %s10051 = scalar_lea.vmem %s12, 256
  %v10052 = vld [vmem:[%s10051] sm:$0xff]
  %v10053 = vld [vmem:[%s10051 + $0x8] sm:$0xff]
  %v10054 = vld [vmem:[%s10051 + $0x10] sm:$0xff]
  %v10055 = vld [vmem:[%s10051 + $0x18] sm:$0xff]
  %v10057 = vsel %vm9512, %v10049, 0
  %10059 = vmatpush.msra.mxu0 0.0
  %10060 = vmatpush.msra.mxu0 0.0
  %10061 = vmatpush.msra.mxu0 0.0
  %10062 = vmatpush.msra.mxu0 0.0
  %10063 = vmatpush.msra.mxu0 0.0
  %10064 = vmatpush.msra.mxu0 0.0
  %10065 = vmatpush.msra.mxu0 0.0
  %10066 = vmatpush.msra.mxu0 0.0
  %10067 = vmatpush.msra.mxu0 0.0
  %10068 = vmatpush.msra.mxu0 0.0
  %10069 = vmatpush.msra.mxu0 0.0
  %10070 = vmatpush.msra.mxu0 0.0
  %10071 = vmatpush.msra.mxu0 %v10055
  %10072 = vmatpush.msra.mxu0 %v10054
  %10073 = vmatpush.msra.mxu0 %v10053
  %10074 = vmatpush.msra.mxu0 %v10052
  %10075 = vmatmul.f32.gmra.mxu0 %v10057
  %v10076 = vpop.f32.mrf.mxu0
  %v10077 = vadd.f32 0.0, %v10076
  %10078 = vdwg.mxu0
  %v10079 = vadd.f32 %v10025, %v10077
  %s10080 = scalar_lea.vmem %s11, 72
  %v10081 = vld [vmem:[%s10080] sm:$0xff]
  %v10083 = vsel %vm9512, %v10081, 0
  %10085 = vmatpush.msra.mxu0 0.0
  %10086 = vmatpush.msra.mxu0 0.0
  %10087 = vmatpush.msra.mxu0 0.0
  %10088 = vmatpush.msra.mxu0 0.0
  %10089 = vmatpush.msra.mxu0 0.0
  %10090 = vmatpush.msra.mxu0 0.0
  %10091 = vmatpush.msra.mxu0 0.0
  %10092 = vmatpush.msra.mxu0 0.0
  %10093 = vmatpush.msra.mxu0 0.0
  %10094 = vmatpush.msra.mxu0 0.0
  %10095 = vmatpush.msra.mxu0 0.0
  %10096 = vmatpush.msra.mxu0 0.0
  %10097 = vmatpush.msra.mxu0 %v9597
  %10098 = vmatpush.msra.mxu0 %v9596
  %10099 = vmatpush.msra.mxu0 %v9595
  %10100 = vmatpush.msra.mxu0 %v9594
  %10101 = vmatmul.f32.gmra.mxu0 %v10083
  %v10102 = vpop.f32.mrf.mxu0
  %v10103 = vadd.f32 0.0, %v10102
  %10104 = vdwg.mxu0
  %s10105 = scalar_lea.vmem %s12, 288
  %v10106 = vld [vmem:[%s10105] sm:$0xff]
  %v10107 = vld [vmem:[%s10105 + $0x8] sm:$0xff]
  %v10108 = vld [vmem:[%s10105 + $0x10] sm:$0xff]
  %v10109 = vld [vmem:[%s10105 + $0x18] sm:$0xff]
  %v10111 = vsel %vm9512, %v10103, 0
  %10113 = vmatpush.msra.mxu0 0.0
  %10114 = vmatpush.msra.mxu0 0.0
  %10115 = vmatpush.msra.mxu0 0.0
  %10116 = vmatpush.msra.mxu0 0.0
  %10117 = vmatpush.msra.mxu0 0.0
  %10118 = vmatpush.msra.mxu0 0.0
  %10119 = vmatpush.msra.mxu0 0.0
  %10120 = vmatpush.msra.mxu0 0.0
  %10121 = vmatpush.msra.mxu0 0.0
  %10122 = vmatpush.msra.mxu0 0.0
  %10123 = vmatpush.msra.mxu0 0.0
  %10124 = vmatpush.msra.mxu0 0.0
  %10125 = vmatpush.msra.mxu0 %v10109
  %10126 = vmatpush.msra.mxu0 %v10108
  %10127 = vmatpush.msra.mxu0 %v10107
  %10128 = vmatpush.msra.mxu0 %v10106
  %10129 = vmatmul.f32.gmra.mxu0 %v10111
  %v10130 = vpop.f32.mrf.mxu0
  %v10131 = vadd.f32 0.0, %v10130
  %10132 = vdwg.mxu0
  %v10133 = vadd.f32 %v10079, %v10131
  %s10134 = scalar_lea.vmem %s11, 80
  %v10135 = vld [vmem:[%s10134] sm:$0xff]
  %v10137 = vsel %vm9512, %v10135, 0
  %10139 = vmatpush.msra.mxu0 0.0
  %10140 = vmatpush.msra.mxu0 0.0
  %10141 = vmatpush.msra.mxu0 0.0
  %10142 = vmatpush.msra.mxu0 0.0
  %10143 = vmatpush.msra.mxu0 0.0
  %10144 = vmatpush.msra.mxu0 0.0
  %10145 = vmatpush.msra.mxu0 0.0
  %10146 = vmatpush.msra.mxu0 0.0
  %10147 = vmatpush.msra.mxu0 0.0
  %10148 = vmatpush.msra.mxu0 0.0
  %10149 = vmatpush.msra.mxu0 0.0
  %10150 = vmatpush.msra.mxu0 0.0
  %10151 = vmatpush.msra.mxu0 %v9597
  %10152 = vmatpush.msra.mxu0 %v9596
  %10153 = vmatpush.msra.mxu0 %v9595
  %10154 = vmatpush.msra.mxu0 %v9594
  %10155 = vmatmul.f32.gmra.mxu0 %v10137
  %v10156 = vpop.f32.mrf.mxu0
  %v10157 = vadd.f32 0.0, %v10156
  %10158 = vdwg.mxu0
  %s10159 = scalar_lea.vmem %s12, 320
  %v10160 = vld [vmem:[%s10159] sm:$0xff]
  %v10161 = vld [vmem:[%s10159 + $0x8] sm:$0xff]
  %v10162 = vld [vmem:[%s10159 + $0x10] sm:$0xff]
  %v10163 = vld [vmem:[%s10159 + $0x18] sm:$0xff]
  %v10165 = vsel %vm9512, %v10157, 0
  %10167 = vmatpush.msra.mxu0 0.0
  %10168 = vmatpush.msra.mxu0 0.0
  %10169 = vmatpush.msra.mxu0 0.0
  %10170 = vmatpush.msra.mxu0 0.0
  %10171 = vmatpush.msra.mxu0 0.0
  %10172 = vmatpush.msra.mxu0 0.0
  %10173 = vmatpush.msra.mxu0 0.0
  %10174 = vmatpush.msra.mxu0 0.0
  %10175 = vmatpush.msra.mxu0 0.0
  %10176 = vmatpush.msra.mxu0 0.0
  %10177 = vmatpush.msra.mxu0 0.0
  %10178 = vmatpush.msra.mxu0 0.0
  %10179 = vmatpush.msra.mxu0 %v10163
  %10180 = vmatpush.msra.mxu0 %v10162
  %10181 = vmatpush.msra.mxu0 %v10161
  %10182 = vmatpush.msra.mxu0 %v10160
  %10183 = vmatmul.f32.gmra.mxu0 %v10165
  %v10184 = vpop.f32.mrf.mxu0
  %v10185 = vadd.f32 0.0, %v10184
  %10186 = vdwg.mxu0
  %v10187 = vadd.f32 %v10133, %v10185
  %s10188 = scalar_lea.vmem %s11, 88
  %v10189 = vld [vmem:[%s10188] sm:$0xff]
  %v10191 = vsel %vm9512, %v10189, 0
  %10193 = vmatpush.msra.mxu0 0.0
  %10194 = vmatpush.msra.mxu0 0.0
  %10195 = vmatpush.msra.mxu0 0.0
  %10196 = vmatpush.msra.mxu0 0.0
  %10197 = vmatpush.msra.mxu0 0.0
  %10198 = vmatpush.msra.mxu0 0.0
  %10199 = vmatpush.msra.mxu0 0.0
  %10200 = vmatpush.msra.mxu0 0.0
  %10201 = vmatpush.msra.mxu0 0.0
  %10202 = vmatpush.msra.mxu0 0.0
  %10203 = vmatpush.msra.mxu0 0.0
  %10204 = vmatpush.msra.mxu0 0.0
  %10205 = vmatpush.msra.mxu0 %v9597
  %10206 = vmatpush.msra.mxu0 %v9596
  %10207 = vmatpush.msra.mxu0 %v9595
  %10208 = vmatpush.msra.mxu0 %v9594
  %10209 = vmatmul.f32.gmra.mxu0 %v10191
  %v10210 = vpop.f32.mrf.mxu0
  %v10211 = vadd.f32 0.0, %v10210
  %10212 = vdwg.mxu0
  %s10213 = scalar_lea.vmem %s12, 352
  %v10214 = vld [vmem:[%s10213] sm:$0xff]
  %v10215 = vld [vmem:[%s10213 + $0x8] sm:$0xff]
  %v10216 = vld [vmem:[%s10213 + $0x10] sm:$0xff]
  %v10217 = vld [vmem:[%s10213 + $0x18] sm:$0xff]
  %v10219 = vsel %vm9512, %v10211, 0
  %10221 = vmatpush.msra.mxu0 0.0
  %10222 = vmatpush.msra.mxu0 0.0
  %10223 = vmatpush.msra.mxu0 0.0
  %10224 = vmatpush.msra.mxu0 0.0
  %10225 = vmatpush.msra.mxu0 0.0
  %10226 = vmatpush.msra.mxu0 0.0
  %10227 = vmatpush.msra.mxu0 0.0
  %10228 = vmatpush.msra.mxu0 0.0
  %10229 = vmatpush.msra.mxu0 0.0
  %10230 = vmatpush.msra.mxu0 0.0
  %10231 = vmatpush.msra.mxu0 0.0
  %10232 = vmatpush.msra.mxu0 0.0
  %10233 = vmatpush.msra.mxu0 %v10217
  %10234 = vmatpush.msra.mxu0 %v10216
  %10235 = vmatpush.msra.mxu0 %v10215
  %10236 = vmatpush.msra.mxu0 %v10214
  %10237 = vmatmul.f32.gmra.mxu0 %v10219
  %v10238 = vpop.f32.mrf.mxu0
  %v10239 = vadd.f32 0.0, %v10238
  %10240 = vdwg.mxu0
  %v10241 = vadd.f32 %v10187, %v10239
  %s10242 = scalar_lea.vmem %s11, 96
  %v10243 = vld [vmem:[%s10242] sm:$0xff]
  %v10245 = vsel %vm9512, %v10243, 0
  %10247 = vmatpush.msra.mxu0 0.0
  %10248 = vmatpush.msra.mxu0 0.0
  %10249 = vmatpush.msra.mxu0 0.0
  %10250 = vmatpush.msra.mxu0 0.0
  %10251 = vmatpush.msra.mxu0 0.0
  %10252 = vmatpush.msra.mxu0 0.0
  %10253 = vmatpush.msra.mxu0 0.0
  %10254 = vmatpush.msra.mxu0 0.0
  %10255 = vmatpush.msra.mxu0 0.0
  %10256 = vmatpush.msra.mxu0 0.0
  %10257 = vmatpush.msra.mxu0 0.0
  %10258 = vmatpush.msra.mxu0 0.0
  %10259 = vmatpush.msra.mxu0 %v9597
  %10260 = vmatpush.msra.mxu0 %v9596
  %10261 = vmatpush.msra.mxu0 %v9595
  %10262 = vmatpush.msra.mxu0 %v9594
  %10263 = vmatmul.f32.gmra.mxu0 %v10245
  %v10264 = vpop.f32.mrf.mxu0
  %v10265 = vadd.f32 0.0, %v10264
  %10266 = vdwg.mxu0
  %s10267 = scalar_lea.vmem %s12, 384
  %v10268 = vld [vmem:[%s10267] sm:$0xff]
  %v10269 = vld [vmem:[%s10267 + $0x8] sm:$0xff]
  %v10270 = vld [vmem:[%s10267 + $0x10] sm:$0xff]
  %v10271 = vld [vmem:[%s10267 + $0x18] sm:$0xff]
  %v10273 = vsel %vm9512, %v10265, 0
  %10275 = vmatpush.msra.mxu0 0.0
  %10276 = vmatpush.msra.mxu0 0.0
  %10277 = vmatpush.msra.mxu0 0.0
  %10278 = vmatpush.msra.mxu0 0.0
  %10279 = vmatpush.msra.mxu0 0.0
  %10280 = vmatpush.msra.mxu0 0.0
  %10281 = vmatpush.msra.mxu0 0.0
  %10282 = vmatpush.msra.mxu0 0.0
  %10283 = vmatpush.msra.mxu0 0.0
  %10284 = vmatpush.msra.mxu0 0.0
  %10285 = vmatpush.msra.mxu0 0.0
  %10286 = vmatpush.msra.mxu0 0.0
  %10287 = vmatpush.msra.mxu0 %v10271
  %10288 = vmatpush.msra.mxu0 %v10270
  %10289 = vmatpush.msra.mxu0 %v10269
  %10290 = vmatpush.msra.mxu0 %v10268
  %10291 = vmatmul.f32.gmra.mxu0 %v10273
  %v10292 = vpop.f32.mrf.mxu0
  %v10293 = vadd.f32 0.0, %v10292
  %10294 = vdwg.mxu0
  %v10295 = vadd.f32 %v10241, %v10293
  %s10296 = scalar_lea.vmem %s11, 104
  %v10297 = vld [vmem:[%s10296] sm:$0xff]
  %v10299 = vsel %vm9512, %v10297, 0
  %10301 = vmatpush.msra.mxu0 0.0
  %10302 = vmatpush.msra.mxu0 0.0
  %10303 = vmatpush.msra.mxu0 0.0
  %10304 = vmatpush.msra.mxu0 0.0
  %10305 = vmatpush.msra.mxu0 0.0
  %10306 = vmatpush.msra.mxu0 0.0
  %10307 = vmatpush.msra.mxu0 0.0
  %10308 = vmatpush.msra.mxu0 0.0
  %10309 = vmatpush.msra.mxu0 0.0
  %10310 = vmatpush.msra.mxu0 0.0
  %10311 = vmatpush.msra.mxu0 0.0
  %10312 = vmatpush.msra.mxu0 0.0
  %10313 = vmatpush.msra.mxu0 %v9597
  %10314 = vmatpush.msra.mxu0 %v9596
  %10315 = vmatpush.msra.mxu0 %v9595
  %10316 = vmatpush.msra.mxu0 %v9594
  %10317 = vmatmul.f32.gmra.mxu0 %v10299
  %v10318 = vpop.f32.mrf.mxu0
  %v10319 = vadd.f32 0.0, %v10318
  %10320 = vdwg.mxu0
  %s10321 = scalar_lea.vmem %s12, 416
  %v10322 = vld [vmem:[%s10321] sm:$0xff]
  %v10323 = vld [vmem:[%s10321 + $0x8] sm:$0xff]
  %v10324 = vld [vmem:[%s10321 + $0x10] sm:$0xff]
  %v10325 = vld [vmem:[%s10321 + $0x18] sm:$0xff]
  %v10327 = vsel %vm9512, %v10319, 0
  %10329 = vmatpush.msra.mxu0 0.0
  %10330 = vmatpush.msra.mxu0 0.0
  %10331 = vmatpush.msra.mxu0 0.0
  %10332 = vmatpush.msra.mxu0 0.0
  %10333 = vmatpush.msra.mxu0 0.0
  %10334 = vmatpush.msra.mxu0 0.0
  %10335 = vmatpush.msra.mxu0 0.0
  %10336 = vmatpush.msra.mxu0 0.0
  %10337 = vmatpush.msra.mxu0 0.0
  %10338 = vmatpush.msra.mxu0 0.0
  %10339 = vmatpush.msra.mxu0 0.0
  %10340 = vmatpush.msra.mxu0 0.0
  %10341 = vmatpush.msra.mxu0 %v10325
  %10342 = vmatpush.msra.mxu0 %v10324
  %10343 = vmatpush.msra.mxu0 %v10323
  %10344 = vmatpush.msra.mxu0 %v10322
  %10345 = vmatmul.f32.gmra.mxu0 %v10327
  %v10346 = vpop.f32.mrf.mxu0
  %v10347 = vadd.f32 0.0, %v10346
  %10348 = vdwg.mxu0
  %v10349 = vadd.f32 %v10295, %v10347
  %s10350 = scalar_lea.vmem %s11, 112
  %v10351 = vld [vmem:[%s10350] sm:$0xff]
  %v10353 = vsel %vm9512, %v10351, 0
  %10355 = vmatpush.msra.mxu0 0.0
  %10356 = vmatpush.msra.mxu0 0.0
  %10357 = vmatpush.msra.mxu0 0.0
  %10358 = vmatpush.msra.mxu0 0.0
  %10359 = vmatpush.msra.mxu0 0.0
  %10360 = vmatpush.msra.mxu0 0.0
  %10361 = vmatpush.msra.mxu0 0.0
  %10362 = vmatpush.msra.mxu0 0.0
  %10363 = vmatpush.msra.mxu0 0.0
  %10364 = vmatpush.msra.mxu0 0.0
  %10365 = vmatpush.msra.mxu0 0.0
  %10366 = vmatpush.msra.mxu0 0.0
  %10367 = vmatpush.msra.mxu0 %v9597
  %10368 = vmatpush.msra.mxu0 %v9596
  %10369 = vmatpush.msra.mxu0 %v9595
  %10370 = vmatpush.msra.mxu0 %v9594
  %10371 = vmatmul.f32.gmra.mxu0 %v10353
  %v10372 = vpop.f32.mrf.mxu0
  %v10373 = vadd.f32 0.0, %v10372
  %10374 = vdwg.mxu0
  %s10375 = scalar_lea.vmem %s12, 448
  %v10376 = vld [vmem:[%s10375] sm:$0xff]
  %v10377 = vld [vmem:[%s10375 + $0x8] sm:$0xff]
  %v10378 = vld [vmem:[%s10375 + $0x10] sm:$0xff]
  %v10379 = vld [vmem:[%s10375 + $0x18] sm:$0xff]
  %v10381 = vsel %vm9512, %v10373, 0
  %10383 = vmatpush.msra.mxu0 0.0
  %10384 = vmatpush.msra.mxu0 0.0
  %10385 = vmatpush.msra.mxu0 0.0
  %10386 = vmatpush.msra.mxu0 0.0
  %10387 = vmatpush.msra.mxu0 0.0
  %10388 = vmatpush.msra.mxu0 0.0
  %10389 = vmatpush.msra.mxu0 0.0
  %10390 = vmatpush.msra.mxu0 0.0
  %10391 = vmatpush.msra.mxu0 0.0
  %10392 = vmatpush.msra.mxu0 0.0
  %10393 = vmatpush.msra.mxu0 0.0
  %10394 = vmatpush.msra.mxu0 0.0
  %10395 = vmatpush.msra.mxu0 %v10379
  %10396 = vmatpush.msra.mxu0 %v10378
  %10397 = vmatpush.msra.mxu0 %v10377
  %10398 = vmatpush.msra.mxu0 %v10376
  %10399 = vmatmul.f32.gmra.mxu0 %v10381
  %v10400 = vpop.f32.mrf.mxu0
  %v10401 = vadd.f32 0.0, %v10400
  %10402 = vdwg.mxu0
  %v10403 = vadd.f32 %v10349, %v10401
  %s10404 = scalar_lea.vmem %s11, 120
  %v10405 = vld [vmem:[%s10404] sm:$0xff]
  %v10407 = vsel %vm9512, %v10405, 0
  %10409 = vmatpush.msra.mxu0 0.0
  %10410 = vmatpush.msra.mxu0 0.0
  %10411 = vmatpush.msra.mxu0 0.0
  %10412 = vmatpush.msra.mxu0 0.0
  %10413 = vmatpush.msra.mxu0 0.0
  %10414 = vmatpush.msra.mxu0 0.0
  %10415 = vmatpush.msra.mxu0 0.0
  %10416 = vmatpush.msra.mxu0 0.0
  %10417 = vmatpush.msra.mxu0 0.0
  %10418 = vmatpush.msra.mxu0 0.0
  %10419 = vmatpush.msra.mxu0 0.0
  %10420 = vmatpush.msra.mxu0 0.0
  %10421 = vmatpush.msra.mxu0 %v9597
  %10422 = vmatpush.msra.mxu0 %v9596
  %10423 = vmatpush.msra.mxu0 %v9595
  %10424 = vmatpush.msra.mxu0 %v9594
  %10425 = vmatmul.f32.gmra.mxu0 %v10407
  %v10426 = vpop.f32.mrf.mxu0
  %v10427 = vadd.f32 0.0, %v10426
  %10428 = vdwg.mxu0
  %s10429 = scalar_lea.vmem %s12, 480
  %v10430 = vld [vmem:[%s10429] sm:$0xff]
  %v10431 = vld [vmem:[%s10429 + $0x8] sm:$0xff]
  %v10432 = vld [vmem:[%s10429 + $0x10] sm:$0xff]
  %v10433 = vld [vmem:[%s10429 + $0x18] sm:$0xff]
  %v10435 = vsel %vm9512, %v10427, 0
  %10437 = vmatpush.msra.mxu0 0.0
  %10438 = vmatpush.msra.mxu0 0.0
  %10439 = vmatpush.msra.mxu0 0.0
  %10440 = vmatpush.msra.mxu0 0.0
  %10441 = vmatpush.msra.mxu0 0.0
  %10442 = vmatpush.msra.mxu0 0.0
  %10443 = vmatpush.msra.mxu0 0.0
  %10444 = vmatpush.msra.mxu0 0.0
  %10445 = vmatpush.msra.mxu0 0.0
  %10446 = vmatpush.msra.mxu0 0.0
  %10447 = vmatpush.msra.mxu0 0.0
  %10448 = vmatpush.msra.mxu0 0.0
  %10449 = vmatpush.msra.mxu0 %v10433
  %10450 = vmatpush.msra.mxu0 %v10432
  %10451 = vmatpush.msra.mxu0 %v10431
  %10452 = vmatpush.msra.mxu0 %v10430
  %10453 = vmatmul.f32.gmra.mxu0 %v10435
  %v10454 = vpop.f32.mrf.mxu0
  %v10455 = vadd.f32 0.0, %v10454
  %10456 = vdwg.mxu0
  %v10457 = vadd.f32 %v10403, %v10455
  %vm10458 = vcmask 523264
  %v10459 = vsel %vm10458, %v10457, 0.0
  %v10460 = vrot.slane %v10459, 4
  %v10461 = vadd.f32 %v10459, %v10460
  %v10462 = vrot.slane %v10461, 2
  %v10463 = vadd.f32 %v10461, %v10462
  %v10464 = vrot.slane %v10463, 1
  %v10465 = vadd.f32 %v10463, %v10464
  %v10466 = vrcp.pop 8.0
  %v10467 = vmul.f32 8.0, %v10466
  %v10468 = vsub.f32 1.0, %v10467
  %v10469 = vmul.f32 %v10466, %v10468
  %v10470 = vadd.f32 %v10466, %v10469
  %vm10471 = vweird.f32 %v10466
  %v10472 = vsel %vm10471, %v10466, %v10470
  %v10473 = vmul.f32 %v10465, %v10472
  %v10474 = vsub.f32 %v10457, %v10473
  %v10475 = vmul.f32 %v10474, %v10474
  %v10476 = vsel %vm10458, %v10475, 0.0
  %v10477 = vrot.slane %v10476, 4
  %v10478 = vadd.f32 %v10476, %v10477
  %v10479 = vrot.slane %v10478, 2
  %v10480 = vadd.f32 %v10478, %v10479
  %v10481 = vrot.slane %v10480, 1
  %v10482 = vadd.f32 %v10480, %v10481
  %v10483 = vmul.f32 %v10482, %v10472
  %v10484 = vld [vmem:[%s13] sm:$0x1]
  %v10485 = vadd.f32 %v10483, 1e-05
  %v10486 = vrsqrt.pop %v10485
  %v10487 = vmul.f32 %v10486, %v10485
  %v10488 = vmul.f32 %v10487, %v10486
  %v10489 = vmul.f32 0.5, %v10488
  %v10490 = vsub.f32 1.5, %v10489
  %v10491 = vmul.f32 %v10486, %v10490
  %vm10492 = vweird.f32 %v10485
  %vm10493 = vweird.f32 %v10486
  %vm10494 = vmor %vm10492, %vm10493
  %v10495 = vsel %vm10494, %v10486, %v10491
  %v10496 = vmul.f32 %v10484, %v10495
  %v10498 = vperm.slane %v10496, 0
  %v10500 = vmul.f32 %v10457, %v10498
  %v10501 = vld [vmem:[%s14] sm:$0x1]
  %v10502 = vmul.f32 %v10473, %v10496
  %v10503 = vsub.f32 %v10501, %v10502
  %v10505 = vperm.slane %v10503, 0
  %v10507 = vadd.f32 %v10500, %v10505
  %vm10508 = vcmp.ge.f32.partialorder %v10507, 0.0
  %v10509 = vmul.f32 %v10507, 0.05
  %v10510 = vsel %vm10508, %v10507, %v10509
  %v10511 = vld [vmem:[%s15] sm:$0x3]
  %v10513 = vsel %vm1381, %v10511, 0
  %10515 = vmatpush.msra.mxu0 0.0
  %10516 = vmatpush.msra.mxu0 0.0
  %10517 = vmatpush.msra.mxu0 0.0
  %10518 = vmatpush.msra.mxu0 0.0
  %10519 = vmatpush.msra.mxu0 0.0
  %10520 = vmatpush.msra.mxu0 0.0
  %10521 = vmatpush.msra.mxu0 0.0
  %10522 = vmatpush.msra.mxu0 0.0
  %10523 = vmatpush.msra.mxu0 0.0
  %10524 = vmatpush.msra.mxu0 0.0
  %10525 = vmatpush.msra.mxu0 0.0
  %10526 = vmatpush.msra.mxu0 0.0
  %10527 = vmatpush.msra.mxu0 0.0
  %10528 = vmatpush.msra.mxu0 0.0
  %10529 = vmatpush.msra.mxu0 0.0
  %10530 = vmatpush.msra.mxu0 %v10510
  %10531 = vmatmul.f32.gmra.mxu0 %v10513
  %v10532 = vpop.f32.mrf.mxu0
  %v10533 = vadd.f32 0.0, %v10532
  %10534 = vdwg.mxu0
  %v10535 = vld [vmem:[%s16] sm:$0xff]
  %v10536 = vld [vmem:[%s16 + $0x8] sm:$0xff]
  %v10537 = vld [vmem:[%s16 + $0x10] sm:$0xff]
  %v10538 = vld [vmem:[%s16 + $0x18] sm:$0xff]
  %v10539 = vld [vmem:[%s16 + $0x20] sm:$0xff]
  %v10540 = vld [vmem:[%s16 + $0x28] sm:$0xff]
  %v10541 = vld [vmem:[%s16 + $0x30] sm:$0xff]
  %v10542 = vld [vmem:[%s16 + $0x38] sm:$0xff]
  %s10543 = scalar_lea.vmem %s15, 2
  %v10544 = vld [vmem:[%s10543] sm:$0x3]
  %v10546 = vsel %vm1381, %v10544, 0
  %10548 = vmatpush.msra.mxu0 0.0
  %10549 = vmatpush.msra.mxu0 0.0
  %10550 = vmatpush.msra.mxu0 0.0
  %10551 = vmatpush.msra.mxu0 0.0
  %10552 = vmatpush.msra.mxu0 0.0
  %10553 = vmatpush.msra.mxu0 0.0
  %10554 = vmatpush.msra.mxu0 0.0
  %10555 = vmatpush.msra.mxu0 0.0
  %10556 = vmatpush.msra.mxu0 0.0
  %10557 = vmatpush.msra.mxu0 0.0
  %10558 = vmatpush.msra.mxu0 0.0
  %10559 = vmatpush.msra.mxu0 0.0
  %10560 = vmatpush.msra.mxu0 0.0
  %10561 = vmatpush.msra.mxu0 0.0
  %10562 = vmatpush.msra.mxu0 0.0
  %10563 = vmatpush.msra.mxu0 %v10510
  %10564 = vmatmul.f32.gmra.mxu0 %v10546
  %v10565 = vpop.f32.mrf.mxu0
  %v10566 = vadd.f32 0.0, %v10565
  %10567 = vdwg.mxu0
  %s10568 = scalar_lea.vmem %s16, 64
  %v10569 = vld [vmem:[%s10568] sm:$0xff]
  %v10570 = vld [vmem:[%s10568 + $0x8] sm:$0xff]
  %v10571 = vld [vmem:[%s10568 + $0x10] sm:$0xff]
  %v10572 = vld [vmem:[%s10568 + $0x18] sm:$0xff]
  %v10573 = vld [vmem:[%s10568 + $0x20] sm:$0xff]
  %v10574 = vld [vmem:[%s10568 + $0x28] sm:$0xff]
  %v10575 = vld [vmem:[%s10568 + $0x30] sm:$0xff]
  %v10576 = vld [vmem:[%s10568 + $0x38] sm:$0xff]
  %v10578 = vsel %vm10458, %v10566, 0
  %10580 = vmatpush.msra.mxu0 0.0
  %10581 = vmatpush.msra.mxu0 0.0
  %10582 = vmatpush.msra.mxu0 0.0
  %10583 = vmatpush.msra.mxu0 0.0
  %10584 = vmatpush.msra.mxu0 0.0
  %10585 = vmatpush.msra.mxu0 0.0
  %10586 = vmatpush.msra.mxu0 0.0
  %10587 = vmatpush.msra.mxu0 0.0
  %10588 = vmatpush.msra.mxu0 %v10576
  %10589 = vmatpush.msra.mxu0 %v10575
  %10590 = vmatpush.msra.mxu0 %v10574
  %10591 = vmatpush.msra.mxu0 %v10573
  %10592 = vmatpush.msra.mxu0 %v10572
  %10593 = vmatpush.msra.mxu0 %v10571
  %10594 = vmatpush.msra.mxu0 %v10570
  %10595 = vmatpush.msra.mxu0 %v10569
  %10596 = vmatmul.f32.gmra.mxu0 %v10578
  %v10597 = vpop.f32.mrf.mxu0
  %v10598 = vadd.f32 0.0, %v10597
  %10599 = vdwg.mxu0
  %v10601 = vsel %vm10458, %v10533, 0
  %10603 = vmatpush.msra.mxu0 0.0
  %10604 = vmatpush.msra.mxu0 0.0
  %10605 = vmatpush.msra.mxu0 0.0
  %10606 = vmatpush.msra.mxu0 0.0
  %10607 = vmatpush.msra.mxu0 0.0
  %10608 = vmatpush.msra.mxu0 0.0
  %10609 = vmatpush.msra.mxu0 0.0
  %10610 = vmatpush.msra.mxu0 0.0
  %10611 = vmatpush.msra.mxu0 %v10542
  %10612 = vmatpush.msra.mxu0 %v10541
  %10613 = vmatpush.msra.mxu0 %v10540
  %10614 = vmatpush.msra.mxu0 %v10539
  %10615 = vmatpush.msra.mxu0 %v10538
  %10616 = vmatpush.msra.mxu0 %v10537
  %10617 = vmatpush.msra.mxu0 %v10536
  %10618 = vmatpush.msra.mxu0 %v10535
  %10619 = vmatmul.f32.gmra.mxu0 %v10601
  %v10620 = vpop.f32.mrf.mxu0
  %v10621 = vadd.f32 %v10598, %v10620
  %10622 = vdwg.mxu0
  %s10623 = scalar_lea.vmem %s15, 4
  %v10624 = vld [vmem:[%s10623] sm:$0x3]
  %v10626 = vsel %vm1381, %v10624, 0
  %10628 = vmatpush.msra.mxu0 0.0
  %10629 = vmatpush.msra.mxu0 0.0
  %10630 = vmatpush.msra.mxu0 0.0
  %10631 = vmatpush.msra.mxu0 0.0
  %10632 = vmatpush.msra.mxu0 0.0
  %10633 = vmatpush.msra.mxu0 0.0
  %10634 = vmatpush.msra.mxu0 0.0
  %10635 = vmatpush.msra.mxu0 0.0
  %10636 = vmatpush.msra.mxu0 0.0
  %10637 = vmatpush.msra.mxu0 0.0
  %10638 = vmatpush.msra.mxu0 0.0
  %10639 = vmatpush.msra.mxu0 0.0
  %10640 = vmatpush.msra.mxu0 0.0
  %10641 = vmatpush.msra.mxu0 0.0
  %10642 = vmatpush.msra.mxu0 0.0
  %10643 = vmatpush.msra.mxu0 %v10510
  %10644 = vmatmul.f32.gmra.mxu0 %v10626
  %v10645 = vpop.f32.mrf.mxu0
  %v10646 = vadd.f32 0.0, %v10645
  %10647 = vdwg.mxu0
  %s10648 = scalar_lea.vmem %s16, 128
  %v10649 = vld [vmem:[%s10648] sm:$0xff]
  %v10650 = vld [vmem:[%s10648 + $0x8] sm:$0xff]
  %v10651 = vld [vmem:[%s10648 + $0x10] sm:$0xff]
  %v10652 = vld [vmem:[%s10648 + $0x18] sm:$0xff]
  %v10653 = vld [vmem:[%s10648 + $0x20] sm:$0xff]
  %v10654 = vld [vmem:[%s10648 + $0x28] sm:$0xff]
  %v10655 = vld [vmem:[%s10648 + $0x30] sm:$0xff]
  %v10656 = vld [vmem:[%s10648 + $0x38] sm:$0xff]
  %v10658 = vsel %vm10458, %v10646, 0
  %10660 = vmatpush.msra.mxu0 0.0
  %10661 = vmatpush.msra.mxu0 0.0
  %10662 = vmatpush.msra.mxu0 0.0
  %10663 = vmatpush.msra.mxu0 0.0
  %10664 = vmatpush.msra.mxu0 0.0
  %10665 = vmatpush.msra.mxu0 0.0
  %10666 = vmatpush.msra.mxu0 0.0
  %10667 = vmatpush.msra.mxu0 0.0
  %10668 = vmatpush.msra.mxu0 %v10656
  %10669 = vmatpush.msra.mxu0 %v10655
  %10670 = vmatpush.msra.mxu0 %v10654
  %10671 = vmatpush.msra.mxu0 %v10653
  %10672 = vmatpush.msra.mxu0 %v10652
  %10673 = vmatpush.msra.mxu0 %v10651
  %10674 = vmatpush.msra.mxu0 %v10650
  %10675 = vmatpush.msra.mxu0 %v10649
  %10676 = vmatmul.f32.gmra.mxu0 %v10658
  %v10677 = vpop.f32.mrf.mxu0
  %v10678 = vadd.f32 0.0, %v10677
  %10679 = vdwg.mxu0
  %v10680 = vadd.f32 %v10621, %v10678
  %s10681 = scalar_lea.vmem %s15, 6
  %v10682 = vld [vmem:[%s10681] sm:$0x3]
  %v10684 = vsel %vm1381, %v10682, 0
  %10686 = vmatpush.msra.mxu0 0.0
  %10687 = vmatpush.msra.mxu0 0.0
  %10688 = vmatpush.msra.mxu0 0.0
  %10689 = vmatpush.msra.mxu0 0.0
  %10690 = vmatpush.msra.mxu0 0.0
  %10691 = vmatpush.msra.mxu0 0.0
  %10692 = vmatpush.msra.mxu0 0.0
  %10693 = vmatpush.msra.mxu0 0.0
  %10694 = vmatpush.msra.mxu0 0.0
  %10695 = vmatpush.msra.mxu0 0.0
  %10696 = vmatpush.msra.mxu0 0.0
  %10697 = vmatpush.msra.mxu0 0.0
  %10698 = vmatpush.msra.mxu0 0.0
  %10699 = vmatpush.msra.mxu0 0.0
  %10700 = vmatpush.msra.mxu0 0.0
  %10701 = vmatpush.msra.mxu0 %v10510
  %10702 = vmatmul.f32.gmra.mxu0 %v10684
  %v10703 = vpop.f32.mrf.mxu0
  %v10704 = vadd.f32 0.0, %v10703
  %10705 = vdwg.mxu0
  %s10706 = scalar_lea.vmem %s16, 192
  %v10707 = vld [vmem:[%s10706] sm:$0xff]
  %v10708 = vld [vmem:[%s10706 + $0x8] sm:$0xff]
  %v10709 = vld [vmem:[%s10706 + $0x10] sm:$0xff]
  %v10710 = vld [vmem:[%s10706 + $0x18] sm:$0xff]
  %v10711 = vld [vmem:[%s10706 + $0x20] sm:$0xff]
  %v10712 = vld [vmem:[%s10706 + $0x28] sm:$0xff]
  %v10713 = vld [vmem:[%s10706 + $0x30] sm:$0xff]
  %v10714 = vld [vmem:[%s10706 + $0x38] sm:$0xff]
  %v10716 = vsel %vm10458, %v10704, 0
  %10718 = vmatpush.msra.mxu0 0.0
  %10719 = vmatpush.msra.mxu0 0.0
  %10720 = vmatpush.msra.mxu0 0.0
  %10721 = vmatpush.msra.mxu0 0.0
  %10722 = vmatpush.msra.mxu0 0.0
  %10723 = vmatpush.msra.mxu0 0.0
  %10724 = vmatpush.msra.mxu0 0.0
  %10725 = vmatpush.msra.mxu0 0.0
  %10726 = vmatpush.msra.mxu0 %v10714
  %10727 = vmatpush.msra.mxu0 %v10713
  %10728 = vmatpush.msra.mxu0 %v10712
  %10729 = vmatpush.msra.mxu0 %v10711
  %10730 = vmatpush.msra.mxu0 %v10710
  %10731 = vmatpush.msra.mxu0 %v10709
  %10732 = vmatpush.msra.mxu0 %v10708
  %10733 = vmatpush.msra.mxu0 %v10707
  %10734 = vmatmul.f32.gmra.mxu0 %v10716
  %v10735 = vpop.f32.mrf.mxu0
  %v10736 = vadd.f32 0.0, %v10735
  %10737 = vdwg.mxu0
  %v10738 = vadd.f32 %v10680, %v10736
  %v10739 = vld [vmem:[#allocation2] sm:$0x1]
  %v10741 = vperm.slane %v10739, 0
  %v10743 = vadd.f32 %v10738, %v10741
  %vm10744 = vcmask 1024
  %10745 = vst.msk [vmem:[%s18] sm:$0x3] %vm10744, %v10743
  // Predicated region
  $region74: #{discriminator_forward.1} parent=0 // pred_check
    _
  $region75: #{discriminator_forward.1} parent=0 // pred_check_branch
    %10747 = sbr.rel (0) target = $region77
  $region76: #{discriminator_forward.1} parent=0 // pred_region
    _
  $region77: #{discriminator_forward.1} parent=0 // pred_fallthru
    _
  // Predicated region
  $region78: #{discriminator_forward.1} parent=0 // pred_check
    _
  $region79: #{discriminator_forward.1} parent=0 // pred_check_branch
    %10749 = sbr.rel (0) target = $region81
  $region80: #{discriminator_forward.1} parent=0 // pred_region
    _
  $region81: #{discriminator_forward.1} parent=0 // pred_fallthru
    _

</llo_original>
